<compile_context>
chip_gen: v7x
topology: tpu7x:2x2x1
jax: 0.10.0
libtpu: 0.0.40
codegen_flags: <defaults>
</compile_context>

<pallas_src>
import math

import jax
import jax.numpy as jnp
from jax.experimental import pallas as pl
from jax.experimental.pallas import tpu as pltpu

_SQRT1_2 = 1.0 / math.sqrt(2.0)
_LANE = 128


def _round_up(x, m):
    return (x + m - 1) // m * m


# ----------------------------- in-kernel math helpers -----------------------------

def _erf(x):
    # Abramowitz & Stegun 7.1.26 rational approximation (|err| <= 1.5e-7) of the exact
    # erf-based GELU PyTorch uses (no erf primitive in Mosaic).  Exact reciprocal; f32.
    a1, a2, a3, a4, a5 = 0.254829592, -0.284496736, 1.421413741, -1.453152027, 1.061405429
    p = 0.3275911
    ax = jnp.abs(x)
    t = 1.0 / (1.0 + p * ax)
    poly = ((((a5 * t + a4) * t + a3) * t + a2) * t + a1) * t
    e = 1.0 - poly * jnp.exp(-ax * ax)
    return jnp.where(x >= 0.0, e, -e)          # erf is odd: single select for the sign


def _gelu(x):
    return 0.5 * x * (1.0 + _erf(x * _SQRT1_2))


# ----------------------------- XLA-side im2col (single gather fusion) -----------------------------

def _build_col(x, *, kh, kw, stride, pad, batch_minor=False, dtype=jnp.bfloat16):
    """im2col pre-split into the 4 MaxPool(2,2) phases.

    x: [IC, B, H, W] channel-major.  Returns (col, POH, POW) with
    col[phase, ic*kh*kw + ki*kw + kj, m], m ordered (b, poh, pow)
    (or (poh, pow, b) when batch_minor=True) and phase = 2*py + px.
    Built from per-(phase, tap) strided slices so the whole producer is one gather-style
    XLA fusion writing col directly in the layout the Pallas kernel consumes."""
    IC, B, H, W = x.shape
    OH = (H + 2 * pad - kh) // stride + 1
    OW = (W + 2 * pad - kw) // stride + 1
    POH, POW = OH // 2, OW // 2                # MaxPool2d(2,2), floor semantics
    xp = jnp.pad(x, ((0, 0), (0, 0), (pad, pad), (pad, pad)))
    s2 = 2 * stride
    phases = []
    for py in range(2):
        for px in range(2):
            taps = []
            for ki in range(kh):
                for kj in range(kw):
                    r0 = py * stride + ki
                    c0 = px * stride + kj
                    sl = jax.lax.slice(
                        xp, (0, 0, r0, c0),
                        (IC, B, r0 + s2 * (POH - 1) + 1, c0 + s2 * (POW - 1) + 1),
                        (1, 1, s2, s2))                      # [IC, B, POH, POW]
                    if batch_minor:
                        sl = jnp.moveaxis(sl, 1, 3)          # [IC, POH, POW, B]
                    taps.append(sl)
            phases.append(jnp.stack(taps, axis=1))           # [IC, kh*kw, ...]
    col = jnp.stack(phases, axis=0)                          # [4, IC, kh*kw, ...]
    return col.reshape(4, IC * kh * kw, B * POH * POW).astype(dtype), POH, POW


# ----------------------------- fused conv + maxpool(2,2) + gelu -----------------------------

def _conv_pool_gelu_kernel(col_ref, w_ref, b_ref, o_ref):
    # col_ref: [4, K, TM] bf16 (4 = 2x2 pool phases), w_ref: [OC, K] bf16, b_ref: [OC, 1] f32
    w = w_ref[...]
    m = jnp.dot(w, col_ref[0], preferred_element_type=jnp.float32)
    # TODO(synk): merge the 4 phase dots into one MXU stream (phase-major lane chunks per
    # m-tile); secondary since the kernel is col-DMA bound at these shapes.
    for p in range(1, 4):
        m = jnp.maximum(m, jnp.dot(w, col_ref[p], preferred_element_type=jnp.float32))
    # bias is phase-independent -> add once after the max; fused f32 GELU epilogue.
    o_ref[...] = _gelu(m + b_ref[...])


def conv_pool_gelu(x, w_flat, b, *, kh, kw, stride, pad, tm=512):
    """Fused Conv2d + MaxPool2d(2,2) + GELU, channel-major in and out.

    x: [IC, B, H, W] f32, w_flat: [OC, IC*kh*kw] bf16 (input scaling already folded in),
    b: [OC, 1] f32.  Returns [OC, B, POH, POW] f32 (lane-dense M = B*POH*POW stores)."""
    IC, B, H, W = x.shape
    OC, K = w_flat.shape
    col, POH, POW = _build_col(x, kh=kh, kw=kw, stride=stride, pad=pad)
    M = B * POH * POW

    # tm=512 keeps the double-buffered bf16 col block <= ~1 MB even for K=512, safe for
    # v5e's 16 MiB / v7x's 32 MiB default scoped VMEM; raise tm (+ vmem_limit_bytes) on
    # v6e for large batches.  At B=2 conv1 gets a grid of 2 ("parallel" -> both v7x TCs);
    # later stages are too small to split and naturally tile once the batch grows.
    tm = min(tm, _round_up(M, _LANE))
    m_pad = _round_up(M, tm)
    if m_pad != M:
        col = jnp.pad(col, ((0, 0), (0, 0), (0, m_pad - M)))

    out = pl.pallas_call(
        _conv_pool_gelu_kernel,
        grid=(m_pad // tm,),
        in_specs=[
            pl.BlockSpec((4, K, tm), lambda i: (0, 0, i)),
            pl.BlockSpec((OC, K), lambda i: (0, 0)),
            pl.BlockSpec((OC, 1), lambda i: (0, 0)),
        ],
        out_specs=pl.BlockSpec((OC, tm), lambda i: (0, i)),
        out_shape=jax.ShapeDtypeStruct((OC, m_pad), jnp.float32),
        compiler_params=pltpu.CompilerParams(dimension_semantics=("parallel",)),
    )(col, w_flat, b)

    # [OC, M] with M = (b, poh, pow) -> channel-major activation, no transpose needed.
    return out[:, :M].reshape(OC, B, POH, POW)


# ----------------------------- fused conv3 + dense tail -----------------------------

def _tail_kernel(col3_ref, w3_ref, b3_ref, fcw3_ref, fcb_ref, infoT_ref,
                 t1w_ref, t1b_ref, t2w_ref, t2b_ref,
                 l1wa_ref, l1wb_ref, l1b_ref, l2w_ref, l2b_ref, o_ref):
    f32 = jnp.float32
    B = o_ref.shape[1]
    n_pos = fcw3_ref.shape[0]                  # spatial positions after conv3+pool (= 6)

    # conv3 + MaxPool(2,2) + GELU; columns of `a` ordered (s, b), s = poh*POW + pow.
    w3 = w3_ref[...]
    m = jnp.dot(w3, col3_ref[0], preferred_element_type=f32)
    for p in range(1, 4):
        m = jnp.maximum(m, jnp.dot(w3, col3_ref[p], preferred_element_type=f32))
    a = _gelu(m + b3_ref[...])                                 # [64, n_pos*B]

    # Flatten + Linear(384, hidden) + GELU: nn.Flatten's NCHW ordering is folded into
    # per-position fc weight blocks, so no in-kernel transpose of `a` is needed.
    xs = jnp.dot(fcw3_ref[0], a[:, 0:B], preferred_element_type=f32)
    for s in range(1, n_pos):
        xs = xs + jnp.dot(fcw3_ref[s], a[:, s * B:(s + 1) * B],
                          preferred_element_type=f32)
    x_cnn = _gelu(xs + fcb_ref[...])                           # [hidden, B]

    # DQN_TAB (transposed: features x batch, PyTorch [out, in] weights used as-is).
    t = jnp.maximum(jnp.dot(t1w_ref[...], infoT_ref[...], preferred_element_type=f32)
                    + t1b_ref[...], 0.0)
    x_tab = jnp.maximum(jnp.dot(t2w_ref[...], t, preferred_element_type=f32)
                        + t2b_ref[...], 0.0)                   # [hidden, B]

    # Head: torch.concat is folded into l1 by splitting its weight into cnn/tab halves.
    y = jnp.maximum(jnp.dot(l1wa_ref[...], x_cnn, preferred_element_type=f32)
                    + jnp.dot(l1wb_ref[...], x_tab, preferred_element_type=f32)
                    + l1b_ref[...], 0.0)
    o_ref[...] = jnp.dot(l2w_ref[...], y, preferred_element_type=f32) + l2b_ref[...]


def conv3_dense_tail(x, info, tp):
    """Fused conv3+pool+GELU -> Flatten -> fc -> GELU, DQN_TAB branch, and l1/l2 head.

    x: [64, B, 6, 4] channel-major conv2 output, info: [B, info_dim].  Returns [B, 4]."""
    B = x.shape[1]
    col3, POH, POW = _build_col(x, kh=3, kw=3, stride=1, pad=1, batch_minor=True)
    assert tp["fcw3"].shape[0] == POH * POW
    n_act = tp["l2_w"].shape[0]
    info_T = info.T.astype(jnp.float32)                        # [info_dim, B]

    args = (col3, tp["c3_w"], tp["c3_b"], tp["fcw3"], tp["fc_b"], info_T,
            tp["t1_w"], tp["t1_b"], tp["t2_w"], tp["t2_b"],
            tp["l1_wa"], tp["l1_wb"], tp["l1_b"], tp["l2_w"], tp["l2_b"])
    in_specs = [pl.BlockSpec(a.shape, lambda i, n=a.ndim: (0,) * n) for a in args]
    out_t = pl.pallas_call(
        _tail_kernel,
        grid=(1,),
        in_specs=in_specs,
        out_specs=pl.BlockSpec((n_act, B), lambda i: (0, 0)),
        out_shape=jax.ShapeDtypeStruct((n_act, B), jnp.float32),
        compiler_params=pltpu.CompilerParams(dimension_semantics=("arbitrary",)),
    )(*args)
    return out_t.T                                             # [B, 4]


# ----------------------------- parameter prep (one-time, outside the hot path) -----------------------------

def prepare_params(p):
    f32, bf16 = jnp.float32, jnp.bfloat16
    out = {}
    # Fold `x /= 255.0` of DQN_CNN into conv1's weights (bias unscaled); conv weights bf16.
    out["c1_w"] = (p["c1_w"].reshape(p["c1_w"].shape[0], -1) / 255.0).astype(bf16)
    out["c1_b"] = p["c1_b"].reshape(-1, 1).astype(f32)
    out["c2_w"] = p["c2_w"].reshape(p["c2_w"].shape[0], -1).astype(bf16)
    out["c2_b"] = p["c2_b"].reshape(-1, 1).astype(f32)
    out["c3_w"] = p["c3_w"].reshape(p["c3_w"].shape[0], -1).astype(bf16)
    out["c3_b"] = p["c3_b"].reshape(-1, 1).astype(f32)

    hidden = p["fc_w"].shape[0]
    oc3 = p["c3_w"].shape[0]
    n_pos = p["fc_w"].shape[1] // oc3          # spatial positions after conv3+pool (= 6)
    # fc weight regrouped per spatial position: fcw3[s, h, oc] = fc_w[h, oc*n_pos + s]
    # (folds nn.Flatten's NCHW ordering into the weight layout).
    out["fcw3"] = p["fc_w"].reshape(hidden, oc3, n_pos).transpose(2, 0, 1).astype(f32)
    out["fc_b"] = p["fc_b"].reshape(-1, 1).astype(f32)

    # Transposed tail: PyTorch [out, in] weights are used as-is (y^T = W @ x^T + b).
    out["t1_w"] = p["t1_w"].astype(f32)
    out["t1_b"] = p["t1_b"].reshape(-1, 1).astype(f32)
    out["t2_w"] = p["t2_w"].astype(f32)
    out["t2_b"] = p["t2_b"].reshape(-1, 1).astype(f32)
    l1_w = p["l1_w"].astype(f32)
    out["l1_wa"] = l1_w[:, :hidden]            # acts on x_cnn
    out["l1_wb"] = l1_w[:, hidden:]            # acts on x_tab
    out["l1_b"] = p["l1_b"].reshape(-1, 1).astype(f32)
    out["l2_w"] = p["l2_w"].astype(f32)
    out["l2_b"] = p["l2_b"].reshape(-1, 1).astype(f32)
    return out


# ----------------------------- DQN forward -----------------------------

def dqn_forward(prep, screen, info):
    # screen: [B, 1, H, W] -> channel-major [1, B, H, W]; free reshape since IC == 1.
    B, IC, H, W = screen.shape
    assert IC == 1
    x = screen.astype(jnp.float32).reshape(IC, B, H, W)
    x = conv_pool_gelu(x, prep["c1_w"], prep["c1_b"], kh=8, kw=8, stride=4, pad=1)
    x = conv_pool_gelu(x, prep["c2_w"], prep["c2_b"], kh=4, kw=4, stride=2, pad=1)
    return conv3_dense_tail(x, info, prep)


# ----------------------------- deterministic parameter init -----------------------------

def _init_linear(key, out_dim, in_dim):
    k1, k2 = jax.random.split(key)
    bound = 1.0 / math.sqrt(in_dim)
    w = jax.random.uniform(k1, (out_dim, in_dim), jnp.float32, -bound, bound)
    b = jax.random.uniform(k2, (out_dim,), jnp.float32, -bound, bound)
    return w, b


def _init_conv(key, oc, ic, kh, kw):
    k1, k2 = jax.random.split(key)
    bound = 1.0 / math.sqrt(ic * kh * kw)
    w = jax.random.uniform(k1, (oc, ic, kh, kw), jnp.float32, -bound, bound)
    b = jax.random.uniform(k2, (oc,), jnp.float32, -bound, bound)
    return w, b


if __name__ == "__main__":
    key = jax.random.PRNGKey(0)
    keys = jax.random.split(key, 10)
    hidden = 16      # hidden_dim / last_dim (module default)
    info_dim = 8     # env.arrayinfo_shape (synthetic)

    params = {}
    params["c1_w"], params["c1_b"] = _init_conv(keys[0], 32, 1, 8, 8)
    params["c2_w"], params["c2_b"] = _init_conv(keys[1], 64, 32, 4, 4)
    params["c3_w"], params["c3_b"] = _init_conv(keys[2], 64, 64, 3, 3)
    params["fc_w"], params["fc_b"] = _init_linear(keys[3], hidden, 384)
    params["t1_w"], params["t1_b"] = _init_linear(keys[4], 4 * hidden, info_dim)
    params["t2_w"], params["t2_b"] = _init_linear(keys[5], hidden, 4 * hidden)
    params["l1_w"], params["l1_b"] = _init_linear(keys[6], hidden, 2 * hidden)
    params["l2_w"], params["l2_b"] = _init_linear(keys[7], 4, hidden)

    prep = prepare_params(params)   # one-time layout/scaling/flatten folds

    # Atari-style 210x160 single-channel screen (the size implied by Linear(384, hidden)).
    screen = jax.random.uniform(keys[8], (2, 1, 210, 160), jnp.float32, 0.0, 255.0)
    info = jax.random.normal(keys[9], (2, info_dim), jnp.float32)

    out = jax.jit(dqn_forward)(prep, screen, info)
    out = jax.block_until_ready(out)
    assert out.shape == (2, 4) and out.dtype == jnp.float32
    print("KERNEL_OK")
</pallas_src>

<mosaic_0001>
module attributes {stable_mosaic.version = 11 : i64} {
  func.func @_conv_pool_gelu_kernel(%arg0: i32, %arg1: memref<4x64x512xbf16, #tpu.memory_space<vmem>>, %arg2: memref<32x64xbf16, #tpu.memory_space<vmem>>, %arg3: memref<32x1xf32, #tpu.memory_space<vmem>>, %arg4: memref<32x512xf32, #tpu.memory_space<vmem>>) attributes {dimension_semantics = [#tpu.dimension_semantics<parallel>], iteration_bounds = array<i64: 2>, scalar_prefetch = 0 : i64, scratch_operands = 0 : i64, tpu.core_type = #tpu.core_type<tc>, window_params = [{transform_indices = @transform_0, window_bounds = array<i64: 4, 64, 512>}, {pipeline_mode = #tpu.pipeline_mode<synchronous>, transform_indices = @transform_1, window_bounds = array<i64: 32, 64>}, {pipeline_mode = #tpu.pipeline_mode<synchronous>, transform_indices = @transform_2, window_bounds = array<i64: 32, 1>}, {transform_indices = @transform_3, window_bounds = array<i64: 32, 512>}]} {
    %c0 = arith.constant 0 : index
    %c0_0 = arith.constant 0 : index
    %0 = vector.load %arg2[%c0, %c0_0] : memref<32x64xbf16, #tpu.memory_space<vmem>>, vector<32x64xbf16>
    %c0_1 = arith.constant 0 : index
    %c0_2 = arith.constant 0 : index
    %c0_3 = arith.constant 0 : index
    %1 = vector.load %arg1[%c0_1, %c0_2, %c0_3] : memref<4x64x512xbf16, #tpu.memory_space<vmem>>, vector<1x64x512xbf16>
    %2 = vector.shape_cast %1 : vector<1x64x512xbf16> to vector<64x512xbf16>
    %cst = arith.constant dense<0.000000e+00> : vector<32x512xf32>
    %3 = tpu.matmul %0, %2, %cst {dimension_numbers = #tpu.dot_dimension_numbers<[1], [0], [0], [1], [0, 0, 1, 1], [], []>} : vector<32x64xbf16>, vector<64x512xbf16>, vector<32x512xf32> -> vector<32x512xf32>
    %c1 = arith.constant 1 : index
    %c0_4 = arith.constant 0 : index
    %c0_5 = arith.constant 0 : index
    %4 = vector.load %arg1[%c1, %c0_4, %c0_5] : memref<4x64x512xbf16, #tpu.memory_space<vmem>>, vector<1x64x512xbf16>
    %5 = vector.shape_cast %4 : vector<1x64x512xbf16> to vector<64x512xbf16>
    %cst_6 = arith.constant dense<0.000000e+00> : vector<32x512xf32>
    %6 = tpu.matmul %0, %5, %cst_6 {dimension_numbers = #tpu.dot_dimension_numbers<[1], [0], [0], [1], [0, 0, 1, 1], [], []>} : vector<32x64xbf16>, vector<64x512xbf16>, vector<32x512xf32> -> vector<32x512xf32>
    %7 = arith.maximumf %3, %6 : vector<32x512xf32>
    %c2 = arith.constant 2 : index
    %c0_7 = arith.constant 0 : index
    %c0_8 = arith.constant 0 : index
    %8 = vector.load %arg1[%c2, %c0_7, %c0_8] : memref<4x64x512xbf16, #tpu.memory_space<vmem>>, vector<1x64x512xbf16>
    %9 = vector.shape_cast %8 : vector<1x64x512xbf16> to vector<64x512xbf16>
    %cst_9 = arith.constant dense<0.000000e+00> : vector<32x512xf32>
    %10 = tpu.matmul %0, %9, %cst_9 {dimension_numbers = #tpu.dot_dimension_numbers<[1], [0], [0], [1], [0, 0, 1, 1], [], []>} : vector<32x64xbf16>, vector<64x512xbf16>, vector<32x512xf32> -> vector<32x512xf32>
    %11 = arith.maximumf %7, %10 : vector<32x512xf32>
    %c3 = arith.constant 3 : index
    %c0_10 = arith.constant 0 : index
    %c0_11 = arith.constant 0 : index
    %12 = vector.load %arg1[%c3, %c0_10, %c0_11] : memref<4x64x512xbf16, #tpu.memory_space<vmem>>, vector<1x64x512xbf16>
    %13 = vector.shape_cast %12 : vector<1x64x512xbf16> to vector<64x512xbf16>
    %cst_12 = arith.constant dense<0.000000e+00> : vector<32x512xf32>
    %14 = tpu.matmul %0, %13, %cst_12 {dimension_numbers = #tpu.dot_dimension_numbers<[1], [0], [0], [1], [0, 0, 1, 1], [], []>} : vector<32x64xbf16>, vector<64x512xbf16>, vector<32x512xf32> -> vector<32x512xf32>
    %15 = arith.maximumf %11, %14 : vector<32x512xf32>
    %c0_13 = arith.constant 0 : index
    %c0_14 = arith.constant 0 : index
    %16 = vector.load %arg3[%c0_13, %c0_14] : memref<32x1xf32, #tpu.memory_space<vmem>>, vector<32x1xf32>
    %17 = vector.broadcast %16 : vector<32x1xf32> to vector<32x512xf32>
    %18 = arith.addf %15, %17 : vector<32x512xf32>
    %cst_15 = arith.constant 5.000000e-01 : f32
    %19 = vector.broadcast %cst_15 : f32 to vector<32x512xf32>
    %20 = arith.mulf %19, %18 : vector<32x512xf32>
    %cst_16 = arith.constant 0.707106769 : f32
    %21 = vector.broadcast %cst_16 : f32 to vector<32x512xf32>
    %22 = arith.mulf %18, %21 : vector<32x512xf32>
    %23 = math.absf %22 : vector<32x512xf32>
    %cst_17 = arith.constant 0.327591091 : f32
    %24 = vector.broadcast %cst_17 : f32 to vector<32x512xf32>
    %25 = arith.mulf %24, %23 : vector<32x512xf32>
    %cst_18 = arith.constant 1.000000e+00 : f32
    %26 = vector.broadcast %cst_18 : f32 to vector<32x512xf32>
    %27 = arith.addf %26, %25 : vector<32x512xf32>
    %cst_19 = arith.constant 1.000000e+00 : f32
    %28 = vector.broadcast %cst_19 : f32 to vector<32x512xf32>
    %29 = arith.divf %28, %27 : vector<32x512xf32>
    %cst_20 = arith.constant 1.06140542 : f32
    %30 = vector.broadcast %cst_20 : f32 to vector<32x512xf32>
    %31 = arith.mulf %30, %29 : vector<32x512xf32>
    %cst_21 = arith.constant -1.45315206 : f32
    %32 = vector.broadcast %cst_21 : f32 to vector<32x512xf32>
    %33 = arith.addf %31, %32 : vector<32x512xf32>
    %34 = arith.mulf %33, %29 : vector<32x512xf32>
    %cst_22 = arith.constant 1.42141378 : f32
    %35 = vector.broadcast %cst_22 : f32 to vector<32x512xf32>
    %36 = arith.addf %34, %35 : vector<32x512xf32>
    %37 = arith.mulf %36, %29 : vector<32x512xf32>
    %cst_23 = arith.constant -0.284496725 : f32
    %38 = vector.broadcast %cst_23 : f32 to vector<32x512xf32>
    %39 = arith.addf %37, %38 : vector<32x512xf32>
    %40 = arith.mulf %39, %29 : vector<32x512xf32>
    %cst_24 = arith.constant 0.254829586 : f32
    %41 = vector.broadcast %cst_24 : f32 to vector<32x512xf32>
    %42 = arith.addf %40, %41 : vector<32x512xf32>
    %43 = arith.mulf %42, %29 : vector<32x512xf32>
    %cst_25 = arith.constant 0.000000e+00 : f32
    %44 = vector.broadcast %cst_25 : f32 to vector<32x512xf32>
    %45 = arith.subf %44, %23 : vector<32x512xf32>
    %46 = arith.mulf %45, %23 : vector<32x512xf32>
    %47 = math.exp %46 : vector<32x512xf32>
    %48 = arith.mulf %43, %47 : vector<32x512xf32>
    %cst_26 = arith.constant 1.000000e+00 : f32
    %49 = vector.broadcast %cst_26 : f32 to vector<32x512xf32>
    %50 = arith.subf %49, %48 : vector<32x512xf32>
    %cst_27 = arith.constant 0.000000e+00 : f32
    %51 = vector.broadcast %cst_27 : f32 to vector<32x512xf32>
    %52 = arith.cmpf oge, %22, %51 : vector<32x512xf32>
    %cst_28 = arith.constant 0.000000e+00 : f32
    %53 = vector.broadcast %cst_28 : f32 to vector<32x512xf32>
    %54 = arith.subf %53, %50 : vector<32x512xf32>
    %55 = arith.select %52, %50, %54 : vector<32x512xi1>, vector<32x512xf32>
    %cst_29 = arith.constant 1.000000e+00 : f32
    %56 = vector.broadcast %cst_29 : f32 to vector<32x512xf32>
    %57 = arith.addf %56, %55 : vector<32x512xf32>
    %58 = arith.mulf %20, %57 : vector<32x512xf32>
    %c0_30 = arith.constant 0 : index
    %c0_31 = arith.constant 0 : index
    %59 = vector.load %arg4[%c0_30, %c0_31] : memref<32x512xf32, #tpu.memory_space<vmem>>, vector<32x512xf32>
    tpu.vector_store %arg4[%c0_30, %c0_31], %58 {strides = array<i32>} : memref<32x512xf32, #tpu.memory_space<vmem>>, vector<32x512xf32>,
    return
  }
  func.func @transform_0(%arg0: i32) -> (i32, i32, i32) {
    %c0_i32 = arith.constant 0 : i32
    %c0_i32_0 = arith.constant 0 : i32
    %c0_i32_1 = arith.constant 0 : i32
    return %c0_i32, %c0_i32_0, %arg0 : i32, i32, i32
  }
  func.func @transform_1(%arg0: i32) -> (i32, i32) {
    %c0_i32 = arith.constant 0 : i32
    %c0_i32_0 = arith.constant 0 : i32
    %c0_i32_1 = arith.constant 0 : i32
    return %c0_i32, %c0_i32_0 : i32, i32
  }
  func.func @transform_2(%arg0: i32) -> (i32, i32) {
    %c0_i32 = arith.constant 0 : i32
    %c0_i32_0 = arith.constant 0 : i32
    %c0_i32_1 = arith.constant 0 : i32
    return %c0_i32, %c0_i32_0 : i32, i32
  }
  func.func @transform_3(%arg0: i32) -> (i32, i32) {
    %c0_i32 = arith.constant 0 : i32
    %c0_i32_0 = arith.constant 0 : i32
    return %c0_i32, %arg0 : i32, i32
  }
}

module attributes {stable_mosaic.version = 11 : i64} {
  func.func @_conv_pool_gelu_kernel(%arg0: i32, %arg1: memref<4x512x128xbf16, #tpu.memory_space<vmem>>, %arg2: memref<64x512xbf16, #tpu.memory_space<vmem>>, %arg3: memref<64x1xf32, #tpu.memory_space<vmem>>, %arg4: memref<64x128xf32, #tpu.memory_space<vmem>>) attributes {dimension_semantics = [#tpu.dimension_semantics<parallel>], iteration_bounds = array<i64: 1>, scalar_prefetch = 0 : i64, scratch_operands = 0 : i64, tpu.core_type = #tpu.core_type<tc>, window_params = [{transform_indices = @transform_0, window_bounds = array<i64: 4, 512, 128>}, {pipeline_mode = #tpu.pipeline_mode<synchronous>, transform_indices = @transform_1, window_bounds = array<i64: 64, 512>}, {pipeline_mode = #tpu.pipeline_mode<synchronous>, transform_indices = @transform_2, window_bounds = array<i64: 64, 1>}, {transform_indices = @transform_3, window_bounds = array<i64: 64, 128>}]} {
    %c0 = arith.constant 0 : index
    %c0_0 = arith.constant 0 : index
    %0 = vector.load %arg2[%c0, %c0_0] : memref<64x512xbf16, #tpu.memory_space<vmem>>, vector<64x512xbf16>
    %c0_1 = arith.constant 0 : index
    %c0_2 = arith.constant 0 : index
    %c0_3 = arith.constant 0 : index
    %1 = vector.load %arg1[%c0_1, %c0_2, %c0_3] : memref<4x512x128xbf16, #tpu.memory_space<vmem>>, vector<1x512x128xbf16>
    %2 = vector.shape_cast %1 : vector<1x512x128xbf16> to vector<512x128xbf16>
    %cst = arith.constant dense<0.000000e+00> : vector<64x128xf32>
    %3 = tpu.matmul %0, %2, %cst {dimension_numbers = #tpu.dot_dimension_numbers<[1], [0], [0], [1], [0, 0, 1, 1], [], []>} : vector<64x512xbf16>, vector<512x128xbf16>, vector<64x128xf32> -> vector<64x128xf32>
    %c1 = arith.constant 1 : index
    %c0_4 = arith.constant 0 : index
    %c0_5 = arith.constant 0 : index
    %4 = vector.load %arg1[%c1, %c0_4, %c0_5] : memref<4x512x128xbf16, #tpu.memory_space<vmem>>, vector<1x512x128xbf16>
    %5 = vector.shape_cast %4 : vector<1x512x128xbf16> to vector<512x128xbf16>
    %cst_6 = arith.constant dense<0.000000e+00> : vector<64x128xf32>
    %6 = tpu.matmul %0, %5, %cst_6 {dimension_numbers = #tpu.dot_dimension_numbers<[1], [0], [0], [1], [0, 0, 1, 1], [], []>} : vector<64x512xbf16>, vector<512x128xbf16>, vector<64x128xf32> -> vector<64x128xf32>
    %7 = arith.maximumf %3, %6 : vector<64x128xf32>
    %c2 = arith.constant 2 : index
    %c0_7 = arith.constant 0 : index
    %c0_8 = arith.constant 0 : index
    %8 = vector.load %arg1[%c2, %c0_7, %c0_8] : memref<4x512x128xbf16, #tpu.memory_space<vmem>>, vector<1x512x128xbf16>
    %9 = vector.shape_cast %8 : vector<1x512x128xbf16> to vector<512x128xbf16>
    %cst_9 = arith.constant dense<0.000000e+00> : vector<64x128xf32>
    %10 = tpu.matmul %0, %9, %cst_9 {dimension_numbers = #tpu.dot_dimension_numbers<[1], [0], [0], [1], [0, 0, 1, 1], [], []>} : vector<64x512xbf16>, vector<512x128xbf16>, vector<64x128xf32> -> vector<64x128xf32>
    %11 = arith.maximumf %7, %10 : vector<64x128xf32>
    %c3 = arith.constant 3 : index
    %c0_10 = arith.constant 0 : index
    %c0_11 = arith.constant 0 : index
    %12 = vector.load %arg1[%c3, %c0_10, %c0_11] : memref<4x512x128xbf16, #tpu.memory_space<vmem>>, vector<1x512x128xbf16>
    %13 = vector.shape_cast %12 : vector<1x512x128xbf16> to vector<512x128xbf16>
    %cst_12 = arith.constant dense<0.000000e+00> : vector<64x128xf32>
    %14 = tpu.matmul %0, %13, %cst_12 {dimension_numbers = #tpu.dot_dimension_numbers<[1], [0], [0], [1], [0, 0, 1, 1], [], []>} : vector<64x512xbf16>, vector<512x128xbf16>, vector<64x128xf32> -> vector<64x128xf32>
    %15 = arith.maximumf %11, %14 : vector<64x128xf32>
    %c0_13 = arith.constant 0 : index
    %c0_14 = arith.constant 0 : index
    %16 = vector.load %arg3[%c0_13, %c0_14] : memref<64x1xf32, #tpu.memory_space<vmem>>, vector<64x1xf32>
    %17 = vector.broadcast %16 : vector<64x1xf32> to vector<64x128xf32>
    %18 = arith.addf %15, %17 : vector<64x128xf32>
    %cst_15 = arith.constant 5.000000e-01 : f32
    %19 = vector.broadcast %cst_15 : f32 to vector<64x128xf32>
    %20 = arith.mulf %19, %18 : vector<64x128xf32>
    %cst_16 = arith.constant 0.707106769 : f32
    %21 = vector.broadcast %cst_16 : f32 to vector<64x128xf32>
    %22 = arith.mulf %18, %21 : vector<64x128xf32>
    %23 = math.absf %22 : vector<64x128xf32>
    %cst_17 = arith.constant 0.327591091 : f32
    %24 = vector.broadcast %cst_17 : f32 to vector<64x128xf32>
    %25 = arith.mulf %24, %23 : vector<64x128xf32>
    %cst_18 = arith.constant 1.000000e+00 : f32
    %26 = vector.broadcast %cst_18 : f32 to vector<64x128xf32>
    %27 = arith.addf %26, %25 : vector<64x128xf32>
    %cst_19 = arith.constant 1.000000e+00 : f32
    %28 = vector.broadcast %cst_19 : f32 to vector<64x128xf32>
    %29 = arith.divf %28, %27 : vector<64x128xf32>
    %cst_20 = arith.constant 1.06140542 : f32
    %30 = vector.broadcast %cst_20 : f32 to vector<64x128xf32>
    %31 = arith.mulf %30, %29 : vector<64x128xf32>
    %cst_21 = arith.constant -1.45315206 : f32
    %32 = vector.broadcast %cst_21 : f32 to vector<64x128xf32>
    %33 = arith.addf %31, %32 : vector<64x128xf32>
    %34 = arith.mulf %33, %29 : vector<64x128xf32>
    %cst_22 = arith.constant 1.42141378 : f32
    %35 = vector.broadcast %cst_22 : f32 to vector<64x128xf32>
    %36 = arith.addf %34, %35 : vector<64x128xf32>
    %37 = arith.mulf %36, %29 : vector<64x128xf32>
    %cst_23 = arith.constant -0.284496725 : f32
    %38 = vector.broadcast %cst_23 : f32 to vector<64x128xf32>
    %39 = arith.addf %37, %38 : vector<64x128xf32>
    %40 = arith.mulf %39, %29 : vector<64x128xf32>
    %cst_24 = arith.constant 0.254829586 : f32
    %41 = vector.broadcast %cst_24 : f32 to vector<64x128xf32>
    %42 = arith.addf %40, %41 : vector<64x128xf32>
    %43 = arith.mulf %42, %29 : vector<64x128xf32>
    %cst_25 = arith.constant 0.000000e+00 : f32
    %44 = vector.broadcast %cst_25 : f32 to vector<64x128xf32>
    %45 = arith.subf %44, %23 : vector<64x128xf32>
    %46 = arith.mulf %45, %23 : vector<64x128xf32>
    %47 = math.exp %46 : vector<64x128xf32>
    %48 = arith.mulf %43, %47 : vector<64x128xf32>
    %cst_26 = arith.constant 1.000000e+00 : f32
    %49 = vector.broadcast %cst_26 : f32 to vector<64x128xf32>
    %50 = arith.subf %49, %48 : vector<64x128xf32>
    %cst_27 = arith.constant 0.000000e+00 : f32
    %51 = vector.broadcast %cst_27 : f32 to vector<64x128xf32>
    %52 = arith.cmpf oge, %22, %51 : vector<64x128xf32>
    %cst_28 = arith.constant 0.000000e+00 : f32
    %53 = vector.broadcast %cst_28 : f32 to vector<64x128xf32>
    %54 = arith.subf %53, %50 : vector<64x128xf32>
    %55 = arith.select %52, %50, %54 : vector<64x128xi1>, vector<64x128xf32>
    %cst_29 = arith.constant 1.000000e+00 : f32
    %56 = vector.broadcast %cst_29 : f32 to vector<64x128xf32>
    %57 = arith.addf %56, %55 : vector<64x128xf32>
    %58 = arith.mulf %20, %57 : vector<64x128xf32>
    %c0_30 = arith.constant 0 : index
    %c0_31 = arith.constant 0 : index
    %59 = vector.load %arg4[%c0_30, %c0_31] : memref<64x128xf32, #tpu.memory_space<vmem>>, vector<64x128xf32>
    tpu.vector_store %arg4[%c0_30, %c0_31], %58 {strides = array<i32>} : memref<64x128xf32, #tpu.memory_space<vmem>>, vector<64x128xf32>,
    return
  }
  func.func @transform_0(%arg0: i32) -> (i32, i32, i32) {
    %c0_i32 = arith.constant 0 : i32
    %c0_i32_0 = arith.constant 0 : i32
    %c0_i32_1 = arith.constant 0 : i32
    return %c0_i32, %c0_i32_0, %arg0 : i32, i32, i32
  }
  func.func @transform_1(%arg0: i32) -> (i32, i32) {
    %c0_i32 = arith.constant 0 : i32
    %c0_i32_0 = arith.constant 0 : i32
    %c0_i32_1 = arith.constant 0 : i32
    return %c0_i32, %c0_i32_0 : i32, i32
  }
  func.func @transform_2(%arg0: i32) -> (i32, i32) {
    %c0_i32 = arith.constant 0 : i32
    %c0_i32_0 = arith.constant 0 : i32
    %c0_i32_1 = arith.constant 0 : i32
    return %c0_i32, %c0_i32_0 : i32, i32
  }
  func.func @transform_3(%arg0: i32) -> (i32, i32) {
    %c0_i32 = arith.constant 0 : i32
    %c0_i32_0 = arith.constant 0 : i32
    return %c0_i32, %arg0 : i32, i32
  }
}

module attributes {stable_mosaic.version = 11 : i64} {
  func.func @_tail_kernel(%arg0: i32, %arg1: memref<4x576x12xbf16, #tpu.memory_space<vmem>>, %arg2: memref<64x576xbf16, #tpu.memory_space<vmem>>, %arg3: memref<64x1xf32, #tpu.memory_space<vmem>>, %arg4: memref<6x16x64xf32, #tpu.memory_space<vmem>>, %arg5: memref<16x1xf32, #tpu.memory_space<vmem>>, %arg6: memref<8x2xf32, #tpu.memory_space<vmem>>, %arg7: memref<64x8xf32, #tpu.memory_space<vmem>>, %arg8: memref<64x1xf32, #tpu.memory_space<vmem>>, %arg9: memref<16x64xf32, #tpu.memory_space<vmem>>, %arg10: memref<16x1xf32, #tpu.memory_space<vmem>>, %arg11: memref<16x16xf32, #tpu.memory_space<vmem>>, %arg12: memref<16x16xf32, #tpu.memory_space<vmem>>, %arg13: memref<16x1xf32, #tpu.memory_space<vmem>>, %arg14: memref<4x16xf32, #tpu.memory_space<vmem>>, %arg15: memref<4x1xf32, #tpu.memory_space<vmem>>, %arg16: memref<4x2xf32, #tpu.memory_space<vmem>>) attributes {dimension_semantics = [#tpu.dimension_semantics<arbitrary>], iteration_bounds = array<i64: 1>, scalar_prefetch = 0 : i64, scratch_operands = 0 : i64, tpu.core_type = #tpu.core_type<tc>, window_params = [{pipeline_mode = #tpu.pipeline_mode<synchronous>, transform_indices = @transform_0, window_bounds = array<i64: 4, 576, 12>}, {pipeline_mode = #tpu.pipeline_mode<synchronous>, transform_indices = @transform_1, window_bounds = array<i64: 64, 576>}, {pipeline_mode = #tpu.pipeline_mode<synchronous>, transform_indices = @transform_2, window_bounds = array<i64: 64, 1>}, {pipeline_mode = #tpu.pipeline_mode<synchronous>, transform_indices = @transform_3, window_bounds = array<i64: 6, 16, 64>}, {pipeline_mode = #tpu.pipeline_mode<synchronous>, transform_indices = @transform_4, window_bounds = array<i64: 16, 1>}, {pipeline_mode = #tpu.pipeline_mode<synchronous>, transform_indices = @transform_5, window_bounds = array<i64: 8, 2>}, {pipeline_mode = #tpu.pipeline_mode<synchronous>, transform_indices = @transform_6, window_bounds = array<i64: 64, 8>}, {pipeline_mode = #tpu.pipeline_mode<synchronous>, transform_indices = @transform_7, window_bounds = array<i64: 64, 1>}, {pipeline_mode = #tpu.pipeline_mode<synchronous>, transform_indices = @transform_8, window_bounds = array<i64: 16, 64>}, {pipeline_mode = #tpu.pipeline_mode<synchronous>, transform_indices = @transform_9, window_bounds = array<i64: 16, 1>}, {pipeline_mode = #tpu.pipeline_mode<synchronous>, transform_indices = @transform_10, window_bounds = array<i64: 16, 16>}, {pipeline_mode = #tpu.pipeline_mode<synchronous>, transform_indices = @transform_11, window_bounds = array<i64: 16, 16>}, {pipeline_mode = #tpu.pipeline_mode<synchronous>, transform_indices = @transform_12, window_bounds = array<i64: 16, 1>}, {pipeline_mode = #tpu.pipeline_mode<synchronous>, transform_indices = @transform_13, window_bounds = array<i64: 4, 16>}, {pipeline_mode = #tpu.pipeline_mode<synchronous>, transform_indices = @transform_14, window_bounds = array<i64: 4, 1>}, {pipeline_mode = #tpu.pipeline_mode<synchronous>, transform_indices = @transform_15, window_bounds = array<i64: 4, 2>}]} {
    %c0 = arith.constant 0 : index
    %c0_0 = arith.constant 0 : index
    %0 = vector.load %arg2[%c0, %c0_0] : memref<64x576xbf16, #tpu.memory_space<vmem>>, vector<64x576xbf16>
    %c0_1 = arith.constant 0 : index
    %c0_2 = arith.constant 0 : index
    %c0_3 = arith.constant 0 : index
    %1 = vector.load %arg1[%c0_1, %c0_2, %c0_3] : memref<4x576x12xbf16, #tpu.memory_space<vmem>>, vector<1x576x12xbf16>
    %2 = vector.shape_cast %1 : vector<1x576x12xbf16> to vector<576x12xbf16>
    %cst = arith.constant dense<0.000000e+00> : vector<64x12xf32>
    %3 = tpu.matmul %0, %2, %cst {dimension_numbers = #tpu.dot_dimension_numbers<[1], [0], [0], [1], [0, 0, 1, 1], [], []>} : vector<64x576xbf16>, vector<576x12xbf16>, vector<64x12xf32> -> vector<64x12xf32>
    %c1 = arith.constant 1 : index
    %c0_4 = arith.constant 0 : index
    %c0_5 = arith.constant 0 : index
    %4 = vector.load %arg1[%c1, %c0_4, %c0_5] : memref<4x576x12xbf16, #tpu.memory_space<vmem>>, vector<1x576x12xbf16>
    %5 = vector.shape_cast %4 : vector<1x576x12xbf16> to vector<576x12xbf16>
    %cst_6 = arith.constant dense<0.000000e+00> : vector<64x12xf32>
    %6 = tpu.matmul %0, %5, %cst_6 {dimension_numbers = #tpu.dot_dimension_numbers<[1], [0], [0], [1], [0, 0, 1, 1], [], []>} : vector<64x576xbf16>, vector<576x12xbf16>, vector<64x12xf32> -> vector<64x12xf32>
    %7 = arith.maximumf %3, %6 : vector<64x12xf32>
    %c2 = arith.constant 2 : index
    %c0_7 = arith.constant 0 : index
    %c0_8 = arith.constant 0 : index
    %8 = vector.load %arg1[%c2, %c0_7, %c0_8] : memref<4x576x12xbf16, #tpu.memory_space<vmem>>, vector<1x576x12xbf16>
    %9 = vector.shape_cast %8 : vector<1x576x12xbf16> to vector<576x12xbf16>
    %cst_9 = arith.constant dense<0.000000e+00> : vector<64x12xf32>
    %10 = tpu.matmul %0, %9, %cst_9 {dimension_numbers = #tpu.dot_dimension_numbers<[1], [0], [0], [1], [0, 0, 1, 1], [], []>} : vector<64x576xbf16>, vector<576x12xbf16>, vector<64x12xf32> -> vector<64x12xf32>
    %11 = arith.maximumf %7, %10 : vector<64x12xf32>
    %c3 = arith.constant 3 : index
    %c0_10 = arith.constant 0 : index
    %c0_11 = arith.constant 0 : index
    %12 = vector.load %arg1[%c3, %c0_10, %c0_11] : memref<4x576x12xbf16, #tpu.memory_space<vmem>>, vector<1x576x12xbf16>
    %13 = vector.shape_cast %12 : vector<1x576x12xbf16> to vector<576x12xbf16>
    %cst_12 = arith.constant dense<0.000000e+00> : vector<64x12xf32>
    %14 = tpu.matmul %0, %13, %cst_12 {dimension_numbers = #tpu.dot_dimension_numbers<[1], [0], [0], [1], [0, 0, 1, 1], [], []>} : vector<64x576xbf16>, vector<576x12xbf16>, vector<64x12xf32> -> vector<64x12xf32>
    %15 = arith.maximumf %11, %14 : vector<64x12xf32>
    %c0_13 = arith.constant 0 : index
    %c0_14 = arith.constant 0 : index
    %16 = vector.load %arg3[%c0_13, %c0_14] : memref<64x1xf32, #tpu.memory_space<vmem>>, vector<64x1xf32>
    %17 = vector.broadcast %16 : vector<64x1xf32> to vector<64x12xf32>
    %18 = arith.addf %15, %17 : vector<64x12xf32>
    %cst_15 = arith.constant 5.000000e-01 : f32
    %19 = vector.broadcast %cst_15 : f32 to vector<64x12xf32>
    %20 = arith.mulf %19, %18 : vector<64x12xf32>
    %cst_16 = arith.constant 0.707106769 : f32
    %21 = vector.broadcast %cst_16 : f32 to vector<64x12xf32>
    %22 = arith.mulf %18, %21 : vector<64x12xf32>
    %23 = math.absf %22 : vector<64x12xf32>
    %cst_17 = arith.constant 0.327591091 : f32
    %24 = vector.broadcast %cst_17 : f32 to vector<64x12xf32>
    %25 = arith.mulf %24, %23 : vector<64x12xf32>
    %cst_18 = arith.constant 1.000000e+00 : f32
    %26 = vector.broadcast %cst_18 : f32 to vector<64x12xf32>
    %27 = arith.addf %26, %25 : vector<64x12xf32>
    %cst_19 = arith.constant 1.000000e+00 : f32
    %28 = vector.broadcast %cst_19 : f32 to vector<64x12xf32>
    %29 = arith.divf %28, %27 : vector<64x12xf32>
    %cst_20 = arith.constant 1.06140542 : f32
    %30 = vector.broadcast %cst_20 : f32 to vector<64x12xf32>
    %31 = arith.mulf %30, %29 : vector<64x12xf32>
    %cst_21 = arith.constant -1.45315206 : f32
    %32 = vector.broadcast %cst_21 : f32 to vector<64x12xf32>
    %33 = arith.addf %31, %32 : vector<64x12xf32>
    %34 = arith.mulf %33, %29 : vector<64x12xf32>
    %cst_22 = arith.constant 1.42141378 : f32
    %35 = vector.broadcast %cst_22 : f32 to vector<64x12xf32>
    %36 = arith.addf %34, %35 : vector<64x12xf32>
    %37 = arith.mulf %36, %29 : vector<64x12xf32>
    %cst_23 = arith.constant -0.284496725 : f32
    %38 = vector.broadcast %cst_23 : f32 to vector<64x12xf32>
    %39 = arith.addf %37, %38 : vector<64x12xf32>
    %40 = arith.mulf %39, %29 : vector<64x12xf32>
    %cst_24 = arith.constant 0.254829586 : f32
    %41 = vector.broadcast %cst_24 : f32 to vector<64x12xf32>
    %42 = arith.addf %40, %41 : vector<64x12xf32>
    %43 = arith.mulf %42, %29 : vector<64x12xf32>
    %cst_25 = arith.constant 0.000000e+00 : f32
    %44 = vector.broadcast %cst_25 : f32 to vector<64x12xf32>
    %45 = arith.subf %44, %23 : vector<64x12xf32>
    %46 = arith.mulf %45, %23 : vector<64x12xf32>
    %47 = math.exp %46 : vector<64x12xf32>
    %48 = arith.mulf %43, %47 : vector<64x12xf32>
    %cst_26 = arith.constant 1.000000e+00 : f32
    %49 = vector.broadcast %cst_26 : f32 to vector<64x12xf32>
    %50 = arith.subf %49, %48 : vector<64x12xf32>
    %cst_27 = arith.constant 0.000000e+00 : f32
    %51 = vector.broadcast %cst_27 : f32 to vector<64x12xf32>
    %52 = arith.cmpf oge, %22, %51 : vector<64x12xf32>
    %cst_28 = arith.constant 0.000000e+00 : f32
    %53 = vector.broadcast %cst_28 : f32 to vector<64x12xf32>
    %54 = arith.subf %53, %50 : vector<64x12xf32>
    %55 = arith.select %52, %50, %54 : vector<64x12xi1>, vector<64x12xf32>
    %cst_29 = arith.constant 1.000000e+00 : f32
    %56 = vector.broadcast %cst_29 : f32 to vector<64x12xf32>
    %57 = arith.addf %56, %55 : vector<64x12xf32>
    %58 = arith.mulf %20, %57 : vector<64x12xf32>
    %c0_30 = arith.constant 0 : index
    %c0_31 = arith.constant 0 : index
    %c0_32 = arith.constant 0 : index
    %59 = vector.load %arg4[%c0_30, %c0_31, %c0_32] : memref<6x16x64xf32, #tpu.memory_space<vmem>>, vector<1x16x64xf32>
    %60 = vector.shape_cast %59 : vector<1x16x64xf32> to vector<16x64xf32>
    %61 = vector.extract_strided_slice %58 {offsets = [0, 0], sizes = [64, 2], strides = [1, 1]} : vector<64x12xf32> to vector<64x2xf32>
    %cst_33 = arith.constant dense<0.000000e+00> : vector<16x2xf32>
    %62 = tpu.matmul %60, %61, %cst_33 {dimension_numbers = #tpu.dot_dimension_numbers<[1], [0], [0], [1], [0, 0, 1, 1], [], []>} : vector<16x64xf32>, vector<64x2xf32>, vector<16x2xf32> -> vector<16x2xf32>
    %c1_34 = arith.constant 1 : index
    %c0_35 = arith.constant 0 : index
    %c0_36 = arith.constant 0 : index
    %63 = vector.load %arg4[%c1_34, %c0_35, %c0_36] : memref<6x16x64xf32, #tpu.memory_space<vmem>>, vector<1x16x64xf32>
    %64 = vector.shape_cast %63 : vector<1x16x64xf32> to vector<16x64xf32>
    %65 = vector.extract_strided_slice %58 {offsets = [0, 2], sizes = [64, 2], strides = [1, 1]} : vector<64x12xf32> to vector<64x2xf32>
    %cst_37 = arith.constant dense<0.000000e+00> : vector<16x2xf32>
    %66 = tpu.matmul %64, %65, %cst_37 {dimension_numbers = #tpu.dot_dimension_numbers<[1], [0], [0], [1], [0, 0, 1, 1], [], []>} : vector<16x64xf32>, vector<64x2xf32>, vector<16x2xf32> -> vector<16x2xf32>
    %67 = arith.addf %62, %66 : vector<16x2xf32>
    %c2_38 = arith.constant 2 : index
    %c0_39 = arith.constant 0 : index
    %c0_40 = arith.constant 0 : index
    %68 = vector.load %arg4[%c2_38, %c0_39, %c0_40] : memref<6x16x64xf32, #tpu.memory_space<vmem>>, vector<1x16x64xf32>
    %69 = vector.shape_cast %68 : vector<1x16x64xf32> to vector<16x64xf32>
    %70 = vector.extract_strided_slice %58 {offsets = [0, 4], sizes = [64, 2], strides = [1, 1]} : vector<64x12xf32> to vector<64x2xf32>
    %cst_41 = arith.constant dense<0.000000e+00> : vector<16x2xf32>
    %71 = tpu.matmul %69, %70, %cst_41 {dimension_numbers = #tpu.dot_dimension_numbers<[1], [0], [0], [1], [0, 0, 1, 1], [], []>} : vector<16x64xf32>, vector<64x2xf32>, vector<16x2xf32> -> vector<16x2xf32>
    %72 = arith.addf %67, %71 : vector<16x2xf32>
    %c3_42 = arith.constant 3 : index
    %c0_43 = arith.constant 0 : index
    %c0_44 = arith.constant 0 : index
    %73 = vector.load %arg4[%c3_42, %c0_43, %c0_44] : memref<6x16x64xf32, #tpu.memory_space<vmem>>, vector<1x16x64xf32>
    %74 = vector.shape_cast %73 : vector<1x16x64xf32> to vector<16x64xf32>
    %75 = vector.extract_strided_slice %58 {offsets = [0, 6], sizes = [64, 2], strides = [1, 1]} : vector<64x12xf32> to vector<64x2xf32>
    %cst_45 = arith.constant dense<0.000000e+00> : vector<16x2xf32>
    %76 = tpu.matmul %74, %75, %cst_45 {dimension_numbers = #tpu.dot_dimension_numbers<[1], [0], [0], [1], [0, 0, 1, 1], [], []>} : vector<16x64xf32>, vector<64x2xf32>, vector<16x2xf32> -> vector<16x2xf32>
    %77 = arith.addf %72, %76 : vector<16x2xf32>
    %c4 = arith.constant 4 : index
    %c0_46 = arith.constant 0 : index
    %c0_47 = arith.constant 0 : index
    %78 = vector.load %arg4[%c4, %c0_46, %c0_47] : memref<6x16x64xf32, #tpu.memory_space<vmem>>, vector<1x16x64xf32>
    %79 = vector.shape_cast %78 : vector<1x16x64xf32> to vector<16x64xf32>
    %80 = vector.extract_strided_slice %58 {offsets = [0, 8], sizes = [64, 2], strides = [1, 1]} : vector<64x12xf32> to vector<64x2xf32>
    %cst_48 = arith.constant dense<0.000000e+00> : vector<16x2xf32>
    %81 = tpu.matmul %79, %80, %cst_48 {dimension_numbers = #tpu.dot_dimension_numbers<[1], [0], [0], [1], [0, 0, 1, 1], [], []>} : vector<16x64xf32>, vector<64x2xf32>, vector<16x2xf32> -> vector<16x2xf32>
    %82 = arith.addf %77, %81 : vector<16x2xf32>
    %c5 = arith.constant 5 : index
    %c0_49 = arith.constant 0 : index
    %c0_50 = arith.constant 0 : index
    %83 = vector.load %arg4[%c5, %c0_49, %c0_50] : memref<6x16x64xf32, #tpu.memory_space<vmem>>, vector<1x16x64xf32>
    %84 = vector.shape_cast %83 : vector<1x16x64xf32> to vector<16x64xf32>
    %85 = vector.extract_strided_slice %58 {offsets = [0, 10], sizes = [64, 2], strides = [1, 1]} : vector<64x12xf32> to vector<64x2xf32>
    %cst_51 = arith.constant dense<0.000000e+00> : vector<16x2xf32>
    %86 = tpu.matmul %84, %85, %cst_51 {dimension_numbers = #tpu.dot_dimension_numbers<[1], [0], [0], [1], [0, 0, 1, 1], [], []>} : vector<16x64xf32>, vector<64x2xf32>, vector<16x2xf32> -> vector<16x2xf32>
    %87 = arith.addf %82, %86 : vector<16x2xf32>
    %c0_52 = arith.constant 0 : index
    %c0_53 = arith.constant 0 : index
    %88 = vector.load %arg5[%c0_52, %c0_53] : memref<16x1xf32, #tpu.memory_space<vmem>>, vector<16x1xf32>
    %89 = vector.broadcast %88 : vector<16x1xf32> to vector<16x2xf32>
    %90 = arith.addf %87, %89 : vector<16x2xf32>
    %cst_54 = arith.constant 5.000000e-01 : f32
    %91 = vector.broadcast %cst_54 : f32 to vector<16x2xf32>
    %92 = arith.mulf %91, %90 : vector<16x2xf32>
    %cst_55 = arith.constant 0.707106769 : f32
    %93 = vector.broadcast %cst_55 : f32 to vector<16x2xf32>
    %94 = arith.mulf %90, %93 : vector<16x2xf32>
    %95 = math.absf %94 : vector<16x2xf32>
    %cst_56 = arith.constant 0.327591091 : f32
    %96 = vector.broadcast %cst_56 : f32 to vector<16x2xf32>
    %97 = arith.mulf %96, %95 : vector<16x2xf32>
    %cst_57 = arith.constant 1.000000e+00 : f32
    %98 = vector.broadcast %cst_57 : f32 to vector<16x2xf32>
    %99 = arith.addf %98, %97 : vector<16x2xf32>
    %cst_58 = arith.constant 1.000000e+00 : f32
    %100 = vector.broadcast %cst_58 : f32 to vector<16x2xf32>
    %101 = arith.divf %100, %99 : vector<16x2xf32>
    %cst_59 = arith.constant 1.06140542 : f32
    %102 = vector.broadcast %cst_59 : f32 to vector<16x2xf32>
    %103 = arith.mulf %102, %101 : vector<16x2xf32>
    %cst_60 = arith.constant -1.45315206 : f32
    %104 = vector.broadcast %cst_60 : f32 to vector<16x2xf32>
    %105 = arith.addf %103, %104 : vector<16x2xf32>
    %106 = arith.mulf %105, %101 : vector<16x2xf32>
    %cst_61 = arith.constant 1.42141378 : f32
    %107 = vector.broadcast %cst_61 : f32 to vector<16x2xf32>
    %108 = arith.addf %106, %107 : vector<16x2xf32>
    %109 = arith.mulf %108, %101 : vector<16x2xf32>
    %cst_62 = arith.constant -0.284496725 : f32
    %110 = vector.broadcast %cst_62 : f32 to vector<16x2xf32>
    %111 = arith.addf %109, %110 : vector<16x2xf32>
    %112 = arith.mulf %111, %101 : vector<16x2xf32>
    %cst_63 = arith.constant 0.254829586 : f32
    %113 = vector.broadcast %cst_63 : f32 to vector<16x2xf32>
    %114 = arith.addf %112, %113 : vector<16x2xf32>
    %115 = arith.mulf %114, %101 : vector<16x2xf32>
    %cst_64 = arith.constant 0.000000e+00 : f32
    %116 = vector.broadcast %cst_64 : f32 to vector<16x2xf32>
    %117 = arith.subf %116, %95 : vector<16x2xf32>
    %118 = arith.mulf %117, %95 : vector<16x2xf32>
    %119 = math.exp %118 : vector<16x2xf32>
    %120 = arith.mulf %115, %119 : vector<16x2xf32>
    %cst_65 = arith.constant 1.000000e+00 : f32
    %121 = vector.broadcast %cst_65 : f32 to vector<16x2xf32>
    %122 = arith.subf %121, %120 : vector<16x2xf32>
    %cst_66 = arith.constant 0.000000e+00 : f32
    %123 = vector.broadcast %cst_66 : f32 to vector<16x2xf32>
    %124 = arith.cmpf oge, %94, %123 : vector<16x2xf32>
    %cst_67 = arith.constant 0.000000e+00 : f32
    %125 = vector.broadcast %cst_67 : f32 to vector<16x2xf32>
    %126 = arith.subf %125, %122 : vector<16x2xf32>
    %127 = arith.select %124, %122, %126 : vector<16x2xi1>, vector<16x2xf32>
    %cst_68 = arith.constant 1.000000e+00 : f32
    %128 = vector.broadcast %cst_68 : f32 to vector<16x2xf32>
    %129 = arith.addf %128, %127 : vector<16x2xf32>
    %130 = arith.mulf %92, %129 : vector<16x2xf32>
    %c0_69 = arith.constant 0 : index
    %c0_70 = arith.constant 0 : index
    %131 = vector.load %arg7[%c0_69, %c0_70] : memref<64x8xf32, #tpu.memory_space<vmem>>, vector<64x8xf32>
    %c0_71 = arith.constant 0 : index
    %c0_72 = arith.constant 0 : index
    %132 = vector.load %arg6[%c0_71, %c0_72] : memref<8x2xf32, #tpu.memory_space<vmem>>, vector<8x2xf32>
    %cst_73 = arith.constant dense<0.000000e+00> : vector<64x2xf32>
    %133 = tpu.matmul %131, %132, %cst_73 {dimension_numbers = #tpu.dot_dimension_numbers<[1], [0], [0], [1], [0, 0, 1, 1], [], []>} : vector<64x8xf32>, vector<8x2xf32>, vector<64x2xf32> -> vector<64x2xf32>
    %c0_74 = arith.constant 0 : index
    %c0_75 = arith.constant 0 : index
    %134 = vector.load %arg8[%c0_74, %c0_75] : memref<64x1xf32, #tpu.memory_space<vmem>>, vector<64x1xf32>
    %135 = vector.broadcast %134 : vector<64x1xf32> to vector<64x2xf32>
    %136 = arith.addf %133, %135 : vector<64x2xf32>
    %cst_76 = arith.constant 0.000000e+00 : f32
    %137 = vector.broadcast %cst_76 : f32 to vector<64x2xf32>
    %138 = arith.maximumf %136, %137 : vector<64x2xf32>
    %c0_77 = arith.constant 0 : index
    %c0_78 = arith.constant 0 : index
    %139 = vector.load %arg9[%c0_77, %c0_78] : memref<16x64xf32, #tpu.memory_space<vmem>>, vector<16x64xf32>
    %cst_79 = arith.constant dense<0.000000e+00> : vector<16x2xf32>
    %140 = tpu.matmul %139, %138, %cst_79 {dimension_numbers = #tpu.dot_dimension_numbers<[1], [0], [0], [1], [0, 0, 1, 1], [], []>} : vector<16x64xf32>, vector<64x2xf32>, vector<16x2xf32> -> vector<16x2xf32>
    %c0_80 = arith.constant 0 : index
    %c0_81 = arith.constant 0 : index
    %141 = vector.load %arg10[%c0_80, %c0_81] : memref<16x1xf32, #tpu.memory_space<vmem>>, vector<16x1xf32>
    %142 = vector.broadcast %141 : vector<16x1xf32> to vector<16x2xf32>
    %143 = arith.addf %140, %142 : vector<16x2xf32>
    %cst_82 = arith.constant 0.000000e+00 : f32
    %144 = vector.broadcast %cst_82 : f32 to vector<16x2xf32>
    %145 = arith.maximumf %143, %144 : vector<16x2xf32>
    %c0_83 = arith.constant 0 : index
    %c0_84 = arith.constant 0 : index
    %146 = vector.load %arg11[%c0_83, %c0_84] : memref<16x16xf32, #tpu.memory_space<vmem>>, vector<16x16xf32>
    %cst_85 = arith.constant dense<0.000000e+00> : vector<16x2xf32>
    %147 = tpu.matmul %146, %130, %cst_85 {dimension_numbers = #tpu.dot_dimension_numbers<[1], [0], [0], [1], [0, 0, 1, 1], [], []>} : vector<16x16xf32>, vector<16x2xf32>, vector<16x2xf32> -> vector<16x2xf32>
    %c0_86 = arith.constant 0 : index
    %c0_87 = arith.constant 0 : index
    %148 = vector.load %arg12[%c0_86, %c0_87] : memref<16x16xf32, #tpu.memory_space<vmem>>, vector<16x16xf32>
    %cst_88 = arith.constant dense<0.000000e+00> : vector<16x2xf32>
    %149 = tpu.matmul %148, %145, %cst_88 {dimension_numbers = #tpu.dot_dimension_numbers<[1], [0], [0], [1], [0, 0, 1, 1], [], []>} : vector<16x16xf32>, vector<16x2xf32>, vector<16x2xf32> -> vector<16x2xf32>
    %150 = arith.addf %147, %149 : vector<16x2xf32>
    %c0_89 = arith.constant 0 : index
    %c0_90 = arith.constant 0 : index
    %151 = vector.load %arg13[%c0_89, %c0_90] : memref<16x1xf32, #tpu.memory_space<vmem>>, vector<16x1xf32>
    %152 = vector.broadcast %151 : vector<16x1xf32> to vector<16x2xf32>
    %153 = arith.addf %150, %152 : vector<16x2xf32>
    %cst_91 = arith.constant 0.000000e+00 : f32
    %154 = vector.broadcast %cst_91 : f32 to vector<16x2xf32>
    %155 = arith.maximumf %153, %154 : vector<16x2xf32>
    %c0_92 = arith.constant 0 : index
    %c0_93 = arith.constant 0 : index
    %156 = vector.load %arg14[%c0_92, %c0_93] : memref<4x16xf32, #tpu.memory_space<vmem>>, vector<4x16xf32>
    %cst_94 = arith.constant dense<0.000000e+00> : vector<4x2xf32>
    %157 = tpu.matmul %156, %155, %cst_94 {dimension_numbers = #tpu.dot_dimension_numbers<[1], [0], [0], [1], [0, 0, 1, 1], [], []>} : vector<4x16xf32>, vector<16x2xf32>, vector<4x2xf32> -> vector<4x2xf32>
    %c0_95 = arith.constant 0 : index
    %c0_96 = arith.constant 0 : index
    %158 = vector.load %arg15[%c0_95, %c0_96] : memref<4x1xf32, #tpu.memory_space<vmem>>, vector<4x1xf32>
    %159 = vector.broadcast %158 : vector<4x1xf32> to vector<4x2xf32>
    %160 = arith.addf %157, %159 : vector<4x2xf32>
    %c0_97 = arith.constant 0 : index
    %c0_98 = arith.constant 0 : index
    %161 = vector.load %arg16[%c0_97, %c0_98] : memref<4x2xf32, #tpu.memory_space<vmem>>, vector<4x2xf32>
    tpu.vector_store %arg16[%c0_97, %c0_98], %160 {strides = array<i32>} : memref<4x2xf32, #tpu.memory_space<vmem>>, vector<4x2xf32>,
    return
  }
  func.func @transform_0(%arg0: i32) -> (i32, i32, i32) {
    %c0_i32 = arith.constant 0 : i32
    %c0_i32_0 = arith.constant 0 : i32
    %c0_i32_1 = arith.constant 0 : i32
    %c0_i32_2 = arith.constant 0 : i32
    return %c0_i32, %c0_i32_0, %c0_i32_1 : i32, i32, i32
  }
  func.func @transform_1(%arg0: i32) -> (i32, i32) {
    %c0_i32 = arith.constant 0 : i32
    %c0_i32_0 = arith.constant 0 : i32
    %c0_i32_1 = arith.constant 0 : i32
    return %c0_i32, %c0_i32_0 : i32, i32
  }
  func.func @transform_2(%arg0: i32) -> (i32, i32) {
    %c0_i32 = arith.constant 0 : i32
    %c0_i32_0 = arith.constant 0 : i32
    %c0_i32_1 = arith.constant 0 : i32
    return %c0_i32, %c0_i32_0 : i32, i32
  }
  func.func @transform_3(%arg0: i32) -> (i32, i32, i32) {
    %c0_i32 = arith.constant 0 : i32
    %c0_i32_0 = arith.constant 0 : i32
    %c0_i32_1 = arith.constant 0 : i32
    %c0_i32_2 = arith.constant 0 : i32
    return %c0_i32, %c0_i32_0, %c0_i32_1 : i32, i32, i32
  }
  func.func @transform_4(%arg0: i32) -> (i32, i32) {
    %c0_i32 = arith.constant 0 : i32
    %c0_i32_0 = arith.constant 0 : i32
    %c0_i32_1 = arith.constant 0 : i32
    return %c0_i32, %c0_i32_0 : i32, i32
  }
  func.func @transform_5(%arg0: i32) -> (i32, i32) {
    %c0_i32 = arith.constant 0 : i32
    %c0_i32_0 = arith.constant 0 : i32
    %c0_i32_1 = arith.constant 0 : i32
    return %c0_i32, %c0_i32_0 : i32, i32
  }
  func.func @transform_6(%arg0: i32) -> (i32, i32) {
    %c0_i32 = arith.constant 0 : i32
    %c0_i32_0 = arith.constant 0 : i32
    %c0_i32_1 = arith.constant 0 : i32
    return %c0_i32, %c0_i32_0 : i32, i32
  }
  func.func @transform_7(%arg0: i32) -> (i32, i32) {
    %c0_i32 = arith.constant 0 : i32
    %c0_i32_0 = arith.constant 0 : i32
    %c0_i32_1 = arith.constant 0 : i32
    return %c0_i32, %c0_i32_0 : i32, i32
  }
  func.func @transform_8(%arg0: i32) -> (i32, i32) {
    %c0_i32 = arith.constant 0 : i32
    %c0_i32_0 = arith.constant 0 : i32
    %c0_i32_1 = arith.constant 0 : i32
    return %c0_i32, %c0_i32_0 : i32, i32
  }
  func.func @transform_9(%arg0: i32) -> (i32, i32) {
    %c0_i32 = arith.constant 0 : i32
    %c0_i32_0 = arith.constant 0 : i32
    %c0_i32_1 = arith.constant 0 : i32
    return %c0_i32, %c0_i32_0 : i32, i32
  }
  func.func @transform_10(%arg0: i32) -> (i32, i32) {
    %c0_i32 = arith.constant 0 : i32
    %c0_i32_0 = arith.constant 0 : i32
    %c0_i32_1 = arith.constant 0 : i32
    return %c0_i32, %c0_i32_0 : i32, i32
  }
  func.func @transform_11(%arg0: i32) -> (i32, i32) {
    %c0_i32 = arith.constant 0 : i32
    %c0_i32_0 = arith.constant 0 : i32
    %c0_i32_1 = arith.constant 0 : i32
    return %c0_i32, %c0_i32_0 : i32, i32
  }
  func.func @transform_12(%arg0: i32) -> (i32, i32) {
    %c0_i32 = arith.constant 0 : i32
    %c0_i32_0 = arith.constant 0 : i32
    %c0_i32_1 = arith.constant 0 : i32
    return %c0_i32, %c0_i32_0 : i32, i32
  }
  func.func @transform_13(%arg0: i32) -> (i32, i32) {
    %c0_i32 = arith.constant 0 : i32
    %c0_i32_0 = arith.constant 0 : i32
    %c0_i32_1 = arith.constant 0 : i32
    return %c0_i32, %c0_i32_0 : i32, i32
  }
  func.func @transform_14(%arg0: i32) -> (i32, i32) {
    %c0_i32 = arith.constant 0 : i32
    %c0_i32_0 = arith.constant 0 : i32
    %c0_i32_1 = arith.constant 0 : i32
    return %c0_i32, %c0_i32_0 : i32, i32
  }
  func.func @transform_15(%arg0: i32) -> (i32, i32) {
    %c0_i32 = arith.constant 0 : i32
    %c0_i32_0 = arith.constant 0 : i32
    %c0_i32_1 = arith.constant 0 : i32
    return %c0_i32, %c0_i32_0 : i32, i32
  }
}

</mosaic_0001>

<llo_original>
// kernel: dqn_forward.3
$region0: #{dqn_forward.3}
  #allocation0 [shape = 'u32[]', space=smem, size = 0x4, offset = 0x4, fixed_abs, tag = 'smem constant byte address 0x4 - core index']
  #allocation1 [shape = 'u32[144,128]{1,0:T(1,128)}', space=vmem, size = 0x12000, scoped, tag = 'internal scratch']
  %s0 = inlined_call_operand.vmem [shape: bf16[4,64,1024], index: 0, kind: input, shape index: {}]
  %s1 = inlined_call_operand.vmem [shape: bf16[32,64], index: 1, kind: input, shape index: {}]
  %s2 = inlined_call_operand.vmem [shape: f32[32,1], index: 2, kind: input, shape index: {}]
  %s3 = inlined_call_operand.vmem [shape: f32[32,1024], index: 3, kind: output, shape index: {}]
  %s4 = sld [smem:[#allocation0]]
  $region87: #{dqn_forward.3} parent=0
    _
  %s6 = ssub.s32 1, %s4
  %s7 = scalar_select 0, %s6, %s4
  $region1: #{dqn_forward.3} parent=0
    #allocation2 [shape = 'u8[524288]{0}', space=vmem, size = 0x80000, scoped, tag = 'input window, operand 0']
    #allocation3 [shape = 'u8[131072]{0}', space=vmem, size = 0x20000, scoped, tag = 'output window, operand 0']
    loop: start=0, step=1, limit=4
    $region2: #{dqn_forward.3} parent=1 // loop_pre_header
      _
    $region3: #{dqn_forward.3} parent=1 // loop_header
      %s9 = sphi 0, %s13
      %p10 = scmp.ge.s32.totalorder %s9, 4
      %s19 = sphi 0, %s21
      %s22 = sphi 0, %s19
      %s23 = sphi 0, %s22
      %s39 = sphi 0, %s23
      %s43 = sphi 0, %s43
      %s45 = sphi 0, %s43
      %s46 = sphi 0, %s45
      %s60 = sphi 0, %s46
      %s64 = sphi 0, %s64
      %s66 = sphi 0, %s64
      %s67 = sphi 0, %s66
      %s81 = sphi 0, %s67
      %s87 = sphi 0, %s89
      %s90 = sphi 0, %s87
      %s91 = sphi 0, %s90
      %s107 = sphi 0, %s91
    $region4: #{dqn_forward.3} parent=1 // loop_header_branch
      %12 = sbr.rel (%p10) target = $region8
    $region5: #{dqn_forward.3} parent=1 // loop_body
      %s14 = ssub.s32 %s9, 1
      %s15 = ssub.s32 %s9, 2
      %s16 = sadd.s32 %s9, 1
      %s17 = ssub.s32 %s9, %s16
      %p18 = scmp.eq.s32.totalorder %s17, 0
      %s20 = sadd.s32 %s19, 1
      %s21 = scalar_select %p18, %s19, %s20
      %p24 = pneg %p18
      %p25 = scmp.eq.s32.totalorder %s9, 1
      %p26 = por %p24, %p25
      %p27 = scmp.ne.s32.totalorder %s19, %s22
      %p28 = scmp.eq.s32.totalorder %s9, 0
      %p29 = por %p27, %p28
      %p30 = scmp.ne.s32.totalorder %s19, %s22
      %p31 = scmp.eq.s32.totalorder %s14, 1
      %p32 = por %p30, %p31
      %p33 = scmp.ne.s32.totalorder %s22, %s23
      %p34 = scmp.eq.s32.totalorder %s14, 0
      %p35 = por %p33, %p34
      %p36 = scmp.ne.s32.totalorder %s22, %s23
      %p37 = scmp.eq.s32.totalorder %s15, 1
      %p38 = por %p36, %p37
      %p40 = scmp.ne.s32.totalorder %s23, %s39
      %p41 = scmp.eq.s32.totalorder %s15, 0
      %p42 = por %p40, %p41
      %s44 = sadd.s32 %s43, 1
      %p47 = scmp.eq.s32.totalorder %s9, 1
      %p48 = scmp.ne.s32.totalorder %s43, %s45
      %p49 = scmp.eq.s32.totalorder %s9, 0
      %p50 = por %p48, %p49
      %p51 = scmp.ne.s32.totalorder %s43, %s45
      %p52 = scmp.eq.s32.totalorder %s14, 1
      %p53 = por %p51, %p52
      %p54 = scmp.ne.s32.totalorder %s45, %s46
      %p55 = scmp.eq.s32.totalorder %s14, 0
      %p56 = por %p54, %p55
      %p57 = scmp.ne.s32.totalorder %s45, %s46
      %p58 = scmp.eq.s32.totalorder %s15, 1
      %p59 = por %p57, %p58
      %p61 = scmp.ne.s32.totalorder %s46, %s60
      %p62 = scmp.eq.s32.totalorder %s15, 0
      %p63 = por %p61, %p62
      %s65 = sadd.s32 %s64, 1
      %p68 = scmp.eq.s32.totalorder %s9, 1
      %p69 = scmp.ne.s32.totalorder %s64, %s66
      %p70 = scmp.eq.s32.totalorder %s9, 0
      %p71 = por %p69, %p70
      %p72 = scmp.ne.s32.totalorder %s64, %s66
      %p73 = scmp.eq.s32.totalorder %s14, 1
      %p74 = por %p72, %p73
      %p75 = scmp.ne.s32.totalorder %s66, %s67
      %p76 = scmp.eq.s32.totalorder %s14, 0
      %p77 = por %p75, %p76
      %p78 = scmp.ne.s32.totalorder %s66, %s67
      %p79 = scmp.eq.s32.totalorder %s15, 1
      %p80 = por %p78, %p79
      %p82 = scmp.ne.s32.totalorder %s67, %s81
      %p83 = scmp.eq.s32.totalorder %s15, 0
      %p84 = por %p82, %p83
      %s85 = ssub.s32 %s9, %s16
      %p86 = scmp.eq.s32.totalorder %s85, 0
      %s88 = sadd.s32 %s87, 1
      %s89 = scalar_select %p86, %s87, %s88
      %p92 = pneg %p86
      %p93 = scmp.eq.s32.totalorder %s9, 1
      %p94 = por %p92, %p93
      %p95 = scmp.ne.s32.totalorder %s87, %s90
      %p96 = scmp.eq.s32.totalorder %s9, 0
      %p97 = por %p95, %p96
      %p98 = scmp.ne.s32.totalorder %s87, %s90
      %p99 = scmp.eq.s32.totalorder %s14, 1
      %p100 = por %p98, %p99
      %p101 = scmp.ne.s32.totalorder %s90, %s91
      %p102 = scmp.eq.s32.totalorder %s14, 0
      %p103 = por %p101, %p102
      %p104 = scmp.ne.s32.totalorder %s90, %s91
      %p105 = scmp.eq.s32.totalorder %s15, 1
      %p106 = por %p104, %p105
      %p108 = scmp.ne.s32.totalorder %s91, %s107
      %p109 = scmp.eq.s32.totalorder %s15, 0
      %p110 = por %p108, %p109
      %p111 = scmp.le.s32.totalorder 1, %s9
      %p112 = scmp.lt.s32.totalorder %s9, 3
      %p113 = pnand %p111, %p112
      %p114 = pneg %p113
      // Predicated region
      $region9: #{dqn_forward.3} parent=5 // pred_check
        _
      $region10: #{dqn_forward.3} parent=5 // pred_check_branch
        %116 = sbr.rel (%p113) target = $region12
      $region11: #{dqn_forward.3} parent=5 // pred_region
        %s117 = ssub.s32 %s9, 1
        // Predicated region
        $region13: #{dqn_forward.3} parent=11 // pred_check
          %p118 = pneg %p56
        $region14: #{dqn_forward.3} parent=11 // pred_check_branch
          %120 = sbr.rel (%p118) target = $region16
        $region15: #{dqn_forward.3} parent=11 // pred_region
          _
        $region16: #{dqn_forward.3} parent=11 // pred_fallthru
          _
        // Predicated region
        $region17: #{dqn_forward.3} parent=11 // pred_check
          %p121 = pneg %p77
        $region18: #{dqn_forward.3} parent=11 // pred_check_branch
          %123 = sbr.rel (%p121) target = $region20
        $region19: #{dqn_forward.3} parent=11 // pred_region
          _
        $region20: #{dqn_forward.3} parent=11 // pred_fallthru
          _
      $region12: #{dqn_forward.3} parent=5 // pred_fallthru
        _
      %p124 = scmp.lt.s32.totalorder %s9, 2
      // Predicated region
      $region21: #{dqn_forward.3} parent=5 // pred_check
        %p125 = pneg %p124
      $region22: #{dqn_forward.3} parent=5 // pred_check_branch
        %127 = sbr.rel (%p125) target = $region24
      $region23: #{dqn_forward.3} parent=5 // pred_region
        // Predicated region
        $region25: #{dqn_forward.3} parent=23 // pred_check
          %p128 = pneg %p29
        $region26: #{dqn_forward.3} parent=23 // pred_check_branch
          %130 = sbr.rel (%p128) target = $region28
        $region27: #{dqn_forward.3} parent=23 // pred_region
          %s131 = sand.u32 %s19, 1
          %s132 = sand.u32 %s19, 1
          %s133 = smul.addr %s132, 512
          %s134 = scalar_lea.vmem [#allocation2], %s133
          %s135 = smul.u32 4, %s9
          %s136 = smul.addr %s135, 4
          %s137 = scalar_lea.vmem %s0, %s136
          // Predicated region
          $region29: #{dqn_forward.3} parent=27 // pred_check
            _
          $region30: #{dqn_forward.3} parent=27 // pred_check_branch
            %139 = sbr.rel (0) target = $region32
          $region31: #{dqn_forward.3} parent=27 // pred_region
            // Predicated region
            $region33: #{dqn_forward.3} parent=31 // pred_check
              _
            $region34: #{dqn_forward.3} parent=31 // pred_check_branch
              %141 = sbr.rel (0) target = $region36
            $region35: #{dqn_forward.3} parent=31 // pred_region
              loop: start=0, step=1, limit=1
              $region37: #{dqn_forward.3} parent=35 // loop_pre_header
                _
              $region38: #{dqn_forward.3} parent=35 // loop_header
                %s143 = sphi 0, %s147
                %p144 = scmp.ge.s32.totalorder %s143, 1
                %s148 = sphi %s137, %s137
                %s149 = sphi %s134, %s134
              $region39: #{dqn_forward.3} parent=35 // loop_header_branch
                %146 = sbr.rel (%p144) target = $region43
              $region40: #{dqn_forward.3} parent=35 // loop_body
                %v150 = vld [vmem:[%s148] sm:$0xff]
                %151 = vst [vmem:[%s149] sm:$0xff] %v150
                %v152 = vld [vmem:[%s148 + $0x8] sm:$0xff]
                %153 = vst [vmem:[%s149 + $0x8] sm:$0xff] %v152
                %v154 = vld [vmem:[%s148 + $0x20] sm:$0xff]
                %155 = vst [vmem:[%s149 + $0x10] sm:$0xff] %v154
                %v156 = vld [vmem:[%s148 + $0x28] sm:$0xff]
                %157 = vst [vmem:[%s149 + $0x18] sm:$0xff] %v156
                %v158 = vld [vmem:[%s148 + $0x40] sm:$0xff]
                %159 = vst [vmem:[%s149 + $0x20] sm:$0xff] %v158
                %v160 = vld [vmem:[%s148 + $0x48] sm:$0xff]
                %161 = vst [vmem:[%s149 + $0x28] sm:$0xff] %v160
                %v162 = vld [vmem:[%s148 + $0x60] sm:$0xff]
                %163 = vst [vmem:[%s149 + $0x30] sm:$0xff] %v162
                %v164 = vld [vmem:[%s148 + $0x68] sm:$0xff]
                %165 = vst [vmem:[%s149 + $0x38] sm:$0xff] %v164
                %v166 = vld [vmem:[%s148 + $0x80] sm:$0xff]
                %167 = vst [vmem:[%s149 + $0x40] sm:$0xff] %v166
                %v168 = vld [vmem:[%s148 + $0x88] sm:$0xff]
                %169 = vst [vmem:[%s149 + $0x48] sm:$0xff] %v168
                %v170 = vld [vmem:[%s148 + $0xa0] sm:$0xff]
                %171 = vst [vmem:[%s149 + $0x50] sm:$0xff] %v170
                %v172 = vld [vmem:[%s148 + $0xa8] sm:$0xff]
                %173 = vst [vmem:[%s149 + $0x58] sm:$0xff] %v172
                %v174 = vld [vmem:[%s148 + $0xc0] sm:$0xff]
                %175 = vst [vmem:[%s149 + $0x60] sm:$0xff] %v174
                %v176 = vld [vmem:[%s148 + $0xc8] sm:$0xff]
                %177 = vst [vmem:[%s149 + $0x68] sm:$0xff] %v176
                %v178 = vld [vmem:[%s148 + $0xe0] sm:$0xff]
                %179 = vst [vmem:[%s149 + $0x70] sm:$0xff] %v178
                %v180 = vld [vmem:[%s148 + $0xe8] sm:$0xff]
                %181 = vst [vmem:[%s149 + $0x78] sm:$0xff] %v180
                %v182 = vld [vmem:[%s148 + $0x100] sm:$0xff]
                %183 = vst [vmem:[%s149 + $0x80] sm:$0xff] %v182
                %v184 = vld [vmem:[%s148 + $0x108] sm:$0xff]
                %185 = vst [vmem:[%s149 + $0x88] sm:$0xff] %v184
                %v186 = vld [vmem:[%s148 + $0x120] sm:$0xff]
                %187 = vst [vmem:[%s149 + $0x90] sm:$0xff] %v186
                %v188 = vld [vmem:[%s148 + $0x128] sm:$0xff]
                %189 = vst [vmem:[%s149 + $0x98] sm:$0xff] %v188
                %v190 = vld [vmem:[%s148 + $0x140] sm:$0xff]
                %191 = vst [vmem:[%s149 + $0xa0] sm:$0xff] %v190
                %v192 = vld [vmem:[%s148 + $0x148] sm:$0xff]
                %193 = vst [vmem:[%s149 + $0xa8] sm:$0xff] %v192
                %v194 = vld [vmem:[%s148 + $0x160] sm:$0xff]
                %195 = vst [vmem:[%s149 + $0xb0] sm:$0xff] %v194
                %v196 = vld [vmem:[%s148 + $0x168] sm:$0xff]
                %197 = vst [vmem:[%s149 + $0xb8] sm:$0xff] %v196
                %v198 = vld [vmem:[%s148 + $0x180] sm:$0xff]
                %199 = vst [vmem:[%s149 + $0xc0] sm:$0xff] %v198
                %v200 = vld [vmem:[%s148 + $0x188] sm:$0xff]
                %201 = vst [vmem:[%s149 + $0xc8] sm:$0xff] %v200
                %v202 = vld [vmem:[%s148 + $0x1a0] sm:$0xff]
                %203 = vst [vmem:[%s149 + $0xd0] sm:$0xff] %v202
                %v204 = vld [vmem:[%s148 + $0x1a8] sm:$0xff]
                %205 = vst [vmem:[%s149 + $0xd8] sm:$0xff] %v204
                %v206 = vld [vmem:[%s148 + $0x1c0] sm:$0xff]
                %207 = vst [vmem:[%s149 + $0xe0] sm:$0xff] %v206
                %v208 = vld [vmem:[%s148 + $0x1c8] sm:$0xff]
                %209 = vst [vmem:[%s149 + $0xe8] sm:$0xff] %v208
                %v210 = vld [vmem:[%s148 + $0x1e0] sm:$0xff]
                %211 = vst [vmem:[%s149 + $0xf0] sm:$0xff] %v210
                %v212 = vld [vmem:[%s148 + $0x1e8] sm:$0xff]
                %213 = vst [vmem:[%s149 + $0xf8] sm:$0xff] %v212
                %v214 = vld [vmem:[%s148 + $0x200] sm:$0xff]
                %215 = vst [vmem:[%s149 + $0x100] sm:$0xff] %v214
                %v216 = vld [vmem:[%s148 + $0x208] sm:$0xff]
                %217 = vst [vmem:[%s149 + $0x108] sm:$0xff] %v216
                %v218 = vld [vmem:[%s148 + $0x220] sm:$0xff]
                %219 = vst [vmem:[%s149 + $0x110] sm:$0xff] %v218
                %v220 = vld [vmem:[%s148 + $0x228] sm:$0xff]
                %221 = vst [vmem:[%s149 + $0x118] sm:$0xff] %v220
                %v222 = vld [vmem:[%s148 + $0x240] sm:$0xff]
                %223 = vst [vmem:[%s149 + $0x120] sm:$0xff] %v222
                %v224 = vld [vmem:[%s148 + $0x248] sm:$0xff]
                %225 = vst [vmem:[%s149 + $0x128] sm:$0xff] %v224
                %v226 = vld [vmem:[%s148 + $0x260] sm:$0xff]
                %227 = vst [vmem:[%s149 + $0x130] sm:$0xff] %v226
                %v228 = vld [vmem:[%s148 + $0x268] sm:$0xff]
                %229 = vst [vmem:[%s149 + $0x138] sm:$0xff] %v228
                %v230 = vld [vmem:[%s148 + $0x280] sm:$0xff]
                %231 = vst [vmem:[%s149 + $0x140] sm:$0xff] %v230
                %v232 = vld [vmem:[%s148 + $0x288] sm:$0xff]
                %233 = vst [vmem:[%s149 + $0x148] sm:$0xff] %v232
                %v234 = vld [vmem:[%s148 + $0x2a0] sm:$0xff]
                %235 = vst [vmem:[%s149 + $0x150] sm:$0xff] %v234
                %v236 = vld [vmem:[%s148 + $0x2a8] sm:$0xff]
                %237 = vst [vmem:[%s149 + $0x158] sm:$0xff] %v236
                %v238 = vld [vmem:[%s148 + $0x2c0] sm:$0xff]
                %239 = vst [vmem:[%s149 + $0x160] sm:$0xff] %v238
                %v240 = vld [vmem:[%s148 + $0x2c8] sm:$0xff]
                %241 = vst [vmem:[%s149 + $0x168] sm:$0xff] %v240
                %v242 = vld [vmem:[%s148 + $0x2e0] sm:$0xff]
                %243 = vst [vmem:[%s149 + $0x170] sm:$0xff] %v242
                %v244 = vld [vmem:[%s148 + $0x2e8] sm:$0xff]
                %245 = vst [vmem:[%s149 + $0x178] sm:$0xff] %v244
                %v246 = vld [vmem:[%s148 + $0x300] sm:$0xff]
                %247 = vst [vmem:[%s149 + $0x180] sm:$0xff] %v246
                %v248 = vld [vmem:[%s148 + $0x308] sm:$0xff]
                %249 = vst [vmem:[%s149 + $0x188] sm:$0xff] %v248
                %v250 = vld [vmem:[%s148 + $0x320] sm:$0xff]
                %251 = vst [vmem:[%s149 + $0x190] sm:$0xff] %v250
                %v252 = vld [vmem:[%s148 + $0x328] sm:$0xff]
                %253 = vst [vmem:[%s149 + $0x198] sm:$0xff] %v252
                %v254 = vld [vmem:[%s148 + $0x340] sm:$0xff]
                %255 = vst [vmem:[%s149 + $0x1a0] sm:$0xff] %v254
                %v256 = vld [vmem:[%s148 + $0x348] sm:$0xff]
                %257 = vst [vmem:[%s149 + $0x1a8] sm:$0xff] %v256
                %v258 = vld [vmem:[%s148 + $0x360] sm:$0xff]
                %259 = vst [vmem:[%s149 + $0x1b0] sm:$0xff] %v258
                %v260 = vld [vmem:[%s148 + $0x368] sm:$0xff]
                %261 = vst [vmem:[%s149 + $0x1b8] sm:$0xff] %v260
                %v262 = vld [vmem:[%s148 + $0x380] sm:$0xff]
                %263 = vst [vmem:[%s149 + $0x1c0] sm:$0xff] %v262
                %v264 = vld [vmem:[%s148 + $0x388] sm:$0xff]
                %265 = vst [vmem:[%s149 + $0x1c8] sm:$0xff] %v264
                %v266 = vld [vmem:[%s148 + $0x3a0] sm:$0xff]
                %267 = vst [vmem:[%s149 + $0x1d0] sm:$0xff] %v266
                %v268 = vld [vmem:[%s148 + $0x3a8] sm:$0xff]
                %269 = vst [vmem:[%s149 + $0x1d8] sm:$0xff] %v268
                %v270 = vld [vmem:[%s148 + $0x3c0] sm:$0xff]
                %271 = vst [vmem:[%s149 + $0x1e0] sm:$0xff] %v270
                %v272 = vld [vmem:[%s148 + $0x3c8] sm:$0xff]
                %273 = vst [vmem:[%s149 + $0x1e8] sm:$0xff] %v272
                %v274 = vld [vmem:[%s148 + $0x3e0] sm:$0xff]
                %275 = vst [vmem:[%s149 + $0x1f0] sm:$0xff] %v274
                %v276 = vld [vmem:[%s148 + $0x3e8] sm:$0xff]
                %277 = vst [vmem:[%s149 + $0x1f8] sm:$0xff] %v276
              $region41: #{dqn_forward.3} parent=35 // loop_footer
                %s147 = sadd.s32 1, %s143
              $region42: #{dqn_forward.3} parent=35 // loop_footer_branch
                %142 = sbr.rel target = $region38
              $region43: #{dqn_forward.3} parent=35 // loop_exit
                _
            $region36: #{dqn_forward.3} parent=31 // pred_fallthru
              _
            // Predicated region
            $region44: #{dqn_forward.3} parent=31 // pred_check
              _
            $region45: #{dqn_forward.3} parent=31 // pred_check_branch
              %279 = sbr.rel target = $region47
            $region46: #{dqn_forward.3} parent=31 // pred_region
              _
            $region47: #{dqn_forward.3} parent=31 // pred_fallthru
              _
          $region32: #{dqn_forward.3} parent=27 // pred_fallthru
            _
          %280 = vnop
        $region28: #{dqn_forward.3} parent=23 // pred_fallthru
          _
      $region24: #{dqn_forward.3} parent=5 // pred_fallthru
        _
      %p281 = scmp.le.s32.totalorder 1, %s9
      %p282 = scmp.lt.s32.totalorder %s9, 3
      %p283 = pnand %p281, %p282
      %p284 = pneg %p283
      // Predicated region
      $region48: #{dqn_forward.3} parent=5 // pred_check
        _
      $region49: #{dqn_forward.3} parent=5 // pred_check_branch
        %286 = sbr.rel (%p283) target = $region51
      $region50: #{dqn_forward.3} parent=5 // pred_region
        %s287 = ssub.s32 %s9, 1
        %s288 = sand.u32 %s22, 1
        %s289 = sand.u32 %s22, 1
        %s290 = smul.addr %s289, 512
        %s291 = scalar_lea.vmem [#allocation2], %s290
        // Predicated region
        $region52: #{dqn_forward.3} parent=50 // pred_check
          %p292 = pneg %p35
        $region53: #{dqn_forward.3} parent=50 // pred_check_branch
          %294 = sbr.rel (%p292) target = $region55
        $region54: #{dqn_forward.3} parent=50 // pred_region
          _
        $region55: #{dqn_forward.3} parent=50 // pred_fallthru
          _
        %s295 = sand.u32 %s22, 1
        %s296 = sand.u32 %s22, 1
        %s297 = smul.addr %s296, 512
        %s298 = scalar_lea.vmem [#allocation2], %s297
        %p299 = pneg %p35
        %p300 = pneg %p32
        %p301 = pneg %p56
        %p302 = pneg %p53
        %p303 = pneg %p77
        %p304 = pneg %p74
        %p305 = pneg %p103
        %p306 = pneg %p100
        %s307 = sand.u32 %s90, 1
        %s308 = sand.u32 %s90, 1
        %s309 = smul.addr %s308, 128
        %s310 = scalar_lea.vmem [#allocation3], %s309
        %s311 = smul.u32 4, %s14
        %s312 = smul.u32 4, %s14
        %v314 = vld [vmem:[%s1] sm:$0xf]
        %v315 = vld [vmem:[%s1 + $0x4] sm:$0xf]
        %v316 = vld [vmem:[%s1 + $0x8] sm:$0xf]
        %v317 = vld [vmem:[%s1 + $0xc] sm:$0xf]
        %v318 = vld [vmem:[%s291] sm:$0xff]
        %v319 = vld [vmem:[%s291 + $0x8] sm:$0xff]
        %v320 = vld [vmem:[%s291 + $0x10] sm:$0xff]
        %v321 = vld [vmem:[%s291 + $0x18] sm:$0xff]
        %v322 = vld [vmem:[%s291 + $0x20] sm:$0xff]
        %v323 = vld [vmem:[%s291 + $0x28] sm:$0xff]
        %v324 = vld [vmem:[%s291 + $0x30] sm:$0xff]
        %v325 = vld [vmem:[%s291 + $0x38] sm:$0xff]
        %v326 = vld [vmem:[%s291 + $0x40] sm:$0xff]
        %v327 = vld [vmem:[%s291 + $0x48] sm:$0xff]
        %v328 = vld [vmem:[%s291 + $0x50] sm:$0xff]
        %v329 = vld [vmem:[%s291 + $0x58] sm:$0xff]
        %v330 = vld [vmem:[%s291 + $0x60] sm:$0xff]
        %v331 = vld [vmem:[%s291 + $0x68] sm:$0xff]
        %v332 = vld [vmem:[%s291 + $0x70] sm:$0xff]
        %v333 = vld [vmem:[%s291 + $0x78] sm:$0xff]
        %v338 = vunpack.c.l.b16 %v314
        %v339 = vunpack.c.l.b16 %v315
        %v340 = vunpack.c.l.b16 %v316
        %v341 = vunpack.c.l.b16 %v317
        %v342 = vpack.c.b16 %v339, %v338
        %v343 = vpack.c.b16 %v341, %v340
        %v360 = vunpack.c.l.b16 %v318
        %v361 = vunpack.c.h.b16 %v318
        %v362 = vunpack.c.l.b16 %v319
        %v363 = vunpack.c.h.b16 %v319
        %v364 = vunpack.c.l.b16 %v320
        %v365 = vunpack.c.h.b16 %v320
        %v366 = vunpack.c.l.b16 %v321
        %v367 = vunpack.c.h.b16 %v321
        %v368 = vunpack.c.l.b16 %v322
        %v369 = vunpack.c.h.b16 %v322
        %v370 = vunpack.c.l.b16 %v323
        %v371 = vunpack.c.h.b16 %v323
        %v372 = vunpack.c.l.b16 %v324
        %v373 = vunpack.c.h.b16 %v324
        %v374 = vunpack.c.l.b16 %v325
        %v375 = vunpack.c.h.b16 %v325
        %v376 = vunpack.c.l.b16 %v326
        %v377 = vunpack.c.h.b16 %v326
        %v378 = vunpack.c.l.b16 %v327
        %v379 = vunpack.c.h.b16 %v327
        %v380 = vunpack.c.l.b16 %v328
        %v381 = vunpack.c.h.b16 %v328
        %v382 = vunpack.c.l.b16 %v329
        %v383 = vunpack.c.h.b16 %v329
        %v384 = vunpack.c.l.b16 %v330
        %v385 = vunpack.c.h.b16 %v330
        %v386 = vunpack.c.l.b16 %v331
        %v387 = vunpack.c.h.b16 %v331
        %v388 = vunpack.c.l.b16 %v332
        %v389 = vunpack.c.h.b16 %v332
        %v390 = vunpack.c.l.b16 %v333
        %v391 = vunpack.c.h.b16 %v333
        %v392 = vpack.c.b16 %v364, %v360
        %v393 = vpack.c.b16 %v365, %v361
        %v394 = vpack.c.b16 %v366, %v362
        %v395 = vpack.c.b16 %v367, %v363
        %v396 = vpack.c.b16 %v372, %v368
        %v397 = vpack.c.b16 %v373, %v369
        %v398 = vpack.c.b16 %v374, %v370
        %v399 = vpack.c.b16 %v375, %v371
        %v400 = vpack.c.b16 %v380, %v376
        %v401 = vpack.c.b16 %v381, %v377
        %v402 = vpack.c.b16 %v382, %v378
        %v403 = vpack.c.b16 %v383, %v379
        %v404 = vpack.c.b16 %v388, %v384
        %v405 = vpack.c.b16 %v389, %v385
        %v406 = vpack.c.b16 %v390, %v386
        %v407 = vpack.c.b16 %v391, %v387
        %vm424 = vcmask 523264
        %v426 = vsel %vm424, %v342, 0
        %v429 = vsel %vm424, %v343, 0
        %431 = vmatprep.subr.bf16.mxu0 %v393
        %432 = vmatpush1.bf16.msra.mxu0 %v392
        %433 = vmatprep.subr.bf16.mxu0 %v397
        %434 = vmatpush1.bf16.msra.mxu0 %v396
        %435 = vmatprep.subr.bf16.mxu0 %v401
        %436 = vmatpush1.bf16.msra.mxu0 %v400
        %437 = vmatprep.subr.bf16.mxu0 %v405
        %438 = vmatpush1.bf16.msra.mxu0 %v404
        %439 = vmatprep.subr.bf16.mxu0 0
        %440 = vmatpush1.bf16.msra.mxu0 0
        %441 = vmatprep.subr.bf16.mxu0 0
        %442 = vmatpush1.bf16.msra.mxu0 0
        %443 = vmatprep.subr.bf16.mxu0 0
        %444 = vmatpush1.bf16.msra.mxu0 0
        %445 = vmatprep.subr.bf16.mxu0 0
        %446 = vmatpush1.bf16.msra.mxu0 0
        %447 = vmatprep.subr.bf16.mxu0 0
        %448 = vmatpush1.bf16.msra.mxu0 0
        %449 = vmatprep.subr.bf16.mxu0 0
        %450 = vmatpush1.bf16.msra.mxu0 0
        %451 = vmatprep.subr.bf16.mxu0 0
        %452 = vmatpush1.bf16.msra.mxu0 0
        %453 = vmatprep.subr.bf16.mxu0 0
        %454 = vmatpush1.bf16.msra.mxu0 0
        %455 = vmatprep.subr.bf16.mxu0 0
        %456 = vmatpush1.bf16.msra.mxu0 0
        %457 = vmatprep.subr.bf16.mxu0 0
        %458 = vmatpush1.bf16.msra.mxu0 0
        %459 = vmatprep.subr.bf16.mxu0 0
        %460 = vmatpush1.bf16.msra.mxu0 0
        %461 = vmatprep.subr.bf16.mxu0 0
        %462 = vmatpush1.bf16.msra.mxu0 0
        %463 = vmatprep.mubr.bf16.mxu0 0
        %464 = vmatmul.mubr.bf16.gmra.mrb[0].mxu0 %v426
        %v465 = vpop.f32.mrb[0].mxu0
        %v466 = vadd.f32 0.0, %v465
        %v467 = vpop.f32.mrb[0].mxu0
        %v468 = vadd.f32 0.0, %v467
        %v469 = vpop.f32.mrb[0].mxu0
        %v470 = vadd.f32 0.0, %v469
        %v471 = vpop.f32.mrb[0].mxu0
        %v472 = vadd.f32 0.0, %v471
        %473 = vmatprep.mubr.bf16.mxu0 0
        %474 = vmatmul.mubr.bf16.gmra.mrb[0].mxu0 %v429
        %v475 = vpop.f32.mrb[0].mxu0
        %v476 = vadd.f32 0.0, %v475
        %v477 = vpop.f32.mrb[0].mxu0
        %v478 = vadd.f32 0.0, %v477
        %v479 = vpop.f32.mrb[0].mxu0
        %v480 = vadd.f32 0.0, %v479
        %v481 = vpop.f32.mrb[0].mxu0
        %v482 = vadd.f32 0.0, %v481
        %483 = vdwg.mxu0
        %484 = vmatprep.subr.bf16.mxu0 %v395
        %485 = vmatpush1.bf16.msra.mxu0 %v394
        %486 = vmatprep.subr.bf16.mxu0 %v399
        %487 = vmatpush1.bf16.msra.mxu0 %v398
        %488 = vmatprep.subr.bf16.mxu0 %v403
        %489 = vmatpush1.bf16.msra.mxu0 %v402
        %490 = vmatprep.subr.bf16.mxu0 %v407
        %491 = vmatpush1.bf16.msra.mxu0 %v406
        %492 = vmatprep.subr.bf16.mxu0 0
        %493 = vmatpush1.bf16.msra.mxu0 0
        %494 = vmatprep.subr.bf16.mxu0 0
        %495 = vmatpush1.bf16.msra.mxu0 0
        %496 = vmatprep.subr.bf16.mxu0 0
        %497 = vmatpush1.bf16.msra.mxu0 0
        %498 = vmatprep.subr.bf16.mxu0 0
        %499 = vmatpush1.bf16.msra.mxu0 0
        %500 = vmatprep.subr.bf16.mxu0 0
        %501 = vmatpush1.bf16.msra.mxu0 0
        %502 = vmatprep.subr.bf16.mxu0 0
        %503 = vmatpush1.bf16.msra.mxu0 0
        %504 = vmatprep.subr.bf16.mxu0 0
        %505 = vmatpush1.bf16.msra.mxu0 0
        %506 = vmatprep.subr.bf16.mxu0 0
        %507 = vmatpush1.bf16.msra.mxu0 0
        %508 = vmatprep.subr.bf16.mxu0 0
        %509 = vmatpush1.bf16.msra.mxu0 0
        %510 = vmatprep.subr.bf16.mxu0 0
        %511 = vmatpush1.bf16.msra.mxu0 0
        %512 = vmatprep.subr.bf16.mxu0 0
        %513 = vmatpush1.bf16.msra.mxu0 0
        %514 = vmatprep.subr.bf16.mxu0 0
        %515 = vmatpush1.bf16.msra.mxu0 0
        %516 = vmatprep.mubr.bf16.mxu0 0
        %517 = vmatmul.mubr.bf16.gmra.mrb[0].mxu0 %v426
        %v518 = vpop.f32.mrb[0].mxu0
        %v519 = vadd.f32 0.0, %v518
        %v520 = vpop.f32.mrb[0].mxu0
        %v521 = vadd.f32 0.0, %v520
        %v522 = vpop.f32.mrb[0].mxu0
        %v523 = vadd.f32 0.0, %v522
        %v524 = vpop.f32.mrb[0].mxu0
        %v525 = vadd.f32 0.0, %v524
        %526 = vmatprep.mubr.bf16.mxu0 0
        %527 = vmatmul.mubr.bf16.gmra.mrb[0].mxu0 %v429
        %v528 = vpop.f32.mrb[0].mxu0
        %v529 = vadd.f32 0.0, %v528
        %v530 = vpop.f32.mrb[0].mxu0
        %v531 = vadd.f32 0.0, %v530
        %v532 = vpop.f32.mrb[0].mxu0
        %v533 = vadd.f32 0.0, %v532
        %v534 = vpop.f32.mrb[0].mxu0
        %v535 = vadd.f32 0.0, %v534
        %536 = vdwg.mxu0
        %s537 = scalar_lea.vmem %s291, 128 [#allocation2]
        %v538 = vld [vmem:[%s537] sm:$0xff]
        %v539 = vld [vmem:[%s537 + $0x8] sm:$0xff]
        %v540 = vld [vmem:[%s537 + $0x10] sm:$0xff]
        %v541 = vld [vmem:[%s537 + $0x18] sm:$0xff]
        %v542 = vld [vmem:[%s537 + $0x20] sm:$0xff]
        %v543 = vld [vmem:[%s537 + $0x28] sm:$0xff]
        %v544 = vld [vmem:[%s537 + $0x30] sm:$0xff]
        %v545 = vld [vmem:[%s537 + $0x38] sm:$0xff]
        %v546 = vld [vmem:[%s537 + $0x40] sm:$0xff]
        %v547 = vld [vmem:[%s537 + $0x48] sm:$0xff]
        %v548 = vld [vmem:[%s537 + $0x50] sm:$0xff]
        %v549 = vld [vmem:[%s537 + $0x58] sm:$0xff]
        %v550 = vld [vmem:[%s537 + $0x60] sm:$0xff]
        %v551 = vld [vmem:[%s537 + $0x68] sm:$0xff]
        %v552 = vld [vmem:[%s537 + $0x70] sm:$0xff]
        %v553 = vld [vmem:[%s537 + $0x78] sm:$0xff]
        %v570 = vunpack.c.l.b16 %v538
        %v571 = vunpack.c.h.b16 %v538
        %v572 = vunpack.c.l.b16 %v539
        %v573 = vunpack.c.h.b16 %v539
        %v574 = vunpack.c.l.b16 %v540
        %v575 = vunpack.c.h.b16 %v540
        %v576 = vunpack.c.l.b16 %v541
        %v577 = vunpack.c.h.b16 %v541
        %v578 = vunpack.c.l.b16 %v542
        %v579 = vunpack.c.h.b16 %v542
        %v580 = vunpack.c.l.b16 %v543
        %v581 = vunpack.c.h.b16 %v543
        %v582 = vunpack.c.l.b16 %v544
        %v583 = vunpack.c.h.b16 %v544
        %v584 = vunpack.c.l.b16 %v545
        %v585 = vunpack.c.h.b16 %v545
        %v586 = vunpack.c.l.b16 %v546
        %v587 = vunpack.c.h.b16 %v546
        %v588 = vunpack.c.l.b16 %v547
        %v589 = vunpack.c.h.b16 %v547
        %v590 = vunpack.c.l.b16 %v548
        %v591 = vunpack.c.h.b16 %v548
        %v592 = vunpack.c.l.b16 %v549
        %v593 = vunpack.c.h.b16 %v549
        %v594 = vunpack.c.l.b16 %v550
        %v595 = vunpack.c.h.b16 %v550
        %v596 = vunpack.c.l.b16 %v551
        %v597 = vunpack.c.h.b16 %v551
        %v598 = vunpack.c.l.b16 %v552
        %v599 = vunpack.c.h.b16 %v552
        %v600 = vunpack.c.l.b16 %v553
        %v601 = vunpack.c.h.b16 %v553
        %v602 = vpack.c.b16 %v574, %v570
        %v603 = vpack.c.b16 %v575, %v571
        %v604 = vpack.c.b16 %v576, %v572
        %v605 = vpack.c.b16 %v577, %v573
        %v606 = vpack.c.b16 %v582, %v578
        %v607 = vpack.c.b16 %v583, %v579
        %v608 = vpack.c.b16 %v584, %v580
        %v609 = vpack.c.b16 %v585, %v581
        %v610 = vpack.c.b16 %v590, %v586
        %v611 = vpack.c.b16 %v591, %v587
        %v612 = vpack.c.b16 %v592, %v588
        %v613 = vpack.c.b16 %v593, %v589
        %v614 = vpack.c.b16 %v598, %v594
        %v615 = vpack.c.b16 %v599, %v595
        %v616 = vpack.c.b16 %v600, %v596
        %v617 = vpack.c.b16 %v601, %v597
        %634 = vmatprep.subr.bf16.mxu0 %v603
        %635 = vmatpush1.bf16.msra.mxu0 %v602
        %636 = vmatprep.subr.bf16.mxu0 %v607
        %637 = vmatpush1.bf16.msra.mxu0 %v606
        %638 = vmatprep.subr.bf16.mxu0 %v611
        %639 = vmatpush1.bf16.msra.mxu0 %v610
        %640 = vmatprep.subr.bf16.mxu0 %v615
        %641 = vmatpush1.bf16.msra.mxu0 %v614
        %642 = vmatprep.subr.bf16.mxu0 0
        %643 = vmatpush1.bf16.msra.mxu0 0
        %644 = vmatprep.subr.bf16.mxu0 0
        %645 = vmatpush1.bf16.msra.mxu0 0
        %646 = vmatprep.subr.bf16.mxu0 0
        %647 = vmatpush1.bf16.msra.mxu0 0
        %648 = vmatprep.subr.bf16.mxu0 0
        %649 = vmatpush1.bf16.msra.mxu0 0
        %650 = vmatprep.subr.bf16.mxu0 0
        %651 = vmatpush1.bf16.msra.mxu0 0
        %652 = vmatprep.subr.bf16.mxu0 0
        %653 = vmatpush1.bf16.msra.mxu0 0
        %654 = vmatprep.subr.bf16.mxu0 0
        %655 = vmatpush1.bf16.msra.mxu0 0
        %656 = vmatprep.subr.bf16.mxu0 0
        %657 = vmatpush1.bf16.msra.mxu0 0
        %658 = vmatprep.subr.bf16.mxu0 0
        %659 = vmatpush1.bf16.msra.mxu0 0
        %660 = vmatprep.subr.bf16.mxu0 0
        %661 = vmatpush1.bf16.msra.mxu0 0
        %662 = vmatprep.subr.bf16.mxu0 0
        %663 = vmatpush1.bf16.msra.mxu0 0
        %664 = vmatprep.subr.bf16.mxu0 0
        %665 = vmatpush1.bf16.msra.mxu0 0
        %666 = vmatprep.mubr.bf16.mxu0 0
        %667 = vmatmul.mubr.bf16.gmra.mrb[0].mxu0 %v426
        %v668 = vpop.f32.mrb[0].mxu0
        %v669 = vadd.f32 0.0, %v668
        %v670 = vpop.f32.mrb[0].mxu0
        %v671 = vadd.f32 0.0, %v670
        %v672 = vpop.f32.mrb[0].mxu0
        %v673 = vadd.f32 0.0, %v672
        %v674 = vpop.f32.mrb[0].mxu0
        %v675 = vadd.f32 0.0, %v674
        %676 = vmatprep.mubr.bf16.mxu0 0
        %677 = vmatmul.mubr.bf16.gmra.mrb[0].mxu0 %v429
        %v678 = vpop.f32.mrb[0].mxu0
        %v679 = vadd.f32 0.0, %v678
        %v680 = vpop.f32.mrb[0].mxu0
        %v681 = vadd.f32 0.0, %v680
        %v682 = vpop.f32.mrb[0].mxu0
        %v683 = vadd.f32 0.0, %v682
        %v684 = vpop.f32.mrb[0].mxu0
        %v685 = vadd.f32 0.0, %v684
        %686 = vdwg.mxu0
        %687 = vmatprep.subr.bf16.mxu0 %v605
        %688 = vmatpush1.bf16.msra.mxu0 %v604
        %689 = vmatprep.subr.bf16.mxu0 %v609
        %690 = vmatpush1.bf16.msra.mxu0 %v608
        %691 = vmatprep.subr.bf16.mxu0 %v613
        %692 = vmatpush1.bf16.msra.mxu0 %v612
        %693 = vmatprep.subr.bf16.mxu0 %v617
        %694 = vmatpush1.bf16.msra.mxu0 %v616
        %695 = vmatprep.subr.bf16.mxu0 0
        %696 = vmatpush1.bf16.msra.mxu0 0
        %697 = vmatprep.subr.bf16.mxu0 0
        %698 = vmatpush1.bf16.msra.mxu0 0
        %699 = vmatprep.subr.bf16.mxu0 0
        %700 = vmatpush1.bf16.msra.mxu0 0
        %701 = vmatprep.subr.bf16.mxu0 0
        %702 = vmatpush1.bf16.msra.mxu0 0
        %703 = vmatprep.subr.bf16.mxu0 0
        %704 = vmatpush1.bf16.msra.mxu0 0
        %705 = vmatprep.subr.bf16.mxu0 0
        %706 = vmatpush1.bf16.msra.mxu0 0
        %707 = vmatprep.subr.bf16.mxu0 0
        %708 = vmatpush1.bf16.msra.mxu0 0
        %709 = vmatprep.subr.bf16.mxu0 0
        %710 = vmatpush1.bf16.msra.mxu0 0
        %711 = vmatprep.subr.bf16.mxu0 0
        %712 = vmatpush1.bf16.msra.mxu0 0
        %713 = vmatprep.subr.bf16.mxu0 0
        %714 = vmatpush1.bf16.msra.mxu0 0
        %715 = vmatprep.subr.bf16.mxu0 0
        %716 = vmatpush1.bf16.msra.mxu0 0
        %717 = vmatprep.subr.bf16.mxu0 0
        %718 = vmatpush1.bf16.msra.mxu0 0
        %719 = vmatprep.mubr.bf16.mxu0 0
        %720 = vmatmul.mubr.bf16.gmra.mrb[0].mxu0 %v426
        %v721 = vpop.f32.mrb[0].mxu0
        %v722 = vadd.f32 0.0, %v721
        %v723 = vpop.f32.mrb[0].mxu0
        %v724 = vadd.f32 0.0, %v723
        %v725 = vpop.f32.mrb[0].mxu0
        %v726 = vadd.f32 0.0, %v725
        %v727 = vpop.f32.mrb[0].mxu0
        %v728 = vadd.f32 0.0, %v727
        %729 = vmatprep.mubr.bf16.mxu0 0
        %730 = vmatmul.mubr.bf16.gmra.mrb[0].mxu0 %v429
        %v731 = vpop.f32.mrb[0].mxu0
        %v732 = vadd.f32 0.0, %v731
        %v733 = vpop.f32.mrb[0].mxu0
        %v734 = vadd.f32 0.0, %v733
        %v735 = vpop.f32.mrb[0].mxu0
        %v736 = vadd.f32 0.0, %v735
        %v737 = vpop.f32.mrb[0].mxu0
        %v738 = vadd.f32 0.0, %v737
        %739 = vdwg.mxu0
        %v740 = vmax.f32 %v466, %v669
        %v741 = vmax.f32 %v468, %v671
        %v742 = vmax.f32 %v519, %v722
        %v743 = vmax.f32 %v521, %v724
        %v744 = vmax.f32 %v470, %v673
        %v745 = vmax.f32 %v472, %v675
        %v746 = vmax.f32 %v523, %v726
        %v747 = vmax.f32 %v525, %v728
        %v748 = vmax.f32 %v476, %v679
        %v749 = vmax.f32 %v478, %v681
        %v750 = vmax.f32 %v529, %v732
        %v751 = vmax.f32 %v531, %v734
        %v752 = vmax.f32 %v480, %v683
        %v753 = vmax.f32 %v482, %v685
        %v754 = vmax.f32 %v533, %v736
        %v755 = vmax.f32 %v535, %v738
        %s756 = scalar_lea.vmem %s291, 256 [#allocation2]
        %v757 = vld [vmem:[%s756] sm:$0xff]
        %v758 = vld [vmem:[%s756 + $0x8] sm:$0xff]
        %v759 = vld [vmem:[%s756 + $0x10] sm:$0xff]
        %v760 = vld [vmem:[%s756 + $0x18] sm:$0xff]
        %v761 = vld [vmem:[%s756 + $0x20] sm:$0xff]
        %v762 = vld [vmem:[%s756 + $0x28] sm:$0xff]
        %v763 = vld [vmem:[%s756 + $0x30] sm:$0xff]
        %v764 = vld [vmem:[%s756 + $0x38] sm:$0xff]
        %v765 = vld [vmem:[%s756 + $0x40] sm:$0xff]
        %v766 = vld [vmem:[%s756 + $0x48] sm:$0xff]
        %v767 = vld [vmem:[%s756 + $0x50] sm:$0xff]
        %v768 = vld [vmem:[%s756 + $0x58] sm:$0xff]
        %v769 = vld [vmem:[%s756 + $0x60] sm:$0xff]
        %v770 = vld [vmem:[%s756 + $0x68] sm:$0xff]
        %v771 = vld [vmem:[%s756 + $0x70] sm:$0xff]
        %v772 = vld [vmem:[%s756 + $0x78] sm:$0xff]
        %v789 = vunpack.c.l.b16 %v757
        %v790 = vunpack.c.h.b16 %v757
        %v791 = vunpack.c.l.b16 %v758
        %v792 = vunpack.c.h.b16 %v758
        %v793 = vunpack.c.l.b16 %v759
        %v794 = vunpack.c.h.b16 %v759
        %v795 = vunpack.c.l.b16 %v760
        %v796 = vunpack.c.h.b16 %v760
        %v797 = vunpack.c.l.b16 %v761
        %v798 = vunpack.c.h.b16 %v761
        %v799 = vunpack.c.l.b16 %v762
        %v800 = vunpack.c.h.b16 %v762
        %v801 = vunpack.c.l.b16 %v763
        %v802 = vunpack.c.h.b16 %v763
        %v803 = vunpack.c.l.b16 %v764
        %v804 = vunpack.c.h.b16 %v764
        %v805 = vunpack.c.l.b16 %v765
        %v806 = vunpack.c.h.b16 %v765
        %v807 = vunpack.c.l.b16 %v766
        %v808 = vunpack.c.h.b16 %v766
        %v809 = vunpack.c.l.b16 %v767
        %v810 = vunpack.c.h.b16 %v767
        %v811 = vunpack.c.l.b16 %v768
        %v812 = vunpack.c.h.b16 %v768
        %v813 = vunpack.c.l.b16 %v769
        %v814 = vunpack.c.h.b16 %v769
        %v815 = vunpack.c.l.b16 %v770
        %v816 = vunpack.c.h.b16 %v770
        %v817 = vunpack.c.l.b16 %v771
        %v818 = vunpack.c.h.b16 %v771
        %v819 = vunpack.c.l.b16 %v772
        %v820 = vunpack.c.h.b16 %v772
        %v821 = vpack.c.b16 %v793, %v789
        %v822 = vpack.c.b16 %v794, %v790
        %v823 = vpack.c.b16 %v795, %v791
        %v824 = vpack.c.b16 %v796, %v792
        %v825 = vpack.c.b16 %v801, %v797
        %v826 = vpack.c.b16 %v802, %v798
        %v827 = vpack.c.b16 %v803, %v799
        %v828 = vpack.c.b16 %v804, %v800
        %v829 = vpack.c.b16 %v809, %v805
        %v830 = vpack.c.b16 %v810, %v806
        %v831 = vpack.c.b16 %v811, %v807
        %v832 = vpack.c.b16 %v812, %v808
        %v833 = vpack.c.b16 %v817, %v813
        %v834 = vpack.c.b16 %v818, %v814
        %v835 = vpack.c.b16 %v819, %v815
        %v836 = vpack.c.b16 %v820, %v816
        %853 = vmatprep.subr.bf16.mxu0 %v822
        %854 = vmatpush1.bf16.msra.mxu0 %v821
        %855 = vmatprep.subr.bf16.mxu0 %v826
        %856 = vmatpush1.bf16.msra.mxu0 %v825
        %857 = vmatprep.subr.bf16.mxu0 %v830
        %858 = vmatpush1.bf16.msra.mxu0 %v829
        %859 = vmatprep.subr.bf16.mxu0 %v834
        %860 = vmatpush1.bf16.msra.mxu0 %v833
        %861 = vmatprep.subr.bf16.mxu0 0
        %862 = vmatpush1.bf16.msra.mxu0 0
        %863 = vmatprep.subr.bf16.mxu0 0
        %864 = vmatpush1.bf16.msra.mxu0 0
        %865 = vmatprep.subr.bf16.mxu0 0
        %866 = vmatpush1.bf16.msra.mxu0 0
        %867 = vmatprep.subr.bf16.mxu0 0
        %868 = vmatpush1.bf16.msra.mxu0 0
        %869 = vmatprep.subr.bf16.mxu0 0
        %870 = vmatpush1.bf16.msra.mxu0 0
        %871 = vmatprep.subr.bf16.mxu0 0
        %872 = vmatpush1.bf16.msra.mxu0 0
        %873 = vmatprep.subr.bf16.mxu0 0
        %874 = vmatpush1.bf16.msra.mxu0 0
        %875 = vmatprep.subr.bf16.mxu0 0
        %876 = vmatpush1.bf16.msra.mxu0 0
        %877 = vmatprep.subr.bf16.mxu0 0
        %878 = vmatpush1.bf16.msra.mxu0 0
        %879 = vmatprep.subr.bf16.mxu0 0
        %880 = vmatpush1.bf16.msra.mxu0 0
        %881 = vmatprep.subr.bf16.mxu0 0
        %882 = vmatpush1.bf16.msra.mxu0 0
        %883 = vmatprep.subr.bf16.mxu0 0
        %884 = vmatpush1.bf16.msra.mxu0 0
        %885 = vmatprep.mubr.bf16.mxu0 0
        %886 = vmatmul.mubr.bf16.gmra.mrb[0].mxu0 %v426
        %v887 = vpop.f32.mrb[0].mxu0
        %v888 = vadd.f32 0.0, %v887
        %v889 = vpop.f32.mrb[0].mxu0
        %v890 = vadd.f32 0.0, %v889
        %v891 = vpop.f32.mrb[0].mxu0
        %v892 = vadd.f32 0.0, %v891
        %v893 = vpop.f32.mrb[0].mxu0
        %v894 = vadd.f32 0.0, %v893
        %895 = vmatprep.mubr.bf16.mxu0 0
        %896 = vmatmul.mubr.bf16.gmra.mrb[0].mxu0 %v429
        %v897 = vpop.f32.mrb[0].mxu0
        %v898 = vadd.f32 0.0, %v897
        %v899 = vpop.f32.mrb[0].mxu0
        %v900 = vadd.f32 0.0, %v899
        %v901 = vpop.f32.mrb[0].mxu0
        %v902 = vadd.f32 0.0, %v901
        %v903 = vpop.f32.mrb[0].mxu0
        %v904 = vadd.f32 0.0, %v903
        %905 = vdwg.mxu0
        %906 = vmatprep.subr.bf16.mxu0 %v824
        %907 = vmatpush1.bf16.msra.mxu0 %v823
        %908 = vmatprep.subr.bf16.mxu0 %v828
        %909 = vmatpush1.bf16.msra.mxu0 %v827
        %910 = vmatprep.subr.bf16.mxu0 %v832
        %911 = vmatpush1.bf16.msra.mxu0 %v831
        %912 = vmatprep.subr.bf16.mxu0 %v836
        %913 = vmatpush1.bf16.msra.mxu0 %v835
        %914 = vmatprep.subr.bf16.mxu0 0
        %915 = vmatpush1.bf16.msra.mxu0 0
        %916 = vmatprep.subr.bf16.mxu0 0
        %917 = vmatpush1.bf16.msra.mxu0 0
        %918 = vmatprep.subr.bf16.mxu0 0
        %919 = vmatpush1.bf16.msra.mxu0 0
        %920 = vmatprep.subr.bf16.mxu0 0
        %921 = vmatpush1.bf16.msra.mxu0 0
        %922 = vmatprep.subr.bf16.mxu0 0
        %923 = vmatpush1.bf16.msra.mxu0 0
        %924 = vmatprep.subr.bf16.mxu0 0
        %925 = vmatpush1.bf16.msra.mxu0 0
        %926 = vmatprep.subr.bf16.mxu0 0
        %927 = vmatpush1.bf16.msra.mxu0 0
        %928 = vmatprep.subr.bf16.mxu0 0
        %929 = vmatpush1.bf16.msra.mxu0 0
        %930 = vmatprep.subr.bf16.mxu0 0
        %931 = vmatpush1.bf16.msra.mxu0 0
        %932 = vmatprep.subr.bf16.mxu0 0
        %933 = vmatpush1.bf16.msra.mxu0 0
        %934 = vmatprep.subr.bf16.mxu0 0
        %935 = vmatpush1.bf16.msra.mxu0 0
        %936 = vmatprep.subr.bf16.mxu0 0
        %937 = vmatpush1.bf16.msra.mxu0 0
        %938 = vmatprep.mubr.bf16.mxu0 0
        %939 = vmatmul.mubr.bf16.gmra.mrb[0].mxu0 %v426
        %v940 = vpop.f32.mrb[0].mxu0
        %v941 = vadd.f32 0.0, %v940
        %v942 = vpop.f32.mrb[0].mxu0
        %v943 = vadd.f32 0.0, %v942
        %v944 = vpop.f32.mrb[0].mxu0
        %v945 = vadd.f32 0.0, %v944
        %v946 = vpop.f32.mrb[0].mxu0
        %v947 = vadd.f32 0.0, %v946
        %948 = vmatprep.mubr.bf16.mxu0 0
        %949 = vmatmul.mubr.bf16.gmra.mrb[0].mxu0 %v429
        %v950 = vpop.f32.mrb[0].mxu0
        %v951 = vadd.f32 0.0, %v950
        %v952 = vpop.f32.mrb[0].mxu0
        %v953 = vadd.f32 0.0, %v952
        %v954 = vpop.f32.mrb[0].mxu0
        %v955 = vadd.f32 0.0, %v954
        %v956 = vpop.f32.mrb[0].mxu0
        %v957 = vadd.f32 0.0, %v956
        %958 = vdwg.mxu0
        %v959 = vmax.f32 %v740, %v888
        %v960 = vmax.f32 %v741, %v890
        %v961 = vmax.f32 %v742, %v941
        %v962 = vmax.f32 %v743, %v943
        %v963 = vmax.f32 %v744, %v892
        %v964 = vmax.f32 %v745, %v894
        %v965 = vmax.f32 %v746, %v945
        %v966 = vmax.f32 %v747, %v947
        %v967 = vmax.f32 %v748, %v898
        %v968 = vmax.f32 %v749, %v900
        %v969 = vmax.f32 %v750, %v951
        %v970 = vmax.f32 %v751, %v953
        %v971 = vmax.f32 %v752, %v902
        %v972 = vmax.f32 %v753, %v904
        %v973 = vmax.f32 %v754, %v955
        %v974 = vmax.f32 %v755, %v957
        %s975 = scalar_lea.vmem %s291, 384 [#allocation2]
        %v976 = vld [vmem:[%s975] sm:$0xff]
        %v977 = vld [vmem:[%s975 + $0x8] sm:$0xff]
        %v978 = vld [vmem:[%s975 + $0x10] sm:$0xff]
        %v979 = vld [vmem:[%s975 + $0x18] sm:$0xff]
        %v980 = vld [vmem:[%s975 + $0x20] sm:$0xff]
        %v981 = vld [vmem:[%s975 + $0x28] sm:$0xff]
        %v982 = vld [vmem:[%s975 + $0x30] sm:$0xff]
        %v983 = vld [vmem:[%s975 + $0x38] sm:$0xff]
        %v984 = vld [vmem:[%s975 + $0x40] sm:$0xff]
        %v985 = vld [vmem:[%s975 + $0x48] sm:$0xff]
        %v986 = vld [vmem:[%s975 + $0x50] sm:$0xff]
        %v987 = vld [vmem:[%s975 + $0x58] sm:$0xff]
        %v988 = vld [vmem:[%s975 + $0x60] sm:$0xff]
        %v989 = vld [vmem:[%s975 + $0x68] sm:$0xff]
        %v990 = vld [vmem:[%s975 + $0x70] sm:$0xff]
        %v991 = vld [vmem:[%s975 + $0x78] sm:$0xff]
        %v1008 = vunpack.c.l.b16 %v976
        %v1009 = vunpack.c.h.b16 %v976
        %v1010 = vunpack.c.l.b16 %v977
        %v1011 = vunpack.c.h.b16 %v977
        %v1012 = vunpack.c.l.b16 %v978
        %v1013 = vunpack.c.h.b16 %v978
        %v1014 = vunpack.c.l.b16 %v979
        %v1015 = vunpack.c.h.b16 %v979
        %v1016 = vunpack.c.l.b16 %v980
        %v1017 = vunpack.c.h.b16 %v980
        %v1018 = vunpack.c.l.b16 %v981
        %v1019 = vunpack.c.h.b16 %v981
        %v1020 = vunpack.c.l.b16 %v982
        %v1021 = vunpack.c.h.b16 %v982
        %v1022 = vunpack.c.l.b16 %v983
        %v1023 = vunpack.c.h.b16 %v983
        %v1024 = vunpack.c.l.b16 %v984
        %v1025 = vunpack.c.h.b16 %v984
        %v1026 = vunpack.c.l.b16 %v985
        %v1027 = vunpack.c.h.b16 %v985
        %v1028 = vunpack.c.l.b16 %v986
        %v1029 = vunpack.c.h.b16 %v986
        %v1030 = vunpack.c.l.b16 %v987
        %v1031 = vunpack.c.h.b16 %v987
        %v1032 = vunpack.c.l.b16 %v988
        %v1033 = vunpack.c.h.b16 %v988
        %v1034 = vunpack.c.l.b16 %v989
        %v1035 = vunpack.c.h.b16 %v989
        %v1036 = vunpack.c.l.b16 %v990
        %v1037 = vunpack.c.h.b16 %v990
        %v1038 = vunpack.c.l.b16 %v991
        %v1039 = vunpack.c.h.b16 %v991
        %v1040 = vpack.c.b16 %v1012, %v1008
        %v1041 = vpack.c.b16 %v1013, %v1009
        %v1042 = vpack.c.b16 %v1014, %v1010
        %v1043 = vpack.c.b16 %v1015, %v1011
        %v1044 = vpack.c.b16 %v1020, %v1016
        %v1045 = vpack.c.b16 %v1021, %v1017
        %v1046 = vpack.c.b16 %v1022, %v1018
        %v1047 = vpack.c.b16 %v1023, %v1019
        %v1048 = vpack.c.b16 %v1028, %v1024
        %v1049 = vpack.c.b16 %v1029, %v1025
        %v1050 = vpack.c.b16 %v1030, %v1026
        %v1051 = vpack.c.b16 %v1031, %v1027
        %v1052 = vpack.c.b16 %v1036, %v1032
        %v1053 = vpack.c.b16 %v1037, %v1033
        %v1054 = vpack.c.b16 %v1038, %v1034
        %v1055 = vpack.c.b16 %v1039, %v1035
        %1072 = vmatprep.subr.bf16.mxu0 %v1041
        %1073 = vmatpush1.bf16.msra.mxu0 %v1040
        %1074 = vmatprep.subr.bf16.mxu0 %v1045
        %1075 = vmatpush1.bf16.msra.mxu0 %v1044
        %1076 = vmatprep.subr.bf16.mxu0 %v1049
        %1077 = vmatpush1.bf16.msra.mxu0 %v1048
        %1078 = vmatprep.subr.bf16.mxu0 %v1053
        %1079 = vmatpush1.bf16.msra.mxu0 %v1052
        %1080 = vmatprep.subr.bf16.mxu0 0
        %1081 = vmatpush1.bf16.msra.mxu0 0
        %1082 = vmatprep.subr.bf16.mxu0 0
        %1083 = vmatpush1.bf16.msra.mxu0 0
        %1084 = vmatprep.subr.bf16.mxu0 0
        %1085 = vmatpush1.bf16.msra.mxu0 0
        %1086 = vmatprep.subr.bf16.mxu0 0
        %1087 = vmatpush1.bf16.msra.mxu0 0
        %1088 = vmatprep.subr.bf16.mxu0 0
        %1089 = vmatpush1.bf16.msra.mxu0 0
        %1090 = vmatprep.subr.bf16.mxu0 0
        %1091 = vmatpush1.bf16.msra.mxu0 0
        %1092 = vmatprep.subr.bf16.mxu0 0
        %1093 = vmatpush1.bf16.msra.mxu0 0
        %1094 = vmatprep.subr.bf16.mxu0 0
        %1095 = vmatpush1.bf16.msra.mxu0 0
        %1096 = vmatprep.subr.bf16.mxu0 0
        %1097 = vmatpush1.bf16.msra.mxu0 0
        %1098 = vmatprep.subr.bf16.mxu0 0
        %1099 = vmatpush1.bf16.msra.mxu0 0
        %1100 = vmatprep.subr.bf16.mxu0 0
        %1101 = vmatpush1.bf16.msra.mxu0 0
        %1102 = vmatprep.subr.bf16.mxu0 0
        %1103 = vmatpush1.bf16.msra.mxu0 0
        %1104 = vmatprep.mubr.bf16.mxu0 0
        %1105 = vmatmul.mubr.bf16.gmra.mrb[0].mxu0 %v426
        %v1106 = vpop.f32.mrb[0].mxu0
        %v1107 = vadd.f32 0.0, %v1106
        %v1108 = vpop.f32.mrb[0].mxu0
        %v1109 = vadd.f32 0.0, %v1108
        %v1110 = vpop.f32.mrb[0].mxu0
        %v1111 = vadd.f32 0.0, %v1110
        %v1112 = vpop.f32.mrb[0].mxu0
        %v1113 = vadd.f32 0.0, %v1112
        %1114 = vmatprep.mubr.bf16.mxu0 0
        %1115 = vmatmul.mubr.bf16.gmra.mrb[0].mxu0 %v429
        %v1116 = vpop.f32.mrb[0].mxu0
        %v1117 = vadd.f32 0.0, %v1116
        %v1118 = vpop.f32.mrb[0].mxu0
        %v1119 = vadd.f32 0.0, %v1118
        %v1120 = vpop.f32.mrb[0].mxu0
        %v1121 = vadd.f32 0.0, %v1120
        %v1122 = vpop.f32.mrb[0].mxu0
        %v1123 = vadd.f32 0.0, %v1122
        %1124 = vdwg.mxu0
        %1125 = vmatprep.subr.bf16.mxu0 %v1043
        %1126 = vmatpush1.bf16.msra.mxu0 %v1042
        %1127 = vmatprep.subr.bf16.mxu0 %v1047
        %1128 = vmatpush1.bf16.msra.mxu0 %v1046
        %1129 = vmatprep.subr.bf16.mxu0 %v1051
        %1130 = vmatpush1.bf16.msra.mxu0 %v1050
        %1131 = vmatprep.subr.bf16.mxu0 %v1055
        %1132 = vmatpush1.bf16.msra.mxu0 %v1054
        %1133 = vmatprep.subr.bf16.mxu0 0
        %1134 = vmatpush1.bf16.msra.mxu0 0
        %1135 = vmatprep.subr.bf16.mxu0 0
        %1136 = vmatpush1.bf16.msra.mxu0 0
        %1137 = vmatprep.subr.bf16.mxu0 0
        %1138 = vmatpush1.bf16.msra.mxu0 0
        %1139 = vmatprep.subr.bf16.mxu0 0
        %1140 = vmatpush1.bf16.msra.mxu0 0
        %1141 = vmatprep.subr.bf16.mxu0 0
        %1142 = vmatpush1.bf16.msra.mxu0 0
        %1143 = vmatprep.subr.bf16.mxu0 0
        %1144 = vmatpush1.bf16.msra.mxu0 0
        %1145 = vmatprep.subr.bf16.mxu0 0
        %1146 = vmatpush1.bf16.msra.mxu0 0
        %1147 = vmatprep.subr.bf16.mxu0 0
        %1148 = vmatpush1.bf16.msra.mxu0 0
        %1149 = vmatprep.subr.bf16.mxu0 0
        %1150 = vmatpush1.bf16.msra.mxu0 0
        %1151 = vmatprep.subr.bf16.mxu0 0
        %1152 = vmatpush1.bf16.msra.mxu0 0
        %1153 = vmatprep.subr.bf16.mxu0 0
        %1154 = vmatpush1.bf16.msra.mxu0 0
        %1155 = vmatprep.subr.bf16.mxu0 0
        %1156 = vmatpush1.bf16.msra.mxu0 0
        %1157 = vmatprep.mubr.bf16.mxu0 0
        %1158 = vmatmul.mubr.bf16.gmra.mrb[0].mxu0 %v426
        %v1159 = vpop.f32.mrb[0].mxu0
        %v1160 = vadd.f32 0.0, %v1159
        %v1161 = vpop.f32.mrb[0].mxu0
        %v1162 = vadd.f32 0.0, %v1161
        %v1163 = vpop.f32.mrb[0].mxu0
        %v1164 = vadd.f32 0.0, %v1163
        %v1165 = vpop.f32.mrb[0].mxu0
        %v1166 = vadd.f32 0.0, %v1165
        %1167 = vmatprep.mubr.bf16.mxu0 0
        %1168 = vmatmul.mubr.bf16.gmra.mrb[0].mxu0 %v429
        %v1169 = vpop.f32.mrb[0].mxu0
        %v1170 = vadd.f32 0.0, %v1169
        %v1171 = vpop.f32.mrb[0].mxu0
        %v1172 = vadd.f32 0.0, %v1171
        %v1173 = vpop.f32.mrb[0].mxu0
        %v1174 = vadd.f32 0.0, %v1173
        %v1175 = vpop.f32.mrb[0].mxu0
        %v1176 = vadd.f32 0.0, %v1175
        %1177 = vdwg.mxu0
        %v1178 = vmax.f32 %v959, %v1107
        %v1179 = vmax.f32 %v960, %v1109
        %v1180 = vmax.f32 %v961, %v1160
        %v1181 = vmax.f32 %v962, %v1162
        %v1182 = vmax.f32 %v963, %v1111
        %v1183 = vmax.f32 %v964, %v1113
        %v1184 = vmax.f32 %v965, %v1164
        %v1185 = vmax.f32 %v966, %v1166
        %v1186 = vmax.f32 %v967, %v1117
        %v1187 = vmax.f32 %v968, %v1119
        %v1188 = vmax.f32 %v969, %v1170
        %v1189 = vmax.f32 %v970, %v1172
        %v1190 = vmax.f32 %v971, %v1121
        %v1191 = vmax.f32 %v972, %v1123
        %v1192 = vmax.f32 %v973, %v1174
        %v1193 = vmax.f32 %v974, %v1176
        %v1194 = vld [vmem:[%s2] sm:$0xff]
        %v1195 = vld [vmem:[%s2 + $0x8] sm:$0xff]
        %v1196 = vld [vmem:[%s2 + $0x10] sm:$0xff]
        %v1197 = vld [vmem:[%s2 + $0x18] sm:$0xff]
        %1199 = vset.pattern.permute.xlu0 0
        %1200 = vperm.xlu0 %1199, %v1194
        %v1201 = vpop.permute.xlu0 %1200
        %1204 = vset.pattern.permute.xlu0 0
        %1205 = vperm.xlu0 %1204, %v1195
        %v1206 = vpop.permute.xlu0 %1205
        %1209 = vset.pattern.permute.xlu0 0
        %1210 = vperm.xlu0 %1209, %v1196
        %v1211 = vpop.permute.xlu0 %1210
        %1214 = vset.pattern.permute.xlu0 0
        %1215 = vperm.xlu0 %1214, %v1197
        %v1216 = vpop.permute.xlu0 %1215
        %v1218 = vadd.f32 %v1178, %v1201
        %v1219 = vadd.f32 %v1179, %v1201
        %v1220 = vadd.f32 %v1180, %v1201
        %v1221 = vadd.f32 %v1181, %v1201
        %v1222 = vadd.f32 %v1182, %v1206
        %v1223 = vadd.f32 %v1183, %v1206
        %v1224 = vadd.f32 %v1184, %v1206
        %v1225 = vadd.f32 %v1185, %v1206
        %v1226 = vadd.f32 %v1186, %v1211
        %v1227 = vadd.f32 %v1187, %v1211
        %v1228 = vadd.f32 %v1188, %v1211
        %v1229 = vadd.f32 %v1189, %v1211
        %v1230 = vadd.f32 %v1190, %v1216
        %v1231 = vadd.f32 %v1191, %v1216
        %v1232 = vadd.f32 %v1192, %v1216
        %v1233 = vadd.f32 %v1193, %v1216
        %v1234 = vmul.f32 %v1218, 0.5
        %v1235 = vmul.f32 %v1219, 0.5
        %v1236 = vmul.f32 %v1220, 0.5
        %v1237 = vmul.f32 %v1221, 0.5
        %v1238 = vmul.f32 %v1222, 0.5
        %v1239 = vmul.f32 %v1223, 0.5
        %v1240 = vmul.f32 %v1224, 0.5
        %v1241 = vmul.f32 %v1225, 0.5
        %v1242 = vmul.f32 %v1226, 0.5
        %v1243 = vmul.f32 %v1227, 0.5
        %v1244 = vmul.f32 %v1228, 0.5
        %v1245 = vmul.f32 %v1229, 0.5
        %v1246 = vmul.f32 %v1230, 0.5
        %v1247 = vmul.f32 %v1231, 0.5
        %v1248 = vmul.f32 %v1232, 0.5
        %v1249 = vmul.f32 %v1233, 0.5
        %v1250 = vmul.f32 %v1218, 0.70710677
        %v1251 = vmul.f32 %v1219, 0.70710677
        %v1252 = vmul.f32 %v1220, 0.70710677
        %v1253 = vmul.f32 %v1221, 0.70710677
        %v1254 = vmul.f32 %v1222, 0.70710677
        %v1255 = vmul.f32 %v1223, 0.70710677
        %v1256 = vmul.f32 %v1224, 0.70710677
        %v1257 = vmul.f32 %v1225, 0.70710677
        %v1258 = vmul.f32 %v1226, 0.70710677
        %v1259 = vmul.f32 %v1227, 0.70710677
        %v1260 = vmul.f32 %v1228, 0.70710677
        %v1261 = vmul.f32 %v1229, 0.70710677
        %v1262 = vmul.f32 %v1230, 0.70710677
        %v1263 = vmul.f32 %v1231, 0.70710677
        %v1264 = vmul.f32 %v1232, 0.70710677
        %v1265 = vmul.f32 %v1233, 0.70710677
        %v1266 = vand.u32 2147483647, %v1250
        %v1267 = vand.u32 2147483647, %v1251
        %v1268 = vand.u32 2147483647, %v1252
        %v1269 = vand.u32 2147483647, %v1253
        %v1270 = vand.u32 2147483647, %v1254
        %v1271 = vand.u32 2147483647, %v1255
        %v1272 = vand.u32 2147483647, %v1256
        %v1273 = vand.u32 2147483647, %v1257
        %v1274 = vand.u32 2147483647, %v1258
        %v1275 = vand.u32 2147483647, %v1259
        %v1276 = vand.u32 2147483647, %v1260
        %v1277 = vand.u32 2147483647, %v1261
        %v1278 = vand.u32 2147483647, %v1262
        %v1279 = vand.u32 2147483647, %v1263
        %v1280 = vand.u32 2147483647, %v1264
        %v1281 = vand.u32 2147483647, %v1265
        %v1282 = vmul.f32 %v1266, 0.3275911
        %v1283 = vmul.f32 %v1267, 0.3275911
        %v1284 = vmul.f32 %v1268, 0.3275911
        %v1285 = vmul.f32 %v1269, 0.3275911
        %v1286 = vmul.f32 %v1270, 0.3275911
        %v1287 = vmul.f32 %v1271, 0.3275911
        %v1288 = vmul.f32 %v1272, 0.3275911
        %v1289 = vmul.f32 %v1273, 0.3275911
        %v1290 = vmul.f32 %v1274, 0.3275911
        %v1291 = vmul.f32 %v1275, 0.3275911
        %v1292 = vmul.f32 %v1276, 0.3275911
        %v1293 = vmul.f32 %v1277, 0.3275911
        %v1294 = vmul.f32 %v1278, 0.3275911
        %v1295 = vmul.f32 %v1279, 0.3275911
        %v1296 = vmul.f32 %v1280, 0.3275911
        %v1297 = vmul.f32 %v1281, 0.3275911
        %v1298 = vadd.f32 %v1282, 1.0
        %v1299 = vadd.f32 %v1283, 1.0
        %v1300 = vadd.f32 %v1284, 1.0
        %v1301 = vadd.f32 %v1285, 1.0
        %v1302 = vadd.f32 %v1286, 1.0
        %v1303 = vadd.f32 %v1287, 1.0
        %v1304 = vadd.f32 %v1288, 1.0
        %v1305 = vadd.f32 %v1289, 1.0
        %v1306 = vadd.f32 %v1290, 1.0
        %v1307 = vadd.f32 %v1291, 1.0
        %v1308 = vadd.f32 %v1292, 1.0
        %v1309 = vadd.f32 %v1293, 1.0
        %v1310 = vadd.f32 %v1294, 1.0
        %v1311 = vadd.f32 %v1295, 1.0
        %v1312 = vadd.f32 %v1296, 1.0
        %v1313 = vadd.f32 %v1297, 1.0
        %v1314 = vrcp.pop %v1298
        %v1315 = vmul.f32 1.0, %v1314
        %v1316 = vrcp.pop %v1299
        %v1317 = vmul.f32 1.0, %v1316
        %v1318 = vrcp.pop %v1300
        %v1319 = vmul.f32 1.0, %v1318
        %v1320 = vrcp.pop %v1301
        %v1321 = vmul.f32 1.0, %v1320
        %v1322 = vrcp.pop %v1302
        %v1323 = vmul.f32 1.0, %v1322
        %v1324 = vrcp.pop %v1303
        %v1325 = vmul.f32 1.0, %v1324
        %v1326 = vrcp.pop %v1304
        %v1327 = vmul.f32 1.0, %v1326
        %v1328 = vrcp.pop %v1305
        %v1329 = vmul.f32 1.0, %v1328
        %v1330 = vrcp.pop %v1306
        %v1331 = vmul.f32 1.0, %v1330
        %v1332 = vrcp.pop %v1307
        %v1333 = vmul.f32 1.0, %v1332
        %v1334 = vrcp.pop %v1308
        %v1335 = vmul.f32 1.0, %v1334
        %v1336 = vrcp.pop %v1309
        %v1337 = vmul.f32 1.0, %v1336
        %v1338 = vrcp.pop %v1310
        %v1339 = vmul.f32 1.0, %v1338
        %v1340 = vrcp.pop %v1311
        %v1341 = vmul.f32 1.0, %v1340
        %v1342 = vrcp.pop %v1312
        %v1343 = vmul.f32 1.0, %v1342
        %v1344 = vrcp.pop %v1313
        %v1345 = vmul.f32 1.0, %v1344
        %v1346 = vmul.f32 %v1315, 1.0614054
        %v1347 = vmul.f32 %v1317, 1.0614054
        %v1348 = vmul.f32 %v1319, 1.0614054
        %v1349 = vmul.f32 %v1321, 1.0614054
        %v1350 = vmul.f32 %v1323, 1.0614054
        %v1351 = vmul.f32 %v1325, 1.0614054
        %v1352 = vmul.f32 %v1327, 1.0614054
        %v1353 = vmul.f32 %v1329, 1.0614054
        %v1354 = vmul.f32 %v1331, 1.0614054
        %v1355 = vmul.f32 %v1333, 1.0614054
        %v1356 = vmul.f32 %v1335, 1.0614054
        %v1357 = vmul.f32 %v1337, 1.0614054
        %v1358 = vmul.f32 %v1339, 1.0614054
        %v1359 = vmul.f32 %v1341, 1.0614054
        %v1360 = vmul.f32 %v1343, 1.0614054
        %v1361 = vmul.f32 %v1345, 1.0614054
        %v1362 = vadd.f32 %v1346, -1.4531521
        %v1363 = vadd.f32 %v1347, -1.4531521
        %v1364 = vadd.f32 %v1348, -1.4531521
        %v1365 = vadd.f32 %v1349, -1.4531521
        %v1366 = vadd.f32 %v1350, -1.4531521
        %v1367 = vadd.f32 %v1351, -1.4531521
        %v1368 = vadd.f32 %v1352, -1.4531521
        %v1369 = vadd.f32 %v1353, -1.4531521
        %v1370 = vadd.f32 %v1354, -1.4531521
        %v1371 = vadd.f32 %v1355, -1.4531521
        %v1372 = vadd.f32 %v1356, -1.4531521
        %v1373 = vadd.f32 %v1357, -1.4531521
        %v1374 = vadd.f32 %v1358, -1.4531521
        %v1375 = vadd.f32 %v1359, -1.4531521
        %v1376 = vadd.f32 %v1360, -1.4531521
        %v1377 = vadd.f32 %v1361, -1.4531521
        %v1378 = vmul.f32 %v1362, %v1315
        %v1379 = vmul.f32 %v1363, %v1317
        %v1380 = vmul.f32 %v1364, %v1319
        %v1381 = vmul.f32 %v1365, %v1321
        %v1382 = vmul.f32 %v1366, %v1323
        %v1383 = vmul.f32 %v1367, %v1325
        %v1384 = vmul.f32 %v1368, %v1327
        %v1385 = vmul.f32 %v1369, %v1329
        %v1386 = vmul.f32 %v1370, %v1331
        %v1387 = vmul.f32 %v1371, %v1333
        %v1388 = vmul.f32 %v1372, %v1335
        %v1389 = vmul.f32 %v1373, %v1337
        %v1390 = vmul.f32 %v1374, %v1339
        %v1391 = vmul.f32 %v1375, %v1341
        %v1392 = vmul.f32 %v1376, %v1343
        %v1393 = vmul.f32 %v1377, %v1345
        %v1394 = vadd.f32 %v1378, 1.4214138
        %v1395 = vadd.f32 %v1379, 1.4214138
        %v1396 = vadd.f32 %v1380, 1.4214138
        %v1397 = vadd.f32 %v1381, 1.4214138
        %v1398 = vadd.f32 %v1382, 1.4214138
        %v1399 = vadd.f32 %v1383, 1.4214138
        %v1400 = vadd.f32 %v1384, 1.4214138
        %v1401 = vadd.f32 %v1385, 1.4214138
        %v1402 = vadd.f32 %v1386, 1.4214138
        %v1403 = vadd.f32 %v1387, 1.4214138
        %v1404 = vadd.f32 %v1388, 1.4214138
        %v1405 = vadd.f32 %v1389, 1.4214138
        %v1406 = vadd.f32 %v1390, 1.4214138
        %v1407 = vadd.f32 %v1391, 1.4214138
        %v1408 = vadd.f32 %v1392, 1.4214138
        %v1409 = vadd.f32 %v1393, 1.4214138
        %v1410 = vmul.f32 %v1394, %v1315
        %v1411 = vmul.f32 %v1395, %v1317
        %v1412 = vmul.f32 %v1396, %v1319
        %v1413 = vmul.f32 %v1397, %v1321
        %v1414 = vmul.f32 %v1398, %v1323
        %v1415 = vmul.f32 %v1399, %v1325
        %v1416 = vmul.f32 %v1400, %v1327
        %v1417 = vmul.f32 %v1401, %v1329
        %v1418 = vmul.f32 %v1402, %v1331
        %v1419 = vmul.f32 %v1403, %v1333
        %v1420 = vmul.f32 %v1404, %v1335
        %v1421 = vmul.f32 %v1405, %v1337
        %v1422 = vmul.f32 %v1406, %v1339
        %v1423 = vmul.f32 %v1407, %v1341
        %v1424 = vmul.f32 %v1408, %v1343
        %v1425 = vmul.f32 %v1409, %v1345
        %v1426 = vadd.f32 %v1410, -0.28449672
        %v1427 = vadd.f32 %v1411, -0.28449672
        %v1428 = vadd.f32 %v1412, -0.28449672
        %v1429 = vadd.f32 %v1413, -0.28449672
        %v1430 = vadd.f32 %v1414, -0.28449672
        %v1431 = vadd.f32 %v1415, -0.28449672
        %v1432 = vadd.f32 %v1416, -0.28449672
        %v1433 = vadd.f32 %v1417, -0.28449672
        %v1434 = vadd.f32 %v1418, -0.28449672
        %v1435 = vadd.f32 %v1419, -0.28449672
        %v1436 = vadd.f32 %v1420, -0.28449672
        %v1437 = vadd.f32 %v1421, -0.28449672
        %v1438 = vadd.f32 %v1422, -0.28449672
        %v1439 = vadd.f32 %v1423, -0.28449672
        %v1440 = vadd.f32 %v1424, -0.28449672
        %v1441 = vadd.f32 %v1425, -0.28449672
        %v1442 = vmul.f32 %v1426, %v1315
        %v1443 = vmul.f32 %v1427, %v1317
        %v1444 = vmul.f32 %v1428, %v1319
        %v1445 = vmul.f32 %v1429, %v1321
        %v1446 = vmul.f32 %v1430, %v1323
        %v1447 = vmul.f32 %v1431, %v1325
        %v1448 = vmul.f32 %v1432, %v1327
        %v1449 = vmul.f32 %v1433, %v1329
        %v1450 = vmul.f32 %v1434, %v1331
        %v1451 = vmul.f32 %v1435, %v1333
        %v1452 = vmul.f32 %v1436, %v1335
        %v1453 = vmul.f32 %v1437, %v1337
        %v1454 = vmul.f32 %v1438, %v1339
        %v1455 = vmul.f32 %v1439, %v1341
        %v1456 = vmul.f32 %v1440, %v1343
        %v1457 = vmul.f32 %v1441, %v1345
        %v1458 = vadd.f32 %v1442, 0.2548296
        %v1459 = vadd.f32 %v1443, 0.2548296
        %v1460 = vadd.f32 %v1444, 0.2548296
        %v1461 = vadd.f32 %v1445, 0.2548296
        %v1462 = vadd.f32 %v1446, 0.2548296
        %v1463 = vadd.f32 %v1447, 0.2548296
        %v1464 = vadd.f32 %v1448, 0.2548296
        %v1465 = vadd.f32 %v1449, 0.2548296
        %v1466 = vadd.f32 %v1450, 0.2548296
        %v1467 = vadd.f32 %v1451, 0.2548296
        %v1468 = vadd.f32 %v1452, 0.2548296
        %v1469 = vadd.f32 %v1453, 0.2548296
        %v1470 = vadd.f32 %v1454, 0.2548296
        %v1471 = vadd.f32 %v1455, 0.2548296
        %v1472 = vadd.f32 %v1456, 0.2548296
        %v1473 = vadd.f32 %v1457, 0.2548296
        %v1474 = vmul.f32 %v1458, %v1315
        %v1475 = vmul.f32 %v1459, %v1317
        %v1476 = vmul.f32 %v1460, %v1319
        %v1477 = vmul.f32 %v1461, %v1321
        %v1478 = vmul.f32 %v1462, %v1323
        %v1479 = vmul.f32 %v1463, %v1325
        %v1480 = vmul.f32 %v1464, %v1327
        %v1481 = vmul.f32 %v1465, %v1329
        %v1482 = vmul.f32 %v1466, %v1331
        %v1483 = vmul.f32 %v1467, %v1333
        %v1484 = vmul.f32 %v1468, %v1335
        %v1485 = vmul.f32 %v1469, %v1337
        %v1486 = vmul.f32 %v1470, %v1339
        %v1487 = vmul.f32 %v1471, %v1341
        %v1488 = vmul.f32 %v1472, %v1343
        %v1489 = vmul.f32 %v1473, %v1345
        %v1490 = vsub.f32 0.0, %v1266
        %v1491 = vsub.f32 0.0, %v1267
        %v1492 = vsub.f32 0.0, %v1268
        %v1493 = vsub.f32 0.0, %v1269
        %v1494 = vsub.f32 0.0, %v1270
        %v1495 = vsub.f32 0.0, %v1271
        %v1496 = vsub.f32 0.0, %v1272
        %v1497 = vsub.f32 0.0, %v1273
        %v1498 = vsub.f32 0.0, %v1274
        %v1499 = vsub.f32 0.0, %v1275
        %v1500 = vsub.f32 0.0, %v1276
        %v1501 = vsub.f32 0.0, %v1277
        %v1502 = vsub.f32 0.0, %v1278
        %v1503 = vsub.f32 0.0, %v1279
        %v1504 = vsub.f32 0.0, %v1280
        %v1505 = vsub.f32 0.0, %v1281
        %v1506 = vmul.f32 %v1490, %v1266
        %v1507 = vmul.f32 %v1491, %v1267
        %v1508 = vmul.f32 %v1492, %v1268
        %v1509 = vmul.f32 %v1493, %v1269
        %v1510 = vmul.f32 %v1494, %v1270
        %v1511 = vmul.f32 %v1495, %v1271
        %v1512 = vmul.f32 %v1496, %v1272
        %v1513 = vmul.f32 %v1497, %v1273
        %v1514 = vmul.f32 %v1498, %v1274
        %v1515 = vmul.f32 %v1499, %v1275
        %v1516 = vmul.f32 %v1500, %v1276
        %v1517 = vmul.f32 %v1501, %v1277
        %v1518 = vmul.f32 %v1502, %v1278
        %v1519 = vmul.f32 %v1503, %v1279
        %v1520 = vmul.f32 %v1504, %v1280
        %v1521 = vmul.f32 %v1505, %v1281
        %v1522 = vmul.f32 %v1506, 1.442695
        %v1523 = vpow.pop %v1522
        %v1524 = vmul.f32 %v1507, 1.442695
        %v1525 = vpow.pop %v1524
        %v1526 = vmul.f32 %v1508, 1.442695
        %v1527 = vpow.pop %v1526
        %v1528 = vmul.f32 %v1509, 1.442695
        %v1529 = vpow.pop %v1528
        %v1530 = vmul.f32 %v1510, 1.442695
        %v1531 = vpow.pop %v1530
        %v1532 = vmul.f32 %v1511, 1.442695
        %v1533 = vpow.pop %v1532
        %v1534 = vmul.f32 %v1512, 1.442695
        %v1535 = vpow.pop %v1534
        %v1536 = vmul.f32 %v1513, 1.442695
        %v1537 = vpow.pop %v1536
        %v1538 = vmul.f32 %v1514, 1.442695
        %v1539 = vpow.pop %v1538
        %v1540 = vmul.f32 %v1515, 1.442695
        %v1541 = vpow.pop %v1540
        %v1542 = vmul.f32 %v1516, 1.442695
        %v1543 = vpow.pop %v1542
        %v1544 = vmul.f32 %v1517, 1.442695
        %v1545 = vpow.pop %v1544
        %v1546 = vmul.f32 %v1518, 1.442695
        %v1547 = vpow.pop %v1546
        %v1548 = vmul.f32 %v1519, 1.442695
        %v1549 = vpow.pop %v1548
        %v1550 = vmul.f32 %v1520, 1.442695
        %v1551 = vpow.pop %v1550
        %v1552 = vmul.f32 %v1521, 1.442695
        %v1553 = vpow.pop %v1552
        %v1554 = vmul.f32 %v1474, %v1523
        %v1555 = vmul.f32 %v1475, %v1525
        %v1556 = vmul.f32 %v1476, %v1527
        %v1557 = vmul.f32 %v1477, %v1529
        %v1558 = vmul.f32 %v1478, %v1531
        %v1559 = vmul.f32 %v1479, %v1533
        %v1560 = vmul.f32 %v1480, %v1535
        %v1561 = vmul.f32 %v1481, %v1537
        %v1562 = vmul.f32 %v1482, %v1539
        %v1563 = vmul.f32 %v1483, %v1541
        %v1564 = vmul.f32 %v1484, %v1543
        %v1565 = vmul.f32 %v1485, %v1545
        %v1566 = vmul.f32 %v1486, %v1547
        %v1567 = vmul.f32 %v1487, %v1549
        %v1568 = vmul.f32 %v1488, %v1551
        %v1569 = vmul.f32 %v1489, %v1553
        %v1570 = vsub.f32 1.0, %v1554
        %v1571 = vsub.f32 1.0, %v1555
        %v1572 = vsub.f32 1.0, %v1556
        %v1573 = vsub.f32 1.0, %v1557
        %v1574 = vsub.f32 1.0, %v1558
        %v1575 = vsub.f32 1.0, %v1559
        %v1576 = vsub.f32 1.0, %v1560
        %v1577 = vsub.f32 1.0, %v1561
        %v1578 = vsub.f32 1.0, %v1562
        %v1579 = vsub.f32 1.0, %v1563
        %v1580 = vsub.f32 1.0, %v1564
        %v1581 = vsub.f32 1.0, %v1565
        %v1582 = vsub.f32 1.0, %v1566
        %v1583 = vsub.f32 1.0, %v1567
        %v1584 = vsub.f32 1.0, %v1568
        %v1585 = vsub.f32 1.0, %v1569
        %vm1586 = vcmp.ge.f32.partialorder %v1250, 0.0
        %vm1587 = vcmp.ge.f32.partialorder %v1251, 0.0
        %vm1588 = vcmp.ge.f32.partialorder %v1252, 0.0
        %vm1589 = vcmp.ge.f32.partialorder %v1253, 0.0
        %vm1590 = vcmp.ge.f32.partialorder %v1254, 0.0
        %vm1591 = vcmp.ge.f32.partialorder %v1255, 0.0
        %vm1592 = vcmp.ge.f32.partialorder %v1256, 0.0
        %vm1593 = vcmp.ge.f32.partialorder %v1257, 0.0
        %vm1594 = vcmp.ge.f32.partialorder %v1258, 0.0
        %vm1595 = vcmp.ge.f32.partialorder %v1259, 0.0
        %vm1596 = vcmp.ge.f32.partialorder %v1260, 0.0
        %vm1597 = vcmp.ge.f32.partialorder %v1261, 0.0
        %vm1598 = vcmp.ge.f32.partialorder %v1262, 0.0
        %vm1599 = vcmp.ge.f32.partialorder %v1263, 0.0
        %vm1600 = vcmp.ge.f32.partialorder %v1264, 0.0
        %vm1601 = vcmp.ge.f32.partialorder %v1265, 0.0
        %v1602 = vsub.f32 0.0, %v1570
        %v1603 = vsub.f32 0.0, %v1571
        %v1604 = vsub.f32 0.0, %v1572
        %v1605 = vsub.f32 0.0, %v1573
        %v1606 = vsub.f32 0.0, %v1574
        %v1607 = vsub.f32 0.0, %v1575
        %v1608 = vsub.f32 0.0, %v1576
        %v1609 = vsub.f32 0.0, %v1577
        %v1610 = vsub.f32 0.0, %v1578
        %v1611 = vsub.f32 0.0, %v1579
        %v1612 = vsub.f32 0.0, %v1580
        %v1613 = vsub.f32 0.0, %v1581
        %v1614 = vsub.f32 0.0, %v1582
        %v1615 = vsub.f32 0.0, %v1583
        %v1616 = vsub.f32 0.0, %v1584
        %v1617 = vsub.f32 0.0, %v1585
        %v1618 = vsel %vm1586, %v1570, %v1602
        %v1619 = vsel %vm1587, %v1571, %v1603
        %v1620 = vsel %vm1588, %v1572, %v1604
        %v1621 = vsel %vm1589, %v1573, %v1605
        %v1622 = vsel %vm1590, %v1574, %v1606
        %v1623 = vsel %vm1591, %v1575, %v1607
        %v1624 = vsel %vm1592, %v1576, %v1608
        %v1625 = vsel %vm1593, %v1577, %v1609
        %v1626 = vsel %vm1594, %v1578, %v1610
        %v1627 = vsel %vm1595, %v1579, %v1611
        %v1628 = vsel %vm1596, %v1580, %v1612
        %v1629 = vsel %vm1597, %v1581, %v1613
        %v1630 = vsel %vm1598, %v1582, %v1614
        %v1631 = vsel %vm1599, %v1583, %v1615
        %v1632 = vsel %vm1600, %v1584, %v1616
        %v1633 = vsel %vm1601, %v1585, %v1617
        %v1634 = vadd.f32 %v1618, 1.0
        %v1635 = vadd.f32 %v1619, 1.0
        %v1636 = vadd.f32 %v1620, 1.0
        %v1637 = vadd.f32 %v1621, 1.0
        %v1638 = vadd.f32 %v1622, 1.0
        %v1639 = vadd.f32 %v1623, 1.0
        %v1640 = vadd.f32 %v1624, 1.0
        %v1641 = vadd.f32 %v1625, 1.0
        %v1642 = vadd.f32 %v1626, 1.0
        %v1643 = vadd.f32 %v1627, 1.0
        %v1644 = vadd.f32 %v1628, 1.0
        %v1645 = vadd.f32 %v1629, 1.0
        %v1646 = vadd.f32 %v1630, 1.0
        %v1647 = vadd.f32 %v1631, 1.0
        %v1648 = vadd.f32 %v1632, 1.0
        %v1649 = vadd.f32 %v1633, 1.0
        %v1650 = vmul.f32 %v1234, %v1634
        %v1651 = vmul.f32 %v1235, %v1635
        %v1652 = vmul.f32 %v1236, %v1636
        %v1653 = vmul.f32 %v1237, %v1637
        %v1654 = vmul.f32 %v1238, %v1638
        %v1655 = vmul.f32 %v1239, %v1639
        %v1656 = vmul.f32 %v1240, %v1640
        %v1657 = vmul.f32 %v1241, %v1641
        %v1658 = vmul.f32 %v1242, %v1642
        %v1659 = vmul.f32 %v1243, %v1643
        %v1660 = vmul.f32 %v1244, %v1644
        %v1661 = vmul.f32 %v1245, %v1645
        %v1662 = vmul.f32 %v1246, %v1646
        %v1663 = vmul.f32 %v1247, %v1647
        %v1664 = vmul.f32 %v1248, %v1648
        %v1665 = vmul.f32 %v1249, %v1649
        %1666 = vst [vmem:[%s310] sm:$0xff] %v1650
        %1667 = vst [vmem:[%s310 + $0x8] sm:$0xff] %v1651
        %1668 = vst [vmem:[%s310 + $0x10] sm:$0xff] %v1652
        %1669 = vst [vmem:[%s310 + $0x18] sm:$0xff] %v1653
        %1670 = vst [vmem:[%s310 + $0x20] sm:$0xff] %v1654
        %1671 = vst [vmem:[%s310 + $0x28] sm:$0xff] %v1655
        %1672 = vst [vmem:[%s310 + $0x30] sm:$0xff] %v1656
        %1673 = vst [vmem:[%s310 + $0x38] sm:$0xff] %v1657
        %1674 = vst [vmem:[%s310 + $0x40] sm:$0xff] %v1658
        %1675 = vst [vmem:[%s310 + $0x48] sm:$0xff] %v1659
        %1676 = vst [vmem:[%s310 + $0x50] sm:$0xff] %v1660
        %1677 = vst [vmem:[%s310 + $0x58] sm:$0xff] %v1661
        %1678 = vst [vmem:[%s310 + $0x60] sm:$0xff] %v1662
        %1679 = vst [vmem:[%s310 + $0x68] sm:$0xff] %v1663
        %1680 = vst [vmem:[%s310 + $0x70] sm:$0xff] %v1664
        %1681 = vst [vmem:[%s310 + $0x78] sm:$0xff] %v1665
        %s1682 = sand.u32 %s90, 1
        %s1683 = sand.u32 %s90, 1
        %s1684 = smul.addr %s1683, 128
        %s1685 = scalar_lea.vmem [#allocation3], %s1684
        // Predicated region
        $region56: #{dqn_forward.3} parent=50 // pred_check
          %p1686 = pneg %p100
        $region57: #{dqn_forward.3} parent=50 // pred_check_branch
          %1688 = sbr.rel (%p1686) target = $region59
        $region58: #{dqn_forward.3} parent=50 // pred_region
          %s1689 = smul.u32 4, %s14
          %s1690 = smul.addr %s1689, 8
          %s1691 = scalar_lea.vmem %s3, %s1690
          // Predicated region
          $region60: #{dqn_forward.3} parent=58 // pred_check
            _
          $region61: #{dqn_forward.3} parent=58 // pred_check_branch
            %1693 = sbr.rel (0) target = $region63
          $region62: #{dqn_forward.3} parent=58 // pred_region
            // Predicated region
            $region64: #{dqn_forward.3} parent=62 // pred_check
              _
            $region65: #{dqn_forward.3} parent=62 // pred_check_branch
              %1695 = sbr.rel (0) target = $region67
            $region66: #{dqn_forward.3} parent=62 // pred_region
              loop: start=0, step=1, limit=1
              $region68: #{dqn_forward.3} parent=66 // loop_pre_header
                _
              $region69: #{dqn_forward.3} parent=66 // loop_header
                %s1697 = sphi 0, %s1701
                %p1698 = scmp.ge.s32.totalorder %s1697, 1
                %s1702 = sphi %s1685, %s1685
                %s1703 = sphi %s1691, %s1691
              $region70: #{dqn_forward.3} parent=66 // loop_header_branch
                %1700 = sbr.rel (%p1698) target = $region74
              $region71: #{dqn_forward.3} parent=66 // loop_body
                %v1704 = vld [vmem:[%s1702] sm:$0xff]
                %1705 = vst [vmem:[%s1703] sm:$0xff] %v1704
                %v1706 = vld [vmem:[%s1702 + $0x8] sm:$0xff]
                %1707 = vst [vmem:[%s1703 + $0x8] sm:$0xff] %v1706
                %v1708 = vld [vmem:[%s1702 + $0x10] sm:$0xff]
                %1709 = vst [vmem:[%s1703 + $0x10] sm:$0xff] %v1708
                %v1710 = vld [vmem:[%s1702 + $0x18] sm:$0xff]
                %1711 = vst [vmem:[%s1703 + $0x18] sm:$0xff] %v1710
                %v1712 = vld [vmem:[%s1702 + $0x20] sm:$0xff]
                %1713 = vst [vmem:[%s1703 + $0x40] sm:$0xff] %v1712
                %v1714 = vld [vmem:[%s1702 + $0x28] sm:$0xff]
                %1715 = vst [vmem:[%s1703 + $0x48] sm:$0xff] %v1714
                %v1716 = vld [vmem:[%s1702 + $0x30] sm:$0xff]
                %1717 = vst [vmem:[%s1703 + $0x50] sm:$0xff] %v1716
                %v1718 = vld [vmem:[%s1702 + $0x38] sm:$0xff]
                %1719 = vst [vmem:[%s1703 + $0x58] sm:$0xff] %v1718
                %v1720 = vld [vmem:[%s1702 + $0x40] sm:$0xff]
                %1721 = vst [vmem:[%s1703 + $0x80] sm:$0xff] %v1720
                %v1722 = vld [vmem:[%s1702 + $0x48] sm:$0xff]
                %1723 = vst [vmem:[%s1703 + $0x88] sm:$0xff] %v1722
                %v1724 = vld [vmem:[%s1702 + $0x50] sm:$0xff]
                %1725 = vst [vmem:[%s1703 + $0x90] sm:$0xff] %v1724
                %v1726 = vld [vmem:[%s1702 + $0x58] sm:$0xff]
                %1727 = vst [vmem:[%s1703 + $0x98] sm:$0xff] %v1726
                %v1728 = vld [vmem:[%s1702 + $0x60] sm:$0xff]
                %1729 = vst [vmem:[%s1703 + $0xc0] sm:$0xff] %v1728
                %v1730 = vld [vmem:[%s1702 + $0x68] sm:$0xff]
                %1731 = vst [vmem:[%s1703 + $0xc8] sm:$0xff] %v1730
                %v1732 = vld [vmem:[%s1702 + $0x70] sm:$0xff]
                %1733 = vst [vmem:[%s1703 + $0xd0] sm:$0xff] %v1732
                %v1734 = vld [vmem:[%s1702 + $0x78] sm:$0xff]
                %1735 = vst [vmem:[%s1703 + $0xd8] sm:$0xff] %v1734
              $region72: #{dqn_forward.3} parent=66 // loop_footer
                %s1701 = sadd.s32 1, %s1697
              $region73: #{dqn_forward.3} parent=66 // loop_footer_branch
                %1696 = sbr.rel target = $region69
              $region74: #{dqn_forward.3} parent=66 // loop_exit
                _
            $region67: #{dqn_forward.3} parent=62 // pred_fallthru
              _
            // Predicated region
            $region75: #{dqn_forward.3} parent=62 // pred_check
              _
            $region76: #{dqn_forward.3} parent=62 // pred_check_branch
              %1737 = sbr.rel target = $region78
            $region77: #{dqn_forward.3} parent=62 // pred_region
              _
            $region78: #{dqn_forward.3} parent=62 // pred_fallthru
              _
          $region63: #{dqn_forward.3} parent=58 // pred_fallthru
            _
          %1738 = vnop
        $region59: #{dqn_forward.3} parent=50 // pred_fallthru
          _
      $region51: #{dqn_forward.3} parent=5 // pred_fallthru
        _
      %p1739 = scmp.le.s32.totalorder 2, %s9
      // Predicated region
      $region79: #{dqn_forward.3} parent=5 // pred_check
        %p1740 = pneg %p1739
      $region80: #{dqn_forward.3} parent=5 // pred_check_branch
        %1742 = sbr.rel (%p1740) target = $region82
      $region81: #{dqn_forward.3} parent=5 // pred_region
        %s1743 = ssub.s32 %s9, 2
        // Predicated region
        $region83: #{dqn_forward.3} parent=81 // pred_check
          %p1744 = pneg %p106
        $region84: #{dqn_forward.3} parent=81 // pred_check_branch
          %1746 = sbr.rel (%p1744) target = $region86
        $region85: #{dqn_forward.3} parent=81 // pred_region
          %s1747 = sand.u32 %s91, 1
          %s1748 = sand.u32 %s91, 1
          %s1749 = smul.addr %s1748, 128
          %s1750 = scalar_lea.vmem [#allocation3], %s1749
        $region86: #{dqn_forward.3} parent=81 // pred_fallthru
          _
      $region82: #{dqn_forward.3} parent=5 // pred_fallthru
        _
    $region6: #{dqn_forward.3} parent=1 // loop_footer
      %s13 = sadd.s32 1, %s9
    $region7: #{dqn_forward.3} parent=1 // loop_footer_branch
      %8 = sbr.rel target = $region3
    $region8: #{dqn_forward.3} parent=1 // loop_exit
      _

// kernel: dqn_forward.4
$region0: #{dqn_forward.4}
  #allocation0 [shape = 'u32[]', space=smem, size = 0x4, offset = 0x4, fixed_abs, tag = 'smem constant byte address 0x4 - core index']
  #allocation1 [shape = 'u32[144,128]{1,0:T(1,128)}', space=vmem, size = 0x12000, scoped, tag = 'internal scratch']
  %s0 = inlined_call_operand.vmem [shape: bf16[4,512,128], index: 0, kind: input, shape index: {}]
  %s1 = inlined_call_operand.vmem [shape: bf16[64,512], index: 1, kind: input, shape index: {}]
  %s2 = inlined_call_operand.vmem [shape: f32[64,1], index: 2, kind: input, shape index: {}]
  %s3 = inlined_call_operand.vmem [shape: f32[64,128], index: 3, kind: output, shape index: {}]
  %s4 = sld [smem:[#allocation0]]
  $region22: #{dqn_forward.4} parent=0
    _
  %s6 = ssub.s32 1, %s4
  %s7 = scalar_select 0, %s6, %s4
  // Predicated region
  $region2: #{dqn_forward.4} parent=0 // pred_check
    _
  $region3: #{dqn_forward.4} parent=0 // pred_check_branch
    %9 = sbr.rel (0) target = $region5
  $region4: #{dqn_forward.4} parent=0 // pred_region
    _
  $region5: #{dqn_forward.4} parent=0 // pred_fallthru
    _
  // Predicated region
  $region6: #{dqn_forward.4} parent=0 // pred_check
    _
  $region7: #{dqn_forward.4} parent=0 // pred_check_branch
    %11 = sbr.rel (0) target = $region9
  $region8: #{dqn_forward.4} parent=0 // pred_region
    _
  $region9: #{dqn_forward.4} parent=0 // pred_fallthru
    _
  // Predicated region
  $region10: #{dqn_forward.4} parent=0 // pred_check
    _
  $region11: #{dqn_forward.4} parent=0 // pred_check_branch
    %13 = sbr.rel (0) target = $region13
  $region12: #{dqn_forward.4} parent=0 // pred_region
    _
  $region13: #{dqn_forward.4} parent=0 // pred_fallthru
    _
  %v15 = vld [vmem:[%s1] sm:$0xff]
  %v16 = vld [vmem:[%s1 + $0x8] sm:$0xff]
  %v17 = vld [vmem:[%s1 + $0x10] sm:$0xff]
  %v18 = vld [vmem:[%s1 + $0x18] sm:$0xff]
  %v19 = vld [vmem:[%s1 + $0x20] sm:$0xff]
  %v20 = vld [vmem:[%s1 + $0x28] sm:$0xff]
  %v21 = vld [vmem:[%s1 + $0x30] sm:$0xff]
  %v22 = vld [vmem:[%s1 + $0x38] sm:$0xff]
  %v23 = vld [vmem:[%s1 + $0x40] sm:$0xff]
  %v24 = vld [vmem:[%s1 + $0x48] sm:$0xff]
  %v25 = vld [vmem:[%s1 + $0x50] sm:$0xff]
  %v26 = vld [vmem:[%s1 + $0x58] sm:$0xff]
  %v27 = vld [vmem:[%s1 + $0x60] sm:$0xff]
  %v28 = vld [vmem:[%s1 + $0x68] sm:$0xff]
  %v29 = vld [vmem:[%s1 + $0x70] sm:$0xff]
  %v30 = vld [vmem:[%s1 + $0x78] sm:$0xff]
  %v31 = vld [vmem:[%s0] sm:$0xf]
  %v32 = vld [vmem:[%s0 + $0x4] sm:$0xf]
  %v33 = vld [vmem:[%s0 + $0x8] sm:$0xf]
  %v34 = vld [vmem:[%s0 + $0xc] sm:$0xf]
  %v35 = vld [vmem:[%s0 + $0x10] sm:$0xf]
  %v36 = vld [vmem:[%s0 + $0x14] sm:$0xf]
  %v37 = vld [vmem:[%s0 + $0x18] sm:$0xf]
  %v38 = vld [vmem:[%s0 + $0x1c] sm:$0xf]
  %v39 = vld [vmem:[%s0 + $0x20] sm:$0xf]
  %v40 = vld [vmem:[%s0 + $0x24] sm:$0xf]
  %v41 = vld [vmem:[%s0 + $0x28] sm:$0xf]
  %v42 = vld [vmem:[%s0 + $0x2c] sm:$0xf]
  %v43 = vld [vmem:[%s0 + $0x30] sm:$0xf]
  %v44 = vld [vmem:[%s0 + $0x34] sm:$0xf]
  %v45 = vld [vmem:[%s0 + $0x38] sm:$0xf]
  %v46 = vld [vmem:[%s0 + $0x3c] sm:$0xf]
  %v47 = vld [vmem:[%s0 + $0x40] sm:$0xf]
  %v48 = vld [vmem:[%s0 + $0x44] sm:$0xf]
  %v49 = vld [vmem:[%s0 + $0x48] sm:$0xf]
  %v50 = vld [vmem:[%s0 + $0x4c] sm:$0xf]
  %v51 = vld [vmem:[%s0 + $0x50] sm:$0xf]
  %v52 = vld [vmem:[%s0 + $0x54] sm:$0xf]
  %v53 = vld [vmem:[%s0 + $0x58] sm:$0xf]
  %v54 = vld [vmem:[%s0 + $0x5c] sm:$0xf]
  %v55 = vld [vmem:[%s0 + $0x60] sm:$0xf]
  %v56 = vld [vmem:[%s0 + $0x64] sm:$0xf]
  %v57 = vld [vmem:[%s0 + $0x68] sm:$0xf]
  %v58 = vld [vmem:[%s0 + $0x6c] sm:$0xf]
  %v59 = vld [vmem:[%s0 + $0x70] sm:$0xf]
  %v60 = vld [vmem:[%s0 + $0x74] sm:$0xf]
  %v61 = vld [vmem:[%s0 + $0x78] sm:$0xf]
  %v62 = vld [vmem:[%s0 + $0x7c] sm:$0xf]
  %v63 = vld [vmem:[%s0 + $0x80] sm:$0xf]
  %v64 = vld [vmem:[%s0 + $0x84] sm:$0xf]
  %v65 = vld [vmem:[%s0 + $0x88] sm:$0xf]
  %v66 = vld [vmem:[%s0 + $0x8c] sm:$0xf]
  %v67 = vld [vmem:[%s0 + $0x90] sm:$0xf]
  %v68 = vld [vmem:[%s0 + $0x94] sm:$0xf]
  %v69 = vld [vmem:[%s0 + $0x98] sm:$0xf]
  %v70 = vld [vmem:[%s0 + $0x9c] sm:$0xf]
  %v71 = vld [vmem:[%s0 + $0xa0] sm:$0xf]
  %v72 = vld [vmem:[%s0 + $0xa4] sm:$0xf]
  %v73 = vld [vmem:[%s0 + $0xa8] sm:$0xf]
  %v74 = vld [vmem:[%s0 + $0xac] sm:$0xf]
  %v75 = vld [vmem:[%s0 + $0xb0] sm:$0xf]
  %v76 = vld [vmem:[%s0 + $0xb4] sm:$0xf]
  %v77 = vld [vmem:[%s0 + $0xb8] sm:$0xf]
  %v78 = vld [vmem:[%s0 + $0xbc] sm:$0xf]
  %v79 = vld [vmem:[%s0 + $0xc0] sm:$0xf]
  %v80 = vld [vmem:[%s0 + $0xc4] sm:$0xf]
  %v81 = vld [vmem:[%s0 + $0xc8] sm:$0xf]
  %v82 = vld [vmem:[%s0 + $0xcc] sm:$0xf]
  %v83 = vld [vmem:[%s0 + $0xd0] sm:$0xf]
  %v84 = vld [vmem:[%s0 + $0xd4] sm:$0xf]
  %v85 = vld [vmem:[%s0 + $0xd8] sm:$0xf]
  %v86 = vld [vmem:[%s0 + $0xdc] sm:$0xf]
  %v87 = vld [vmem:[%s0 + $0xe0] sm:$0xf]
  %v88 = vld [vmem:[%s0 + $0xe4] sm:$0xf]
  %v89 = vld [vmem:[%s0 + $0xe8] sm:$0xf]
  %v90 = vld [vmem:[%s0 + $0xec] sm:$0xf]
  %v91 = vld [vmem:[%s0 + $0xf0] sm:$0xf]
  %v92 = vld [vmem:[%s0 + $0xf4] sm:$0xf]
  %v93 = vld [vmem:[%s0 + $0xf8] sm:$0xf]
  %v94 = vld [vmem:[%s0 + $0xfc] sm:$0xf]
  %v111 = vunpack.c.l.b16 %v15
  %v112 = vunpack.c.h.b16 %v15
  %v113 = vunpack.c.l.b16 %v16
  %v114 = vunpack.c.h.b16 %v16
  %v115 = vunpack.c.l.b16 %v17
  %v116 = vunpack.c.h.b16 %v17
  %v117 = vunpack.c.l.b16 %v18
  %v118 = vunpack.c.h.b16 %v18
  %v119 = vunpack.c.l.b16 %v19
  %v120 = vunpack.c.h.b16 %v19
  %v121 = vunpack.c.l.b16 %v20
  %v122 = vunpack.c.h.b16 %v20
  %v123 = vunpack.c.l.b16 %v21
  %v124 = vunpack.c.h.b16 %v21
  %v125 = vunpack.c.l.b16 %v22
  %v126 = vunpack.c.h.b16 %v22
  %v127 = vunpack.c.l.b16 %v23
  %v128 = vunpack.c.h.b16 %v23
  %v129 = vunpack.c.l.b16 %v24
  %v130 = vunpack.c.h.b16 %v24
  %v131 = vunpack.c.l.b16 %v25
  %v132 = vunpack.c.h.b16 %v25
  %v133 = vunpack.c.l.b16 %v26
  %v134 = vunpack.c.h.b16 %v26
  %v135 = vunpack.c.l.b16 %v27
  %v136 = vunpack.c.h.b16 %v27
  %v137 = vunpack.c.l.b16 %v28
  %v138 = vunpack.c.h.b16 %v28
  %v139 = vunpack.c.l.b16 %v29
  %v140 = vunpack.c.h.b16 %v29
  %v141 = vunpack.c.l.b16 %v30
  %v142 = vunpack.c.h.b16 %v30
  %v143 = vpack.c.b16 %v115, %v111
  %v144 = vpack.c.b16 %v116, %v112
  %v145 = vpack.c.b16 %v117, %v113
  %v146 = vpack.c.b16 %v118, %v114
  %v147 = vpack.c.b16 %v123, %v119
  %v148 = vpack.c.b16 %v124, %v120
  %v149 = vpack.c.b16 %v125, %v121
  %v150 = vpack.c.b16 %v126, %v122
  %v151 = vpack.c.b16 %v131, %v127
  %v152 = vpack.c.b16 %v132, %v128
  %v153 = vpack.c.b16 %v133, %v129
  %v154 = vpack.c.b16 %v134, %v130
  %v155 = vpack.c.b16 %v139, %v135
  %v156 = vpack.c.b16 %v140, %v136
  %v157 = vpack.c.b16 %v141, %v137
  %v158 = vpack.c.b16 %v142, %v138
  %v239 = vunpack.c.l.b16 %v31
  %v240 = vunpack.c.l.b16 %v32
  %v241 = vunpack.c.l.b16 %v33
  %v242 = vunpack.c.l.b16 %v34
  %v243 = vunpack.c.l.b16 %v35
  %v244 = vunpack.c.l.b16 %v36
  %v245 = vunpack.c.l.b16 %v37
  %v246 = vunpack.c.l.b16 %v38
  %v247 = vunpack.c.l.b16 %v39
  %v248 = vunpack.c.l.b16 %v40
  %v249 = vunpack.c.l.b16 %v41
  %v250 = vunpack.c.l.b16 %v42
  %v251 = vunpack.c.l.b16 %v43
  %v252 = vunpack.c.l.b16 %v44
  %v253 = vunpack.c.l.b16 %v45
  %v254 = vunpack.c.l.b16 %v46
  %v255 = vunpack.c.l.b16 %v47
  %v256 = vunpack.c.l.b16 %v48
  %v257 = vunpack.c.l.b16 %v49
  %v258 = vunpack.c.l.b16 %v50
  %v259 = vunpack.c.l.b16 %v51
  %v260 = vunpack.c.l.b16 %v52
  %v261 = vunpack.c.l.b16 %v53
  %v262 = vunpack.c.l.b16 %v54
  %v263 = vunpack.c.l.b16 %v55
  %v264 = vunpack.c.l.b16 %v56
  %v265 = vunpack.c.l.b16 %v57
  %v266 = vunpack.c.l.b16 %v58
  %v267 = vunpack.c.l.b16 %v59
  %v268 = vunpack.c.l.b16 %v60
  %v269 = vunpack.c.l.b16 %v61
  %v270 = vunpack.c.l.b16 %v62
  %v271 = vunpack.c.l.b16 %v63
  %v272 = vunpack.c.l.b16 %v64
  %v273 = vunpack.c.l.b16 %v65
  %v274 = vunpack.c.l.b16 %v66
  %v275 = vunpack.c.l.b16 %v67
  %v276 = vunpack.c.l.b16 %v68
  %v277 = vunpack.c.l.b16 %v69
  %v278 = vunpack.c.l.b16 %v70
  %v279 = vunpack.c.l.b16 %v71
  %v280 = vunpack.c.l.b16 %v72
  %v281 = vunpack.c.l.b16 %v73
  %v282 = vunpack.c.l.b16 %v74
  %v283 = vunpack.c.l.b16 %v75
  %v284 = vunpack.c.l.b16 %v76
  %v285 = vunpack.c.l.b16 %v77
  %v286 = vunpack.c.l.b16 %v78
  %v287 = vunpack.c.l.b16 %v79
  %v288 = vunpack.c.l.b16 %v80
  %v289 = vunpack.c.l.b16 %v81
  %v290 = vunpack.c.l.b16 %v82
  %v291 = vunpack.c.l.b16 %v83
  %v292 = vunpack.c.l.b16 %v84
  %v293 = vunpack.c.l.b16 %v85
  %v294 = vunpack.c.l.b16 %v86
  %v295 = vunpack.c.l.b16 %v87
  %v296 = vunpack.c.l.b16 %v88
  %v297 = vunpack.c.l.b16 %v89
  %v298 = vunpack.c.l.b16 %v90
  %v299 = vunpack.c.l.b16 %v91
  %v300 = vunpack.c.l.b16 %v92
  %v301 = vunpack.c.l.b16 %v93
  %v302 = vunpack.c.l.b16 %v94
  %v303 = vpack.c.b16 %v240, %v239
  %v304 = vpack.c.b16 %v242, %v241
  %v305 = vpack.c.b16 %v244, %v243
  %v306 = vpack.c.b16 %v246, %v245
  %v307 = vpack.c.b16 %v248, %v247
  %v308 = vpack.c.b16 %v250, %v249
  %v309 = vpack.c.b16 %v252, %v251
  %v310 = vpack.c.b16 %v254, %v253
  %v311 = vpack.c.b16 %v256, %v255
  %v312 = vpack.c.b16 %v258, %v257
  %v313 = vpack.c.b16 %v260, %v259
  %v314 = vpack.c.b16 %v262, %v261
  %v315 = vpack.c.b16 %v264, %v263
  %v316 = vpack.c.b16 %v266, %v265
  %v317 = vpack.c.b16 %v268, %v267
  %v318 = vpack.c.b16 %v270, %v269
  %v319 = vpack.c.b16 %v272, %v271
  %v320 = vpack.c.b16 %v274, %v273
  %v321 = vpack.c.b16 %v276, %v275
  %v322 = vpack.c.b16 %v278, %v277
  %v323 = vpack.c.b16 %v280, %v279
  %v324 = vpack.c.b16 %v282, %v281
  %v325 = vpack.c.b16 %v284, %v283
  %v326 = vpack.c.b16 %v286, %v285
  %v327 = vpack.c.b16 %v288, %v287
  %v328 = vpack.c.b16 %v290, %v289
  %v329 = vpack.c.b16 %v292, %v291
  %v330 = vpack.c.b16 %v294, %v293
  %v331 = vpack.c.b16 %v296, %v295
  %v332 = vpack.c.b16 %v298, %v297
  %v333 = vpack.c.b16 %v300, %v299
  %v334 = vpack.c.b16 %v302, %v301
  %367 = vmatprep.subr.bf16.mxu0 0
  %368 = vmatpush1.bf16.msra.mxu0 %v303
  %369 = vmatprep.subr.bf16.mxu0 0
  %370 = vmatpush1.bf16.msra.mxu0 %v304
  %371 = vmatprep.subr.bf16.mxu0 0
  %372 = vmatpush1.bf16.msra.mxu0 %v305
  %373 = vmatprep.subr.bf16.mxu0 0
  %374 = vmatpush1.bf16.msra.mxu0 %v306
  %375 = vmatprep.subr.bf16.mxu0 0
  %376 = vmatpush1.bf16.msra.mxu0 %v307
  %377 = vmatprep.subr.bf16.mxu0 0
  %378 = vmatpush1.bf16.msra.mxu0 %v308
  %379 = vmatprep.subr.bf16.mxu0 0
  %380 = vmatpush1.bf16.msra.mxu0 %v309
  %381 = vmatprep.subr.bf16.mxu0 0
  %382 = vmatpush1.bf16.msra.mxu0 %v310
  %383 = vmatprep.subr.bf16.mxu0 0
  %384 = vmatpush1.bf16.msra.mxu0 %v311
  %385 = vmatprep.subr.bf16.mxu0 0
  %386 = vmatpush1.bf16.msra.mxu0 %v312
  %387 = vmatprep.subr.bf16.mxu0 0
  %388 = vmatpush1.bf16.msra.mxu0 %v313
  %389 = vmatprep.subr.bf16.mxu0 0
  %390 = vmatpush1.bf16.msra.mxu0 %v314
  %391 = vmatprep.subr.bf16.mxu0 0
  %392 = vmatpush1.bf16.msra.mxu0 %v315
  %393 = vmatprep.subr.bf16.mxu0 0
  %394 = vmatpush1.bf16.msra.mxu0 %v316
  %395 = vmatprep.subr.bf16.mxu0 0
  %396 = vmatpush1.bf16.msra.mxu0 %v317
  %397 = vmatprep.subr.bf16.mxu0 0
  %398 = vmatpush1.bf16.msra.mxu0 %v318
  %399 = vmatprep.mubr.bf16.mxu0 %v144
  %400 = vmatmul.mubr.bf16.gmra.mrb[0].mxu0 %v143
  %v401 = vpop.f32.mrb[0].mxu0
  %v402 = vadd.f32 0.0, %v401
  %v403 = vpop.f32.mrb[0].mxu0
  %v404 = vpop.f32.mrb[0].mxu0
  %v405 = vadd.f32 0.0, %v404
  %v406 = vpop.f32.mrb[0].mxu0
  %407 = vmatprep.mubr.bf16.mxu0 %v148
  %408 = vmatmul.mubr.bf16.gmra.mrb[0].mxu0 %v147
  %v409 = vpop.f32.mrb[0].mxu0
  %v410 = vadd.f32 0.0, %v409
  %v411 = vpop.f32.mrb[0].mxu0
  %v412 = vpop.f32.mrb[0].mxu0
  %v413 = vadd.f32 0.0, %v412
  %v414 = vpop.f32.mrb[0].mxu0
  %415 = vmatprep.mubr.bf16.mxu0 %v152
  %416 = vmatmul.mubr.bf16.gmra.mrb[0].mxu0 %v151
  %v417 = vpop.f32.mrb[0].mxu0
  %v418 = vadd.f32 0.0, %v417
  %v419 = vpop.f32.mrb[0].mxu0
  %v420 = vpop.f32.mrb[0].mxu0
  %v421 = vadd.f32 0.0, %v420
  %v422 = vpop.f32.mrb[0].mxu0
  %423 = vmatprep.mubr.bf16.mxu0 %v156
  %424 = vmatmul.mubr.bf16.gmra.mrb[0].mxu0 %v155
  %v425 = vpop.f32.mrb[0].mxu0
  %v426 = vadd.f32 0.0, %v425
  %v427 = vpop.f32.mrb[0].mxu0
  %v428 = vpop.f32.mrb[0].mxu0
  %v429 = vadd.f32 0.0, %v428
  %v430 = vpop.f32.mrb[0].mxu0
  %431 = vdwg.mxu0
  %432 = vmatprep.subr.bf16.mxu0 0
  %433 = vmatpush1.bf16.msra.mxu0 %v319
  %434 = vmatprep.subr.bf16.mxu0 0
  %435 = vmatpush1.bf16.msra.mxu0 %v320
  %436 = vmatprep.subr.bf16.mxu0 0
  %437 = vmatpush1.bf16.msra.mxu0 %v321
  %438 = vmatprep.subr.bf16.mxu0 0
  %439 = vmatpush1.bf16.msra.mxu0 %v322
  %440 = vmatprep.subr.bf16.mxu0 0
  %441 = vmatpush1.bf16.msra.mxu0 %v323
  %442 = vmatprep.subr.bf16.mxu0 0
  %443 = vmatpush1.bf16.msra.mxu0 %v324
  %444 = vmatprep.subr.bf16.mxu0 0
  %445 = vmatpush1.bf16.msra.mxu0 %v325
  %446 = vmatprep.subr.bf16.mxu0 0
  %447 = vmatpush1.bf16.msra.mxu0 %v326
  %448 = vmatprep.subr.bf16.mxu0 0
  %449 = vmatpush1.bf16.msra.mxu0 %v327
  %450 = vmatprep.subr.bf16.mxu0 0
  %451 = vmatpush1.bf16.msra.mxu0 %v328
  %452 = vmatprep.subr.bf16.mxu0 0
  %453 = vmatpush1.bf16.msra.mxu0 %v329
  %454 = vmatprep.subr.bf16.mxu0 0
  %455 = vmatpush1.bf16.msra.mxu0 %v330
  %456 = vmatprep.subr.bf16.mxu0 0
  %457 = vmatpush1.bf16.msra.mxu0 %v331
  %458 = vmatprep.subr.bf16.mxu0 0
  %459 = vmatpush1.bf16.msra.mxu0 %v332
  %460 = vmatprep.subr.bf16.mxu0 0
  %461 = vmatpush1.bf16.msra.mxu0 %v333
  %462 = vmatprep.subr.bf16.mxu0 0
  %463 = vmatpush1.bf16.msra.mxu0 %v334
  %464 = vmatprep.mubr.bf16.mxu0 %v146
  %465 = vmatmul.mubr.bf16.gmra.mrb[0].mxu0 %v145
  %v466 = vpop.f32.mrb[0].mxu0
  %v467 = vadd.f32 %v402, %v466
  %v468 = vpop.f32.mrb[0].mxu0
  %v469 = vpop.f32.mrb[0].mxu0
  %v470 = vadd.f32 %v405, %v469
  %v471 = vpop.f32.mrb[0].mxu0
  %472 = vmatprep.mubr.bf16.mxu0 %v150
  %473 = vmatmul.mubr.bf16.gmra.mrb[0].mxu0 %v149
  %v474 = vpop.f32.mrb[0].mxu0
  %v475 = vadd.f32 %v410, %v474
  %v476 = vpop.f32.mrb[0].mxu0
  %v477 = vpop.f32.mrb[0].mxu0
  %v478 = vadd.f32 %v413, %v477
  %v479 = vpop.f32.mrb[0].mxu0
  %480 = vmatprep.mubr.bf16.mxu0 %v154
  %481 = vmatmul.mubr.bf16.gmra.mrb[0].mxu0 %v153
  %v482 = vpop.f32.mrb[0].mxu0
  %v483 = vadd.f32 %v418, %v482
  %v484 = vpop.f32.mrb[0].mxu0
  %v485 = vpop.f32.mrb[0].mxu0
  %v486 = vadd.f32 %v421, %v485
  %v487 = vpop.f32.mrb[0].mxu0
  %488 = vmatprep.mubr.bf16.mxu0 %v158
  %489 = vmatmul.mubr.bf16.gmra.mrb[0].mxu0 %v157
  %v490 = vpop.f32.mrb[0].mxu0
  %v491 = vadd.f32 %v426, %v490
  %v492 = vpop.f32.mrb[0].mxu0
  %v493 = vpop.f32.mrb[0].mxu0
  %v494 = vadd.f32 %v429, %v493
  %v495 = vpop.f32.mrb[0].mxu0
  %496 = vdwg.mxu0
  %s497 = scalar_lea.vmem %s0, 256
  %v498 = vld [vmem:[%s497] sm:$0xf]
  %v499 = vld [vmem:[%s497 + $0x4] sm:$0xf]
  %v500 = vld [vmem:[%s497 + $0x8] sm:$0xf]
  %v501 = vld [vmem:[%s497 + $0xc] sm:$0xf]
  %v502 = vld [vmem:[%s497 + $0x10] sm:$0xf]
  %v503 = vld [vmem:[%s497 + $0x14] sm:$0xf]
  %v504 = vld [vmem:[%s497 + $0x18] sm:$0xf]
  %v505 = vld [vmem:[%s497 + $0x1c] sm:$0xf]
  %v506 = vld [vmem:[%s497 + $0x20] sm:$0xf]
  %v507 = vld [vmem:[%s497 + $0x24] sm:$0xf]
  %v508 = vld [vmem:[%s497 + $0x28] sm:$0xf]
  %v509 = vld [vmem:[%s497 + $0x2c] sm:$0xf]
  %v510 = vld [vmem:[%s497 + $0x30] sm:$0xf]
  %v511 = vld [vmem:[%s497 + $0x34] sm:$0xf]
  %v512 = vld [vmem:[%s497 + $0x38] sm:$0xf]
  %v513 = vld [vmem:[%s497 + $0x3c] sm:$0xf]
  %v514 = vld [vmem:[%s497 + $0x40] sm:$0xf]
  %v515 = vld [vmem:[%s497 + $0x44] sm:$0xf]
  %v516 = vld [vmem:[%s497 + $0x48] sm:$0xf]
  %v517 = vld [vmem:[%s497 + $0x4c] sm:$0xf]
  %v518 = vld [vmem:[%s497 + $0x50] sm:$0xf]
  %v519 = vld [vmem:[%s497 + $0x54] sm:$0xf]
  %v520 = vld [vmem:[%s497 + $0x58] sm:$0xf]
  %v521 = vld [vmem:[%s497 + $0x5c] sm:$0xf]
  %v522 = vld [vmem:[%s497 + $0x60] sm:$0xf]
  %v523 = vld [vmem:[%s497 + $0x64] sm:$0xf]
  %v524 = vld [vmem:[%s497 + $0x68] sm:$0xf]
  %v525 = vld [vmem:[%s497 + $0x6c] sm:$0xf]
  %v526 = vld [vmem:[%s497 + $0x70] sm:$0xf]
  %v527 = vld [vmem:[%s497 + $0x74] sm:$0xf]
  %v528 = vld [vmem:[%s497 + $0x78] sm:$0xf]
  %v529 = vld [vmem:[%s497 + $0x7c] sm:$0xf]
  %v530 = vld [vmem:[%s497 + $0x80] sm:$0xf]
  %v531 = vld [vmem:[%s497 + $0x84] sm:$0xf]
  %v532 = vld [vmem:[%s497 + $0x88] sm:$0xf]
  %v533 = vld [vmem:[%s497 + $0x8c] sm:$0xf]
  %v534 = vld [vmem:[%s497 + $0x90] sm:$0xf]
  %v535 = vld [vmem:[%s497 + $0x94] sm:$0xf]
  %v536 = vld [vmem:[%s497 + $0x98] sm:$0xf]
  %v537 = vld [vmem:[%s497 + $0x9c] sm:$0xf]
  %v538 = vld [vmem:[%s497 + $0xa0] sm:$0xf]
  %v539 = vld [vmem:[%s497 + $0xa4] sm:$0xf]
  %v540 = vld [vmem:[%s497 + $0xa8] sm:$0xf]
  %v541 = vld [vmem:[%s497 + $0xac] sm:$0xf]
  %v542 = vld [vmem:[%s497 + $0xb0] sm:$0xf]
  %v543 = vld [vmem:[%s497 + $0xb4] sm:$0xf]
  %v544 = vld [vmem:[%s497 + $0xb8] sm:$0xf]
  %v545 = vld [vmem:[%s497 + $0xbc] sm:$0xf]
  %v546 = vld [vmem:[%s497 + $0xc0] sm:$0xf]
  %v547 = vld [vmem:[%s497 + $0xc4] sm:$0xf]
  %v548 = vld [vmem:[%s497 + $0xc8] sm:$0xf]
  %v549 = vld [vmem:[%s497 + $0xcc] sm:$0xf]
  %v550 = vld [vmem:[%s497 + $0xd0] sm:$0xf]
  %v551 = vld [vmem:[%s497 + $0xd4] sm:$0xf]
  %v552 = vld [vmem:[%s497 + $0xd8] sm:$0xf]
  %v553 = vld [vmem:[%s497 + $0xdc] sm:$0xf]
  %v554 = vld [vmem:[%s497 + $0xe0] sm:$0xf]
  %v555 = vld [vmem:[%s497 + $0xe4] sm:$0xf]
  %v556 = vld [vmem:[%s497 + $0xe8] sm:$0xf]
  %v557 = vld [vmem:[%s497 + $0xec] sm:$0xf]
  %v558 = vld [vmem:[%s497 + $0xf0] sm:$0xf]
  %v559 = vld [vmem:[%s497 + $0xf4] sm:$0xf]
  %v560 = vld [vmem:[%s497 + $0xf8] sm:$0xf]
  %v561 = vld [vmem:[%s497 + $0xfc] sm:$0xf]
  %v626 = vunpack.c.l.b16 %v498
  %v627 = vunpack.c.l.b16 %v499
  %v628 = vunpack.c.l.b16 %v500
  %v629 = vunpack.c.l.b16 %v501
  %v630 = vunpack.c.l.b16 %v502
  %v631 = vunpack.c.l.b16 %v503
  %v632 = vunpack.c.l.b16 %v504
  %v633 = vunpack.c.l.b16 %v505
  %v634 = vunpack.c.l.b16 %v506
  %v635 = vunpack.c.l.b16 %v507
  %v636 = vunpack.c.l.b16 %v508
  %v637 = vunpack.c.l.b16 %v509
  %v638 = vunpack.c.l.b16 %v510
  %v639 = vunpack.c.l.b16 %v511
  %v640 = vunpack.c.l.b16 %v512
  %v641 = vunpack.c.l.b16 %v513
  %v642 = vunpack.c.l.b16 %v514
  %v643 = vunpack.c.l.b16 %v515
  %v644 = vunpack.c.l.b16 %v516
  %v645 = vunpack.c.l.b16 %v517
  %v646 = vunpack.c.l.b16 %v518
  %v647 = vunpack.c.l.b16 %v519
  %v648 = vunpack.c.l.b16 %v520
  %v649 = vunpack.c.l.b16 %v521
  %v650 = vunpack.c.l.b16 %v522
  %v651 = vunpack.c.l.b16 %v523
  %v652 = vunpack.c.l.b16 %v524
  %v653 = vunpack.c.l.b16 %v525
  %v654 = vunpack.c.l.b16 %v526
  %v655 = vunpack.c.l.b16 %v527
  %v656 = vunpack.c.l.b16 %v528
  %v657 = vunpack.c.l.b16 %v529
  %v658 = vunpack.c.l.b16 %v530
  %v659 = vunpack.c.l.b16 %v531
  %v660 = vunpack.c.l.b16 %v532
  %v661 = vunpack.c.l.b16 %v533
  %v662 = vunpack.c.l.b16 %v534
  %v663 = vunpack.c.l.b16 %v535
  %v664 = vunpack.c.l.b16 %v536
  %v665 = vunpack.c.l.b16 %v537
  %v666 = vunpack.c.l.b16 %v538
  %v667 = vunpack.c.l.b16 %v539
  %v668 = vunpack.c.l.b16 %v540
  %v669 = vunpack.c.l.b16 %v541
  %v670 = vunpack.c.l.b16 %v542
  %v671 = vunpack.c.l.b16 %v543
  %v672 = vunpack.c.l.b16 %v544
  %v673 = vunpack.c.l.b16 %v545
  %v674 = vunpack.c.l.b16 %v546
  %v675 = vunpack.c.l.b16 %v547
  %v676 = vunpack.c.l.b16 %v548
  %v677 = vunpack.c.l.b16 %v549
  %v678 = vunpack.c.l.b16 %v550
  %v679 = vunpack.c.l.b16 %v551
  %v680 = vunpack.c.l.b16 %v552
  %v681 = vunpack.c.l.b16 %v553
  %v682 = vunpack.c.l.b16 %v554
  %v683 = vunpack.c.l.b16 %v555
  %v684 = vunpack.c.l.b16 %v556
  %v685 = vunpack.c.l.b16 %v557
  %v686 = vunpack.c.l.b16 %v558
  %v687 = vunpack.c.l.b16 %v559
  %v688 = vunpack.c.l.b16 %v560
  %v689 = vunpack.c.l.b16 %v561
  %v690 = vpack.c.b16 %v627, %v626
  %v691 = vpack.c.b16 %v629, %v628
  %v692 = vpack.c.b16 %v631, %v630
  %v693 = vpack.c.b16 %v633, %v632
  %v694 = vpack.c.b16 %v635, %v634
  %v695 = vpack.c.b16 %v637, %v636
  %v696 = vpack.c.b16 %v639, %v638
  %v697 = vpack.c.b16 %v641, %v640
  %v698 = vpack.c.b16 %v643, %v642
  %v699 = vpack.c.b16 %v645, %v644
  %v700 = vpack.c.b16 %v647, %v646
  %v701 = vpack.c.b16 %v649, %v648
  %v702 = vpack.c.b16 %v651, %v650
  %v703 = vpack.c.b16 %v653, %v652
  %v704 = vpack.c.b16 %v655, %v654
  %v705 = vpack.c.b16 %v657, %v656
  %v706 = vpack.c.b16 %v659, %v658
  %v707 = vpack.c.b16 %v661, %v660
  %v708 = vpack.c.b16 %v663, %v662
  %v709 = vpack.c.b16 %v665, %v664
  %v710 = vpack.c.b16 %v667, %v666
  %v711 = vpack.c.b16 %v669, %v668
  %v712 = vpack.c.b16 %v671, %v670
  %v713 = vpack.c.b16 %v673, %v672
  %v714 = vpack.c.b16 %v675, %v674
  %v715 = vpack.c.b16 %v677, %v676
  %v716 = vpack.c.b16 %v679, %v678
  %v717 = vpack.c.b16 %v681, %v680
  %v718 = vpack.c.b16 %v683, %v682
  %v719 = vpack.c.b16 %v685, %v684
  %v720 = vpack.c.b16 %v687, %v686
  %v721 = vpack.c.b16 %v689, %v688
  %754 = vmatprep.subr.bf16.mxu0 0
  %755 = vmatpush1.bf16.msra.mxu0 %v690
  %756 = vmatprep.subr.bf16.mxu0 0
  %757 = vmatpush1.bf16.msra.mxu0 %v691
  %758 = vmatprep.subr.bf16.mxu0 0
  %759 = vmatpush1.bf16.msra.mxu0 %v692
  %760 = vmatprep.subr.bf16.mxu0 0
  %761 = vmatpush1.bf16.msra.mxu0 %v693
  %762 = vmatprep.subr.bf16.mxu0 0
  %763 = vmatpush1.bf16.msra.mxu0 %v694
  %764 = vmatprep.subr.bf16.mxu0 0
  %765 = vmatpush1.bf16.msra.mxu0 %v695
  %766 = vmatprep.subr.bf16.mxu0 0
  %767 = vmatpush1.bf16.msra.mxu0 %v696
  %768 = vmatprep.subr.bf16.mxu0 0
  %769 = vmatpush1.bf16.msra.mxu0 %v697
  %770 = vmatprep.subr.bf16.mxu0 0
  %771 = vmatpush1.bf16.msra.mxu0 %v698
  %772 = vmatprep.subr.bf16.mxu0 0
  %773 = vmatpush1.bf16.msra.mxu0 %v699
  %774 = vmatprep.subr.bf16.mxu0 0
  %775 = vmatpush1.bf16.msra.mxu0 %v700
  %776 = vmatprep.subr.bf16.mxu0 0
  %777 = vmatpush1.bf16.msra.mxu0 %v701
  %778 = vmatprep.subr.bf16.mxu0 0
  %779 = vmatpush1.bf16.msra.mxu0 %v702
  %780 = vmatprep.subr.bf16.mxu0 0
  %781 = vmatpush1.bf16.msra.mxu0 %v703
  %782 = vmatprep.subr.bf16.mxu0 0
  %783 = vmatpush1.bf16.msra.mxu0 %v704
  %784 = vmatprep.subr.bf16.mxu0 0
  %785 = vmatpush1.bf16.msra.mxu0 %v705
  %786 = vmatprep.mubr.bf16.mxu0 %v144
  %787 = vmatmul.mubr.bf16.gmra.mrb[0].mxu0 %v143
  %v788 = vpop.f32.mrb[0].mxu0
  %v789 = vadd.f32 0.0, %v788
  %v790 = vpop.f32.mrb[0].mxu0
  %v791 = vpop.f32.mrb[0].mxu0
  %v792 = vadd.f32 0.0, %v791
  %v793 = vpop.f32.mrb[0].mxu0
  %794 = vmatprep.mubr.bf16.mxu0 %v148
  %795 = vmatmul.mubr.bf16.gmra.mrb[0].mxu0 %v147
  %v796 = vpop.f32.mrb[0].mxu0
  %v797 = vadd.f32 0.0, %v796
  %v798 = vpop.f32.mrb[0].mxu0
  %v799 = vpop.f32.mrb[0].mxu0
  %v800 = vadd.f32 0.0, %v799
  %v801 = vpop.f32.mrb[0].mxu0
  %802 = vmatprep.mubr.bf16.mxu0 %v152
  %803 = vmatmul.mubr.bf16.gmra.mrb[0].mxu0 %v151
  %v804 = vpop.f32.mrb[0].mxu0
  %v805 = vadd.f32 0.0, %v804
  %v806 = vpop.f32.mrb[0].mxu0
  %v807 = vpop.f32.mrb[0].mxu0
  %v808 = vadd.f32 0.0, %v807
  %v809 = vpop.f32.mrb[0].mxu0
  %810 = vmatprep.mubr.bf16.mxu0 %v156
  %811 = vmatmul.mubr.bf16.gmra.mrb[0].mxu0 %v155
  %v812 = vpop.f32.mrb[0].mxu0
  %v813 = vadd.f32 0.0, %v812
  %v814 = vpop.f32.mrb[0].mxu0
  %v815 = vpop.f32.mrb[0].mxu0
  %v816 = vadd.f32 0.0, %v815
  %v817 = vpop.f32.mrb[0].mxu0
  %818 = vdwg.mxu0
  %819 = vmatprep.subr.bf16.mxu0 0
  %820 = vmatpush1.bf16.msra.mxu0 %v706
  %821 = vmatprep.subr.bf16.mxu0 0
  %822 = vmatpush1.bf16.msra.mxu0 %v707
  %823 = vmatprep.subr.bf16.mxu0 0
  %824 = vmatpush1.bf16.msra.mxu0 %v708
  %825 = vmatprep.subr.bf16.mxu0 0
  %826 = vmatpush1.bf16.msra.mxu0 %v709
  %827 = vmatprep.subr.bf16.mxu0 0
  %828 = vmatpush1.bf16.msra.mxu0 %v710
  %829 = vmatprep.subr.bf16.mxu0 0
  %830 = vmatpush1.bf16.msra.mxu0 %v711
  %831 = vmatprep.subr.bf16.mxu0 0
  %832 = vmatpush1.bf16.msra.mxu0 %v712
  %833 = vmatprep.subr.bf16.mxu0 0
  %834 = vmatpush1.bf16.msra.mxu0 %v713
  %835 = vmatprep.subr.bf16.mxu0 0
  %836 = vmatpush1.bf16.msra.mxu0 %v714
  %837 = vmatprep.subr.bf16.mxu0 0
  %838 = vmatpush1.bf16.msra.mxu0 %v715
  %839 = vmatprep.subr.bf16.mxu0 0
  %840 = vmatpush1.bf16.msra.mxu0 %v716
  %841 = vmatprep.subr.bf16.mxu0 0
  %842 = vmatpush1.bf16.msra.mxu0 %v717
  %843 = vmatprep.subr.bf16.mxu0 0
  %844 = vmatpush1.bf16.msra.mxu0 %v718
  %845 = vmatprep.subr.bf16.mxu0 0
  %846 = vmatpush1.bf16.msra.mxu0 %v719
  %847 = vmatprep.subr.bf16.mxu0 0
  %848 = vmatpush1.bf16.msra.mxu0 %v720
  %849 = vmatprep.subr.bf16.mxu0 0
  %850 = vmatpush1.bf16.msra.mxu0 %v721
  %851 = vmatprep.mubr.bf16.mxu0 %v146
  %852 = vmatmul.mubr.bf16.gmra.mrb[0].mxu0 %v145
  %v853 = vpop.f32.mrb[0].mxu0
  %v854 = vadd.f32 %v789, %v853
  %v855 = vpop.f32.mrb[0].mxu0
  %v856 = vpop.f32.mrb[0].mxu0
  %v857 = vadd.f32 %v792, %v856
  %v858 = vpop.f32.mrb[0].mxu0
  %859 = vmatprep.mubr.bf16.mxu0 %v150
  %860 = vmatmul.mubr.bf16.gmra.mrb[0].mxu0 %v149
  %v861 = vpop.f32.mrb[0].mxu0
  %v862 = vadd.f32 %v797, %v861
  %v863 = vpop.f32.mrb[0].mxu0
  %v864 = vpop.f32.mrb[0].mxu0
  %v865 = vadd.f32 %v800, %v864
  %v866 = vpop.f32.mrb[0].mxu0
  %867 = vmatprep.mubr.bf16.mxu0 %v154
  %868 = vmatmul.mubr.bf16.gmra.mrb[0].mxu0 %v153
  %v869 = vpop.f32.mrb[0].mxu0
  %v870 = vadd.f32 %v805, %v869
  %v871 = vpop.f32.mrb[0].mxu0
  %v872 = vpop.f32.mrb[0].mxu0
  %v873 = vadd.f32 %v808, %v872
  %v874 = vpop.f32.mrb[0].mxu0
  %875 = vmatprep.mubr.bf16.mxu0 %v158
  %876 = vmatmul.mubr.bf16.gmra.mrb[0].mxu0 %v157
  %v877 = vpop.f32.mrb[0].mxu0
  %v878 = vadd.f32 %v813, %v877
  %v879 = vpop.f32.mrb[0].mxu0
  %v880 = vpop.f32.mrb[0].mxu0
  %v881 = vadd.f32 %v816, %v880
  %v882 = vpop.f32.mrb[0].mxu0
  %883 = vdwg.mxu0
  %v884 = vmax.f32 %v467, %v854
  %v885 = vmax.f32 %v470, %v857
  %v886 = vmax.f32 %v475, %v862
  %v887 = vmax.f32 %v478, %v865
  %v888 = vmax.f32 %v483, %v870
  %v889 = vmax.f32 %v486, %v873
  %v890 = vmax.f32 %v491, %v878
  %v891 = vmax.f32 %v494, %v881
  %s892 = scalar_lea.vmem %s0, 512
  %v893 = vld [vmem:[%s892] sm:$0xf]
  %v894 = vld [vmem:[%s892 + $0x4] sm:$0xf]
  %v895 = vld [vmem:[%s892 + $0x8] sm:$0xf]
  %v896 = vld [vmem:[%s892 + $0xc] sm:$0xf]
  %v897 = vld [vmem:[%s892 + $0x10] sm:$0xf]
  %v898 = vld [vmem:[%s892 + $0x14] sm:$0xf]
  %v899 = vld [vmem:[%s892 + $0x18] sm:$0xf]
  %v900 = vld [vmem:[%s892 + $0x1c] sm:$0xf]
  %v901 = vld [vmem:[%s892 + $0x20] sm:$0xf]
  %v902 = vld [vmem:[%s892 + $0x24] sm:$0xf]
  %v903 = vld [vmem:[%s892 + $0x28] sm:$0xf]
  %v904 = vld [vmem:[%s892 + $0x2c] sm:$0xf]
  %v905 = vld [vmem:[%s892 + $0x30] sm:$0xf]
  %v906 = vld [vmem:[%s892 + $0x34] sm:$0xf]
  %v907 = vld [vmem:[%s892 + $0x38] sm:$0xf]
  %v908 = vld [vmem:[%s892 + $0x3c] sm:$0xf]
  %v909 = vld [vmem:[%s892 + $0x40] sm:$0xf]
  %v910 = vld [vmem:[%s892 + $0x44] sm:$0xf]
  %v911 = vld [vmem:[%s892 + $0x48] sm:$0xf]
  %v912 = vld [vmem:[%s892 + $0x4c] sm:$0xf]
  %v913 = vld [vmem:[%s892 + $0x50] sm:$0xf]
  %v914 = vld [vmem:[%s892 + $0x54] sm:$0xf]
  %v915 = vld [vmem:[%s892 + $0x58] sm:$0xf]
  %v916 = vld [vmem:[%s892 + $0x5c] sm:$0xf]
  %v917 = vld [vmem:[%s892 + $0x60] sm:$0xf]
  %v918 = vld [vmem:[%s892 + $0x64] sm:$0xf]
  %v919 = vld [vmem:[%s892 + $0x68] sm:$0xf]
  %v920 = vld [vmem:[%s892 + $0x6c] sm:$0xf]
  %v921 = vld [vmem:[%s892 + $0x70] sm:$0xf]
  %v922 = vld [vmem:[%s892 + $0x74] sm:$0xf]
  %v923 = vld [vmem:[%s892 + $0x78] sm:$0xf]
  %v924 = vld [vmem:[%s892 + $0x7c] sm:$0xf]
  %v925 = vld [vmem:[%s892 + $0x80] sm:$0xf]
  %v926 = vld [vmem:[%s892 + $0x84] sm:$0xf]
  %v927 = vld [vmem:[%s892 + $0x88] sm:$0xf]
  %v928 = vld [vmem:[%s892 + $0x8c] sm:$0xf]
  %v929 = vld [vmem:[%s892 + $0x90] sm:$0xf]
  %v930 = vld [vmem:[%s892 + $0x94] sm:$0xf]
  %v931 = vld [vmem:[%s892 + $0x98] sm:$0xf]
  %v932 = vld [vmem:[%s892 + $0x9c] sm:$0xf]
  %v933 = vld [vmem:[%s892 + $0xa0] sm:$0xf]
  %v934 = vld [vmem:[%s892 + $0xa4] sm:$0xf]
  %v935 = vld [vmem:[%s892 + $0xa8] sm:$0xf]
  %v936 = vld [vmem:[%s892 + $0xac] sm:$0xf]
  %v937 = vld [vmem:[%s892 + $0xb0] sm:$0xf]
  %v938 = vld [vmem:[%s892 + $0xb4] sm:$0xf]
  %v939 = vld [vmem:[%s892 + $0xb8] sm:$0xf]
  %v940 = vld [vmem:[%s892 + $0xbc] sm:$0xf]
  %v941 = vld [vmem:[%s892 + $0xc0] sm:$0xf]
  %v942 = vld [vmem:[%s892 + $0xc4] sm:$0xf]
  %v943 = vld [vmem:[%s892 + $0xc8] sm:$0xf]
  %v944 = vld [vmem:[%s892 + $0xcc] sm:$0xf]
  %v945 = vld [vmem:[%s892 + $0xd0] sm:$0xf]
  %v946 = vld [vmem:[%s892 + $0xd4] sm:$0xf]
  %v947 = vld [vmem:[%s892 + $0xd8] sm:$0xf]
  %v948 = vld [vmem:[%s892 + $0xdc] sm:$0xf]
  %v949 = vld [vmem:[%s892 + $0xe0] sm:$0xf]
  %v950 = vld [vmem:[%s892 + $0xe4] sm:$0xf]
  %v951 = vld [vmem:[%s892 + $0xe8] sm:$0xf]
  %v952 = vld [vmem:[%s892 + $0xec] sm:$0xf]
  %v953 = vld [vmem:[%s892 + $0xf0] sm:$0xf]
  %v954 = vld [vmem:[%s892 + $0xf4] sm:$0xf]
  %v955 = vld [vmem:[%s892 + $0xf8] sm:$0xf]
  %v956 = vld [vmem:[%s892 + $0xfc] sm:$0xf]
  %v1021 = vunpack.c.l.b16 %v893
  %v1022 = vunpack.c.l.b16 %v894
  %v1023 = vunpack.c.l.b16 %v895
  %v1024 = vunpack.c.l.b16 %v896
  %v1025 = vunpack.c.l.b16 %v897
  %v1026 = vunpack.c.l.b16 %v898
  %v1027 = vunpack.c.l.b16 %v899
  %v1028 = vunpack.c.l.b16 %v900
  %v1029 = vunpack.c.l.b16 %v901
  %v1030 = vunpack.c.l.b16 %v902
  %v1031 = vunpack.c.l.b16 %v903
  %v1032 = vunpack.c.l.b16 %v904
  %v1033 = vunpack.c.l.b16 %v905
  %v1034 = vunpack.c.l.b16 %v906
  %v1035 = vunpack.c.l.b16 %v907
  %v1036 = vunpack.c.l.b16 %v908
  %v1037 = vunpack.c.l.b16 %v909
  %v1038 = vunpack.c.l.b16 %v910
  %v1039 = vunpack.c.l.b16 %v911
  %v1040 = vunpack.c.l.b16 %v912
  %v1041 = vunpack.c.l.b16 %v913
  %v1042 = vunpack.c.l.b16 %v914
  %v1043 = vunpack.c.l.b16 %v915
  %v1044 = vunpack.c.l.b16 %v916
  %v1045 = vunpack.c.l.b16 %v917
  %v1046 = vunpack.c.l.b16 %v918
  %v1047 = vunpack.c.l.b16 %v919
  %v1048 = vunpack.c.l.b16 %v920
  %v1049 = vunpack.c.l.b16 %v921
  %v1050 = vunpack.c.l.b16 %v922
  %v1051 = vunpack.c.l.b16 %v923
  %v1052 = vunpack.c.l.b16 %v924
  %v1053 = vunpack.c.l.b16 %v925
  %v1054 = vunpack.c.l.b16 %v926
  %v1055 = vunpack.c.l.b16 %v927
  %v1056 = vunpack.c.l.b16 %v928
  %v1057 = vunpack.c.l.b16 %v929
  %v1058 = vunpack.c.l.b16 %v930
  %v1059 = vunpack.c.l.b16 %v931
  %v1060 = vunpack.c.l.b16 %v932
  %v1061 = vunpack.c.l.b16 %v933
  %v1062 = vunpack.c.l.b16 %v934
  %v1063 = vunpack.c.l.b16 %v935
  %v1064 = vunpack.c.l.b16 %v936
  %v1065 = vunpack.c.l.b16 %v937
  %v1066 = vunpack.c.l.b16 %v938
  %v1067 = vunpack.c.l.b16 %v939
  %v1068 = vunpack.c.l.b16 %v940
  %v1069 = vunpack.c.l.b16 %v941
  %v1070 = vunpack.c.l.b16 %v942
  %v1071 = vunpack.c.l.b16 %v943
  %v1072 = vunpack.c.l.b16 %v944
  %v1073 = vunpack.c.l.b16 %v945
  %v1074 = vunpack.c.l.b16 %v946
  %v1075 = vunpack.c.l.b16 %v947
  %v1076 = vunpack.c.l.b16 %v948
  %v1077 = vunpack.c.l.b16 %v949
  %v1078 = vunpack.c.l.b16 %v950
  %v1079 = vunpack.c.l.b16 %v951
  %v1080 = vunpack.c.l.b16 %v952
  %v1081 = vunpack.c.l.b16 %v953
  %v1082 = vunpack.c.l.b16 %v954
  %v1083 = vunpack.c.l.b16 %v955
  %v1084 = vunpack.c.l.b16 %v956
  %v1085 = vpack.c.b16 %v1022, %v1021
  %v1086 = vpack.c.b16 %v1024, %v1023
  %v1087 = vpack.c.b16 %v1026, %v1025
  %v1088 = vpack.c.b16 %v1028, %v1027
  %v1089 = vpack.c.b16 %v1030, %v1029
  %v1090 = vpack.c.b16 %v1032, %v1031
  %v1091 = vpack.c.b16 %v1034, %v1033
  %v1092 = vpack.c.b16 %v1036, %v1035
  %v1093 = vpack.c.b16 %v1038, %v1037
  %v1094 = vpack.c.b16 %v1040, %v1039
  %v1095 = vpack.c.b16 %v1042, %v1041
  %v1096 = vpack.c.b16 %v1044, %v1043
  %v1097 = vpack.c.b16 %v1046, %v1045
  %v1098 = vpack.c.b16 %v1048, %v1047
  %v1099 = vpack.c.b16 %v1050, %v1049
  %v1100 = vpack.c.b16 %v1052, %v1051
  %v1101 = vpack.c.b16 %v1054, %v1053
  %v1102 = vpack.c.b16 %v1056, %v1055
  %v1103 = vpack.c.b16 %v1058, %v1057
  %v1104 = vpack.c.b16 %v1060, %v1059
  %v1105 = vpack.c.b16 %v1062, %v1061
  %v1106 = vpack.c.b16 %v1064, %v1063
  %v1107 = vpack.c.b16 %v1066, %v1065
  %v1108 = vpack.c.b16 %v1068, %v1067
  %v1109 = vpack.c.b16 %v1070, %v1069
  %v1110 = vpack.c.b16 %v1072, %v1071
  %v1111 = vpack.c.b16 %v1074, %v1073
  %v1112 = vpack.c.b16 %v1076, %v1075
  %v1113 = vpack.c.b16 %v1078, %v1077
  %v1114 = vpack.c.b16 %v1080, %v1079
  %v1115 = vpack.c.b16 %v1082, %v1081
  %v1116 = vpack.c.b16 %v1084, %v1083
  %1149 = vmatprep.subr.bf16.mxu0 0
  %1150 = vmatpush1.bf16.msra.mxu0 %v1085
  %1151 = vmatprep.subr.bf16.mxu0 0
  %1152 = vmatpush1.bf16.msra.mxu0 %v1086
  %1153 = vmatprep.subr.bf16.mxu0 0
  %1154 = vmatpush1.bf16.msra.mxu0 %v1087
  %1155 = vmatprep.subr.bf16.mxu0 0
  %1156 = vmatpush1.bf16.msra.mxu0 %v1088
  %1157 = vmatprep.subr.bf16.mxu0 0
  %1158 = vmatpush1.bf16.msra.mxu0 %v1089
  %1159 = vmatprep.subr.bf16.mxu0 0
  %1160 = vmatpush1.bf16.msra.mxu0 %v1090
  %1161 = vmatprep.subr.bf16.mxu0 0
  %1162 = vmatpush1.bf16.msra.mxu0 %v1091
  %1163 = vmatprep.subr.bf16.mxu0 0
  %1164 = vmatpush1.bf16.msra.mxu0 %v1092
  %1165 = vmatprep.subr.bf16.mxu0 0
  %1166 = vmatpush1.bf16.msra.mxu0 %v1093
  %1167 = vmatprep.subr.bf16.mxu0 0
  %1168 = vmatpush1.bf16.msra.mxu0 %v1094
  %1169 = vmatprep.subr.bf16.mxu0 0
  %1170 = vmatpush1.bf16.msra.mxu0 %v1095
  %1171 = vmatprep.subr.bf16.mxu0 0
  %1172 = vmatpush1.bf16.msra.mxu0 %v1096
  %1173 = vmatprep.subr.bf16.mxu0 0
  %1174 = vmatpush1.bf16.msra.mxu0 %v1097
  %1175 = vmatprep.subr.bf16.mxu0 0
  %1176 = vmatpush1.bf16.msra.mxu0 %v1098
  %1177 = vmatprep.subr.bf16.mxu0 0
  %1178 = vmatpush1.bf16.msra.mxu0 %v1099
  %1179 = vmatprep.subr.bf16.mxu0 0
  %1180 = vmatpush1.bf16.msra.mxu0 %v1100
  %1181 = vmatprep.mubr.bf16.mxu0 %v144
  %1182 = vmatmul.mubr.bf16.gmra.mrb[0].mxu0 %v143
  %v1183 = vpop.f32.mrb[0].mxu0
  %v1184 = vadd.f32 0.0, %v1183
  %v1185 = vpop.f32.mrb[0].mxu0
  %v1186 = vpop.f32.mrb[0].mxu0
  %v1187 = vadd.f32 0.0, %v1186
  %v1188 = vpop.f32.mrb[0].mxu0
  %1189 = vmatprep.mubr.bf16.mxu0 %v148
  %1190 = vmatmul.mubr.bf16.gmra.mrb[0].mxu0 %v147
  %v1191 = vpop.f32.mrb[0].mxu0
  %v1192 = vadd.f32 0.0, %v1191
  %v1193 = vpop.f32.mrb[0].mxu0
  %v1194 = vpop.f32.mrb[0].mxu0
  %v1195 = vadd.f32 0.0, %v1194
  %v1196 = vpop.f32.mrb[0].mxu0
  %1197 = vmatprep.mubr.bf16.mxu0 %v152
  %1198 = vmatmul.mubr.bf16.gmra.mrb[0].mxu0 %v151
  %v1199 = vpop.f32.mrb[0].mxu0
  %v1200 = vadd.f32 0.0, %v1199
  %v1201 = vpop.f32.mrb[0].mxu0
  %v1202 = vpop.f32.mrb[0].mxu0
  %v1203 = vadd.f32 0.0, %v1202
  %v1204 = vpop.f32.mrb[0].mxu0
  %1205 = vmatprep.mubr.bf16.mxu0 %v156
  %1206 = vmatmul.mubr.bf16.gmra.mrb[0].mxu0 %v155
  %v1207 = vpop.f32.mrb[0].mxu0
  %v1208 = vadd.f32 0.0, %v1207
  %v1209 = vpop.f32.mrb[0].mxu0
  %v1210 = vpop.f32.mrb[0].mxu0
  %v1211 = vadd.f32 0.0, %v1210
  %v1212 = vpop.f32.mrb[0].mxu0
  %1213 = vdwg.mxu0
  %1214 = vmatprep.subr.bf16.mxu0 0
  %1215 = vmatpush1.bf16.msra.mxu0 %v1101
  %1216 = vmatprep.subr.bf16.mxu0 0
  %1217 = vmatpush1.bf16.msra.mxu0 %v1102
  %1218 = vmatprep.subr.bf16.mxu0 0
  %1219 = vmatpush1.bf16.msra.mxu0 %v1103
  %1220 = vmatprep.subr.bf16.mxu0 0
  %1221 = vmatpush1.bf16.msra.mxu0 %v1104
  %1222 = vmatprep.subr.bf16.mxu0 0
  %1223 = vmatpush1.bf16.msra.mxu0 %v1105
  %1224 = vmatprep.subr.bf16.mxu0 0
  %1225 = vmatpush1.bf16.msra.mxu0 %v1106
  %1226 = vmatprep.subr.bf16.mxu0 0
  %1227 = vmatpush1.bf16.msra.mxu0 %v1107
  %1228 = vmatprep.subr.bf16.mxu0 0
  %1229 = vmatpush1.bf16.msra.mxu0 %v1108
  %1230 = vmatprep.subr.bf16.mxu0 0
  %1231 = vmatpush1.bf16.msra.mxu0 %v1109
  %1232 = vmatprep.subr.bf16.mxu0 0
  %1233 = vmatpush1.bf16.msra.mxu0 %v1110
  %1234 = vmatprep.subr.bf16.mxu0 0
  %1235 = vmatpush1.bf16.msra.mxu0 %v1111
  %1236 = vmatprep.subr.bf16.mxu0 0
  %1237 = vmatpush1.bf16.msra.mxu0 %v1112
  %1238 = vmatprep.subr.bf16.mxu0 0
  %1239 = vmatpush1.bf16.msra.mxu0 %v1113
  %1240 = vmatprep.subr.bf16.mxu0 0
  %1241 = vmatpush1.bf16.msra.mxu0 %v1114
  %1242 = vmatprep.subr.bf16.mxu0 0
  %1243 = vmatpush1.bf16.msra.mxu0 %v1115
  %1244 = vmatprep.subr.bf16.mxu0 0
  %1245 = vmatpush1.bf16.msra.mxu0 %v1116
  %1246 = vmatprep.mubr.bf16.mxu0 %v146
  %1247 = vmatmul.mubr.bf16.gmra.mrb[0].mxu0 %v145
  %v1248 = vpop.f32.mrb[0].mxu0
  %v1249 = vadd.f32 %v1184, %v1248
  %v1250 = vpop.f32.mrb[0].mxu0
  %v1251 = vpop.f32.mrb[0].mxu0
  %v1252 = vadd.f32 %v1187, %v1251
  %v1253 = vpop.f32.mrb[0].mxu0
  %1254 = vmatprep.mubr.bf16.mxu0 %v150
  %1255 = vmatmul.mubr.bf16.gmra.mrb[0].mxu0 %v149
  %v1256 = vpop.f32.mrb[0].mxu0
  %v1257 = vadd.f32 %v1192, %v1256
  %v1258 = vpop.f32.mrb[0].mxu0
  %v1259 = vpop.f32.mrb[0].mxu0
  %v1260 = vadd.f32 %v1195, %v1259
  %v1261 = vpop.f32.mrb[0].mxu0
  %1262 = vmatprep.mubr.bf16.mxu0 %v154
  %1263 = vmatmul.mubr.bf16.gmra.mrb[0].mxu0 %v153
  %v1264 = vpop.f32.mrb[0].mxu0
  %v1265 = vadd.f32 %v1200, %v1264
  %v1266 = vpop.f32.mrb[0].mxu0
  %v1267 = vpop.f32.mrb[0].mxu0
  %v1268 = vadd.f32 %v1203, %v1267
  %v1269 = vpop.f32.mrb[0].mxu0
  %1270 = vmatprep.mubr.bf16.mxu0 %v158
  %1271 = vmatmul.mubr.bf16.gmra.mrb[0].mxu0 %v157
  %v1272 = vpop.f32.mrb[0].mxu0
  %v1273 = vadd.f32 %v1208, %v1272
  %v1274 = vpop.f32.mrb[0].mxu0
  %v1275 = vpop.f32.mrb[0].mxu0
  %v1276 = vadd.f32 %v1211, %v1275
  %v1277 = vpop.f32.mrb[0].mxu0
  %1278 = vdwg.mxu0
  %v1279 = vmax.f32 %v884, %v1249
  %v1280 = vmax.f32 %v885, %v1252
  %v1281 = vmax.f32 %v886, %v1257
  %v1282 = vmax.f32 %v887, %v1260
  %v1283 = vmax.f32 %v888, %v1265
  %v1284 = vmax.f32 %v889, %v1268
  %v1285 = vmax.f32 %v890, %v1273
  %v1286 = vmax.f32 %v891, %v1276
  %s1287 = scalar_lea.vmem %s0, 768
  %v1288 = vld [vmem:[%s1287] sm:$0xf]
  %v1289 = vld [vmem:[%s1287 + $0x4] sm:$0xf]
  %v1290 = vld [vmem:[%s1287 + $0x8] sm:$0xf]
  %v1291 = vld [vmem:[%s1287 + $0xc] sm:$0xf]
  %v1292 = vld [vmem:[%s1287 + $0x10] sm:$0xf]
  %v1293 = vld [vmem:[%s1287 + $0x14] sm:$0xf]
  %v1294 = vld [vmem:[%s1287 + $0x18] sm:$0xf]
  %v1295 = vld [vmem:[%s1287 + $0x1c] sm:$0xf]
  %v1296 = vld [vmem:[%s1287 + $0x20] sm:$0xf]
  %v1297 = vld [vmem:[%s1287 + $0x24] sm:$0xf]
  %v1298 = vld [vmem:[%s1287 + $0x28] sm:$0xf]
  %v1299 = vld [vmem:[%s1287 + $0x2c] sm:$0xf]
  %v1300 = vld [vmem:[%s1287 + $0x30] sm:$0xf]
  %v1301 = vld [vmem:[%s1287 + $0x34] sm:$0xf]
  %v1302 = vld [vmem:[%s1287 + $0x38] sm:$0xf]
  %v1303 = vld [vmem:[%s1287 + $0x3c] sm:$0xf]
  %v1304 = vld [vmem:[%s1287 + $0x40] sm:$0xf]
  %v1305 = vld [vmem:[%s1287 + $0x44] sm:$0xf]
  %v1306 = vld [vmem:[%s1287 + $0x48] sm:$0xf]
  %v1307 = vld [vmem:[%s1287 + $0x4c] sm:$0xf]
  %v1308 = vld [vmem:[%s1287 + $0x50] sm:$0xf]
  %v1309 = vld [vmem:[%s1287 + $0x54] sm:$0xf]
  %v1310 = vld [vmem:[%s1287 + $0x58] sm:$0xf]
  %v1311 = vld [vmem:[%s1287 + $0x5c] sm:$0xf]
  %v1312 = vld [vmem:[%s1287 + $0x60] sm:$0xf]
  %v1313 = vld [vmem:[%s1287 + $0x64] sm:$0xf]
  %v1314 = vld [vmem:[%s1287 + $0x68] sm:$0xf]
  %v1315 = vld [vmem:[%s1287 + $0x6c] sm:$0xf]
  %v1316 = vld [vmem:[%s1287 + $0x70] sm:$0xf]
  %v1317 = vld [vmem:[%s1287 + $0x74] sm:$0xf]
  %v1318 = vld [vmem:[%s1287 + $0x78] sm:$0xf]
  %v1319 = vld [vmem:[%s1287 + $0x7c] sm:$0xf]
  %v1320 = vld [vmem:[%s1287 + $0x80] sm:$0xf]
  %v1321 = vld [vmem:[%s1287 + $0x84] sm:$0xf]
  %v1322 = vld [vmem:[%s1287 + $0x88] sm:$0xf]
  %v1323 = vld [vmem:[%s1287 + $0x8c] sm:$0xf]
  %v1324 = vld [vmem:[%s1287 + $0x90] sm:$0xf]
  %v1325 = vld [vmem:[%s1287 + $0x94] sm:$0xf]
  %v1326 = vld [vmem:[%s1287 + $0x98] sm:$0xf]
  %v1327 = vld [vmem:[%s1287 + $0x9c] sm:$0xf]
  %v1328 = vld [vmem:[%s1287 + $0xa0] sm:$0xf]
  %v1329 = vld [vmem:[%s1287 + $0xa4] sm:$0xf]
  %v1330 = vld [vmem:[%s1287 + $0xa8] sm:$0xf]
  %v1331 = vld [vmem:[%s1287 + $0xac] sm:$0xf]
  %v1332 = vld [vmem:[%s1287 + $0xb0] sm:$0xf]
  %v1333 = vld [vmem:[%s1287 + $0xb4] sm:$0xf]
  %v1334 = vld [vmem:[%s1287 + $0xb8] sm:$0xf]
  %v1335 = vld [vmem:[%s1287 + $0xbc] sm:$0xf]
  %v1336 = vld [vmem:[%s1287 + $0xc0] sm:$0xf]
  %v1337 = vld [vmem:[%s1287 + $0xc4] sm:$0xf]
  %v1338 = vld [vmem:[%s1287 + $0xc8] sm:$0xf]
  %v1339 = vld [vmem:[%s1287 + $0xcc] sm:$0xf]
  %v1340 = vld [vmem:[%s1287 + $0xd0] sm:$0xf]
  %v1341 = vld [vmem:[%s1287 + $0xd4] sm:$0xf]
  %v1342 = vld [vmem:[%s1287 + $0xd8] sm:$0xf]
  %v1343 = vld [vmem:[%s1287 + $0xdc] sm:$0xf]
  %v1344 = vld [vmem:[%s1287 + $0xe0] sm:$0xf]
  %v1345 = vld [vmem:[%s1287 + $0xe4] sm:$0xf]
  %v1346 = vld [vmem:[%s1287 + $0xe8] sm:$0xf]
  %v1347 = vld [vmem:[%s1287 + $0xec] sm:$0xf]
  %v1348 = vld [vmem:[%s1287 + $0xf0] sm:$0xf]
  %v1349 = vld [vmem:[%s1287 + $0xf4] sm:$0xf]
  %v1350 = vld [vmem:[%s1287 + $0xf8] sm:$0xf]
  %v1351 = vld [vmem:[%s1287 + $0xfc] sm:$0xf]
  %v1416 = vunpack.c.l.b16 %v1288
  %v1417 = vunpack.c.l.b16 %v1289
  %v1418 = vunpack.c.l.b16 %v1290
  %v1419 = vunpack.c.l.b16 %v1291
  %v1420 = vunpack.c.l.b16 %v1292
  %v1421 = vunpack.c.l.b16 %v1293
  %v1422 = vunpack.c.l.b16 %v1294
  %v1423 = vunpack.c.l.b16 %v1295
  %v1424 = vunpack.c.l.b16 %v1296
  %v1425 = vunpack.c.l.b16 %v1297
  %v1426 = vunpack.c.l.b16 %v1298
  %v1427 = vunpack.c.l.b16 %v1299
  %v1428 = vunpack.c.l.b16 %v1300
  %v1429 = vunpack.c.l.b16 %v1301
  %v1430 = vunpack.c.l.b16 %v1302
  %v1431 = vunpack.c.l.b16 %v1303
  %v1432 = vunpack.c.l.b16 %v1304
  %v1433 = vunpack.c.l.b16 %v1305
  %v1434 = vunpack.c.l.b16 %v1306
  %v1435 = vunpack.c.l.b16 %v1307
  %v1436 = vunpack.c.l.b16 %v1308
  %v1437 = vunpack.c.l.b16 %v1309
  %v1438 = vunpack.c.l.b16 %v1310
  %v1439 = vunpack.c.l.b16 %v1311
  %v1440 = vunpack.c.l.b16 %v1312
  %v1441 = vunpack.c.l.b16 %v1313
  %v1442 = vunpack.c.l.b16 %v1314
  %v1443 = vunpack.c.l.b16 %v1315
  %v1444 = vunpack.c.l.b16 %v1316
  %v1445 = vunpack.c.l.b16 %v1317
  %v1446 = vunpack.c.l.b16 %v1318
  %v1447 = vunpack.c.l.b16 %v1319
  %v1448 = vunpack.c.l.b16 %v1320
  %v1449 = vunpack.c.l.b16 %v1321
  %v1450 = vunpack.c.l.b16 %v1322
  %v1451 = vunpack.c.l.b16 %v1323
  %v1452 = vunpack.c.l.b16 %v1324
  %v1453 = vunpack.c.l.b16 %v1325
  %v1454 = vunpack.c.l.b16 %v1326
  %v1455 = vunpack.c.l.b16 %v1327
  %v1456 = vunpack.c.l.b16 %v1328
  %v1457 = vunpack.c.l.b16 %v1329
  %v1458 = vunpack.c.l.b16 %v1330
  %v1459 = vunpack.c.l.b16 %v1331
  %v1460 = vunpack.c.l.b16 %v1332
  %v1461 = vunpack.c.l.b16 %v1333
  %v1462 = vunpack.c.l.b16 %v1334
  %v1463 = vunpack.c.l.b16 %v1335
  %v1464 = vunpack.c.l.b16 %v1336
  %v1465 = vunpack.c.l.b16 %v1337
  %v1466 = vunpack.c.l.b16 %v1338
  %v1467 = vunpack.c.l.b16 %v1339
  %v1468 = vunpack.c.l.b16 %v1340
  %v1469 = vunpack.c.l.b16 %v1341
  %v1470 = vunpack.c.l.b16 %v1342
  %v1471 = vunpack.c.l.b16 %v1343
  %v1472 = vunpack.c.l.b16 %v1344
  %v1473 = vunpack.c.l.b16 %v1345
  %v1474 = vunpack.c.l.b16 %v1346
  %v1475 = vunpack.c.l.b16 %v1347
  %v1476 = vunpack.c.l.b16 %v1348
  %v1477 = vunpack.c.l.b16 %v1349
  %v1478 = vunpack.c.l.b16 %v1350
  %v1479 = vunpack.c.l.b16 %v1351
  %v1480 = vpack.c.b16 %v1417, %v1416
  %v1481 = vpack.c.b16 %v1419, %v1418
  %v1482 = vpack.c.b16 %v1421, %v1420
  %v1483 = vpack.c.b16 %v1423, %v1422
  %v1484 = vpack.c.b16 %v1425, %v1424
  %v1485 = vpack.c.b16 %v1427, %v1426
  %v1486 = vpack.c.b16 %v1429, %v1428
  %v1487 = vpack.c.b16 %v1431, %v1430
  %v1488 = vpack.c.b16 %v1433, %v1432
  %v1489 = vpack.c.b16 %v1435, %v1434
  %v1490 = vpack.c.b16 %v1437, %v1436
  %v1491 = vpack.c.b16 %v1439, %v1438
  %v1492 = vpack.c.b16 %v1441, %v1440
  %v1493 = vpack.c.b16 %v1443, %v1442
  %v1494 = vpack.c.b16 %v1445, %v1444
  %v1495 = vpack.c.b16 %v1447, %v1446
  %v1496 = vpack.c.b16 %v1449, %v1448
  %v1497 = vpack.c.b16 %v1451, %v1450
  %v1498 = vpack.c.b16 %v1453, %v1452
  %v1499 = vpack.c.b16 %v1455, %v1454
  %v1500 = vpack.c.b16 %v1457, %v1456
  %v1501 = vpack.c.b16 %v1459, %v1458
  %v1502 = vpack.c.b16 %v1461, %v1460
  %v1503 = vpack.c.b16 %v1463, %v1462
  %v1504 = vpack.c.b16 %v1465, %v1464
  %v1505 = vpack.c.b16 %v1467, %v1466
  %v1506 = vpack.c.b16 %v1469, %v1468
  %v1507 = vpack.c.b16 %v1471, %v1470
  %v1508 = vpack.c.b16 %v1473, %v1472
  %v1509 = vpack.c.b16 %v1475, %v1474
  %v1510 = vpack.c.b16 %v1477, %v1476
  %v1511 = vpack.c.b16 %v1479, %v1478
  %1544 = vmatprep.subr.bf16.mxu0 0
  %1545 = vmatpush1.bf16.msra.mxu0 %v1480
  %1546 = vmatprep.subr.bf16.mxu0 0
  %1547 = vmatpush1.bf16.msra.mxu0 %v1481
  %1548 = vmatprep.subr.bf16.mxu0 0
  %1549 = vmatpush1.bf16.msra.mxu0 %v1482
  %1550 = vmatprep.subr.bf16.mxu0 0
  %1551 = vmatpush1.bf16.msra.mxu0 %v1483
  %1552 = vmatprep.subr.bf16.mxu0 0
  %1553 = vmatpush1.bf16.msra.mxu0 %v1484
  %1554 = vmatprep.subr.bf16.mxu0 0
  %1555 = vmatpush1.bf16.msra.mxu0 %v1485
  %1556 = vmatprep.subr.bf16.mxu0 0
  %1557 = vmatpush1.bf16.msra.mxu0 %v1486
  %1558 = vmatprep.subr.bf16.mxu0 0
  %1559 = vmatpush1.bf16.msra.mxu0 %v1487
  %1560 = vmatprep.subr.bf16.mxu0 0
  %1561 = vmatpush1.bf16.msra.mxu0 %v1488
  %1562 = vmatprep.subr.bf16.mxu0 0
  %1563 = vmatpush1.bf16.msra.mxu0 %v1489
  %1564 = vmatprep.subr.bf16.mxu0 0
  %1565 = vmatpush1.bf16.msra.mxu0 %v1490
  %1566 = vmatprep.subr.bf16.mxu0 0
  %1567 = vmatpush1.bf16.msra.mxu0 %v1491
  %1568 = vmatprep.subr.bf16.mxu0 0
  %1569 = vmatpush1.bf16.msra.mxu0 %v1492
  %1570 = vmatprep.subr.bf16.mxu0 0
  %1571 = vmatpush1.bf16.msra.mxu0 %v1493
  %1572 = vmatprep.subr.bf16.mxu0 0
  %1573 = vmatpush1.bf16.msra.mxu0 %v1494
  %1574 = vmatprep.subr.bf16.mxu0 0
  %1575 = vmatpush1.bf16.msra.mxu0 %v1495
  %1576 = vmatprep.mubr.bf16.mxu0 %v144
  %1577 = vmatmul.mubr.bf16.gmra.mrb[0].mxu0 %v143
  %v1578 = vpop.f32.mrb[0].mxu0
  %v1579 = vadd.f32 0.0, %v1578
  %v1580 = vpop.f32.mrb[0].mxu0
  %v1581 = vpop.f32.mrb[0].mxu0
  %v1582 = vadd.f32 0.0, %v1581
  %v1583 = vpop.f32.mrb[0].mxu0
  %1584 = vmatprep.mubr.bf16.mxu0 %v148
  %1585 = vmatmul.mubr.bf16.gmra.mrb[0].mxu0 %v147
  %v1586 = vpop.f32.mrb[0].mxu0
  %v1587 = vadd.f32 0.0, %v1586
  %v1588 = vpop.f32.mrb[0].mxu0
  %v1589 = vpop.f32.mrb[0].mxu0
  %v1590 = vadd.f32 0.0, %v1589
  %v1591 = vpop.f32.mrb[0].mxu0
  %1592 = vmatprep.mubr.bf16.mxu0 %v152
  %1593 = vmatmul.mubr.bf16.gmra.mrb[0].mxu0 %v151
  %v1594 = vpop.f32.mrb[0].mxu0
  %v1595 = vadd.f32 0.0, %v1594
  %v1596 = vpop.f32.mrb[0].mxu0
  %v1597 = vpop.f32.mrb[0].mxu0
  %v1598 = vadd.f32 0.0, %v1597
  %v1599 = vpop.f32.mrb[0].mxu0
  %1600 = vmatprep.mubr.bf16.mxu0 %v156
  %1601 = vmatmul.mubr.bf16.gmra.mrb[0].mxu0 %v155
  %v1602 = vpop.f32.mrb[0].mxu0
  %v1603 = vadd.f32 0.0, %v1602
  %v1604 = vpop.f32.mrb[0].mxu0
  %v1605 = vpop.f32.mrb[0].mxu0
  %v1606 = vadd.f32 0.0, %v1605
  %v1607 = vpop.f32.mrb[0].mxu0
  %1608 = vdwg.mxu0
  %1609 = vmatprep.subr.bf16.mxu0 0
  %1610 = vmatpush1.bf16.msra.mxu0 %v1496
  %1611 = vmatprep.subr.bf16.mxu0 0
  %1612 = vmatpush1.bf16.msra.mxu0 %v1497
  %1613 = vmatprep.subr.bf16.mxu0 0
  %1614 = vmatpush1.bf16.msra.mxu0 %v1498
  %1615 = vmatprep.subr.bf16.mxu0 0
  %1616 = vmatpush1.bf16.msra.mxu0 %v1499
  %1617 = vmatprep.subr.bf16.mxu0 0
  %1618 = vmatpush1.bf16.msra.mxu0 %v1500
  %1619 = vmatprep.subr.bf16.mxu0 0
  %1620 = vmatpush1.bf16.msra.mxu0 %v1501
  %1621 = vmatprep.subr.bf16.mxu0 0
  %1622 = vmatpush1.bf16.msra.mxu0 %v1502
  %1623 = vmatprep.subr.bf16.mxu0 0
  %1624 = vmatpush1.bf16.msra.mxu0 %v1503
  %1625 = vmatprep.subr.bf16.mxu0 0
  %1626 = vmatpush1.bf16.msra.mxu0 %v1504
  %1627 = vmatprep.subr.bf16.mxu0 0
  %1628 = vmatpush1.bf16.msra.mxu0 %v1505
  %1629 = vmatprep.subr.bf16.mxu0 0
  %1630 = vmatpush1.bf16.msra.mxu0 %v1506
  %1631 = vmatprep.subr.bf16.mxu0 0
  %1632 = vmatpush1.bf16.msra.mxu0 %v1507
  %1633 = vmatprep.subr.bf16.mxu0 0
  %1634 = vmatpush1.bf16.msra.mxu0 %v1508
  %1635 = vmatprep.subr.bf16.mxu0 0
  %1636 = vmatpush1.bf16.msra.mxu0 %v1509
  %1637 = vmatprep.subr.bf16.mxu0 0
  %1638 = vmatpush1.bf16.msra.mxu0 %v1510
  %1639 = vmatprep.subr.bf16.mxu0 0
  %1640 = vmatpush1.bf16.msra.mxu0 %v1511
  %1641 = vmatprep.mubr.bf16.mxu0 %v146
  %1642 = vmatmul.mubr.bf16.gmra.mrb[0].mxu0 %v145
  %v1643 = vpop.f32.mrb[0].mxu0
  %v1644 = vadd.f32 %v1579, %v1643
  %v1645 = vpop.f32.mrb[0].mxu0
  %v1646 = vpop.f32.mrb[0].mxu0
  %v1647 = vadd.f32 %v1582, %v1646
  %v1648 = vpop.f32.mrb[0].mxu0
  %1649 = vmatprep.mubr.bf16.mxu0 %v150
  %1650 = vmatmul.mubr.bf16.gmra.mrb[0].mxu0 %v149
  %v1651 = vpop.f32.mrb[0].mxu0
  %v1652 = vadd.f32 %v1587, %v1651
  %v1653 = vpop.f32.mrb[0].mxu0
  %v1654 = vpop.f32.mrb[0].mxu0
  %v1655 = vadd.f32 %v1590, %v1654
  %v1656 = vpop.f32.mrb[0].mxu0
  %1657 = vmatprep.mubr.bf16.mxu0 %v154
  %1658 = vmatmul.mubr.bf16.gmra.mrb[0].mxu0 %v153
  %v1659 = vpop.f32.mrb[0].mxu0
  %v1660 = vadd.f32 %v1595, %v1659
  %v1661 = vpop.f32.mrb[0].mxu0
  %v1662 = vpop.f32.mrb[0].mxu0
  %v1663 = vadd.f32 %v1598, %v1662
  %v1664 = vpop.f32.mrb[0].mxu0
  %1665 = vmatprep.mubr.bf16.mxu0 %v158
  %1666 = vmatmul.mubr.bf16.gmra.mrb[0].mxu0 %v157
  %v1667 = vpop.f32.mrb[0].mxu0
  %v1668 = vadd.f32 %v1603, %v1667
  %v1669 = vpop.f32.mrb[0].mxu0
  %v1670 = vpop.f32.mrb[0].mxu0
  %v1671 = vadd.f32 %v1606, %v1670
  %v1672 = vpop.f32.mrb[0].mxu0
  %1673 = vdwg.mxu0
  %v1674 = vmax.f32 %v1279, %v1644
  %v1675 = vmax.f32 %v1280, %v1647
  %v1676 = vmax.f32 %v1281, %v1652
  %v1677 = vmax.f32 %v1282, %v1655
  %v1678 = vmax.f32 %v1283, %v1660
  %v1679 = vmax.f32 %v1284, %v1663
  %v1680 = vmax.f32 %v1285, %v1668
  %v1681 = vmax.f32 %v1286, %v1671
  %v1682 = vld [vmem:[%s2] sm:$0xff]
  %v1683 = vld [vmem:[%s2 + $0x8] sm:$0xff]
  %v1684 = vld [vmem:[%s2 + $0x10] sm:$0xff]
  %v1685 = vld [vmem:[%s2 + $0x18] sm:$0xff]
  %v1686 = vld [vmem:[%s2 + $0x20] sm:$0xff]
  %v1687 = vld [vmem:[%s2 + $0x28] sm:$0xff]
  %v1688 = vld [vmem:[%s2 + $0x30] sm:$0xff]
  %v1689 = vld [vmem:[%s2 + $0x38] sm:$0xff]
  %1691 = vset.pattern.permute.xlu0 0
  %1692 = vperm.xlu0 %1691, %v1682
  %v1693 = vpop.permute.xlu0 %1692
  %1696 = vset.pattern.permute.xlu0 0
  %1697 = vperm.xlu0 %1696, %v1683
  %v1698 = vpop.permute.xlu0 %1697
  %1701 = vset.pattern.permute.xlu0 0
  %1702 = vperm.xlu0 %1701, %v1684
  %v1703 = vpop.permute.xlu0 %1702
  %1706 = vset.pattern.permute.xlu0 0
  %1707 = vperm.xlu0 %1706, %v1685
  %v1708 = vpop.permute.xlu0 %1707
  %1711 = vset.pattern.permute.xlu0 0
  %1712 = vperm.xlu0 %1711, %v1686
  %v1713 = vpop.permute.xlu0 %1712
  %1716 = vset.pattern.permute.xlu0 0
  %1717 = vperm.xlu0 %1716, %v1687
  %v1718 = vpop.permute.xlu0 %1717
  %1721 = vset.pattern.permute.xlu0 0
  %1722 = vperm.xlu0 %1721, %v1688
  %v1723 = vpop.permute.xlu0 %1722
  %1726 = vset.pattern.permute.xlu0 0
  %1727 = vperm.xlu0 %1726, %v1689
  %v1728 = vpop.permute.xlu0 %1727
  %v1730 = vadd.f32 %v1674, %v1693
  %v1731 = vadd.f32 %v1675, %v1698
  %v1732 = vadd.f32 %v1676, %v1703
  %v1733 = vadd.f32 %v1677, %v1708
  %v1734 = vadd.f32 %v1678, %v1713
  %v1735 = vadd.f32 %v1679, %v1718
  %v1736 = vadd.f32 %v1680, %v1723
  %v1737 = vadd.f32 %v1681, %v1728
  %v1738 = vmul.f32 %v1730, 0.5
  %v1739 = vmul.f32 %v1731, 0.5
  %v1740 = vmul.f32 %v1732, 0.5
  %v1741 = vmul.f32 %v1733, 0.5
  %v1742 = vmul.f32 %v1734, 0.5
  %v1743 = vmul.f32 %v1735, 0.5
  %v1744 = vmul.f32 %v1736, 0.5
  %v1745 = vmul.f32 %v1737, 0.5
  %v1746 = vmul.f32 %v1730, 0.70710677
  %v1747 = vmul.f32 %v1731, 0.70710677
  %v1748 = vmul.f32 %v1732, 0.70710677
  %v1749 = vmul.f32 %v1733, 0.70710677
  %v1750 = vmul.f32 %v1734, 0.70710677
  %v1751 = vmul.f32 %v1735, 0.70710677
  %v1752 = vmul.f32 %v1736, 0.70710677
  %v1753 = vmul.f32 %v1737, 0.70710677
  %v1754 = vand.u32 2147483647, %v1746
  %v1755 = vand.u32 2147483647, %v1747
  %v1756 = vand.u32 2147483647, %v1748
  %v1757 = vand.u32 2147483647, %v1749
  %v1758 = vand.u32 2147483647, %v1750
  %v1759 = vand.u32 2147483647, %v1751
  %v1760 = vand.u32 2147483647, %v1752
  %v1761 = vand.u32 2147483647, %v1753
  %v1762 = vmul.f32 %v1754, 0.3275911
  %v1763 = vmul.f32 %v1755, 0.3275911
  %v1764 = vmul.f32 %v1756, 0.3275911
  %v1765 = vmul.f32 %v1757, 0.3275911
  %v1766 = vmul.f32 %v1758, 0.3275911
  %v1767 = vmul.f32 %v1759, 0.3275911
  %v1768 = vmul.f32 %v1760, 0.3275911
  %v1769 = vmul.f32 %v1761, 0.3275911
  %v1770 = vadd.f32 %v1762, 1.0
  %v1771 = vadd.f32 %v1763, 1.0
  %v1772 = vadd.f32 %v1764, 1.0
  %v1773 = vadd.f32 %v1765, 1.0
  %v1774 = vadd.f32 %v1766, 1.0
  %v1775 = vadd.f32 %v1767, 1.0
  %v1776 = vadd.f32 %v1768, 1.0
  %v1777 = vadd.f32 %v1769, 1.0
  %v1778 = vrcp.pop %v1770
  %v1779 = vmul.f32 1.0, %v1778
  %v1780 = vrcp.pop %v1771
  %v1781 = vmul.f32 1.0, %v1780
  %v1782 = vrcp.pop %v1772
  %v1783 = vmul.f32 1.0, %v1782
  %v1784 = vrcp.pop %v1773
  %v1785 = vmul.f32 1.0, %v1784
  %v1786 = vrcp.pop %v1774
  %v1787 = vmul.f32 1.0, %v1786
  %v1788 = vrcp.pop %v1775
  %v1789 = vmul.f32 1.0, %v1788
  %v1790 = vrcp.pop %v1776
  %v1791 = vmul.f32 1.0, %v1790
  %v1792 = vrcp.pop %v1777
  %v1793 = vmul.f32 1.0, %v1792
  %v1794 = vmul.f32 %v1779, 1.0614054
  %v1795 = vmul.f32 %v1781, 1.0614054
  %v1796 = vmul.f32 %v1783, 1.0614054
  %v1797 = vmul.f32 %v1785, 1.0614054
  %v1798 = vmul.f32 %v1787, 1.0614054
  %v1799 = vmul.f32 %v1789, 1.0614054
  %v1800 = vmul.f32 %v1791, 1.0614054
  %v1801 = vmul.f32 %v1793, 1.0614054
  %v1802 = vadd.f32 %v1794, -1.4531521
  %v1803 = vadd.f32 %v1795, -1.4531521
  %v1804 = vadd.f32 %v1796, -1.4531521
  %v1805 = vadd.f32 %v1797, -1.4531521
  %v1806 = vadd.f32 %v1798, -1.4531521
  %v1807 = vadd.f32 %v1799, -1.4531521
  %v1808 = vadd.f32 %v1800, -1.4531521
  %v1809 = vadd.f32 %v1801, -1.4531521
  %v1810 = vmul.f32 %v1802, %v1779
  %v1811 = vmul.f32 %v1803, %v1781
  %v1812 = vmul.f32 %v1804, %v1783
  %v1813 = vmul.f32 %v1805, %v1785
  %v1814 = vmul.f32 %v1806, %v1787
  %v1815 = vmul.f32 %v1807, %v1789
  %v1816 = vmul.f32 %v1808, %v1791
  %v1817 = vmul.f32 %v1809, %v1793
  %v1818 = vadd.f32 %v1810, 1.4214138
  %v1819 = vadd.f32 %v1811, 1.4214138
  %v1820 = vadd.f32 %v1812, 1.4214138
  %v1821 = vadd.f32 %v1813, 1.4214138
  %v1822 = vadd.f32 %v1814, 1.4214138
  %v1823 = vadd.f32 %v1815, 1.4214138
  %v1824 = vadd.f32 %v1816, 1.4214138
  %v1825 = vadd.f32 %v1817, 1.4214138
  %v1826 = vmul.f32 %v1818, %v1779
  %v1827 = vmul.f32 %v1819, %v1781
  %v1828 = vmul.f32 %v1820, %v1783
  %v1829 = vmul.f32 %v1821, %v1785
  %v1830 = vmul.f32 %v1822, %v1787
  %v1831 = vmul.f32 %v1823, %v1789
  %v1832 = vmul.f32 %v1824, %v1791
  %v1833 = vmul.f32 %v1825, %v1793
  %v1834 = vadd.f32 %v1826, -0.28449672
  %v1835 = vadd.f32 %v1827, -0.28449672
  %v1836 = vadd.f32 %v1828, -0.28449672
  %v1837 = vadd.f32 %v1829, -0.28449672
  %v1838 = vadd.f32 %v1830, -0.28449672
  %v1839 = vadd.f32 %v1831, -0.28449672
  %v1840 = vadd.f32 %v1832, -0.28449672
  %v1841 = vadd.f32 %v1833, -0.28449672
  %v1842 = vmul.f32 %v1834, %v1779
  %v1843 = vmul.f32 %v1835, %v1781
  %v1844 = vmul.f32 %v1836, %v1783
  %v1845 = vmul.f32 %v1837, %v1785
  %v1846 = vmul.f32 %v1838, %v1787
  %v1847 = vmul.f32 %v1839, %v1789
  %v1848 = vmul.f32 %v1840, %v1791
  %v1849 = vmul.f32 %v1841, %v1793
  %v1850 = vadd.f32 %v1842, 0.2548296
  %v1851 = vadd.f32 %v1843, 0.2548296
  %v1852 = vadd.f32 %v1844, 0.2548296
  %v1853 = vadd.f32 %v1845, 0.2548296
  %v1854 = vadd.f32 %v1846, 0.2548296
  %v1855 = vadd.f32 %v1847, 0.2548296
  %v1856 = vadd.f32 %v1848, 0.2548296
  %v1857 = vadd.f32 %v1849, 0.2548296
  %v1858 = vmul.f32 %v1850, %v1779
  %v1859 = vmul.f32 %v1851, %v1781
  %v1860 = vmul.f32 %v1852, %v1783
  %v1861 = vmul.f32 %v1853, %v1785
  %v1862 = vmul.f32 %v1854, %v1787
  %v1863 = vmul.f32 %v1855, %v1789
  %v1864 = vmul.f32 %v1856, %v1791
  %v1865 = vmul.f32 %v1857, %v1793
  %v1866 = vsub.f32 0.0, %v1754
  %v1867 = vsub.f32 0.0, %v1755
  %v1868 = vsub.f32 0.0, %v1756
  %v1869 = vsub.f32 0.0, %v1757
  %v1870 = vsub.f32 0.0, %v1758
  %v1871 = vsub.f32 0.0, %v1759
  %v1872 = vsub.f32 0.0, %v1760
  %v1873 = vsub.f32 0.0, %v1761
  %v1874 = vmul.f32 %v1866, %v1754
  %v1875 = vmul.f32 %v1867, %v1755
  %v1876 = vmul.f32 %v1868, %v1756
  %v1877 = vmul.f32 %v1869, %v1757
  %v1878 = vmul.f32 %v1870, %v1758
  %v1879 = vmul.f32 %v1871, %v1759
  %v1880 = vmul.f32 %v1872, %v1760
  %v1881 = vmul.f32 %v1873, %v1761
  %v1882 = vmul.f32 %v1874, 1.442695
  %v1883 = vpow.pop %v1882
  %v1884 = vmul.f32 %v1875, 1.442695
  %v1885 = vpow.pop %v1884
  %v1886 = vmul.f32 %v1876, 1.442695
  %v1887 = vpow.pop %v1886
  %v1888 = vmul.f32 %v1877, 1.442695
  %v1889 = vpow.pop %v1888
  %v1890 = vmul.f32 %v1878, 1.442695
  %v1891 = vpow.pop %v1890
  %v1892 = vmul.f32 %v1879, 1.442695
  %v1893 = vpow.pop %v1892
  %v1894 = vmul.f32 %v1880, 1.442695
  %v1895 = vpow.pop %v1894
  %v1896 = vmul.f32 %v1881, 1.442695
  %v1897 = vpow.pop %v1896
  %v1898 = vmul.f32 %v1858, %v1883
  %v1899 = vmul.f32 %v1859, %v1885
  %v1900 = vmul.f32 %v1860, %v1887
  %v1901 = vmul.f32 %v1861, %v1889
  %v1902 = vmul.f32 %v1862, %v1891
  %v1903 = vmul.f32 %v1863, %v1893
  %v1904 = vmul.f32 %v1864, %v1895
  %v1905 = vmul.f32 %v1865, %v1897
  %v1906 = vsub.f32 1.0, %v1898
  %v1907 = vsub.f32 1.0, %v1899
  %v1908 = vsub.f32 1.0, %v1900
  %v1909 = vsub.f32 1.0, %v1901
  %v1910 = vsub.f32 1.0, %v1902
  %v1911 = vsub.f32 1.0, %v1903
  %v1912 = vsub.f32 1.0, %v1904
  %v1913 = vsub.f32 1.0, %v1905
  %vm1914 = vcmp.ge.f32.partialorder %v1746, 0.0
  %vm1915 = vcmp.ge.f32.partialorder %v1747, 0.0
  %vm1916 = vcmp.ge.f32.partialorder %v1748, 0.0
  %vm1917 = vcmp.ge.f32.partialorder %v1749, 0.0
  %vm1918 = vcmp.ge.f32.partialorder %v1750, 0.0
  %vm1919 = vcmp.ge.f32.partialorder %v1751, 0.0
  %vm1920 = vcmp.ge.f32.partialorder %v1752, 0.0
  %vm1921 = vcmp.ge.f32.partialorder %v1753, 0.0
  %v1922 = vsub.f32 0.0, %v1906
  %v1923 = vsub.f32 0.0, %v1907
  %v1924 = vsub.f32 0.0, %v1908
  %v1925 = vsub.f32 0.0, %v1909
  %v1926 = vsub.f32 0.0, %v1910
  %v1927 = vsub.f32 0.0, %v1911
  %v1928 = vsub.f32 0.0, %v1912
  %v1929 = vsub.f32 0.0, %v1913
  %v1930 = vsel %vm1914, %v1906, %v1922
  %v1931 = vsel %vm1915, %v1907, %v1923
  %v1932 = vsel %vm1916, %v1908, %v1924
  %v1933 = vsel %vm1917, %v1909, %v1925
  %v1934 = vsel %vm1918, %v1910, %v1926
  %v1935 = vsel %vm1919, %v1911, %v1927
  %v1936 = vsel %vm1920, %v1912, %v1928
  %v1937 = vsel %vm1921, %v1913, %v1929
  %v1938 = vadd.f32 %v1930, 1.0
  %v1939 = vadd.f32 %v1931, 1.0
  %v1940 = vadd.f32 %v1932, 1.0
  %v1941 = vadd.f32 %v1933, 1.0
  %v1942 = vadd.f32 %v1934, 1.0
  %v1943 = vadd.f32 %v1935, 1.0
  %v1944 = vadd.f32 %v1936, 1.0
  %v1945 = vadd.f32 %v1937, 1.0
  %v1946 = vmul.f32 %v1738, %v1938
  %v1947 = vmul.f32 %v1739, %v1939
  %v1948 = vmul.f32 %v1740, %v1940
  %v1949 = vmul.f32 %v1741, %v1941
  %v1950 = vmul.f32 %v1742, %v1942
  %v1951 = vmul.f32 %v1743, %v1943
  %v1952 = vmul.f32 %v1744, %v1944
  %v1953 = vmul.f32 %v1745, %v1945
  %1954 = vst [vmem:[%s3] sm:$0xff] %v1946
  %1955 = vst [vmem:[%s3 + $0x8] sm:$0xff] %v1947
  %1956 = vst [vmem:[%s3 + $0x10] sm:$0xff] %v1948
  %1957 = vst [vmem:[%s3 + $0x18] sm:$0xff] %v1949
  %1958 = vst [vmem:[%s3 + $0x20] sm:$0xff] %v1950
  %1959 = vst [vmem:[%s3 + $0x28] sm:$0xff] %v1951
  %1960 = vst [vmem:[%s3 + $0x30] sm:$0xff] %v1952
  %1961 = vst [vmem:[%s3 + $0x38] sm:$0xff] %v1953
  // Predicated region
  $region14: #{dqn_forward.4} parent=0 // pred_check
    _
  $region15: #{dqn_forward.4} parent=0 // pred_check_branch
    %1963 = sbr.rel (0) target = $region17
  $region16: #{dqn_forward.4} parent=0 // pred_region
    _
  $region17: #{dqn_forward.4} parent=0 // pred_fallthru
    _
  // Predicated region
  $region18: #{dqn_forward.4} parent=0 // pred_check
    _
  $region19: #{dqn_forward.4} parent=0 // pred_check_branch
    %1965 = sbr.rel (0) target = $region21
  $region20: #{dqn_forward.4} parent=0 // pred_region
    _
  $region21: #{dqn_forward.4} parent=0 // pred_fallthru
    _

// kernel: dqn_forward.5
$region0: #{dqn_forward.5}
  #allocation0 [shape = 'u32[]', space=smem, size = 0x4, offset = 0x4, fixed_abs, tag = 'smem constant byte address 0x4 - core index']
  #allocation1 [shape = 'u32[144,128]{1,0:T(1,128)}', space=vmem, size = 0x12000, scoped, tag = 'internal scratch']
  %s0 = inlined_call_operand.vmem [shape: bf16[4,576,12], index: 0, kind: input, shape index: {}]
  %s1 = inlined_call_operand.vmem [shape: bf16[64,576], index: 1, kind: input, shape index: {}]
  %s2 = inlined_call_operand.vmem [shape: f32[64,1], index: 2, kind: input, shape index: {}]
  %s3 = inlined_call_operand.vmem [shape: f32[6,16,64], index: 3, kind: input, shape index: {}]
  %s4 = inlined_call_operand.vmem [shape: f32[16,1], index: 4, kind: input, shape index: {}]
  %s5 = inlined_call_operand.vmem [shape: f32[8,2], index: 5, kind: input, shape index: {}]
  %s6 = inlined_call_operand.vmem [shape: f32[64,8], index: 6, kind: input, shape index: {}]
  %s7 = inlined_call_operand.vmem [shape: f32[64,1], index: 7, kind: input, shape index: {}]
  %s8 = inlined_call_operand.vmem [shape: f32[16,64], index: 8, kind: input, shape index: {}]
  %s9 = inlined_call_operand.vmem [shape: f32[16,1], index: 9, kind: input, shape index: {}]
  %s10 = inlined_call_operand.vmem [shape: f32[16,16], index: 10, kind: input, shape index: {}]
  %s11 = inlined_call_operand.vmem [shape: f32[16,16], index: 11, kind: input, shape index: {}]
  %s12 = inlined_call_operand.vmem [shape: f32[16,1], index: 12, kind: input, shape index: {}]
  %s13 = inlined_call_operand.vmem [shape: f32[4,16], index: 13, kind: input, shape index: {}]
  %s14 = inlined_call_operand.vmem [shape: f32[4,1], index: 14, kind: input, shape index: {}]
  %s15 = inlined_call_operand.vmem [shape: f32[4,2], index: 15, kind: output, shape index: {}]
  %s16 = sld [smem:[#allocation0]]
  $region70: #{dqn_forward.5} parent=0
    _
  %s18 = ssub.s32 1, %s16
  %s19 = scalar_select 0, %s18, %s16
  // Predicated region
  $region2: #{dqn_forward.5} parent=0 // pred_check
    _
  $region3: #{dqn_forward.5} parent=0 // pred_check_branch
    %21 = sbr.rel (0) target = $region5
  $region4: #{dqn_forward.5} parent=0 // pred_region
    _
  $region5: #{dqn_forward.5} parent=0 // pred_fallthru
    _
  // Predicated region
  $region6: #{dqn_forward.5} parent=0 // pred_check
    _
  $region7: #{dqn_forward.5} parent=0 // pred_check_branch
    %23 = sbr.rel (0) target = $region9
  $region8: #{dqn_forward.5} parent=0 // pred_region
    _
  $region9: #{dqn_forward.5} parent=0 // pred_fallthru
    _
  // Predicated region
  $region10: #{dqn_forward.5} parent=0 // pred_check
    _
  $region11: #{dqn_forward.5} parent=0 // pred_check_branch
    %25 = sbr.rel (0) target = $region13
  $region12: #{dqn_forward.5} parent=0 // pred_region
    _
  $region13: #{dqn_forward.5} parent=0 // pred_fallthru
    _
  // Predicated region
  $region14: #{dqn_forward.5} parent=0 // pred_check
    _
  $region15: #{dqn_forward.5} parent=0 // pred_check_branch
    %27 = sbr.rel (0) target = $region17
  $region16: #{dqn_forward.5} parent=0 // pred_region
    _
  $region17: #{dqn_forward.5} parent=0 // pred_fallthru
    _
  // Predicated region
  $region18: #{dqn_forward.5} parent=0 // pred_check
    _
  $region19: #{dqn_forward.5} parent=0 // pred_check_branch
    %29 = sbr.rel (0) target = $region21
  $region20: #{dqn_forward.5} parent=0 // pred_region
    _
  $region21: #{dqn_forward.5} parent=0 // pred_fallthru
    _
  // Predicated region
  $region22: #{dqn_forward.5} parent=0 // pred_check
    _
  $region23: #{dqn_forward.5} parent=0 // pred_check_branch
    %31 = sbr.rel (0) target = $region25
  $region24: #{dqn_forward.5} parent=0 // pred_region
    _
  $region25: #{dqn_forward.5} parent=0 // pred_fallthru
    _
  // Predicated region
  $region26: #{dqn_forward.5} parent=0 // pred_check
    _
  $region27: #{dqn_forward.5} parent=0 // pred_check_branch
    %33 = sbr.rel (0) target = $region29
  $region28: #{dqn_forward.5} parent=0 // pred_region
    _
  $region29: #{dqn_forward.5} parent=0 // pred_fallthru
    _
  // Predicated region
  $region30: #{dqn_forward.5} parent=0 // pred_check
    _
  $region31: #{dqn_forward.5} parent=0 // pred_check_branch
    %35 = sbr.rel (0) target = $region33
  $region32: #{dqn_forward.5} parent=0 // pred_region
    _
  $region33: #{dqn_forward.5} parent=0 // pred_fallthru
    _
  // Predicated region
  $region34: #{dqn_forward.5} parent=0 // pred_check
    _
  $region35: #{dqn_forward.5} parent=0 // pred_check_branch
    %37 = sbr.rel (0) target = $region37
  $region36: #{dqn_forward.5} parent=0 // pred_region
    _
  $region37: #{dqn_forward.5} parent=0 // pred_fallthru
    _
  // Predicated region
  $region38: #{dqn_forward.5} parent=0 // pred_check
    _
  $region39: #{dqn_forward.5} parent=0 // pred_check_branch
    %39 = sbr.rel (0) target = $region41
  $region40: #{dqn_forward.5} parent=0 // pred_region
    _
  $region41: #{dqn_forward.5} parent=0 // pred_fallthru
    _
  // Predicated region
  $region42: #{dqn_forward.5} parent=0 // pred_check
    _
  $region43: #{dqn_forward.5} parent=0 // pred_check_branch
    %41 = sbr.rel (0) target = $region45
  $region44: #{dqn_forward.5} parent=0 // pred_region
    _
  $region45: #{dqn_forward.5} parent=0 // pred_fallthru
    _
  // Predicated region
  $region46: #{dqn_forward.5} parent=0 // pred_check
    _
  $region47: #{dqn_forward.5} parent=0 // pred_check_branch
    %43 = sbr.rel (0) target = $region49
  $region48: #{dqn_forward.5} parent=0 // pred_region
    _
  $region49: #{dqn_forward.5} parent=0 // pred_fallthru
    _
  // Predicated region
  $region50: #{dqn_forward.5} parent=0 // pred_check
    _
  $region51: #{dqn_forward.5} parent=0 // pred_check_branch
    %45 = sbr.rel (0) target = $region53
  $region52: #{dqn_forward.5} parent=0 // pred_region
    _
  $region53: #{dqn_forward.5} parent=0 // pred_fallthru
    _
  // Predicated region
  $region54: #{dqn_forward.5} parent=0 // pred_check
    _
  $region55: #{dqn_forward.5} parent=0 // pred_check_branch
    %47 = sbr.rel (0) target = $region57
  $region56: #{dqn_forward.5} parent=0 // pred_region
    _
  $region57: #{dqn_forward.5} parent=0 // pred_fallthru
    _
  // Predicated region
  $region58: #{dqn_forward.5} parent=0 // pred_check
    _
  $region59: #{dqn_forward.5} parent=0 // pred_check_branch
    %49 = sbr.rel (0) target = $region61
  $region60: #{dqn_forward.5} parent=0 // pred_region
    _
  $region61: #{dqn_forward.5} parent=0 // pred_fallthru
    _
  %v51 = vld [vmem:[%s1] sm:$0xff]
  %v52 = vld [vmem:[%s1 + $0x8] sm:$0xff]
  %v53 = vld [vmem:[%s1 + $0x10] sm:$0xf]
  %v54 = vld [vmem:[%s1 + $0x14] sm:$0xff]
  %v55 = vld [vmem:[%s1 + $0x1c] sm:$0xff]
  %v56 = vld [vmem:[%s1 + $0x24] sm:$0xf]
  %v57 = vld [vmem:[%s1 + $0x28] sm:$0xff]
  %v58 = vld [vmem:[%s1 + $0x30] sm:$0xff]
  %v59 = vld [vmem:[%s1 + $0x38] sm:$0xf]
  %v60 = vld [vmem:[%s1 + $0x3c] sm:$0xff]
  %v61 = vld [vmem:[%s1 + $0x44] sm:$0xff]
  %v62 = vld [vmem:[%s1 + $0x4c] sm:$0xf]
  %v63 = vld [vmem:[%s1 + $0x50] sm:$0xff]
  %v64 = vld [vmem:[%s1 + $0x58] sm:$0xff]
  %v65 = vld [vmem:[%s1 + $0x60] sm:$0xf]
  %v66 = vld [vmem:[%s1 + $0x64] sm:$0xff]
  %v67 = vld [vmem:[%s1 + $0x6c] sm:$0xff]
  %v68 = vld [vmem:[%s1 + $0x74] sm:$0xf]
  %v69 = vld [vmem:[%s1 + $0x78] sm:$0xff]
  %v70 = vld [vmem:[%s1 + $0x80] sm:$0xff]
  %v71 = vld [vmem:[%s1 + $0x88] sm:$0xf]
  %v72 = vld [vmem:[%s1 + $0x8c] sm:$0xff]
  %v73 = vld [vmem:[%s1 + $0x94] sm:$0xff]
  %v74 = vld [vmem:[%s1 + $0x9c] sm:$0xf]
  %v75 = vld [vmem:[%s0] sm:$0xf]
  %v76 = vld [vmem:[%s0 + $0x4] sm:$0xf]
  %v77 = vld [vmem:[%s0 + $0x8] sm:$0xf]
  %v78 = vld [vmem:[%s0 + $0xc] sm:$0xf]
  %v79 = vld [vmem:[%s0 + $0x10] sm:$0xf]
  %v80 = vld [vmem:[%s0 + $0x14] sm:$0xf]
  %v81 = vld [vmem:[%s0 + $0x18] sm:$0xf]
  %v82 = vld [vmem:[%s0 + $0x1c] sm:$0xf]
  %v83 = vld [vmem:[%s0 + $0x20] sm:$0xf]
  %v84 = vld [vmem:[%s0 + $0x24] sm:$0xf]
  %v85 = vld [vmem:[%s0 + $0x28] sm:$0xf]
  %v86 = vld [vmem:[%s0 + $0x2c] sm:$0xf]
  %v87 = vld [vmem:[%s0 + $0x30] sm:$0xf]
  %v88 = vld [vmem:[%s0 + $0x34] sm:$0xf]
  %v89 = vld [vmem:[%s0 + $0x38] sm:$0xf]
  %v90 = vld [vmem:[%s0 + $0x3c] sm:$0xf]
  %v91 = vld [vmem:[%s0 + $0x40] sm:$0xf]
  %v92 = vld [vmem:[%s0 + $0x44] sm:$0xf]
  %v93 = vld [vmem:[%s0 + $0x48] sm:$0xf]
  %v94 = vld [vmem:[%s0 + $0x4c] sm:$0xf]
  %v95 = vld [vmem:[%s0 + $0x50] sm:$0xf]
  %v96 = vld [vmem:[%s0 + $0x54] sm:$0xf]
  %v97 = vld [vmem:[%s0 + $0x58] sm:$0xf]
  %v98 = vld [vmem:[%s0 + $0x5c] sm:$0xf]
  %v99 = vld [vmem:[%s0 + $0x60] sm:$0xf]
  %v100 = vld [vmem:[%s0 + $0x64] sm:$0xf]
  %v101 = vld [vmem:[%s0 + $0x68] sm:$0xf]
  %v102 = vld [vmem:[%s0 + $0x6c] sm:$0xf]
  %v103 = vld [vmem:[%s0 + $0x70] sm:$0xf]
  %v104 = vld [vmem:[%s0 + $0x74] sm:$0xf]
  %v105 = vld [vmem:[%s0 + $0x78] sm:$0xf]
  %v106 = vld [vmem:[%s0 + $0x7c] sm:$0xf]
  %v107 = vld [vmem:[%s0 + $0x80] sm:$0xf]
  %v108 = vld [vmem:[%s0 + $0x84] sm:$0xf]
  %v109 = vld [vmem:[%s0 + $0x88] sm:$0xf]
  %v110 = vld [vmem:[%s0 + $0x8c] sm:$0xf]
  %v111 = vld [vmem:[%s0 + $0x90] sm:$0xf]
  %v112 = vld [vmem:[%s0 + $0x94] sm:$0xf]
  %v113 = vld [vmem:[%s0 + $0x98] sm:$0xf]
  %v114 = vld [vmem:[%s0 + $0x9c] sm:$0xf]
  %v115 = vld [vmem:[%s0 + $0xa0] sm:$0xf]
  %v116 = vld [vmem:[%s0 + $0xa4] sm:$0xf]
  %v117 = vld [vmem:[%s0 + $0xa8] sm:$0xf]
  %v118 = vld [vmem:[%s0 + $0xac] sm:$0xf]
  %v119 = vld [vmem:[%s0 + $0xb0] sm:$0xf]
  %v120 = vld [vmem:[%s0 + $0xb4] sm:$0xf]
  %v121 = vld [vmem:[%s0 + $0xb8] sm:$0xf]
  %v122 = vld [vmem:[%s0 + $0xbc] sm:$0xf]
  %v123 = vld [vmem:[%s0 + $0xc0] sm:$0xf]
  %v124 = vld [vmem:[%s0 + $0xc4] sm:$0xf]
  %v125 = vld [vmem:[%s0 + $0xc8] sm:$0xf]
  %v126 = vld [vmem:[%s0 + $0xcc] sm:$0xf]
  %v127 = vld [vmem:[%s0 + $0xd0] sm:$0xf]
  %v128 = vld [vmem:[%s0 + $0xd4] sm:$0xf]
  %v129 = vld [vmem:[%s0 + $0xd8] sm:$0xf]
  %v130 = vld [vmem:[%s0 + $0xdc] sm:$0xf]
  %v131 = vld [vmem:[%s0 + $0xe0] sm:$0xf]
  %v132 = vld [vmem:[%s0 + $0xe4] sm:$0xf]
  %v133 = vld [vmem:[%s0 + $0xe8] sm:$0xf]
  %v134 = vld [vmem:[%s0 + $0xec] sm:$0xf]
  %v135 = vld [vmem:[%s0 + $0xf0] sm:$0xf]
  %v136 = vld [vmem:[%s0 + $0xf4] sm:$0xf]
  %v137 = vld [vmem:[%s0 + $0xf8] sm:$0xf]
  %v138 = vld [vmem:[%s0 + $0xfc] sm:$0xf]
  %v139 = vld [vmem:[%s0 + $0x100] sm:$0xf]
  %v140 = vld [vmem:[%s0 + $0x104] sm:$0xf]
  %v141 = vld [vmem:[%s0 + $0x108] sm:$0xf]
  %v142 = vld [vmem:[%s0 + $0x10c] sm:$0xf]
  %v143 = vld [vmem:[%s0 + $0x110] sm:$0xf]
  %v144 = vld [vmem:[%s0 + $0x114] sm:$0xf]
  %v145 = vld [vmem:[%s0 + $0x118] sm:$0xf]
  %v146 = vld [vmem:[%s0 + $0x11c] sm:$0xf]
  %v171 = vunpack.c.l.b16 %v51
  %v172 = vunpack.c.h.b16 %v51
  %v173 = vunpack.c.l.b16 %v52
  %v174 = vunpack.c.h.b16 %v52
  %v175 = vunpack.c.l.b16 %v53
  %v176 = vunpack.c.l.b16 %v54
  %v177 = vunpack.c.h.b16 %v54
  %v178 = vunpack.c.l.b16 %v55
  %v179 = vunpack.c.h.b16 %v55
  %v180 = vunpack.c.l.b16 %v56
  %v181 = vunpack.c.l.b16 %v57
  %v182 = vunpack.c.h.b16 %v57
  %v183 = vunpack.c.l.b16 %v58
  %v184 = vunpack.c.h.b16 %v58
  %v185 = vunpack.c.l.b16 %v59
  %v186 = vunpack.c.l.b16 %v60
  %v187 = vunpack.c.h.b16 %v60
  %v188 = vunpack.c.l.b16 %v61
  %v189 = vunpack.c.h.b16 %v61
  %v190 = vunpack.c.l.b16 %v62
  %v191 = vunpack.c.l.b16 %v63
  %v192 = vunpack.c.h.b16 %v63
  %v193 = vunpack.c.l.b16 %v64
  %v194 = vunpack.c.h.b16 %v64
  %v195 = vunpack.c.l.b16 %v65
  %v196 = vunpack.c.l.b16 %v66
  %v197 = vunpack.c.h.b16 %v66
  %v198 = vunpack.c.l.b16 %v67
  %v199 = vunpack.c.h.b16 %v67
  %v200 = vunpack.c.l.b16 %v68
  %v201 = vunpack.c.l.b16 %v69
  %v202 = vunpack.c.h.b16 %v69
  %v203 = vunpack.c.l.b16 %v70
  %v204 = vunpack.c.h.b16 %v70
  %v205 = vunpack.c.l.b16 %v71
  %v206 = vunpack.c.l.b16 %v72
  %v207 = vunpack.c.h.b16 %v72
  %v208 = vunpack.c.l.b16 %v73
  %v209 = vunpack.c.h.b16 %v73
  %v210 = vunpack.c.l.b16 %v74
  %v211 = vpack.c.b16 %v176, %v171
  %v212 = vpack.c.b16 %v177, %v172
  %v213 = vpack.c.b16 %v178, %v173
  %v214 = vpack.c.b16 %v179, %v174
  %v215 = vpack.c.b16 %v180, %v175
  %v216 = vpack.c.b16 %v186, %v181
  %v217 = vpack.c.b16 %v187, %v182
  %v218 = vpack.c.b16 %v188, %v183
  %v219 = vpack.c.b16 %v189, %v184
  %v220 = vpack.c.b16 %v190, %v185
  %v221 = vpack.c.b16 %v196, %v191
  %v222 = vpack.c.b16 %v197, %v192
  %v223 = vpack.c.b16 %v198, %v193
  %v224 = vpack.c.b16 %v199, %v194
  %v225 = vpack.c.b16 %v200, %v195
  %v226 = vpack.c.b16 %v206, %v201
  %v227 = vpack.c.b16 %v207, %v202
  %v228 = vpack.c.b16 %v208, %v203
  %v229 = vpack.c.b16 %v209, %v204
  %v230 = vpack.c.b16 %v210, %v205
  %v319 = vunpack.c.l.b16 %v75
  %v320 = vunpack.c.l.b16 %v76
  %v321 = vunpack.c.l.b16 %v77
  %v322 = vunpack.c.l.b16 %v78
  %v323 = vunpack.c.l.b16 %v79
  %v324 = vunpack.c.l.b16 %v80
  %v325 = vunpack.c.l.b16 %v81
  %v326 = vunpack.c.l.b16 %v82
  %v327 = vunpack.c.l.b16 %v83
  %v328 = vunpack.c.l.b16 %v84
  %v329 = vunpack.c.l.b16 %v85
  %v330 = vunpack.c.l.b16 %v86
  %v331 = vunpack.c.l.b16 %v87
  %v332 = vunpack.c.l.b16 %v88
  %v333 = vunpack.c.l.b16 %v89
  %v334 = vunpack.c.l.b16 %v90
  %v335 = vunpack.c.l.b16 %v91
  %v336 = vunpack.c.l.b16 %v92
  %v337 = vunpack.c.l.b16 %v93
  %v338 = vunpack.c.l.b16 %v94
  %v339 = vunpack.c.l.b16 %v95
  %v340 = vunpack.c.l.b16 %v96
  %v341 = vunpack.c.l.b16 %v97
  %v342 = vunpack.c.l.b16 %v98
  %v343 = vunpack.c.l.b16 %v99
  %v344 = vunpack.c.l.b16 %v100
  %v345 = vunpack.c.l.b16 %v101
  %v346 = vunpack.c.l.b16 %v102
  %v347 = vunpack.c.l.b16 %v103
  %v348 = vunpack.c.l.b16 %v104
  %v349 = vunpack.c.l.b16 %v105
  %v350 = vunpack.c.l.b16 %v106
  %v351 = vunpack.c.l.b16 %v107
  %v352 = vunpack.c.l.b16 %v108
  %v353 = vunpack.c.l.b16 %v109
  %v354 = vunpack.c.l.b16 %v110
  %v355 = vunpack.c.l.b16 %v111
  %v356 = vunpack.c.l.b16 %v112
  %v357 = vunpack.c.l.b16 %v113
  %v358 = vunpack.c.l.b16 %v114
  %v359 = vunpack.c.l.b16 %v115
  %v360 = vunpack.c.l.b16 %v116
  %v361 = vunpack.c.l.b16 %v117
  %v362 = vunpack.c.l.b16 %v118
  %v363 = vunpack.c.l.b16 %v119
  %v364 = vunpack.c.l.b16 %v120
  %v365 = vunpack.c.l.b16 %v121
  %v366 = vunpack.c.l.b16 %v122
  %v367 = vunpack.c.l.b16 %v123
  %v368 = vunpack.c.l.b16 %v124
  %v369 = vunpack.c.l.b16 %v125
  %v370 = vunpack.c.l.b16 %v126
  %v371 = vunpack.c.l.b16 %v127
  %v372 = vunpack.c.l.b16 %v128
  %v373 = vunpack.c.l.b16 %v129
  %v374 = vunpack.c.l.b16 %v130
  %v375 = vunpack.c.l.b16 %v131
  %v376 = vunpack.c.l.b16 %v132
  %v377 = vunpack.c.l.b16 %v133
  %v378 = vunpack.c.l.b16 %v134
  %v379 = vunpack.c.l.b16 %v135
  %v380 = vunpack.c.l.b16 %v136
  %v381 = vunpack.c.l.b16 %v137
  %v382 = vunpack.c.l.b16 %v138
  %v383 = vunpack.c.l.b16 %v139
  %v384 = vunpack.c.l.b16 %v140
  %v385 = vunpack.c.l.b16 %v141
  %v386 = vunpack.c.l.b16 %v142
  %v387 = vunpack.c.l.b16 %v143
  %v388 = vunpack.c.l.b16 %v144
  %v389 = vunpack.c.l.b16 %v145
  %v390 = vunpack.c.l.b16 %v146
  %v391 = vpack.c.b16 %v320, %v319
  %v392 = vpack.c.b16 %v322, %v321
  %v393 = vpack.c.b16 %v324, %v323
  %v394 = vpack.c.b16 %v326, %v325
  %v395 = vpack.c.b16 %v328, %v327
  %v396 = vpack.c.b16 %v330, %v329
  %v397 = vpack.c.b16 %v332, %v331
  %v398 = vpack.c.b16 %v334, %v333
  %v399 = vpack.c.b16 %v336, %v335
  %v400 = vpack.c.b16 %v338, %v337
  %v401 = vpack.c.b16 %v340, %v339
  %v402 = vpack.c.b16 %v342, %v341
  %v403 = vpack.c.b16 %v344, %v343
  %v404 = vpack.c.b16 %v346, %v345
  %v405 = vpack.c.b16 %v348, %v347
  %v406 = vpack.c.b16 %v350, %v349
  %v407 = vpack.c.b16 %v352, %v351
  %v408 = vpack.c.b16 %v354, %v353
  %v409 = vpack.c.b16 %v356, %v355
  %v410 = vpack.c.b16 %v358, %v357
  %v411 = vpack.c.b16 %v360, %v359
  %v412 = vpack.c.b16 %v362, %v361
  %v413 = vpack.c.b16 %v364, %v363
  %v414 = vpack.c.b16 %v366, %v365
  %v415 = vpack.c.b16 %v368, %v367
  %v416 = vpack.c.b16 %v370, %v369
  %v417 = vpack.c.b16 %v372, %v371
  %v418 = vpack.c.b16 %v374, %v373
  %v419 = vpack.c.b16 %v376, %v375
  %v420 = vpack.c.b16 %v378, %v377
  %v421 = vpack.c.b16 %v380, %v379
  %v422 = vpack.c.b16 %v382, %v381
  %v423 = vpack.c.b16 %v384, %v383
  %v424 = vpack.c.b16 %v386, %v385
  %v425 = vpack.c.b16 %v388, %v387
  %v426 = vpack.c.b16 %v390, %v389
  %vm463 = vcmask 523264
  %v465 = vsel %vm463, %v215, 0
  %v468 = vsel %vm463, %v220, 0
  %v471 = vsel %vm463, %v225, 0
  %v474 = vsel %vm463, %v230, 0
  %476 = vmatprep.subr.bf16.mxu0 0
  %477 = vmatpush1.bf16.msra.mxu0 %v391
  %478 = vmatprep.subr.bf16.mxu0 0
  %479 = vmatpush1.bf16.msra.mxu0 %v392
  %480 = vmatprep.subr.bf16.mxu0 0
  %481 = vmatpush1.bf16.msra.mxu0 %v393
  %482 = vmatprep.subr.bf16.mxu0 0
  %483 = vmatpush1.bf16.msra.mxu0 %v394
  %484 = vmatprep.subr.bf16.mxu0 0
  %485 = vmatpush1.bf16.msra.mxu0 %v395
  %486 = vmatprep.subr.bf16.mxu0 0
  %487 = vmatpush1.bf16.msra.mxu0 %v396
  %488 = vmatprep.subr.bf16.mxu0 0
  %489 = vmatpush1.bf16.msra.mxu0 %v397
  %490 = vmatprep.subr.bf16.mxu0 0
  %491 = vmatpush1.bf16.msra.mxu0 %v398
  %492 = vmatprep.subr.bf16.mxu0 0
  %493 = vmatpush1.bf16.msra.mxu0 %v399
  %494 = vmatprep.subr.bf16.mxu0 0
  %495 = vmatpush1.bf16.msra.mxu0 %v400
  %496 = vmatprep.subr.bf16.mxu0 0
  %497 = vmatpush1.bf16.msra.mxu0 %v401
  %498 = vmatprep.subr.bf16.mxu0 0
  %499 = vmatpush1.bf16.msra.mxu0 %v402
  %500 = vmatprep.subr.bf16.mxu0 0
  %501 = vmatpush1.bf16.msra.mxu0 %v403
  %502 = vmatprep.subr.bf16.mxu0 0
  %503 = vmatpush1.bf16.msra.mxu0 %v404
  %504 = vmatprep.subr.bf16.mxu0 0
  %505 = vmatpush1.bf16.msra.mxu0 %v405
  %506 = vmatprep.subr.bf16.mxu0 0
  %507 = vmatpush1.bf16.msra.mxu0 %v406
  %508 = vmatprep.mubr.bf16.mxu0 %v212
  %509 = vmatmul.mubr.bf16.gmra.mrb[0].mxu0 %v211
  %v510 = vpop.f32.mrb[0].mxu0
  %v511 = vadd.f32 0.0, %v510
  %v512 = vpop.f32.mrb[0].mxu0
  %v513 = vpop.f32.mrb[0].mxu0
  %v514 = vadd.f32 0.0, %v513
  %v515 = vpop.f32.mrb[0].mxu0
  %516 = vmatprep.mubr.bf16.mxu0 %v217
  %517 = vmatmul.mubr.bf16.gmra.mrb[0].mxu0 %v216
  %v518 = vpop.f32.mrb[0].mxu0
  %v519 = vadd.f32 0.0, %v518
  %v520 = vpop.f32.mrb[0].mxu0
  %v521 = vpop.f32.mrb[0].mxu0
  %v522 = vadd.f32 0.0, %v521
  %v523 = vpop.f32.mrb[0].mxu0
  %524 = vmatprep.mubr.bf16.mxu0 %v222
  %525 = vmatmul.mubr.bf16.gmra.mrb[0].mxu0 %v221
  %v526 = vpop.f32.mrb[0].mxu0
  %v527 = vadd.f32 0.0, %v526
  %v528 = vpop.f32.mrb[0].mxu0
  %v529 = vpop.f32.mrb[0].mxu0
  %v530 = vadd.f32 0.0, %v529
  %v531 = vpop.f32.mrb[0].mxu0
  %532 = vmatprep.mubr.bf16.mxu0 %v227
  %533 = vmatmul.mubr.bf16.gmra.mrb[0].mxu0 %v226
  %v534 = vpop.f32.mrb[0].mxu0
  %v535 = vadd.f32 0.0, %v534
  %v536 = vpop.f32.mrb[0].mxu0
  %v537 = vpop.f32.mrb[0].mxu0
  %v538 = vadd.f32 0.0, %v537
  %v539 = vpop.f32.mrb[0].mxu0
  %540 = vdwg.mxu0
  %541 = vmatprep.subr.bf16.mxu0 0
  %542 = vmatpush1.bf16.msra.mxu0 %v407
  %543 = vmatprep.subr.bf16.mxu0 0
  %544 = vmatpush1.bf16.msra.mxu0 %v408
  %545 = vmatprep.subr.bf16.mxu0 0
  %546 = vmatpush1.bf16.msra.mxu0 %v409
  %547 = vmatprep.subr.bf16.mxu0 0
  %548 = vmatpush1.bf16.msra.mxu0 %v410
  %549 = vmatprep.subr.bf16.mxu0 0
  %550 = vmatpush1.bf16.msra.mxu0 %v411
  %551 = vmatprep.subr.bf16.mxu0 0
  %552 = vmatpush1.bf16.msra.mxu0 %v412
  %553 = vmatprep.subr.bf16.mxu0 0
  %554 = vmatpush1.bf16.msra.mxu0 %v413
  %555 = vmatprep.subr.bf16.mxu0 0
  %556 = vmatpush1.bf16.msra.mxu0 %v414
  %557 = vmatprep.subr.bf16.mxu0 0
  %558 = vmatpush1.bf16.msra.mxu0 %v415
  %559 = vmatprep.subr.bf16.mxu0 0
  %560 = vmatpush1.bf16.msra.mxu0 %v416
  %561 = vmatprep.subr.bf16.mxu0 0
  %562 = vmatpush1.bf16.msra.mxu0 %v417
  %563 = vmatprep.subr.bf16.mxu0 0
  %564 = vmatpush1.bf16.msra.mxu0 %v418
  %565 = vmatprep.subr.bf16.mxu0 0
  %566 = vmatpush1.bf16.msra.mxu0 %v419
  %567 = vmatprep.subr.bf16.mxu0 0
  %568 = vmatpush1.bf16.msra.mxu0 %v420
  %569 = vmatprep.subr.bf16.mxu0 0
  %570 = vmatpush1.bf16.msra.mxu0 %v421
  %571 = vmatprep.subr.bf16.mxu0 0
  %572 = vmatpush1.bf16.msra.mxu0 %v422
  %573 = vmatprep.mubr.bf16.mxu0 %v214
  %574 = vmatmul.mubr.bf16.gmra.mrb[0].mxu0 %v213
  %v575 = vpop.f32.mrb[0].mxu0
  %v576 = vadd.f32 %v511, %v575
  %v577 = vpop.f32.mrb[0].mxu0
  %v578 = vpop.f32.mrb[0].mxu0
  %v579 = vadd.f32 %v514, %v578
  %v580 = vpop.f32.mrb[0].mxu0
  %581 = vmatprep.mubr.bf16.mxu0 %v219
  %582 = vmatmul.mubr.bf16.gmra.mrb[0].mxu0 %v218
  %v583 = vpop.f32.mrb[0].mxu0
  %v584 = vadd.f32 %v519, %v583
  %v585 = vpop.f32.mrb[0].mxu0
  %v586 = vpop.f32.mrb[0].mxu0
  %v587 = vadd.f32 %v522, %v586
  %v588 = vpop.f32.mrb[0].mxu0
  %589 = vmatprep.mubr.bf16.mxu0 %v224
  %590 = vmatmul.mubr.bf16.gmra.mrb[0].mxu0 %v223
  %v591 = vpop.f32.mrb[0].mxu0
  %v592 = vadd.f32 %v527, %v591
  %v593 = vpop.f32.mrb[0].mxu0
  %v594 = vpop.f32.mrb[0].mxu0
  %v595 = vadd.f32 %v530, %v594
  %v596 = vpop.f32.mrb[0].mxu0
  %597 = vmatprep.mubr.bf16.mxu0 %v229
  %598 = vmatmul.mubr.bf16.gmra.mrb[0].mxu0 %v228
  %v599 = vpop.f32.mrb[0].mxu0
  %v600 = vadd.f32 %v535, %v599
  %v601 = vpop.f32.mrb[0].mxu0
  %v602 = vpop.f32.mrb[0].mxu0
  %v603 = vadd.f32 %v538, %v602
  %v604 = vpop.f32.mrb[0].mxu0
  %605 = vdwg.mxu0
  %606 = vmatprep.subr.bf16.mxu0 0
  %607 = vmatpush1.bf16.msra.mxu0 %v423
  %608 = vmatprep.subr.bf16.mxu0 0
  %609 = vmatpush1.bf16.msra.mxu0 %v424
  %610 = vmatprep.subr.bf16.mxu0 0
  %611 = vmatpush1.bf16.msra.mxu0 %v425
  %612 = vmatprep.subr.bf16.mxu0 0
  %613 = vmatpush1.bf16.msra.mxu0 %v426
  %614 = vmatprep.subr.bf16.mxu0 0
  %615 = vmatpush1.bf16.msra.mxu0 0
  %616 = vmatprep.subr.bf16.mxu0 0
  %617 = vmatpush1.bf16.msra.mxu0 0
  %618 = vmatprep.subr.bf16.mxu0 0
  %619 = vmatpush1.bf16.msra.mxu0 0
  %620 = vmatprep.subr.bf16.mxu0 0
  %621 = vmatpush1.bf16.msra.mxu0 0
  %622 = vmatprep.subr.bf16.mxu0 0
  %623 = vmatpush1.bf16.msra.mxu0 0
  %624 = vmatprep.subr.bf16.mxu0 0
  %625 = vmatpush1.bf16.msra.mxu0 0
  %626 = vmatprep.subr.bf16.mxu0 0
  %627 = vmatpush1.bf16.msra.mxu0 0
  %628 = vmatprep.subr.bf16.mxu0 0
  %629 = vmatpush1.bf16.msra.mxu0 0
  %630 = vmatprep.subr.bf16.mxu0 0
  %631 = vmatpush1.bf16.msra.mxu0 0
  %632 = vmatprep.subr.bf16.mxu0 0
  %633 = vmatpush1.bf16.msra.mxu0 0
  %634 = vmatprep.subr.bf16.mxu0 0
  %635 = vmatpush1.bf16.msra.mxu0 0
  %636 = vmatprep.subr.bf16.mxu0 0
  %637 = vmatpush1.bf16.msra.mxu0 0
  %638 = vmatprep.mubr.bf16.mxu0 0
  %639 = vmatmul.mubr.bf16.gmra.mrb[0].mxu0 %v465
  %v640 = vpop.f32.mrb[0].mxu0
  %v641 = vadd.f32 %v576, %v640
  %v642 = vpop.f32.mrb[0].mxu0
  %v643 = vpop.f32.mrb[0].mxu0
  %v644 = vadd.f32 %v579, %v643
  %v645 = vpop.f32.mrb[0].mxu0
  %646 = vmatprep.mubr.bf16.mxu0 0
  %647 = vmatmul.mubr.bf16.gmra.mrb[0].mxu0 %v468
  %v648 = vpop.f32.mrb[0].mxu0
  %v649 = vadd.f32 %v584, %v648
  %v650 = vpop.f32.mrb[0].mxu0
  %v651 = vpop.f32.mrb[0].mxu0
  %v652 = vadd.f32 %v587, %v651
  %v653 = vpop.f32.mrb[0].mxu0
  %654 = vmatprep.mubr.bf16.mxu0 0
  %655 = vmatmul.mubr.bf16.gmra.mrb[0].mxu0 %v471
  %v656 = vpop.f32.mrb[0].mxu0
  %v657 = vadd.f32 %v592, %v656
  %v658 = vpop.f32.mrb[0].mxu0
  %v659 = vpop.f32.mrb[0].mxu0
  %v660 = vadd.f32 %v595, %v659
  %v661 = vpop.f32.mrb[0].mxu0
  %662 = vmatprep.mubr.bf16.mxu0 0
  %663 = vmatmul.mubr.bf16.gmra.mrb[0].mxu0 %v474
  %v664 = vpop.f32.mrb[0].mxu0
  %v665 = vadd.f32 %v600, %v664
  %v666 = vpop.f32.mrb[0].mxu0
  %v667 = vpop.f32.mrb[0].mxu0
  %v668 = vadd.f32 %v603, %v667
  %v669 = vpop.f32.mrb[0].mxu0
  %670 = vdwg.mxu0
  %s671 = scalar_lea.vmem %s0, 288
  %v672 = vld [vmem:[%s671] sm:$0xf]
  %v673 = vld [vmem:[%s671 + $0x4] sm:$0xf]
  %v674 = vld [vmem:[%s671 + $0x8] sm:$0xf]
  %v675 = vld [vmem:[%s671 + $0xc] sm:$0xf]
  %v676 = vld [vmem:[%s671 + $0x10] sm:$0xf]
  %v677 = vld [vmem:[%s671 + $0x14] sm:$0xf]
  %v678 = vld [vmem:[%s671 + $0x18] sm:$0xf]
  %v679 = vld [vmem:[%s671 + $0x1c] sm:$0xf]
  %v680 = vld [vmem:[%s671 + $0x20] sm:$0xf]
  %v681 = vld [vmem:[%s671 + $0x24] sm:$0xf]
  %v682 = vld [vmem:[%s671 + $0x28] sm:$0xf]
  %v683 = vld [vmem:[%s671 + $0x2c] sm:$0xf]
  %v684 = vld [vmem:[%s671 + $0x30] sm:$0xf]
  %v685 = vld [vmem:[%s671 + $0x34] sm:$0xf]
  %v686 = vld [vmem:[%s671 + $0x38] sm:$0xf]
  %v687 = vld [vmem:[%s671 + $0x3c] sm:$0xf]
  %v688 = vld [vmem:[%s671 + $0x40] sm:$0xf]
  %v689 = vld [vmem:[%s671 + $0x44] sm:$0xf]
  %v690 = vld [vmem:[%s671 + $0x48] sm:$0xf]
  %v691 = vld [vmem:[%s671 + $0x4c] sm:$0xf]
  %v692 = vld [vmem:[%s671 + $0x50] sm:$0xf]
  %v693 = vld [vmem:[%s671 + $0x54] sm:$0xf]
  %v694 = vld [vmem:[%s671 + $0x58] sm:$0xf]
  %v695 = vld [vmem:[%s671 + $0x5c] sm:$0xf]
  %v696 = vld [vmem:[%s671 + $0x60] sm:$0xf]
  %v697 = vld [vmem:[%s671 + $0x64] sm:$0xf]
  %v698 = vld [vmem:[%s671 + $0x68] sm:$0xf]
  %v699 = vld [vmem:[%s671 + $0x6c] sm:$0xf]
  %v700 = vld [vmem:[%s671 + $0x70] sm:$0xf]
  %v701 = vld [vmem:[%s671 + $0x74] sm:$0xf]
  %v702 = vld [vmem:[%s671 + $0x78] sm:$0xf]
  %v703 = vld [vmem:[%s671 + $0x7c] sm:$0xf]
  %v704 = vld [vmem:[%s671 + $0x80] sm:$0xf]
  %v705 = vld [vmem:[%s671 + $0x84] sm:$0xf]
  %v706 = vld [vmem:[%s671 + $0x88] sm:$0xf]
  %v707 = vld [vmem:[%s671 + $0x8c] sm:$0xf]
  %v708 = vld [vmem:[%s671 + $0x90] sm:$0xf]
  %v709 = vld [vmem:[%s671 + $0x94] sm:$0xf]
  %v710 = vld [vmem:[%s671 + $0x98] sm:$0xf]
  %v711 = vld [vmem:[%s671 + $0x9c] sm:$0xf]
  %v712 = vld [vmem:[%s671 + $0xa0] sm:$0xf]
  %v713 = vld [vmem:[%s671 + $0xa4] sm:$0xf]
  %v714 = vld [vmem:[%s671 + $0xa8] sm:$0xf]
  %v715 = vld [vmem:[%s671 + $0xac] sm:$0xf]
  %v716 = vld [vmem:[%s671 + $0xb0] sm:$0xf]
  %v717 = vld [vmem:[%s671 + $0xb4] sm:$0xf]
  %v718 = vld [vmem:[%s671 + $0xb8] sm:$0xf]
  %v719 = vld [vmem:[%s671 + $0xbc] sm:$0xf]
  %v720 = vld [vmem:[%s671 + $0xc0] sm:$0xf]
  %v721 = vld [vmem:[%s671 + $0xc4] sm:$0xf]
  %v722 = vld [vmem:[%s671 + $0xc8] sm:$0xf]
  %v723 = vld [vmem:[%s671 + $0xcc] sm:$0xf]
  %v724 = vld [vmem:[%s671 + $0xd0] sm:$0xf]
  %v725 = vld [vmem:[%s671 + $0xd4] sm:$0xf]
  %v726 = vld [vmem:[%s671 + $0xd8] sm:$0xf]
  %v727 = vld [vmem:[%s671 + $0xdc] sm:$0xf]
  %v728 = vld [vmem:[%s671 + $0xe0] sm:$0xf]
  %v729 = vld [vmem:[%s671 + $0xe4] sm:$0xf]
  %v730 = vld [vmem:[%s671 + $0xe8] sm:$0xf]
  %v731 = vld [vmem:[%s671 + $0xec] sm:$0xf]
  %v732 = vld [vmem:[%s671 + $0xf0] sm:$0xf]
  %v733 = vld [vmem:[%s671 + $0xf4] sm:$0xf]
  %v734 = vld [vmem:[%s671 + $0xf8] sm:$0xf]
  %v735 = vld [vmem:[%s671 + $0xfc] sm:$0xf]
  %v736 = vld [vmem:[%s671 + $0x100] sm:$0xf]
  %v737 = vld [vmem:[%s671 + $0x104] sm:$0xf]
  %v738 = vld [vmem:[%s671 + $0x108] sm:$0xf]
  %v739 = vld [vmem:[%s671 + $0x10c] sm:$0xf]
  %v740 = vld [vmem:[%s671 + $0x110] sm:$0xf]
  %v741 = vld [vmem:[%s671 + $0x114] sm:$0xf]
  %v742 = vld [vmem:[%s671 + $0x118] sm:$0xf]
  %v743 = vld [vmem:[%s671 + $0x11c] sm:$0xf]
  %v816 = vunpack.c.l.b16 %v672
  %v817 = vunpack.c.l.b16 %v673
  %v818 = vunpack.c.l.b16 %v674
  %v819 = vunpack.c.l.b16 %v675
  %v820 = vunpack.c.l.b16 %v676
  %v821 = vunpack.c.l.b16 %v677
  %v822 = vunpack.c.l.b16 %v678
  %v823 = vunpack.c.l.b16 %v679
  %v824 = vunpack.c.l.b16 %v680
  %v825 = vunpack.c.l.b16 %v681
  %v826 = vunpack.c.l.b16 %v682
  %v827 = vunpack.c.l.b16 %v683
  %v828 = vunpack.c.l.b16 %v684
  %v829 = vunpack.c.l.b16 %v685
  %v830 = vunpack.c.l.b16 %v686
  %v831 = vunpack.c.l.b16 %v687
  %v832 = vunpack.c.l.b16 %v688
  %v833 = vunpack.c.l.b16 %v689
  %v834 = vunpack.c.l.b16 %v690
  %v835 = vunpack.c.l.b16 %v691
  %v836 = vunpack.c.l.b16 %v692
  %v837 = vunpack.c.l.b16 %v693
  %v838 = vunpack.c.l.b16 %v694
  %v839 = vunpack.c.l.b16 %v695
  %v840 = vunpack.c.l.b16 %v696
  %v841 = vunpack.c.l.b16 %v697
  %v842 = vunpack.c.l.b16 %v698
  %v843 = vunpack.c.l.b16 %v699
  %v844 = vunpack.c.l.b16 %v700
  %v845 = vunpack.c.l.b16 %v701
  %v846 = vunpack.c.l.b16 %v702
  %v847 = vunpack.c.l.b16 %v703
  %v848 = vunpack.c.l.b16 %v704
  %v849 = vunpack.c.l.b16 %v705
  %v850 = vunpack.c.l.b16 %v706
  %v851 = vunpack.c.l.b16 %v707
  %v852 = vunpack.c.l.b16 %v708
  %v853 = vunpack.c.l.b16 %v709
  %v854 = vunpack.c.l.b16 %v710
  %v855 = vunpack.c.l.b16 %v711
  %v856 = vunpack.c.l.b16 %v712
  %v857 = vunpack.c.l.b16 %v713
  %v858 = vunpack.c.l.b16 %v714
  %v859 = vunpack.c.l.b16 %v715
  %v860 = vunpack.c.l.b16 %v716
  %v861 = vunpack.c.l.b16 %v717
  %v862 = vunpack.c.l.b16 %v718
  %v863 = vunpack.c.l.b16 %v719
  %v864 = vunpack.c.l.b16 %v720
  %v865 = vunpack.c.l.b16 %v721
  %v866 = vunpack.c.l.b16 %v722
  %v867 = vunpack.c.l.b16 %v723
  %v868 = vunpack.c.l.b16 %v724
  %v869 = vunpack.c.l.b16 %v725
  %v870 = vunpack.c.l.b16 %v726
  %v871 = vunpack.c.l.b16 %v727
  %v872 = vunpack.c.l.b16 %v728
  %v873 = vunpack.c.l.b16 %v729
  %v874 = vunpack.c.l.b16 %v730
  %v875 = vunpack.c.l.b16 %v731
  %v876 = vunpack.c.l.b16 %v732
  %v877 = vunpack.c.l.b16 %v733
  %v878 = vunpack.c.l.b16 %v734
  %v879 = vunpack.c.l.b16 %v735
  %v880 = vunpack.c.l.b16 %v736
  %v881 = vunpack.c.l.b16 %v737
  %v882 = vunpack.c.l.b16 %v738
  %v883 = vunpack.c.l.b16 %v739
  %v884 = vunpack.c.l.b16 %v740
  %v885 = vunpack.c.l.b16 %v741
  %v886 = vunpack.c.l.b16 %v742
  %v887 = vunpack.c.l.b16 %v743
  %v888 = vpack.c.b16 %v817, %v816
  %v889 = vpack.c.b16 %v819, %v818
  %v890 = vpack.c.b16 %v821, %v820
  %v891 = vpack.c.b16 %v823, %v822
  %v892 = vpack.c.b16 %v825, %v824
  %v893 = vpack.c.b16 %v827, %v826
  %v894 = vpack.c.b16 %v829, %v828
  %v895 = vpack.c.b16 %v831, %v830
  %v896 = vpack.c.b16 %v833, %v832
  %v897 = vpack.c.b16 %v835, %v834
  %v898 = vpack.c.b16 %v837, %v836
  %v899 = vpack.c.b16 %v839, %v838
  %v900 = vpack.c.b16 %v841, %v840
  %v901 = vpack.c.b16 %v843, %v842
  %v902 = vpack.c.b16 %v845, %v844
  %v903 = vpack.c.b16 %v847, %v846
  %v904 = vpack.c.b16 %v849, %v848
  %v905 = vpack.c.b16 %v851, %v850
  %v906 = vpack.c.b16 %v853, %v852
  %v907 = vpack.c.b16 %v855, %v854
  %v908 = vpack.c.b16 %v857, %v856
  %v909 = vpack.c.b16 %v859, %v858
  %v910 = vpack.c.b16 %v861, %v860
  %v911 = vpack.c.b16 %v863, %v862
  %v912 = vpack.c.b16 %v865, %v864
  %v913 = vpack.c.b16 %v867, %v866
  %v914 = vpack.c.b16 %v869, %v868
  %v915 = vpack.c.b16 %v871, %v870
  %v916 = vpack.c.b16 %v873, %v872
  %v917 = vpack.c.b16 %v875, %v874
  %v918 = vpack.c.b16 %v877, %v876
  %v919 = vpack.c.b16 %v879, %v878
  %v920 = vpack.c.b16 %v881, %v880
  %v921 = vpack.c.b16 %v883, %v882
  %v922 = vpack.c.b16 %v885, %v884
  %v923 = vpack.c.b16 %v887, %v886
  %960 = vmatprep.subr.bf16.mxu0 0
  %961 = vmatpush1.bf16.msra.mxu0 %v888
  %962 = vmatprep.subr.bf16.mxu0 0
  %963 = vmatpush1.bf16.msra.mxu0 %v889
  %964 = vmatprep.subr.bf16.mxu0 0
  %965 = vmatpush1.bf16.msra.mxu0 %v890
  %966 = vmatprep.subr.bf16.mxu0 0
  %967 = vmatpush1.bf16.msra.mxu0 %v891
  %968 = vmatprep.subr.bf16.mxu0 0
  %969 = vmatpush1.bf16.msra.mxu0 %v892
  %970 = vmatprep.subr.bf16.mxu0 0
  %971 = vmatpush1.bf16.msra.mxu0 %v893
  %972 = vmatprep.subr.bf16.mxu0 0
  %973 = vmatpush1.bf16.msra.mxu0 %v894
  %974 = vmatprep.subr.bf16.mxu0 0
  %975 = vmatpush1.bf16.msra.mxu0 %v895
  %976 = vmatprep.subr.bf16.mxu0 0
  %977 = vmatpush1.bf16.msra.mxu0 %v896
  %978 = vmatprep.subr.bf16.mxu0 0
  %979 = vmatpush1.bf16.msra.mxu0 %v897
  %980 = vmatprep.subr.bf16.mxu0 0
  %981 = vmatpush1.bf16.msra.mxu0 %v898
  %982 = vmatprep.subr.bf16.mxu0 0
  %983 = vmatpush1.bf16.msra.mxu0 %v899
  %984 = vmatprep.subr.bf16.mxu0 0
  %985 = vmatpush1.bf16.msra.mxu0 %v900
  %986 = vmatprep.subr.bf16.mxu0 0
  %987 = vmatpush1.bf16.msra.mxu0 %v901
  %988 = vmatprep.subr.bf16.mxu0 0
  %989 = vmatpush1.bf16.msra.mxu0 %v902
  %990 = vmatprep.subr.bf16.mxu0 0
  %991 = vmatpush1.bf16.msra.mxu0 %v903
  %992 = vmatprep.mubr.bf16.mxu0 %v212
  %993 = vmatmul.mubr.bf16.gmra.mrb[0].mxu0 %v211
  %v994 = vpop.f32.mrb[0].mxu0
  %v995 = vadd.f32 0.0, %v994
  %v996 = vpop.f32.mrb[0].mxu0
  %v997 = vpop.f32.mrb[0].mxu0
  %v998 = vadd.f32 0.0, %v997
  %v999 = vpop.f32.mrb[0].mxu0
  %1000 = vmatprep.mubr.bf16.mxu0 %v217
  %1001 = vmatmul.mubr.bf16.gmra.mrb[0].mxu0 %v216
  %v1002 = vpop.f32.mrb[0].mxu0
  %v1003 = vadd.f32 0.0, %v1002
  %v1004 = vpop.f32.mrb[0].mxu0
  %v1005 = vpop.f32.mrb[0].mxu0
  %v1006 = vadd.f32 0.0, %v1005
  %v1007 = vpop.f32.mrb[0].mxu0
  %1008 = vmatprep.mubr.bf16.mxu0 %v222
  %1009 = vmatmul.mubr.bf16.gmra.mrb[0].mxu0 %v221
  %v1010 = vpop.f32.mrb[0].mxu0
  %v1011 = vadd.f32 0.0, %v1010
  %v1012 = vpop.f32.mrb[0].mxu0
  %v1013 = vpop.f32.mrb[0].mxu0
  %v1014 = vadd.f32 0.0, %v1013
  %v1015 = vpop.f32.mrb[0].mxu0
  %1016 = vmatprep.mubr.bf16.mxu0 %v227
  %1017 = vmatmul.mubr.bf16.gmra.mrb[0].mxu0 %v226
  %v1018 = vpop.f32.mrb[0].mxu0
  %v1019 = vadd.f32 0.0, %v1018
  %v1020 = vpop.f32.mrb[0].mxu0
  %v1021 = vpop.f32.mrb[0].mxu0
  %v1022 = vadd.f32 0.0, %v1021
  %v1023 = vpop.f32.mrb[0].mxu0
  %1024 = vdwg.mxu0
  %1025 = vmatprep.subr.bf16.mxu0 0
  %1026 = vmatpush1.bf16.msra.mxu0 %v904
  %1027 = vmatprep.subr.bf16.mxu0 0
  %1028 = vmatpush1.bf16.msra.mxu0 %v905
  %1029 = vmatprep.subr.bf16.mxu0 0
  %1030 = vmatpush1.bf16.msra.mxu0 %v906
  %1031 = vmatprep.subr.bf16.mxu0 0
  %1032 = vmatpush1.bf16.msra.mxu0 %v907
  %1033 = vmatprep.subr.bf16.mxu0 0
  %1034 = vmatpush1.bf16.msra.mxu0 %v908
  %1035 = vmatprep.subr.bf16.mxu0 0
  %1036 = vmatpush1.bf16.msra.mxu0 %v909
  %1037 = vmatprep.subr.bf16.mxu0 0
  %1038 = vmatpush1.bf16.msra.mxu0 %v910
  %1039 = vmatprep.subr.bf16.mxu0 0
  %1040 = vmatpush1.bf16.msra.mxu0 %v911
  %1041 = vmatprep.subr.bf16.mxu0 0
  %1042 = vmatpush1.bf16.msra.mxu0 %v912
  %1043 = vmatprep.subr.bf16.mxu0 0
  %1044 = vmatpush1.bf16.msra.mxu0 %v913
  %1045 = vmatprep.subr.bf16.mxu0 0
  %1046 = vmatpush1.bf16.msra.mxu0 %v914
  %1047 = vmatprep.subr.bf16.mxu0 0
  %1048 = vmatpush1.bf16.msra.mxu0 %v915
  %1049 = vmatprep.subr.bf16.mxu0 0
  %1050 = vmatpush1.bf16.msra.mxu0 %v916
  %1051 = vmatprep.subr.bf16.mxu0 0
  %1052 = vmatpush1.bf16.msra.mxu0 %v917
  %1053 = vmatprep.subr.bf16.mxu0 0
  %1054 = vmatpush1.bf16.msra.mxu0 %v918
  %1055 = vmatprep.subr.bf16.mxu0 0
  %1056 = vmatpush1.bf16.msra.mxu0 %v919
  %1057 = vmatprep.mubr.bf16.mxu0 %v214
  %1058 = vmatmul.mubr.bf16.gmra.mrb[0].mxu0 %v213
  %v1059 = vpop.f32.mrb[0].mxu0
  %v1060 = vadd.f32 %v995, %v1059
  %v1061 = vpop.f32.mrb[0].mxu0
  %v1062 = vpop.f32.mrb[0].mxu0
  %v1063 = vadd.f32 %v998, %v1062
  %v1064 = vpop.f32.mrb[0].mxu0
  %1065 = vmatprep.mubr.bf16.mxu0 %v219
  %1066 = vmatmul.mubr.bf16.gmra.mrb[0].mxu0 %v218
  %v1067 = vpop.f32.mrb[0].mxu0
  %v1068 = vadd.f32 %v1003, %v1067
  %v1069 = vpop.f32.mrb[0].mxu0
  %v1070 = vpop.f32.mrb[0].mxu0
  %v1071 = vadd.f32 %v1006, %v1070
  %v1072 = vpop.f32.mrb[0].mxu0
  %1073 = vmatprep.mubr.bf16.mxu0 %v224
  %1074 = vmatmul.mubr.bf16.gmra.mrb[0].mxu0 %v223
  %v1075 = vpop.f32.mrb[0].mxu0
  %v1076 = vadd.f32 %v1011, %v1075
  %v1077 = vpop.f32.mrb[0].mxu0
  %v1078 = vpop.f32.mrb[0].mxu0
  %v1079 = vadd.f32 %v1014, %v1078
  %v1080 = vpop.f32.mrb[0].mxu0
  %1081 = vmatprep.mubr.bf16.mxu0 %v229
  %1082 = vmatmul.mubr.bf16.gmra.mrb[0].mxu0 %v228
  %v1083 = vpop.f32.mrb[0].mxu0
  %v1084 = vadd.f32 %v1019, %v1083
  %v1085 = vpop.f32.mrb[0].mxu0
  %v1086 = vpop.f32.mrb[0].mxu0
  %v1087 = vadd.f32 %v1022, %v1086
  %v1088 = vpop.f32.mrb[0].mxu0
  %1089 = vdwg.mxu0
  %1090 = vmatprep.subr.bf16.mxu0 0
  %1091 = vmatpush1.bf16.msra.mxu0 %v920
  %1092 = vmatprep.subr.bf16.mxu0 0
  %1093 = vmatpush1.bf16.msra.mxu0 %v921
  %1094 = vmatprep.subr.bf16.mxu0 0
  %1095 = vmatpush1.bf16.msra.mxu0 %v922
  %1096 = vmatprep.subr.bf16.mxu0 0
  %1097 = vmatpush1.bf16.msra.mxu0 %v923
  %1098 = vmatprep.subr.bf16.mxu0 0
  %1099 = vmatpush1.bf16.msra.mxu0 0
  %1100 = vmatprep.subr.bf16.mxu0 0
  %1101 = vmatpush1.bf16.msra.mxu0 0
  %1102 = vmatprep.subr.bf16.mxu0 0
  %1103 = vmatpush1.bf16.msra.mxu0 0
  %1104 = vmatprep.subr.bf16.mxu0 0
  %1105 = vmatpush1.bf16.msra.mxu0 0
  %1106 = vmatprep.subr.bf16.mxu0 0
  %1107 = vmatpush1.bf16.msra.mxu0 0
  %1108 = vmatprep.subr.bf16.mxu0 0
  %1109 = vmatpush1.bf16.msra.mxu0 0
  %1110 = vmatprep.subr.bf16.mxu0 0
  %1111 = vmatpush1.bf16.msra.mxu0 0
  %1112 = vmatprep.subr.bf16.mxu0 0
  %1113 = vmatpush1.bf16.msra.mxu0 0
  %1114 = vmatprep.subr.bf16.mxu0 0
  %1115 = vmatpush1.bf16.msra.mxu0 0
  %1116 = vmatprep.subr.bf16.mxu0 0
  %1117 = vmatpush1.bf16.msra.mxu0 0
  %1118 = vmatprep.subr.bf16.mxu0 0
  %1119 = vmatpush1.bf16.msra.mxu0 0
  %1120 = vmatprep.subr.bf16.mxu0 0
  %1121 = vmatpush1.bf16.msra.mxu0 0
  %1122 = vmatprep.mubr.bf16.mxu0 0
  %1123 = vmatmul.mubr.bf16.gmra.mrb[0].mxu0 %v465
  %v1124 = vpop.f32.mrb[0].mxu0
  %v1125 = vadd.f32 %v1060, %v1124
  %v1126 = vpop.f32.mrb[0].mxu0
  %v1127 = vpop.f32.mrb[0].mxu0
  %v1128 = vadd.f32 %v1063, %v1127
  %v1129 = vpop.f32.mrb[0].mxu0
  %1130 = vmatprep.mubr.bf16.mxu0 0
  %1131 = vmatmul.mubr.bf16.gmra.mrb[0].mxu0 %v468
  %v1132 = vpop.f32.mrb[0].mxu0
  %v1133 = vadd.f32 %v1068, %v1132
  %v1134 = vpop.f32.mrb[0].mxu0
  %v1135 = vpop.f32.mrb[0].mxu0
  %v1136 = vadd.f32 %v1071, %v1135
  %v1137 = vpop.f32.mrb[0].mxu0
  %1138 = vmatprep.mubr.bf16.mxu0 0
  %1139 = vmatmul.mubr.bf16.gmra.mrb[0].mxu0 %v471
  %v1140 = vpop.f32.mrb[0].mxu0
  %v1141 = vadd.f32 %v1076, %v1140
  %v1142 = vpop.f32.mrb[0].mxu0
  %v1143 = vpop.f32.mrb[0].mxu0
  %v1144 = vadd.f32 %v1079, %v1143
  %v1145 = vpop.f32.mrb[0].mxu0
  %1146 = vmatprep.mubr.bf16.mxu0 0
  %1147 = vmatmul.mubr.bf16.gmra.mrb[0].mxu0 %v474
  %v1148 = vpop.f32.mrb[0].mxu0
  %v1149 = vadd.f32 %v1084, %v1148
  %v1150 = vpop.f32.mrb[0].mxu0
  %v1151 = vpop.f32.mrb[0].mxu0
  %v1152 = vadd.f32 %v1087, %v1151
  %v1153 = vpop.f32.mrb[0].mxu0
  %1154 = vdwg.mxu0
  %v1155 = vmax.f32 %v641, %v1125
  %v1156 = vmax.f32 %v644, %v1128
  %v1157 = vmax.f32 %v649, %v1133
  %v1158 = vmax.f32 %v652, %v1136
  %v1159 = vmax.f32 %v657, %v1141
  %v1160 = vmax.f32 %v660, %v1144
  %v1161 = vmax.f32 %v665, %v1149
  %v1162 = vmax.f32 %v668, %v1152
  %s1163 = scalar_lea.vmem %s0, 576
  %v1164 = vld [vmem:[%s1163] sm:$0xf]
  %v1165 = vld [vmem:[%s1163 + $0x4] sm:$0xf]
  %v1166 = vld [vmem:[%s1163 + $0x8] sm:$0xf]
  %v1167 = vld [vmem:[%s1163 + $0xc] sm:$0xf]
  %v1168 = vld [vmem:[%s1163 + $0x10] sm:$0xf]
  %v1169 = vld [vmem:[%s1163 + $0x14] sm:$0xf]
  %v1170 = vld [vmem:[%s1163 + $0x18] sm:$0xf]
  %v1171 = vld [vmem:[%s1163 + $0x1c] sm:$0xf]
  %v1172 = vld [vmem:[%s1163 + $0x20] sm:$0xf]
  %v1173 = vld [vmem:[%s1163 + $0x24] sm:$0xf]
  %v1174 = vld [vmem:[%s1163 + $0x28] sm:$0xf]
  %v1175 = vld [vmem:[%s1163 + $0x2c] sm:$0xf]
  %v1176 = vld [vmem:[%s1163 + $0x30] sm:$0xf]
  %v1177 = vld [vmem:[%s1163 + $0x34] sm:$0xf]
  %v1178 = vld [vmem:[%s1163 + $0x38] sm:$0xf]
  %v1179 = vld [vmem:[%s1163 + $0x3c] sm:$0xf]
  %v1180 = vld [vmem:[%s1163 + $0x40] sm:$0xf]
  %v1181 = vld [vmem:[%s1163 + $0x44] sm:$0xf]
  %v1182 = vld [vmem:[%s1163 + $0x48] sm:$0xf]
  %v1183 = vld [vmem:[%s1163 + $0x4c] sm:$0xf]
  %v1184 = vld [vmem:[%s1163 + $0x50] sm:$0xf]
  %v1185 = vld [vmem:[%s1163 + $0x54] sm:$0xf]
  %v1186 = vld [vmem:[%s1163 + $0x58] sm:$0xf]
  %v1187 = vld [vmem:[%s1163 + $0x5c] sm:$0xf]
  %v1188 = vld [vmem:[%s1163 + $0x60] sm:$0xf]
  %v1189 = vld [vmem:[%s1163 + $0x64] sm:$0xf]
  %v1190 = vld [vmem:[%s1163 + $0x68] sm:$0xf]
  %v1191 = vld [vmem:[%s1163 + $0x6c] sm:$0xf]
  %v1192 = vld [vmem:[%s1163 + $0x70] sm:$0xf]
  %v1193 = vld [vmem:[%s1163 + $0x74] sm:$0xf]
  %v1194 = vld [vmem:[%s1163 + $0x78] sm:$0xf]
  %v1195 = vld [vmem:[%s1163 + $0x7c] sm:$0xf]
  %v1196 = vld [vmem:[%s1163 + $0x80] sm:$0xf]
  %v1197 = vld [vmem:[%s1163 + $0x84] sm:$0xf]
  %v1198 = vld [vmem:[%s1163 + $0x88] sm:$0xf]
  %v1199 = vld [vmem:[%s1163 + $0x8c] sm:$0xf]
  %v1200 = vld [vmem:[%s1163 + $0x90] sm:$0xf]
  %v1201 = vld [vmem:[%s1163 + $0x94] sm:$0xf]
  %v1202 = vld [vmem:[%s1163 + $0x98] sm:$0xf]
  %v1203 = vld [vmem:[%s1163 + $0x9c] sm:$0xf]
  %v1204 = vld [vmem:[%s1163 + $0xa0] sm:$0xf]
  %v1205 = vld [vmem:[%s1163 + $0xa4] sm:$0xf]
  %v1206 = vld [vmem:[%s1163 + $0xa8] sm:$0xf]
  %v1207 = vld [vmem:[%s1163 + $0xac] sm:$0xf]
  %v1208 = vld [vmem:[%s1163 + $0xb0] sm:$0xf]
  %v1209 = vld [vmem:[%s1163 + $0xb4] sm:$0xf]
  %v1210 = vld [vmem:[%s1163 + $0xb8] sm:$0xf]
  %v1211 = vld [vmem:[%s1163 + $0xbc] sm:$0xf]
  %v1212 = vld [vmem:[%s1163 + $0xc0] sm:$0xf]
  %v1213 = vld [vmem:[%s1163 + $0xc4] sm:$0xf]
  %v1214 = vld [vmem:[%s1163 + $0xc8] sm:$0xf]
  %v1215 = vld [vmem:[%s1163 + $0xcc] sm:$0xf]
  %v1216 = vld [vmem:[%s1163 + $0xd0] sm:$0xf]
  %v1217 = vld [vmem:[%s1163 + $0xd4] sm:$0xf]
  %v1218 = vld [vmem:[%s1163 + $0xd8] sm:$0xf]
  %v1219 = vld [vmem:[%s1163 + $0xdc] sm:$0xf]
  %v1220 = vld [vmem:[%s1163 + $0xe0] sm:$0xf]
  %v1221 = vld [vmem:[%s1163 + $0xe4] sm:$0xf]
  %v1222 = vld [vmem:[%s1163 + $0xe8] sm:$0xf]
  %v1223 = vld [vmem:[%s1163 + $0xec] sm:$0xf]
  %v1224 = vld [vmem:[%s1163 + $0xf0] sm:$0xf]
  %v1225 = vld [vmem:[%s1163 + $0xf4] sm:$0xf]
  %v1226 = vld [vmem:[%s1163 + $0xf8] sm:$0xf]
  %v1227 = vld [vmem:[%s1163 + $0xfc] sm:$0xf]
  %v1228 = vld [vmem:[%s1163 + $0x100] sm:$0xf]
  %v1229 = vld [vmem:[%s1163 + $0x104] sm:$0xf]
  %v1230 = vld [vmem:[%s1163 + $0x108] sm:$0xf]
  %v1231 = vld [vmem:[%s1163 + $0x10c] sm:$0xf]
  %v1232 = vld [vmem:[%s1163 + $0x110] sm:$0xf]
  %v1233 = vld [vmem:[%s1163 + $0x114] sm:$0xf]
  %v1234 = vld [vmem:[%s1163 + $0x118] sm:$0xf]
  %v1235 = vld [vmem:[%s1163 + $0x11c] sm:$0xf]
  %v1308 = vunpack.c.l.b16 %v1164
  %v1309 = vunpack.c.l.b16 %v1165
  %v1310 = vunpack.c.l.b16 %v1166
  %v1311 = vunpack.c.l.b16 %v1167
  %v1312 = vunpack.c.l.b16 %v1168
  %v1313 = vunpack.c.l.b16 %v1169
  %v1314 = vunpack.c.l.b16 %v1170
  %v1315 = vunpack.c.l.b16 %v1171
  %v1316 = vunpack.c.l.b16 %v1172
  %v1317 = vunpack.c.l.b16 %v1173
  %v1318 = vunpack.c.l.b16 %v1174
  %v1319 = vunpack.c.l.b16 %v1175
  %v1320 = vunpack.c.l.b16 %v1176
  %v1321 = vunpack.c.l.b16 %v1177
  %v1322 = vunpack.c.l.b16 %v1178
  %v1323 = vunpack.c.l.b16 %v1179
  %v1324 = vunpack.c.l.b16 %v1180
  %v1325 = vunpack.c.l.b16 %v1181
  %v1326 = vunpack.c.l.b16 %v1182
  %v1327 = vunpack.c.l.b16 %v1183
  %v1328 = vunpack.c.l.b16 %v1184
  %v1329 = vunpack.c.l.b16 %v1185
  %v1330 = vunpack.c.l.b16 %v1186
  %v1331 = vunpack.c.l.b16 %v1187
  %v1332 = vunpack.c.l.b16 %v1188
  %v1333 = vunpack.c.l.b16 %v1189
  %v1334 = vunpack.c.l.b16 %v1190
  %v1335 = vunpack.c.l.b16 %v1191
  %v1336 = vunpack.c.l.b16 %v1192
  %v1337 = vunpack.c.l.b16 %v1193
  %v1338 = vunpack.c.l.b16 %v1194
  %v1339 = vunpack.c.l.b16 %v1195
  %v1340 = vunpack.c.l.b16 %v1196
  %v1341 = vunpack.c.l.b16 %v1197
  %v1342 = vunpack.c.l.b16 %v1198
  %v1343 = vunpack.c.l.b16 %v1199
  %v1344 = vunpack.c.l.b16 %v1200
  %v1345 = vunpack.c.l.b16 %v1201
  %v1346 = vunpack.c.l.b16 %v1202
  %v1347 = vunpack.c.l.b16 %v1203
  %v1348 = vunpack.c.l.b16 %v1204
  %v1349 = vunpack.c.l.b16 %v1205
  %v1350 = vunpack.c.l.b16 %v1206
  %v1351 = vunpack.c.l.b16 %v1207
  %v1352 = vunpack.c.l.b16 %v1208
  %v1353 = vunpack.c.l.b16 %v1209
  %v1354 = vunpack.c.l.b16 %v1210
  %v1355 = vunpack.c.l.b16 %v1211
  %v1356 = vunpack.c.l.b16 %v1212
  %v1357 = vunpack.c.l.b16 %v1213
  %v1358 = vunpack.c.l.b16 %v1214
  %v1359 = vunpack.c.l.b16 %v1215
  %v1360 = vunpack.c.l.b16 %v1216
  %v1361 = vunpack.c.l.b16 %v1217
  %v1362 = vunpack.c.l.b16 %v1218
  %v1363 = vunpack.c.l.b16 %v1219
  %v1364 = vunpack.c.l.b16 %v1220
  %v1365 = vunpack.c.l.b16 %v1221
  %v1366 = vunpack.c.l.b16 %v1222
  %v1367 = vunpack.c.l.b16 %v1223
  %v1368 = vunpack.c.l.b16 %v1224
  %v1369 = vunpack.c.l.b16 %v1225
  %v1370 = vunpack.c.l.b16 %v1226
  %v1371 = vunpack.c.l.b16 %v1227
  %v1372 = vunpack.c.l.b16 %v1228
  %v1373 = vunpack.c.l.b16 %v1229
  %v1374 = vunpack.c.l.b16 %v1230
  %v1375 = vunpack.c.l.b16 %v1231
  %v1376 = vunpack.c.l.b16 %v1232
  %v1377 = vunpack.c.l.b16 %v1233
  %v1378 = vunpack.c.l.b16 %v1234
  %v1379 = vunpack.c.l.b16 %v1235
  %v1380 = vpack.c.b16 %v1309, %v1308
  %v1381 = vpack.c.b16 %v1311, %v1310
  %v1382 = vpack.c.b16 %v1313, %v1312
  %v1383 = vpack.c.b16 %v1315, %v1314
  %v1384 = vpack.c.b16 %v1317, %v1316
  %v1385 = vpack.c.b16 %v1319, %v1318
  %v1386 = vpack.c.b16 %v1321, %v1320
  %v1387 = vpack.c.b16 %v1323, %v1322
  %v1388 = vpack.c.b16 %v1325, %v1324
  %v1389 = vpack.c.b16 %v1327, %v1326
  %v1390 = vpack.c.b16 %v1329, %v1328
  %v1391 = vpack.c.b16 %v1331, %v1330
  %v1392 = vpack.c.b16 %v1333, %v1332
  %v1393 = vpack.c.b16 %v1335, %v1334
  %v1394 = vpack.c.b16 %v1337, %v1336
  %v1395 = vpack.c.b16 %v1339, %v1338
  %v1396 = vpack.c.b16 %v1341, %v1340
  %v1397 = vpack.c.b16 %v1343, %v1342
  %v1398 = vpack.c.b16 %v1345, %v1344
  %v1399 = vpack.c.b16 %v1347, %v1346
  %v1400 = vpack.c.b16 %v1349, %v1348
  %v1401 = vpack.c.b16 %v1351, %v1350
  %v1402 = vpack.c.b16 %v1353, %v1352
  %v1403 = vpack.c.b16 %v1355, %v1354
  %v1404 = vpack.c.b16 %v1357, %v1356
  %v1405 = vpack.c.b16 %v1359, %v1358
  %v1406 = vpack.c.b16 %v1361, %v1360
  %v1407 = vpack.c.b16 %v1363, %v1362
  %v1408 = vpack.c.b16 %v1365, %v1364
  %v1409 = vpack.c.b16 %v1367, %v1366
  %v1410 = vpack.c.b16 %v1369, %v1368
  %v1411 = vpack.c.b16 %v1371, %v1370
  %v1412 = vpack.c.b16 %v1373, %v1372
  %v1413 = vpack.c.b16 %v1375, %v1374
  %v1414 = vpack.c.b16 %v1377, %v1376
  %v1415 = vpack.c.b16 %v1379, %v1378
  %1452 = vmatprep.subr.bf16.mxu0 0
  %1453 = vmatpush1.bf16.msra.mxu0 %v1380
  %1454 = vmatprep.subr.bf16.mxu0 0
  %1455 = vmatpush1.bf16.msra.mxu0 %v1381
  %1456 = vmatprep.subr.bf16.mxu0 0
  %1457 = vmatpush1.bf16.msra.mxu0 %v1382
  %1458 = vmatprep.subr.bf16.mxu0 0
  %1459 = vmatpush1.bf16.msra.mxu0 %v1383
  %1460 = vmatprep.subr.bf16.mxu0 0
  %1461 = vmatpush1.bf16.msra.mxu0 %v1384
  %1462 = vmatprep.subr.bf16.mxu0 0
  %1463 = vmatpush1.bf16.msra.mxu0 %v1385
  %1464 = vmatprep.subr.bf16.mxu0 0
  %1465 = vmatpush1.bf16.msra.mxu0 %v1386
  %1466 = vmatprep.subr.bf16.mxu0 0
  %1467 = vmatpush1.bf16.msra.mxu0 %v1387
  %1468 = vmatprep.subr.bf16.mxu0 0
  %1469 = vmatpush1.bf16.msra.mxu0 %v1388
  %1470 = vmatprep.subr.bf16.mxu0 0
  %1471 = vmatpush1.bf16.msra.mxu0 %v1389
  %1472 = vmatprep.subr.bf16.mxu0 0
  %1473 = vmatpush1.bf16.msra.mxu0 %v1390
  %1474 = vmatprep.subr.bf16.mxu0 0
  %1475 = vmatpush1.bf16.msra.mxu0 %v1391
  %1476 = vmatprep.subr.bf16.mxu0 0
  %1477 = vmatpush1.bf16.msra.mxu0 %v1392
  %1478 = vmatprep.subr.bf16.mxu0 0
  %1479 = vmatpush1.bf16.msra.mxu0 %v1393
  %1480 = vmatprep.subr.bf16.mxu0 0
  %1481 = vmatpush1.bf16.msra.mxu0 %v1394
  %1482 = vmatprep.subr.bf16.mxu0 0
  %1483 = vmatpush1.bf16.msra.mxu0 %v1395
  %1484 = vmatprep.mubr.bf16.mxu0 %v212
  %1485 = vmatmul.mubr.bf16.gmra.mrb[0].mxu0 %v211
  %v1486 = vpop.f32.mrb[0].mxu0
  %v1487 = vadd.f32 0.0, %v1486
  %v1488 = vpop.f32.mrb[0].mxu0
  %v1489 = vpop.f32.mrb[0].mxu0
  %v1490 = vadd.f32 0.0, %v1489
  %v1491 = vpop.f32.mrb[0].mxu0
  %1492 = vmatprep.mubr.bf16.mxu0 %v217
  %1493 = vmatmul.mubr.bf16.gmra.mrb[0].mxu0 %v216
  %v1494 = vpop.f32.mrb[0].mxu0
  %v1495 = vadd.f32 0.0, %v1494
  %v1496 = vpop.f32.mrb[0].mxu0
  %v1497 = vpop.f32.mrb[0].mxu0
  %v1498 = vadd.f32 0.0, %v1497
  %v1499 = vpop.f32.mrb[0].mxu0
  %1500 = vmatprep.mubr.bf16.mxu0 %v222
  %1501 = vmatmul.mubr.bf16.gmra.mrb[0].mxu0 %v221
  %v1502 = vpop.f32.mrb[0].mxu0
  %v1503 = vadd.f32 0.0, %v1502
  %v1504 = vpop.f32.mrb[0].mxu0
  %v1505 = vpop.f32.mrb[0].mxu0
  %v1506 = vadd.f32 0.0, %v1505
  %v1507 = vpop.f32.mrb[0].mxu0
  %1508 = vmatprep.mubr.bf16.mxu0 %v227
  %1509 = vmatmul.mubr.bf16.gmra.mrb[0].mxu0 %v226
  %v1510 = vpop.f32.mrb[0].mxu0
  %v1511 = vadd.f32 0.0, %v1510
  %v1512 = vpop.f32.mrb[0].mxu0
  %v1513 = vpop.f32.mrb[0].mxu0
  %v1514 = vadd.f32 0.0, %v1513
  %v1515 = vpop.f32.mrb[0].mxu0
  %1516 = vdwg.mxu0
  %1517 = vmatprep.subr.bf16.mxu0 0
  %1518 = vmatpush1.bf16.msra.mxu0 %v1396
  %1519 = vmatprep.subr.bf16.mxu0 0
  %1520 = vmatpush1.bf16.msra.mxu0 %v1397
  %1521 = vmatprep.subr.bf16.mxu0 0
  %1522 = vmatpush1.bf16.msra.mxu0 %v1398
  %1523 = vmatprep.subr.bf16.mxu0 0
  %1524 = vmatpush1.bf16.msra.mxu0 %v1399
  %1525 = vmatprep.subr.bf16.mxu0 0
  %1526 = vmatpush1.bf16.msra.mxu0 %v1400
  %1527 = vmatprep.subr.bf16.mxu0 0
  %1528 = vmatpush1.bf16.msra.mxu0 %v1401
  %1529 = vmatprep.subr.bf16.mxu0 0
  %1530 = vmatpush1.bf16.msra.mxu0 %v1402
  %1531 = vmatprep.subr.bf16.mxu0 0
  %1532 = vmatpush1.bf16.msra.mxu0 %v1403
  %1533 = vmatprep.subr.bf16.mxu0 0
  %1534 = vmatpush1.bf16.msra.mxu0 %v1404
  %1535 = vmatprep.subr.bf16.mxu0 0
  %1536 = vmatpush1.bf16.msra.mxu0 %v1405
  %1537 = vmatprep.subr.bf16.mxu0 0
  %1538 = vmatpush1.bf16.msra.mxu0 %v1406
  %1539 = vmatprep.subr.bf16.mxu0 0
  %1540 = vmatpush1.bf16.msra.mxu0 %v1407
  %1541 = vmatprep.subr.bf16.mxu0 0
  %1542 = vmatpush1.bf16.msra.mxu0 %v1408
  %1543 = vmatprep.subr.bf16.mxu0 0
  %1544 = vmatpush1.bf16.msra.mxu0 %v1409
  %1545 = vmatprep.subr.bf16.mxu0 0
  %1546 = vmatpush1.bf16.msra.mxu0 %v1410
  %1547 = vmatprep.subr.bf16.mxu0 0
  %1548 = vmatpush1.bf16.msra.mxu0 %v1411
  %1549 = vmatprep.mubr.bf16.mxu0 %v214
  %1550 = vmatmul.mubr.bf16.gmra.mrb[0].mxu0 %v213
  %v1551 = vpop.f32.mrb[0].mxu0
  %v1552 = vadd.f32 %v1487, %v1551
  %v1553 = vpop.f32.mrb[0].mxu0
  %v1554 = vpop.f32.mrb[0].mxu0
  %v1555 = vadd.f32 %v1490, %v1554
  %v1556 = vpop.f32.mrb[0].mxu0
  %1557 = vmatprep.mubr.bf16.mxu0 %v219
  %1558 = vmatmul.mubr.bf16.gmra.mrb[0].mxu0 %v218
  %v1559 = vpop.f32.mrb[0].mxu0
  %v1560 = vadd.f32 %v1495, %v1559
  %v1561 = vpop.f32.mrb[0].mxu0
  %v1562 = vpop.f32.mrb[0].mxu0
  %v1563 = vadd.f32 %v1498, %v1562
  %v1564 = vpop.f32.mrb[0].mxu0
  %1565 = vmatprep.mubr.bf16.mxu0 %v224
  %1566 = vmatmul.mubr.bf16.gmra.mrb[0].mxu0 %v223
  %v1567 = vpop.f32.mrb[0].mxu0
  %v1568 = vadd.f32 %v1503, %v1567
  %v1569 = vpop.f32.mrb[0].mxu0
  %v1570 = vpop.f32.mrb[0].mxu0
  %v1571 = vadd.f32 %v1506, %v1570
  %v1572 = vpop.f32.mrb[0].mxu0
  %1573 = vmatprep.mubr.bf16.mxu0 %v229
  %1574 = vmatmul.mubr.bf16.gmra.mrb[0].mxu0 %v228
  %v1575 = vpop.f32.mrb[0].mxu0
  %v1576 = vadd.f32 %v1511, %v1575
  %v1577 = vpop.f32.mrb[0].mxu0
  %v1578 = vpop.f32.mrb[0].mxu0
  %v1579 = vadd.f32 %v1514, %v1578
  %v1580 = vpop.f32.mrb[0].mxu0
  %1581 = vdwg.mxu0
  %1582 = vmatprep.subr.bf16.mxu0 0
  %1583 = vmatpush1.bf16.msra.mxu0 %v1412
  %1584 = vmatprep.subr.bf16.mxu0 0
  %1585 = vmatpush1.bf16.msra.mxu0 %v1413
  %1586 = vmatprep.subr.bf16.mxu0 0
  %1587 = vmatpush1.bf16.msra.mxu0 %v1414
  %1588 = vmatprep.subr.bf16.mxu0 0
  %1589 = vmatpush1.bf16.msra.mxu0 %v1415
  %1590 = vmatprep.subr.bf16.mxu0 0
  %1591 = vmatpush1.bf16.msra.mxu0 0
  %1592 = vmatprep.subr.bf16.mxu0 0
  %1593 = vmatpush1.bf16.msra.mxu0 0
  %1594 = vmatprep.subr.bf16.mxu0 0
  %1595 = vmatpush1.bf16.msra.mxu0 0
  %1596 = vmatprep.subr.bf16.mxu0 0
  %1597 = vmatpush1.bf16.msra.mxu0 0
  %1598 = vmatprep.subr.bf16.mxu0 0
  %1599 = vmatpush1.bf16.msra.mxu0 0
  %1600 = vmatprep.subr.bf16.mxu0 0
  %1601 = vmatpush1.bf16.msra.mxu0 0
  %1602 = vmatprep.subr.bf16.mxu0 0
  %1603 = vmatpush1.bf16.msra.mxu0 0
  %1604 = vmatprep.subr.bf16.mxu0 0
  %1605 = vmatpush1.bf16.msra.mxu0 0
  %1606 = vmatprep.subr.bf16.mxu0 0
  %1607 = vmatpush1.bf16.msra.mxu0 0
  %1608 = vmatprep.subr.bf16.mxu0 0
  %1609 = vmatpush1.bf16.msra.mxu0 0
  %1610 = vmatprep.subr.bf16.mxu0 0
  %1611 = vmatpush1.bf16.msra.mxu0 0
  %1612 = vmatprep.subr.bf16.mxu0 0
  %1613 = vmatpush1.bf16.msra.mxu0 0
  %1614 = vmatprep.mubr.bf16.mxu0 0
  %1615 = vmatmul.mubr.bf16.gmra.mrb[0].mxu0 %v465
  %v1616 = vpop.f32.mrb[0].mxu0
  %v1617 = vadd.f32 %v1552, %v1616
  %v1618 = vpop.f32.mrb[0].mxu0
  %v1619 = vpop.f32.mrb[0].mxu0
  %v1620 = vadd.f32 %v1555, %v1619
  %v1621 = vpop.f32.mrb[0].mxu0
  %1622 = vmatprep.mubr.bf16.mxu0 0
  %1623 = vmatmul.mubr.bf16.gmra.mrb[0].mxu0 %v468
  %v1624 = vpop.f32.mrb[0].mxu0
  %v1625 = vadd.f32 %v1560, %v1624
  %v1626 = vpop.f32.mrb[0].mxu0
  %v1627 = vpop.f32.mrb[0].mxu0
  %v1628 = vadd.f32 %v1563, %v1627
  %v1629 = vpop.f32.mrb[0].mxu0
  %1630 = vmatprep.mubr.bf16.mxu0 0
  %1631 = vmatmul.mubr.bf16.gmra.mrb[0].mxu0 %v471
  %v1632 = vpop.f32.mrb[0].mxu0
  %v1633 = vadd.f32 %v1568, %v1632
  %v1634 = vpop.f32.mrb[0].mxu0
  %v1635 = vpop.f32.mrb[0].mxu0
  %v1636 = vadd.f32 %v1571, %v1635
  %v1637 = vpop.f32.mrb[0].mxu0
  %1638 = vmatprep.mubr.bf16.mxu0 0
  %1639 = vmatmul.mubr.bf16.gmra.mrb[0].mxu0 %v474
  %v1640 = vpop.f32.mrb[0].mxu0
  %v1641 = vadd.f32 %v1576, %v1640
  %v1642 = vpop.f32.mrb[0].mxu0
  %v1643 = vpop.f32.mrb[0].mxu0
  %v1644 = vadd.f32 %v1579, %v1643
  %v1645 = vpop.f32.mrb[0].mxu0
  %1646 = vdwg.mxu0
  %v1647 = vmax.f32 %v1155, %v1617
  %v1648 = vmax.f32 %v1156, %v1620
  %v1649 = vmax.f32 %v1157, %v1625
  %v1650 = vmax.f32 %v1158, %v1628
  %v1651 = vmax.f32 %v1159, %v1633
  %v1652 = vmax.f32 %v1160, %v1636
  %v1653 = vmax.f32 %v1161, %v1641
  %v1654 = vmax.f32 %v1162, %v1644
  %s1655 = scalar_lea.vmem %s0, 864
  %v1656 = vld [vmem:[%s1655] sm:$0xf]
  %v1657 = vld [vmem:[%s1655 + $0x4] sm:$0xf]
  %v1658 = vld [vmem:[%s1655 + $0x8] sm:$0xf]
  %v1659 = vld [vmem:[%s1655 + $0xc] sm:$0xf]
  %v1660 = vld [vmem:[%s1655 + $0x10] sm:$0xf]
  %v1661 = vld [vmem:[%s1655 + $0x14] sm:$0xf]
  %v1662 = vld [vmem:[%s1655 + $0x18] sm:$0xf]
  %v1663 = vld [vmem:[%s1655 + $0x1c] sm:$0xf]
  %v1664 = vld [vmem:[%s1655 + $0x20] sm:$0xf]
  %v1665 = vld [vmem:[%s1655 + $0x24] sm:$0xf]
  %v1666 = vld [vmem:[%s1655 + $0x28] sm:$0xf]
  %v1667 = vld [vmem:[%s1655 + $0x2c] sm:$0xf]
  %v1668 = vld [vmem:[%s1655 + $0x30] sm:$0xf]
  %v1669 = vld [vmem:[%s1655 + $0x34] sm:$0xf]
  %v1670 = vld [vmem:[%s1655 + $0x38] sm:$0xf]
  %v1671 = vld [vmem:[%s1655 + $0x3c] sm:$0xf]
  %v1672 = vld [vmem:[%s1655 + $0x40] sm:$0xf]
  %v1673 = vld [vmem:[%s1655 + $0x44] sm:$0xf]
  %v1674 = vld [vmem:[%s1655 + $0x48] sm:$0xf]
  %v1675 = vld [vmem:[%s1655 + $0x4c] sm:$0xf]
  %v1676 = vld [vmem:[%s1655 + $0x50] sm:$0xf]
  %v1677 = vld [vmem:[%s1655 + $0x54] sm:$0xf]
  %v1678 = vld [vmem:[%s1655 + $0x58] sm:$0xf]
  %v1679 = vld [vmem:[%s1655 + $0x5c] sm:$0xf]
  %v1680 = vld [vmem:[%s1655 + $0x60] sm:$0xf]
  %v1681 = vld [vmem:[%s1655 + $0x64] sm:$0xf]
  %v1682 = vld [vmem:[%s1655 + $0x68] sm:$0xf]
  %v1683 = vld [vmem:[%s1655 + $0x6c] sm:$0xf]
  %v1684 = vld [vmem:[%s1655 + $0x70] sm:$0xf]
  %v1685 = vld [vmem:[%s1655 + $0x74] sm:$0xf]
  %v1686 = vld [vmem:[%s1655 + $0x78] sm:$0xf]
  %v1687 = vld [vmem:[%s1655 + $0x7c] sm:$0xf]
  %v1688 = vld [vmem:[%s1655 + $0x80] sm:$0xf]
  %v1689 = vld [vmem:[%s1655 + $0x84] sm:$0xf]
  %v1690 = vld [vmem:[%s1655 + $0x88] sm:$0xf]
  %v1691 = vld [vmem:[%s1655 + $0x8c] sm:$0xf]
  %v1692 = vld [vmem:[%s1655 + $0x90] sm:$0xf]
  %v1693 = vld [vmem:[%s1655 + $0x94] sm:$0xf]
  %v1694 = vld [vmem:[%s1655 + $0x98] sm:$0xf]
  %v1695 = vld [vmem:[%s1655 + $0x9c] sm:$0xf]
  %v1696 = vld [vmem:[%s1655 + $0xa0] sm:$0xf]
  %v1697 = vld [vmem:[%s1655 + $0xa4] sm:$0xf]
  %v1698 = vld [vmem:[%s1655 + $0xa8] sm:$0xf]
  %v1699 = vld [vmem:[%s1655 + $0xac] sm:$0xf]
  %v1700 = vld [vmem:[%s1655 + $0xb0] sm:$0xf]
  %v1701 = vld [vmem:[%s1655 + $0xb4] sm:$0xf]
  %v1702 = vld [vmem:[%s1655 + $0xb8] sm:$0xf]
  %v1703 = vld [vmem:[%s1655 + $0xbc] sm:$0xf]
  %v1704 = vld [vmem:[%s1655 + $0xc0] sm:$0xf]
  %v1705 = vld [vmem:[%s1655 + $0xc4] sm:$0xf]
  %v1706 = vld [vmem:[%s1655 + $0xc8] sm:$0xf]
  %v1707 = vld [vmem:[%s1655 + $0xcc] sm:$0xf]
  %v1708 = vld [vmem:[%s1655 + $0xd0] sm:$0xf]
  %v1709 = vld [vmem:[%s1655 + $0xd4] sm:$0xf]
  %v1710 = vld [vmem:[%s1655 + $0xd8] sm:$0xf]
  %v1711 = vld [vmem:[%s1655 + $0xdc] sm:$0xf]
  %v1712 = vld [vmem:[%s1655 + $0xe0] sm:$0xf]
  %v1713 = vld [vmem:[%s1655 + $0xe4] sm:$0xf]
  %v1714 = vld [vmem:[%s1655 + $0xe8] sm:$0xf]
  %v1715 = vld [vmem:[%s1655 + $0xec] sm:$0xf]
  %v1716 = vld [vmem:[%s1655 + $0xf0] sm:$0xf]
  %v1717 = vld [vmem:[%s1655 + $0xf4] sm:$0xf]
  %v1718 = vld [vmem:[%s1655 + $0xf8] sm:$0xf]
  %v1719 = vld [vmem:[%s1655 + $0xfc] sm:$0xf]
  %v1720 = vld [vmem:[%s1655 + $0x100] sm:$0xf]
  %v1721 = vld [vmem:[%s1655 + $0x104] sm:$0xf]
  %v1722 = vld [vmem:[%s1655 + $0x108] sm:$0xf]
  %v1723 = vld [vmem:[%s1655 + $0x10c] sm:$0xf]
  %v1724 = vld [vmem:[%s1655 + $0x110] sm:$0xf]
  %v1725 = vld [vmem:[%s1655 + $0x114] sm:$0xf]
  %v1726 = vld [vmem:[%s1655 + $0x118] sm:$0xf]
  %v1727 = vld [vmem:[%s1655 + $0x11c] sm:$0xf]
  %v1800 = vunpack.c.l.b16 %v1656
  %v1801 = vunpack.c.l.b16 %v1657
  %v1802 = vunpack.c.l.b16 %v1658
  %v1803 = vunpack.c.l.b16 %v1659
  %v1804 = vunpack.c.l.b16 %v1660
  %v1805 = vunpack.c.l.b16 %v1661
  %v1806 = vunpack.c.l.b16 %v1662
  %v1807 = vunpack.c.l.b16 %v1663
  %v1808 = vunpack.c.l.b16 %v1664
  %v1809 = vunpack.c.l.b16 %v1665
  %v1810 = vunpack.c.l.b16 %v1666
  %v1811 = vunpack.c.l.b16 %v1667
  %v1812 = vunpack.c.l.b16 %v1668
  %v1813 = vunpack.c.l.b16 %v1669
  %v1814 = vunpack.c.l.b16 %v1670
  %v1815 = vunpack.c.l.b16 %v1671
  %v1816 = vunpack.c.l.b16 %v1672
  %v1817 = vunpack.c.l.b16 %v1673
  %v1818 = vunpack.c.l.b16 %v1674
  %v1819 = vunpack.c.l.b16 %v1675
  %v1820 = vunpack.c.l.b16 %v1676
  %v1821 = vunpack.c.l.b16 %v1677
  %v1822 = vunpack.c.l.b16 %v1678
  %v1823 = vunpack.c.l.b16 %v1679
  %v1824 = vunpack.c.l.b16 %v1680
  %v1825 = vunpack.c.l.b16 %v1681
  %v1826 = vunpack.c.l.b16 %v1682
  %v1827 = vunpack.c.l.b16 %v1683
  %v1828 = vunpack.c.l.b16 %v1684
  %v1829 = vunpack.c.l.b16 %v1685
  %v1830 = vunpack.c.l.b16 %v1686
  %v1831 = vunpack.c.l.b16 %v1687
  %v1832 = vunpack.c.l.b16 %v1688
  %v1833 = vunpack.c.l.b16 %v1689
  %v1834 = vunpack.c.l.b16 %v1690
  %v1835 = vunpack.c.l.b16 %v1691
  %v1836 = vunpack.c.l.b16 %v1692
  %v1837 = vunpack.c.l.b16 %v1693
  %v1838 = vunpack.c.l.b16 %v1694
  %v1839 = vunpack.c.l.b16 %v1695
  %v1840 = vunpack.c.l.b16 %v1696
  %v1841 = vunpack.c.l.b16 %v1697
  %v1842 = vunpack.c.l.b16 %v1698
  %v1843 = vunpack.c.l.b16 %v1699
  %v1844 = vunpack.c.l.b16 %v1700
  %v1845 = vunpack.c.l.b16 %v1701
  %v1846 = vunpack.c.l.b16 %v1702
  %v1847 = vunpack.c.l.b16 %v1703
  %v1848 = vunpack.c.l.b16 %v1704
  %v1849 = vunpack.c.l.b16 %v1705
  %v1850 = vunpack.c.l.b16 %v1706
  %v1851 = vunpack.c.l.b16 %v1707
  %v1852 = vunpack.c.l.b16 %v1708
  %v1853 = vunpack.c.l.b16 %v1709
  %v1854 = vunpack.c.l.b16 %v1710
  %v1855 = vunpack.c.l.b16 %v1711
  %v1856 = vunpack.c.l.b16 %v1712
  %v1857 = vunpack.c.l.b16 %v1713
  %v1858 = vunpack.c.l.b16 %v1714
  %v1859 = vunpack.c.l.b16 %v1715
  %v1860 = vunpack.c.l.b16 %v1716
  %v1861 = vunpack.c.l.b16 %v1717
  %v1862 = vunpack.c.l.b16 %v1718
  %v1863 = vunpack.c.l.b16 %v1719
  %v1864 = vunpack.c.l.b16 %v1720
  %v1865 = vunpack.c.l.b16 %v1721
  %v1866 = vunpack.c.l.b16 %v1722
  %v1867 = vunpack.c.l.b16 %v1723
  %v1868 = vunpack.c.l.b16 %v1724
  %v1869 = vunpack.c.l.b16 %v1725
  %v1870 = vunpack.c.l.b16 %v1726
  %v1871 = vunpack.c.l.b16 %v1727
  %v1872 = vpack.c.b16 %v1801, %v1800
  %v1873 = vpack.c.b16 %v1803, %v1802
  %v1874 = vpack.c.b16 %v1805, %v1804
  %v1875 = vpack.c.b16 %v1807, %v1806
  %v1876 = vpack.c.b16 %v1809, %v1808
  %v1877 = vpack.c.b16 %v1811, %v1810
  %v1878 = vpack.c.b16 %v1813, %v1812
  %v1879 = vpack.c.b16 %v1815, %v1814
  %v1880 = vpack.c.b16 %v1817, %v1816
  %v1881 = vpack.c.b16 %v1819, %v1818
  %v1882 = vpack.c.b16 %v1821, %v1820
  %v1883 = vpack.c.b16 %v1823, %v1822
  %v1884 = vpack.c.b16 %v1825, %v1824
  %v1885 = vpack.c.b16 %v1827, %v1826
  %v1886 = vpack.c.b16 %v1829, %v1828
  %v1887 = vpack.c.b16 %v1831, %v1830
  %v1888 = vpack.c.b16 %v1833, %v1832
  %v1889 = vpack.c.b16 %v1835, %v1834
  %v1890 = vpack.c.b16 %v1837, %v1836
  %v1891 = vpack.c.b16 %v1839, %v1838
  %v1892 = vpack.c.b16 %v1841, %v1840
  %v1893 = vpack.c.b16 %v1843, %v1842
  %v1894 = vpack.c.b16 %v1845, %v1844
  %v1895 = vpack.c.b16 %v1847, %v1846
  %v1896 = vpack.c.b16 %v1849, %v1848
  %v1897 = vpack.c.b16 %v1851, %v1850
  %v1898 = vpack.c.b16 %v1853, %v1852
  %v1899 = vpack.c.b16 %v1855, %v1854
  %v1900 = vpack.c.b16 %v1857, %v1856
  %v1901 = vpack.c.b16 %v1859, %v1858
  %v1902 = vpack.c.b16 %v1861, %v1860
  %v1903 = vpack.c.b16 %v1863, %v1862
  %v1904 = vpack.c.b16 %v1865, %v1864
  %v1905 = vpack.c.b16 %v1867, %v1866
  %v1906 = vpack.c.b16 %v1869, %v1868
  %v1907 = vpack.c.b16 %v1871, %v1870
  %1944 = vmatprep.subr.bf16.mxu0 0
  %1945 = vmatpush1.bf16.msra.mxu0 %v1872
  %1946 = vmatprep.subr.bf16.mxu0 0
  %1947 = vmatpush1.bf16.msra.mxu0 %v1873
  %1948 = vmatprep.subr.bf16.mxu0 0
  %1949 = vmatpush1.bf16.msra.mxu0 %v1874
  %1950 = vmatprep.subr.bf16.mxu0 0
  %1951 = vmatpush1.bf16.msra.mxu0 %v1875
  %1952 = vmatprep.subr.bf16.mxu0 0
  %1953 = vmatpush1.bf16.msra.mxu0 %v1876
  %1954 = vmatprep.subr.bf16.mxu0 0
  %1955 = vmatpush1.bf16.msra.mxu0 %v1877
  %1956 = vmatprep.subr.bf16.mxu0 0
  %1957 = vmatpush1.bf16.msra.mxu0 %v1878
  %1958 = vmatprep.subr.bf16.mxu0 0
  %1959 = vmatpush1.bf16.msra.mxu0 %v1879
  %1960 = vmatprep.subr.bf16.mxu0 0
  %1961 = vmatpush1.bf16.msra.mxu0 %v1880
  %1962 = vmatprep.subr.bf16.mxu0 0
  %1963 = vmatpush1.bf16.msra.mxu0 %v1881
  %1964 = vmatprep.subr.bf16.mxu0 0
  %1965 = vmatpush1.bf16.msra.mxu0 %v1882
  %1966 = vmatprep.subr.bf16.mxu0 0
  %1967 = vmatpush1.bf16.msra.mxu0 %v1883
  %1968 = vmatprep.subr.bf16.mxu0 0
  %1969 = vmatpush1.bf16.msra.mxu0 %v1884
  %1970 = vmatprep.subr.bf16.mxu0 0
  %1971 = vmatpush1.bf16.msra.mxu0 %v1885
  %1972 = vmatprep.subr.bf16.mxu0 0
  %1973 = vmatpush1.bf16.msra.mxu0 %v1886
  %1974 = vmatprep.subr.bf16.mxu0 0
  %1975 = vmatpush1.bf16.msra.mxu0 %v1887
  %1976 = vmatprep.mubr.bf16.mxu0 %v212
  %1977 = vmatmul.mubr.bf16.gmra.mrb[0].mxu0 %v211
  %v1978 = vpop.f32.mrb[0].mxu0
  %v1979 = vadd.f32 0.0, %v1978
  %v1980 = vpop.f32.mrb[0].mxu0
  %v1981 = vpop.f32.mrb[0].mxu0
  %v1982 = vadd.f32 0.0, %v1981
  %v1983 = vpop.f32.mrb[0].mxu0
  %1984 = vmatprep.mubr.bf16.mxu0 %v217
  %1985 = vmatmul.mubr.bf16.gmra.mrb[0].mxu0 %v216
  %v1986 = vpop.f32.mrb[0].mxu0
  %v1987 = vadd.f32 0.0, %v1986
  %v1988 = vpop.f32.mrb[0].mxu0
  %v1989 = vpop.f32.mrb[0].mxu0
  %v1990 = vadd.f32 0.0, %v1989
  %v1991 = vpop.f32.mrb[0].mxu0
  %1992 = vmatprep.mubr.bf16.mxu0 %v222
  %1993 = vmatmul.mubr.bf16.gmra.mrb[0].mxu0 %v221
  %v1994 = vpop.f32.mrb[0].mxu0
  %v1995 = vadd.f32 0.0, %v1994
  %v1996 = vpop.f32.mrb[0].mxu0
  %v1997 = vpop.f32.mrb[0].mxu0
  %v1998 = vadd.f32 0.0, %v1997
  %v1999 = vpop.f32.mrb[0].mxu0
  %2000 = vmatprep.mubr.bf16.mxu0 %v227
  %2001 = vmatmul.mubr.bf16.gmra.mrb[0].mxu0 %v226
  %v2002 = vpop.f32.mrb[0].mxu0
  %v2003 = vadd.f32 0.0, %v2002
  %v2004 = vpop.f32.mrb[0].mxu0
  %v2005 = vpop.f32.mrb[0].mxu0
  %v2006 = vadd.f32 0.0, %v2005
  %v2007 = vpop.f32.mrb[0].mxu0
  %2008 = vdwg.mxu0
  %2009 = vmatprep.subr.bf16.mxu0 0
  %2010 = vmatpush1.bf16.msra.mxu0 %v1888
  %2011 = vmatprep.subr.bf16.mxu0 0
  %2012 = vmatpush1.bf16.msra.mxu0 %v1889
  %2013 = vmatprep.subr.bf16.mxu0 0
  %2014 = vmatpush1.bf16.msra.mxu0 %v1890
  %2015 = vmatprep.subr.bf16.mxu0 0
  %2016 = vmatpush1.bf16.msra.mxu0 %v1891
  %2017 = vmatprep.subr.bf16.mxu0 0
  %2018 = vmatpush1.bf16.msra.mxu0 %v1892
  %2019 = vmatprep.subr.bf16.mxu0 0
  %2020 = vmatpush1.bf16.msra.mxu0 %v1893
  %2021 = vmatprep.subr.bf16.mxu0 0
  %2022 = vmatpush1.bf16.msra.mxu0 %v1894
  %2023 = vmatprep.subr.bf16.mxu0 0
  %2024 = vmatpush1.bf16.msra.mxu0 %v1895
  %2025 = vmatprep.subr.bf16.mxu0 0
  %2026 = vmatpush1.bf16.msra.mxu0 %v1896
  %2027 = vmatprep.subr.bf16.mxu0 0
  %2028 = vmatpush1.bf16.msra.mxu0 %v1897
  %2029 = vmatprep.subr.bf16.mxu0 0
  %2030 = vmatpush1.bf16.msra.mxu0 %v1898
  %2031 = vmatprep.subr.bf16.mxu0 0
  %2032 = vmatpush1.bf16.msra.mxu0 %v1899
  %2033 = vmatprep.subr.bf16.mxu0 0
  %2034 = vmatpush1.bf16.msra.mxu0 %v1900
  %2035 = vmatprep.subr.bf16.mxu0 0
  %2036 = vmatpush1.bf16.msra.mxu0 %v1901
  %2037 = vmatprep.subr.bf16.mxu0 0
  %2038 = vmatpush1.bf16.msra.mxu0 %v1902
  %2039 = vmatprep.subr.bf16.mxu0 0
  %2040 = vmatpush1.bf16.msra.mxu0 %v1903
  %2041 = vmatprep.mubr.bf16.mxu0 %v214
  %2042 = vmatmul.mubr.bf16.gmra.mrb[0].mxu0 %v213
  %v2043 = vpop.f32.mrb[0].mxu0
  %v2044 = vadd.f32 %v1979, %v2043
  %v2045 = vpop.f32.mrb[0].mxu0
  %v2046 = vpop.f32.mrb[0].mxu0
  %v2047 = vadd.f32 %v1982, %v2046
  %v2048 = vpop.f32.mrb[0].mxu0
  %2049 = vmatprep.mubr.bf16.mxu0 %v219
  %2050 = vmatmul.mubr.bf16.gmra.mrb[0].mxu0 %v218
  %v2051 = vpop.f32.mrb[0].mxu0
  %v2052 = vadd.f32 %v1987, %v2051
  %v2053 = vpop.f32.mrb[0].mxu0
  %v2054 = vpop.f32.mrb[0].mxu0
  %v2055 = vadd.f32 %v1990, %v2054
  %v2056 = vpop.f32.mrb[0].mxu0
  %2057 = vmatprep.mubr.bf16.mxu0 %v224
  %2058 = vmatmul.mubr.bf16.gmra.mrb[0].mxu0 %v223
  %v2059 = vpop.f32.mrb[0].mxu0
  %v2060 = vadd.f32 %v1995, %v2059
  %v2061 = vpop.f32.mrb[0].mxu0
  %v2062 = vpop.f32.mrb[0].mxu0
  %v2063 = vadd.f32 %v1998, %v2062
  %v2064 = vpop.f32.mrb[0].mxu0
  %2065 = vmatprep.mubr.bf16.mxu0 %v229
  %2066 = vmatmul.mubr.bf16.gmra.mrb[0].mxu0 %v228
  %v2067 = vpop.f32.mrb[0].mxu0
  %v2068 = vadd.f32 %v2003, %v2067
  %v2069 = vpop.f32.mrb[0].mxu0
  %v2070 = vpop.f32.mrb[0].mxu0
  %v2071 = vadd.f32 %v2006, %v2070
  %v2072 = vpop.f32.mrb[0].mxu0
  %2073 = vdwg.mxu0
  %2074 = vmatprep.subr.bf16.mxu0 0
  %2075 = vmatpush1.bf16.msra.mxu0 %v1904
  %2076 = vmatprep.subr.bf16.mxu0 0
  %2077 = vmatpush1.bf16.msra.mxu0 %v1905
  %2078 = vmatprep.subr.bf16.mxu0 0
  %2079 = vmatpush1.bf16.msra.mxu0 %v1906
  %2080 = vmatprep.subr.bf16.mxu0 0
  %2081 = vmatpush1.bf16.msra.mxu0 %v1907
  %2082 = vmatprep.subr.bf16.mxu0 0
  %2083 = vmatpush1.bf16.msra.mxu0 0
  %2084 = vmatprep.subr.bf16.mxu0 0
  %2085 = vmatpush1.bf16.msra.mxu0 0
  %2086 = vmatprep.subr.bf16.mxu0 0
  %2087 = vmatpush1.bf16.msra.mxu0 0
  %2088 = vmatprep.subr.bf16.mxu0 0
  %2089 = vmatpush1.bf16.msra.mxu0 0
  %2090 = vmatprep.subr.bf16.mxu0 0
  %2091 = vmatpush1.bf16.msra.mxu0 0
  %2092 = vmatprep.subr.bf16.mxu0 0
  %2093 = vmatpush1.bf16.msra.mxu0 0
  %2094 = vmatprep.subr.bf16.mxu0 0
  %2095 = vmatpush1.bf16.msra.mxu0 0
  %2096 = vmatprep.subr.bf16.mxu0 0
  %2097 = vmatpush1.bf16.msra.mxu0 0
  %2098 = vmatprep.subr.bf16.mxu0 0
  %2099 = vmatpush1.bf16.msra.mxu0 0
  %2100 = vmatprep.subr.bf16.mxu0 0
  %2101 = vmatpush1.bf16.msra.mxu0 0
  %2102 = vmatprep.subr.bf16.mxu0 0
  %2103 = vmatpush1.bf16.msra.mxu0 0
  %2104 = vmatprep.subr.bf16.mxu0 0
  %2105 = vmatpush1.bf16.msra.mxu0 0
  %2106 = vmatprep.mubr.bf16.mxu0 0
  %2107 = vmatmul.mubr.bf16.gmra.mrb[0].mxu0 %v465
  %v2108 = vpop.f32.mrb[0].mxu0
  %v2109 = vadd.f32 %v2044, %v2108
  %v2110 = vpop.f32.mrb[0].mxu0
  %v2111 = vpop.f32.mrb[0].mxu0
  %v2112 = vadd.f32 %v2047, %v2111
  %v2113 = vpop.f32.mrb[0].mxu0
  %2114 = vmatprep.mubr.bf16.mxu0 0
  %2115 = vmatmul.mubr.bf16.gmra.mrb[0].mxu0 %v468
  %v2116 = vpop.f32.mrb[0].mxu0
  %v2117 = vadd.f32 %v2052, %v2116
  %v2118 = vpop.f32.mrb[0].mxu0
  %v2119 = vpop.f32.mrb[0].mxu0
  %v2120 = vadd.f32 %v2055, %v2119
  %v2121 = vpop.f32.mrb[0].mxu0
  %2122 = vmatprep.mubr.bf16.mxu0 0
  %2123 = vmatmul.mubr.bf16.gmra.mrb[0].mxu0 %v471
  %v2124 = vpop.f32.mrb[0].mxu0
  %v2125 = vadd.f32 %v2060, %v2124
  %v2126 = vpop.f32.mrb[0].mxu0
  %v2127 = vpop.f32.mrb[0].mxu0
  %v2128 = vadd.f32 %v2063, %v2127
  %v2129 = vpop.f32.mrb[0].mxu0
  %2130 = vmatprep.mubr.bf16.mxu0 0
  %2131 = vmatmul.mubr.bf16.gmra.mrb[0].mxu0 %v474
  %v2132 = vpop.f32.mrb[0].mxu0
  %v2133 = vadd.f32 %v2068, %v2132
  %v2134 = vpop.f32.mrb[0].mxu0
  %v2135 = vpop.f32.mrb[0].mxu0
  %v2136 = vadd.f32 %v2071, %v2135
  %v2137 = vpop.f32.mrb[0].mxu0
  %2138 = vdwg.mxu0
  %v2139 = vmax.f32 %v1647, %v2109
  %v2140 = vmax.f32 %v1648, %v2112
  %v2141 = vmax.f32 %v1649, %v2117
  %v2142 = vmax.f32 %v1650, %v2120
  %v2143 = vmax.f32 %v1651, %v2125
  %v2144 = vmax.f32 %v1652, %v2128
  %v2145 = vmax.f32 %v1653, %v2133
  %v2146 = vmax.f32 %v1654, %v2136
  %v2147 = vld [vmem:[%s2] sm:$0xff]
  %v2148 = vld [vmem:[%s2 + $0x8] sm:$0xff]
  %v2149 = vld [vmem:[%s2 + $0x10] sm:$0xff]
  %v2150 = vld [vmem:[%s2 + $0x18] sm:$0xff]
  %v2151 = vld [vmem:[%s2 + $0x20] sm:$0xff]
  %v2152 = vld [vmem:[%s2 + $0x28] sm:$0xff]
  %v2153 = vld [vmem:[%s2 + $0x30] sm:$0xff]
  %v2154 = vld [vmem:[%s2 + $0x38] sm:$0xff]
  %2156 = vset.pattern.permute.xlu0 0
  %2157 = vperm.xlu0 %2156, %v2147
  %v2158 = vpop.permute.xlu0 %2157
  %2161 = vset.pattern.permute.xlu0 0
  %2162 = vperm.xlu0 %2161, %v2148
  %v2163 = vpop.permute.xlu0 %2162
  %2166 = vset.pattern.permute.xlu0 0
  %2167 = vperm.xlu0 %2166, %v2149
  %v2168 = vpop.permute.xlu0 %2167
  %2171 = vset.pattern.permute.xlu0 0
  %2172 = vperm.xlu0 %2171, %v2150
  %v2173 = vpop.permute.xlu0 %2172
  %2176 = vset.pattern.permute.xlu0 0
  %2177 = vperm.xlu0 %2176, %v2151
  %v2178 = vpop.permute.xlu0 %2177
  %2181 = vset.pattern.permute.xlu0 0
  %2182 = vperm.xlu0 %2181, %v2152
  %v2183 = vpop.permute.xlu0 %2182
  %2186 = vset.pattern.permute.xlu0 0
  %2187 = vperm.xlu0 %2186, %v2153
  %v2188 = vpop.permute.xlu0 %2187
  %2191 = vset.pattern.permute.xlu0 0
  %2192 = vperm.xlu0 %2191, %v2154
  %v2193 = vpop.permute.xlu0 %2192
  %v2195 = vadd.f32 %v2139, %v2158
  %v2196 = vadd.f32 %v2140, %v2163
  %v2197 = vadd.f32 %v2141, %v2168
  %v2198 = vadd.f32 %v2142, %v2173
  %v2199 = vadd.f32 %v2143, %v2178
  %v2200 = vadd.f32 %v2144, %v2183
  %v2201 = vadd.f32 %v2145, %v2188
  %v2202 = vadd.f32 %v2146, %v2193
  %v2203 = vmul.f32 %v2195, 0.5
  %v2204 = vmul.f32 %v2196, 0.5
  %v2205 = vmul.f32 %v2197, 0.5
  %v2206 = vmul.f32 %v2198, 0.5
  %v2207 = vmul.f32 %v2199, 0.5
  %v2208 = vmul.f32 %v2200, 0.5
  %v2209 = vmul.f32 %v2201, 0.5
  %v2210 = vmul.f32 %v2202, 0.5
  %v2211 = vmul.f32 %v2195, 0.70710677
  %v2212 = vmul.f32 %v2196, 0.70710677
  %v2213 = vmul.f32 %v2197, 0.70710677
  %v2214 = vmul.f32 %v2198, 0.70710677
  %v2215 = vmul.f32 %v2199, 0.70710677
  %v2216 = vmul.f32 %v2200, 0.70710677
  %v2217 = vmul.f32 %v2201, 0.70710677
  %v2218 = vmul.f32 %v2202, 0.70710677
  %v2219 = vand.u32 2147483647, %v2211
  %v2220 = vand.u32 2147483647, %v2212
  %v2221 = vand.u32 2147483647, %v2213
  %v2222 = vand.u32 2147483647, %v2214
  %v2223 = vand.u32 2147483647, %v2215
  %v2224 = vand.u32 2147483647, %v2216
  %v2225 = vand.u32 2147483647, %v2217
  %v2226 = vand.u32 2147483647, %v2218
  %v2227 = vmul.f32 %v2219, 0.3275911
  %v2228 = vmul.f32 %v2220, 0.3275911
  %v2229 = vmul.f32 %v2221, 0.3275911
  %v2230 = vmul.f32 %v2222, 0.3275911
  %v2231 = vmul.f32 %v2223, 0.3275911
  %v2232 = vmul.f32 %v2224, 0.3275911
  %v2233 = vmul.f32 %v2225, 0.3275911
  %v2234 = vmul.f32 %v2226, 0.3275911
  %v2235 = vadd.f32 %v2227, 1.0
  %v2236 = vadd.f32 %v2228, 1.0
  %v2237 = vadd.f32 %v2229, 1.0
  %v2238 = vadd.f32 %v2230, 1.0
  %v2239 = vadd.f32 %v2231, 1.0
  %v2240 = vadd.f32 %v2232, 1.0
  %v2241 = vadd.f32 %v2233, 1.0
  %v2242 = vadd.f32 %v2234, 1.0
  %v2243 = vrcp.pop %v2235
  %v2244 = vmul.f32 1.0, %v2243
  %v2245 = vrcp.pop %v2236
  %v2246 = vmul.f32 1.0, %v2245
  %v2247 = vrcp.pop %v2237
  %v2248 = vmul.f32 1.0, %v2247
  %v2249 = vrcp.pop %v2238
  %v2250 = vmul.f32 1.0, %v2249
  %v2251 = vrcp.pop %v2239
  %v2252 = vmul.f32 1.0, %v2251
  %v2253 = vrcp.pop %v2240
  %v2254 = vmul.f32 1.0, %v2253
  %v2255 = vrcp.pop %v2241
  %v2256 = vmul.f32 1.0, %v2255
  %v2257 = vrcp.pop %v2242
  %v2258 = vmul.f32 1.0, %v2257
  %v2259 = vmul.f32 %v2244, 1.0614054
  %v2260 = vmul.f32 %v2246, 1.0614054
  %v2261 = vmul.f32 %v2248, 1.0614054
  %v2262 = vmul.f32 %v2250, 1.0614054
  %v2263 = vmul.f32 %v2252, 1.0614054
  %v2264 = vmul.f32 %v2254, 1.0614054
  %v2265 = vmul.f32 %v2256, 1.0614054
  %v2266 = vmul.f32 %v2258, 1.0614054
  %v2267 = vadd.f32 %v2259, -1.4531521
  %v2268 = vadd.f32 %v2260, -1.4531521
  %v2269 = vadd.f32 %v2261, -1.4531521
  %v2270 = vadd.f32 %v2262, -1.4531521
  %v2271 = vadd.f32 %v2263, -1.4531521
  %v2272 = vadd.f32 %v2264, -1.4531521
  %v2273 = vadd.f32 %v2265, -1.4531521
  %v2274 = vadd.f32 %v2266, -1.4531521
  %v2275 = vmul.f32 %v2267, %v2244
  %v2276 = vmul.f32 %v2268, %v2246
  %v2277 = vmul.f32 %v2269, %v2248
  %v2278 = vmul.f32 %v2270, %v2250
  %v2279 = vmul.f32 %v2271, %v2252
  %v2280 = vmul.f32 %v2272, %v2254
  %v2281 = vmul.f32 %v2273, %v2256
  %v2282 = vmul.f32 %v2274, %v2258
  %v2283 = vadd.f32 %v2275, 1.4214138
  %v2284 = vadd.f32 %v2276, 1.4214138
  %v2285 = vadd.f32 %v2277, 1.4214138
  %v2286 = vadd.f32 %v2278, 1.4214138
  %v2287 = vadd.f32 %v2279, 1.4214138
  %v2288 = vadd.f32 %v2280, 1.4214138
  %v2289 = vadd.f32 %v2281, 1.4214138
  %v2290 = vadd.f32 %v2282, 1.4214138
  %v2291 = vmul.f32 %v2283, %v2244
  %v2292 = vmul.f32 %v2284, %v2246
  %v2293 = vmul.f32 %v2285, %v2248
  %v2294 = vmul.f32 %v2286, %v2250
  %v2295 = vmul.f32 %v2287, %v2252
  %v2296 = vmul.f32 %v2288, %v2254
  %v2297 = vmul.f32 %v2289, %v2256
  %v2298 = vmul.f32 %v2290, %v2258
  %v2299 = vadd.f32 %v2291, -0.28449672
  %v2300 = vadd.f32 %v2292, -0.28449672
  %v2301 = vadd.f32 %v2293, -0.28449672
  %v2302 = vadd.f32 %v2294, -0.28449672
  %v2303 = vadd.f32 %v2295, -0.28449672
  %v2304 = vadd.f32 %v2296, -0.28449672
  %v2305 = vadd.f32 %v2297, -0.28449672
  %v2306 = vadd.f32 %v2298, -0.28449672
  %v2307 = vmul.f32 %v2299, %v2244
  %v2308 = vmul.f32 %v2300, %v2246
  %v2309 = vmul.f32 %v2301, %v2248
  %v2310 = vmul.f32 %v2302, %v2250
  %v2311 = vmul.f32 %v2303, %v2252
  %v2312 = vmul.f32 %v2304, %v2254
  %v2313 = vmul.f32 %v2305, %v2256
  %v2314 = vmul.f32 %v2306, %v2258
  %v2315 = vadd.f32 %v2307, 0.2548296
  %v2316 = vadd.f32 %v2308, 0.2548296
  %v2317 = vadd.f32 %v2309, 0.2548296
  %v2318 = vadd.f32 %v2310, 0.2548296
  %v2319 = vadd.f32 %v2311, 0.2548296
  %v2320 = vadd.f32 %v2312, 0.2548296
  %v2321 = vadd.f32 %v2313, 0.2548296
  %v2322 = vadd.f32 %v2314, 0.2548296
  %v2323 = vmul.f32 %v2315, %v2244
  %v2324 = vmul.f32 %v2316, %v2246
  %v2325 = vmul.f32 %v2317, %v2248
  %v2326 = vmul.f32 %v2318, %v2250
  %v2327 = vmul.f32 %v2319, %v2252
  %v2328 = vmul.f32 %v2320, %v2254
  %v2329 = vmul.f32 %v2321, %v2256
  %v2330 = vmul.f32 %v2322, %v2258
  %v2331 = vsub.f32 0.0, %v2219
  %v2332 = vsub.f32 0.0, %v2220
  %v2333 = vsub.f32 0.0, %v2221
  %v2334 = vsub.f32 0.0, %v2222
  %v2335 = vsub.f32 0.0, %v2223
  %v2336 = vsub.f32 0.0, %v2224
  %v2337 = vsub.f32 0.0, %v2225
  %v2338 = vsub.f32 0.0, %v2226
  %v2339 = vmul.f32 %v2331, %v2219
  %v2340 = vmul.f32 %v2332, %v2220
  %v2341 = vmul.f32 %v2333, %v2221
  %v2342 = vmul.f32 %v2334, %v2222
  %v2343 = vmul.f32 %v2335, %v2223
  %v2344 = vmul.f32 %v2336, %v2224
  %v2345 = vmul.f32 %v2337, %v2225
  %v2346 = vmul.f32 %v2338, %v2226
  %v2347 = vmul.f32 %v2339, 1.442695
  %v2348 = vpow.pop %v2347
  %v2349 = vmul.f32 %v2340, 1.442695
  %v2350 = vpow.pop %v2349
  %v2351 = vmul.f32 %v2341, 1.442695
  %v2352 = vpow.pop %v2351
  %v2353 = vmul.f32 %v2342, 1.442695
  %v2354 = vpow.pop %v2353
  %v2355 = vmul.f32 %v2343, 1.442695
  %v2356 = vpow.pop %v2355
  %v2357 = vmul.f32 %v2344, 1.442695
  %v2358 = vpow.pop %v2357
  %v2359 = vmul.f32 %v2345, 1.442695
  %v2360 = vpow.pop %v2359
  %v2361 = vmul.f32 %v2346, 1.442695
  %v2362 = vpow.pop %v2361
  %v2363 = vmul.f32 %v2323, %v2348
  %v2364 = vmul.f32 %v2324, %v2350
  %v2365 = vmul.f32 %v2325, %v2352
  %v2366 = vmul.f32 %v2326, %v2354
  %v2367 = vmul.f32 %v2327, %v2356
  %v2368 = vmul.f32 %v2328, %v2358
  %v2369 = vmul.f32 %v2329, %v2360
  %v2370 = vmul.f32 %v2330, %v2362
  %v2371 = vsub.f32 1.0, %v2363
  %v2372 = vsub.f32 1.0, %v2364
  %v2373 = vsub.f32 1.0, %v2365
  %v2374 = vsub.f32 1.0, %v2366
  %v2375 = vsub.f32 1.0, %v2367
  %v2376 = vsub.f32 1.0, %v2368
  %v2377 = vsub.f32 1.0, %v2369
  %v2378 = vsub.f32 1.0, %v2370
  %vm2379 = vcmp.ge.f32.partialorder %v2211, 0.0
  %vm2380 = vcmp.ge.f32.partialorder %v2212, 0.0
  %vm2381 = vcmp.ge.f32.partialorder %v2213, 0.0
  %vm2382 = vcmp.ge.f32.partialorder %v2214, 0.0
  %vm2383 = vcmp.ge.f32.partialorder %v2215, 0.0
  %vm2384 = vcmp.ge.f32.partialorder %v2216, 0.0
  %vm2385 = vcmp.ge.f32.partialorder %v2217, 0.0
  %vm2386 = vcmp.ge.f32.partialorder %v2218, 0.0
  %v2387 = vsub.f32 0.0, %v2371
  %v2388 = vsub.f32 0.0, %v2372
  %v2389 = vsub.f32 0.0, %v2373
  %v2390 = vsub.f32 0.0, %v2374
  %v2391 = vsub.f32 0.0, %v2375
  %v2392 = vsub.f32 0.0, %v2376
  %v2393 = vsub.f32 0.0, %v2377
  %v2394 = vsub.f32 0.0, %v2378
  %v2395 = vsel %vm2379, %v2371, %v2387
  %v2396 = vsel %vm2380, %v2372, %v2388
  %v2397 = vsel %vm2381, %v2373, %v2389
  %v2398 = vsel %vm2382, %v2374, %v2390
  %v2399 = vsel %vm2383, %v2375, %v2391
  %v2400 = vsel %vm2384, %v2376, %v2392
  %v2401 = vsel %vm2385, %v2377, %v2393
  %v2402 = vsel %vm2386, %v2378, %v2394
  %v2403 = vadd.f32 %v2395, 1.0
  %v2404 = vadd.f32 %v2396, 1.0
  %v2405 = vadd.f32 %v2397, 1.0
  %v2406 = vadd.f32 %v2398, 1.0
  %v2407 = vadd.f32 %v2399, 1.0
  %v2408 = vadd.f32 %v2400, 1.0
  %v2409 = vadd.f32 %v2401, 1.0
  %v2410 = vadd.f32 %v2402, 1.0
  %v2411 = vmul.f32 %v2203, %v2403
  %v2412 = vmul.f32 %v2204, %v2404
  %v2413 = vmul.f32 %v2205, %v2405
  %v2414 = vmul.f32 %v2206, %v2406
  %v2415 = vmul.f32 %v2207, %v2407
  %v2416 = vmul.f32 %v2208, %v2408
  %v2417 = vmul.f32 %v2209, %v2409
  %v2418 = vmul.f32 %v2210, %v2410
  %v2419 = vld [vmem:[%s3] sm:$0xff]
  %v2420 = vld [vmem:[%s3 + $0x8] sm:$0xff]
  %s2421 = scalar_lea.vmem %s3, 16
  %v2422 = vld [vmem:[%s2421] sm:$0xff]
  %v2423 = vld [vmem:[%s2421 + $0x8] sm:$0xff]
  %2432 = vrot.lane.b32.xlu0 %v2411, 126
  %v2433 = vpop.permute.xlu0 %2432
  %2434 = vrot.lane.b32.xlu0 %v2412, 126
  %v2435 = vpop.permute.xlu0 %2434
  %2436 = vrot.lane.b32.xlu0 %v2413, 126
  %v2437 = vpop.permute.xlu0 %2436
  %2438 = vrot.lane.b32.xlu0 %v2414, 126
  %v2439 = vpop.permute.xlu0 %2438
  %2440 = vrot.lane.b32.xlu0 %v2415, 126
  %v2441 = vpop.permute.xlu0 %2440
  %2442 = vrot.lane.b32.xlu0 %v2416, 126
  %v2443 = vpop.permute.xlu0 %2442
  %2444 = vrot.lane.b32.xlu0 %v2417, 126
  %v2445 = vpop.permute.xlu0 %2444
  %2446 = vrot.lane.b32.xlu0 %v2418, 126
  %v2447 = vpop.permute.xlu0 %2446
  %v2457 = vsel %vm463, %v2422, 0
  %v2460 = vsel %vm463, %v2423, 0
  %2462 = vmatprep.subr.mxu0 0.0
  %2463 = vmatpush1.msra.mxu0 %v2433
  %2464 = vmatprep.subr.mxu0 0.0
  %2465 = vmatpush1.msra.mxu0 %v2435
  %2466 = vmatprep.subr.mxu0 0.0
  %2467 = vmatpush1.msra.mxu0 %v2437
  %2468 = vmatprep.subr.mxu0 0.0
  %2469 = vmatpush1.msra.mxu0 %v2439
  %2470 = vmatprep.subr.mxu0 0.0
  %2471 = vmatpush1.msra.mxu0 %v2441
  %2472 = vmatprep.subr.mxu0 0.0
  %2473 = vmatpush1.msra.mxu0 %v2443
  %2474 = vmatprep.subr.mxu0 0.0
  %2475 = vmatpush1.msra.mxu0 %v2445
  %2476 = vmatprep.subr.mxu0 0.0
  %2477 = vmatpush1.msra.mxu0 %v2447
  %2478 = vmatprep.subr.mxu0 0.0
  %2479 = vmatpush1.msra.mxu0 0.0
  %2480 = vmatprep.subr.mxu0 0.0
  %2481 = vmatpush1.msra.mxu0 0.0
  %2482 = vmatprep.subr.mxu0 0.0
  %2483 = vmatpush1.msra.mxu0 0.0
  %2484 = vmatprep.subr.mxu0 0.0
  %2485 = vmatpush1.msra.mxu0 0.0
  %2486 = vmatprep.subr.mxu0 0.0
  %2487 = vmatpush1.msra.mxu0 0.0
  %2488 = vmatprep.subr.mxu0 0.0
  %2489 = vmatpush1.msra.mxu0 0.0
  %2490 = vmatprep.subr.mxu0 0.0
  %2491 = vmatpush1.msra.mxu0 0.0
  %2492 = vmatprep.subr.mxu0 0.0
  %2493 = vmatpush1.msra.mxu0 0.0
  %2494 = vmatprep.subr.mxu0 0.0
  %2495 = vmatpush1.msra.mxu0 0.0
  %2496 = vmatprep.subr.mxu0 0.0
  %2497 = vmatpush1.msra.mxu0 0.0
  %2498 = vmatprep.subr.mxu0 0.0
  %2499 = vmatpush1.msra.mxu0 0.0
  %2500 = vmatprep.subr.mxu0 0.0
  %2501 = vmatpush1.msra.mxu0 0.0
  %2502 = vmatprep.subr.mxu0 0.0
  %2503 = vmatpush1.msra.mxu0 0.0
  %2504 = vmatprep.subr.mxu0 0.0
  %2505 = vmatpush1.msra.mxu0 0.0
  %2506 = vmatprep.subr.mxu0 0.0
  %2507 = vmatpush1.msra.mxu0 0.0
  %2508 = vmatprep.subr.mxu0 0.0
  %2509 = vmatpush1.msra.mxu0 0.0
  %2510 = vmatprep.subr.mxu0 0.0
  %2511 = vmatpush1.msra.mxu0 0.0
  %2512 = vmatprep.subr.mxu0 0.0
  %2513 = vmatpush1.msra.mxu0 0.0
  %2514 = vmatprep.subr.mxu0 0.0
  %2515 = vmatpush1.msra.mxu0 0.0
  %2516 = vmatprep.subr.mxu0 0.0
  %2517 = vmatpush1.msra.mxu0 0.0
  %2518 = vmatprep.subr.mxu0 0.0
  %2519 = vmatpush1.msra.mxu0 0.0
  %2520 = vmatprep.subr.mxu0 0.0
  %2521 = vmatpush1.msra.mxu0 0.0
  %2522 = vmatprep.subr.mxu0 0.0
  %2523 = vmatpush1.msra.mxu0 0.0
  %2524 = vmatprep.subr.mxu0 0.0
  %2525 = vmatpush1.msra.mxu0 0.0
  %2526 = vmatprep.mubr.f32.mxu0 0.0
  %2527 = vmatmul.mubr.f32.gmra.mrb[0].mxu0 %v2457
  %v2528 = vpop.f32.mrb[0].mxu0
  %v2529 = vadd.f32 0.0, %v2528
  %v2530 = vpop.f32.mrb[0].mxu0
  %2531 = vmatprep.mubr.f32.mxu0 0.0
  %2532 = vmatmul.mubr.f32.gmra.mrb[0].mxu0 %v2460
  %v2533 = vpop.f32.mrb[0].mxu0
  %v2534 = vadd.f32 0.0, %v2533
  %v2535 = vpop.f32.mrb[0].mxu0
  %2536 = vdwg.mxu0
  %v2538 = vsel %vm463, %v2419, 0
  %v2541 = vsel %vm463, %v2420, 0
  %2543 = vmatprep.subr.mxu0 0.0
  %2544 = vmatpush1.msra.mxu0 %v2411
  %2545 = vmatprep.subr.mxu0 0.0
  %2546 = vmatpush1.msra.mxu0 %v2412
  %2547 = vmatprep.subr.mxu0 0.0
  %2548 = vmatpush1.msra.mxu0 %v2413
  %2549 = vmatprep.subr.mxu0 0.0
  %2550 = vmatpush1.msra.mxu0 %v2414
  %2551 = vmatprep.subr.mxu0 0.0
  %2552 = vmatpush1.msra.mxu0 %v2415
  %2553 = vmatprep.subr.mxu0 0.0
  %2554 = vmatpush1.msra.mxu0 %v2416
  %2555 = vmatprep.subr.mxu0 0.0
  %2556 = vmatpush1.msra.mxu0 %v2417
  %2557 = vmatprep.subr.mxu0 0.0
  %2558 = vmatpush1.msra.mxu0 %v2418
  %2559 = vmatprep.subr.mxu0 0.0
  %2560 = vmatpush1.msra.mxu0 0.0
  %2561 = vmatprep.subr.mxu0 0.0
  %2562 = vmatpush1.msra.mxu0 0.0
  %2563 = vmatprep.subr.mxu0 0.0
  %2564 = vmatpush1.msra.mxu0 0.0
  %2565 = vmatprep.subr.mxu0 0.0
  %2566 = vmatpush1.msra.mxu0 0.0
  %2567 = vmatprep.subr.mxu0 0.0
  %2568 = vmatpush1.msra.mxu0 0.0
  %2569 = vmatprep.subr.mxu0 0.0
  %2570 = vmatpush1.msra.mxu0 0.0
  %2571 = vmatprep.subr.mxu0 0.0
  %2572 = vmatpush1.msra.mxu0 0.0
  %2573 = vmatprep.subr.mxu0 0.0
  %2574 = vmatpush1.msra.mxu0 0.0
  %2575 = vmatprep.subr.mxu0 0.0
  %2576 = vmatpush1.msra.mxu0 0.0
  %2577 = vmatprep.subr.mxu0 0.0
  %2578 = vmatpush1.msra.mxu0 0.0
  %2579 = vmatprep.subr.mxu0 0.0
  %2580 = vmatpush1.msra.mxu0 0.0
  %2581 = vmatprep.subr.mxu0 0.0
  %2582 = vmatpush1.msra.mxu0 0.0
  %2583 = vmatprep.subr.mxu0 0.0
  %2584 = vmatpush1.msra.mxu0 0.0
  %2585 = vmatprep.subr.mxu0 0.0
  %2586 = vmatpush1.msra.mxu0 0.0
  %2587 = vmatprep.subr.mxu0 0.0
  %2588 = vmatpush1.msra.mxu0 0.0
  %2589 = vmatprep.subr.mxu0 0.0
  %2590 = vmatpush1.msra.mxu0 0.0
  %2591 = vmatprep.subr.mxu0 0.0
  %2592 = vmatpush1.msra.mxu0 0.0
  %2593 = vmatprep.subr.mxu0 0.0
  %2594 = vmatpush1.msra.mxu0 0.0
  %2595 = vmatprep.subr.mxu0 0.0
  %2596 = vmatpush1.msra.mxu0 0.0
  %2597 = vmatprep.subr.mxu0 0.0
  %2598 = vmatpush1.msra.mxu0 0.0
  %2599 = vmatprep.subr.mxu0 0.0
  %2600 = vmatpush1.msra.mxu0 0.0
  %2601 = vmatprep.subr.mxu0 0.0
  %2602 = vmatpush1.msra.mxu0 0.0
  %2603 = vmatprep.subr.mxu0 0.0
  %2604 = vmatpush1.msra.mxu0 0.0
  %2605 = vmatprep.subr.mxu0 0.0
  %2606 = vmatpush1.msra.mxu0 0.0
  %2607 = vmatprep.mubr.f32.mxu0 0.0
  %2608 = vmatmul.mubr.f32.gmra.mrb[0].mxu0 %v2538
  %v2609 = vpop.f32.mrb[0].mxu0
  %v2610 = vadd.f32 %v2529, %v2609
  %v2611 = vpop.f32.mrb[0].mxu0
  %2612 = vmatprep.mubr.f32.mxu0 0.0
  %2613 = vmatmul.mubr.f32.gmra.mrb[0].mxu0 %v2541
  %v2614 = vpop.f32.mrb[0].mxu0
  %v2615 = vadd.f32 %v2534, %v2614
  %v2616 = vpop.f32.mrb[0].mxu0
  %2617 = vdwg.mxu0
  %s2618 = scalar_lea.vmem %s3, 32
  %v2619 = vld [vmem:[%s2618] sm:$0xff]
  %v2620 = vld [vmem:[%s2618 + $0x8] sm:$0xff]
  %2621 = vrot.lane.b32.xlu0 %v2411, 124
  %v2622 = vpop.permute.xlu0 %2621
  %2623 = vrot.lane.b32.xlu0 %v2412, 124
  %v2624 = vpop.permute.xlu0 %2623
  %2625 = vrot.lane.b32.xlu0 %v2413, 124
  %v2626 = vpop.permute.xlu0 %2625
  %2627 = vrot.lane.b32.xlu0 %v2414, 124
  %v2628 = vpop.permute.xlu0 %2627
  %2629 = vrot.lane.b32.xlu0 %v2415, 124
  %v2630 = vpop.permute.xlu0 %2629
  %2631 = vrot.lane.b32.xlu0 %v2416, 124
  %v2632 = vpop.permute.xlu0 %2631
  %2633 = vrot.lane.b32.xlu0 %v2417, 124
  %v2634 = vpop.permute.xlu0 %2633
  %2635 = vrot.lane.b32.xlu0 %v2418, 124
  %v2636 = vpop.permute.xlu0 %2635
  %v2646 = vsel %vm463, %v2619, 0
  %v2649 = vsel %vm463, %v2620, 0
  %2651 = vmatprep.subr.mxu0 0.0
  %2652 = vmatpush1.msra.mxu0 %v2622
  %2653 = vmatprep.subr.mxu0 0.0
  %2654 = vmatpush1.msra.mxu0 %v2624
  %2655 = vmatprep.subr.mxu0 0.0
  %2656 = vmatpush1.msra.mxu0 %v2626
  %2657 = vmatprep.subr.mxu0 0.0
  %2658 = vmatpush1.msra.mxu0 %v2628
  %2659 = vmatprep.subr.mxu0 0.0
  %2660 = vmatpush1.msra.mxu0 %v2630
  %2661 = vmatprep.subr.mxu0 0.0
  %2662 = vmatpush1.msra.mxu0 %v2632
  %2663 = vmatprep.subr.mxu0 0.0
  %2664 = vmatpush1.msra.mxu0 %v2634
  %2665 = vmatprep.subr.mxu0 0.0
  %2666 = vmatpush1.msra.mxu0 %v2636
  %2667 = vmatprep.subr.mxu0 0.0
  %2668 = vmatpush1.msra.mxu0 0.0
  %2669 = vmatprep.subr.mxu0 0.0
  %2670 = vmatpush1.msra.mxu0 0.0
  %2671 = vmatprep.subr.mxu0 0.0
  %2672 = vmatpush1.msra.mxu0 0.0
  %2673 = vmatprep.subr.mxu0 0.0
  %2674 = vmatpush1.msra.mxu0 0.0
  %2675 = vmatprep.subr.mxu0 0.0
  %2676 = vmatpush1.msra.mxu0 0.0
  %2677 = vmatprep.subr.mxu0 0.0
  %2678 = vmatpush1.msra.mxu0 0.0
  %2679 = vmatprep.subr.mxu0 0.0
  %2680 = vmatpush1.msra.mxu0 0.0
  %2681 = vmatprep.subr.mxu0 0.0
  %2682 = vmatpush1.msra.mxu0 0.0
  %2683 = vmatprep.subr.mxu0 0.0
  %2684 = vmatpush1.msra.mxu0 0.0
  %2685 = vmatprep.subr.mxu0 0.0
  %2686 = vmatpush1.msra.mxu0 0.0
  %2687 = vmatprep.subr.mxu0 0.0
  %2688 = vmatpush1.msra.mxu0 0.0
  %2689 = vmatprep.subr.mxu0 0.0
  %2690 = vmatpush1.msra.mxu0 0.0
  %2691 = vmatprep.subr.mxu0 0.0
  %2692 = vmatpush1.msra.mxu0 0.0
  %2693 = vmatprep.subr.mxu0 0.0
  %2694 = vmatpush1.msra.mxu0 0.0
  %2695 = vmatprep.subr.mxu0 0.0
  %2696 = vmatpush1.msra.mxu0 0.0
  %2697 = vmatprep.subr.mxu0 0.0
  %2698 = vmatpush1.msra.mxu0 0.0
  %2699 = vmatprep.subr.mxu0 0.0
  %2700 = vmatpush1.msra.mxu0 0.0
  %2701 = vmatprep.subr.mxu0 0.0
  %2702 = vmatpush1.msra.mxu0 0.0
  %2703 = vmatprep.subr.mxu0 0.0
  %2704 = vmatpush1.msra.mxu0 0.0
  %2705 = vmatprep.subr.mxu0 0.0
  %2706 = vmatpush1.msra.mxu0 0.0
  %2707 = vmatprep.subr.mxu0 0.0
  %2708 = vmatpush1.msra.mxu0 0.0
  %2709 = vmatprep.subr.mxu0 0.0
  %2710 = vmatpush1.msra.mxu0 0.0
  %2711 = vmatprep.subr.mxu0 0.0
  %2712 = vmatpush1.msra.mxu0 0.0
  %2713 = vmatprep.subr.mxu0 0.0
  %2714 = vmatpush1.msra.mxu0 0.0
  %2715 = vmatprep.mubr.f32.mxu0 0.0
  %2716 = vmatmul.mubr.f32.gmra.mrb[0].mxu0 %v2646
  %v2717 = vpop.f32.mrb[0].mxu0
  %v2718 = vadd.f32 0.0, %v2717
  %v2719 = vpop.f32.mrb[0].mxu0
  %2720 = vmatprep.mubr.f32.mxu0 0.0
  %2721 = vmatmul.mubr.f32.gmra.mrb[0].mxu0 %v2649
  %v2722 = vpop.f32.mrb[0].mxu0
  %v2723 = vadd.f32 0.0, %v2722
  %v2724 = vpop.f32.mrb[0].mxu0
  %2725 = vdwg.mxu0
  %v2726 = vadd.f32 %v2610, %v2718
  %v2727 = vadd.f32 %v2615, %v2723
  %s2728 = scalar_lea.vmem %s3, 48
  %v2729 = vld [vmem:[%s2728] sm:$0xff]
  %v2730 = vld [vmem:[%s2728 + $0x8] sm:$0xff]
  %2731 = vrot.lane.b32.xlu0 %v2411, 122
  %v2732 = vpop.permute.xlu0 %2731
  %2733 = vrot.lane.b32.xlu0 %v2412, 122
  %v2734 = vpop.permute.xlu0 %2733
  %2735 = vrot.lane.b32.xlu0 %v2413, 122
  %v2736 = vpop.permute.xlu0 %2735
  %2737 = vrot.lane.b32.xlu0 %v2414, 122
  %v2738 = vpop.permute.xlu0 %2737
  %2739 = vrot.lane.b32.xlu0 %v2415, 122
  %v2740 = vpop.permute.xlu0 %2739
  %2741 = vrot.lane.b32.xlu0 %v2416, 122
  %v2742 = vpop.permute.xlu0 %2741
  %2743 = vrot.lane.b32.xlu0 %v2417, 122
  %v2744 = vpop.permute.xlu0 %2743
  %2745 = vrot.lane.b32.xlu0 %v2418, 122
  %v2746 = vpop.permute.xlu0 %2745
  %v2756 = vsel %vm463, %v2729, 0
  %v2759 = vsel %vm463, %v2730, 0
  %2761 = vmatprep.subr.mxu0 0.0
  %2762 = vmatpush1.msra.mxu0 %v2732
  %2763 = vmatprep.subr.mxu0 0.0
  %2764 = vmatpush1.msra.mxu0 %v2734
  %2765 = vmatprep.subr.mxu0 0.0
  %2766 = vmatpush1.msra.mxu0 %v2736
  %2767 = vmatprep.subr.mxu0 0.0
  %2768 = vmatpush1.msra.mxu0 %v2738
  %2769 = vmatprep.subr.mxu0 0.0
  %2770 = vmatpush1.msra.mxu0 %v2740
  %2771 = vmatprep.subr.mxu0 0.0
  %2772 = vmatpush1.msra.mxu0 %v2742
  %2773 = vmatprep.subr.mxu0 0.0
  %2774 = vmatpush1.msra.mxu0 %v2744
  %2775 = vmatprep.subr.mxu0 0.0
  %2776 = vmatpush1.msra.mxu0 %v2746
  %2777 = vmatprep.subr.mxu0 0.0
  %2778 = vmatpush1.msra.mxu0 0.0
  %2779 = vmatprep.subr.mxu0 0.0
  %2780 = vmatpush1.msra.mxu0 0.0
  %2781 = vmatprep.subr.mxu0 0.0
  %2782 = vmatpush1.msra.mxu0 0.0
  %2783 = vmatprep.subr.mxu0 0.0
  %2784 = vmatpush1.msra.mxu0 0.0
  %2785 = vmatprep.subr.mxu0 0.0
  %2786 = vmatpush1.msra.mxu0 0.0
  %2787 = vmatprep.subr.mxu0 0.0
  %2788 = vmatpush1.msra.mxu0 0.0
  %2789 = vmatprep.subr.mxu0 0.0
  %2790 = vmatpush1.msra.mxu0 0.0
  %2791 = vmatprep.subr.mxu0 0.0
  %2792 = vmatpush1.msra.mxu0 0.0
  %2793 = vmatprep.subr.mxu0 0.0
  %2794 = vmatpush1.msra.mxu0 0.0
  %2795 = vmatprep.subr.mxu0 0.0
  %2796 = vmatpush1.msra.mxu0 0.0
  %2797 = vmatprep.subr.mxu0 0.0
  %2798 = vmatpush1.msra.mxu0 0.0
  %2799 = vmatprep.subr.mxu0 0.0
  %2800 = vmatpush1.msra.mxu0 0.0
  %2801 = vmatprep.subr.mxu0 0.0
  %2802 = vmatpush1.msra.mxu0 0.0
  %2803 = vmatprep.subr.mxu0 0.0
  %2804 = vmatpush1.msra.mxu0 0.0
  %2805 = vmatprep.subr.mxu0 0.0
  %2806 = vmatpush1.msra.mxu0 0.0
  %2807 = vmatprep.subr.mxu0 0.0
  %2808 = vmatpush1.msra.mxu0 0.0
  %2809 = vmatprep.subr.mxu0 0.0
  %2810 = vmatpush1.msra.mxu0 0.0
  %2811 = vmatprep.subr.mxu0 0.0
  %2812 = vmatpush1.msra.mxu0 0.0
  %2813 = vmatprep.subr.mxu0 0.0
  %2814 = vmatpush1.msra.mxu0 0.0
  %2815 = vmatprep.subr.mxu0 0.0
  %2816 = vmatpush1.msra.mxu0 0.0
  %2817 = vmatprep.subr.mxu0 0.0
  %2818 = vmatpush1.msra.mxu0 0.0
  %2819 = vmatprep.subr.mxu0 0.0
  %2820 = vmatpush1.msra.mxu0 0.0
  %2821 = vmatprep.subr.mxu0 0.0
  %2822 = vmatpush1.msra.mxu0 0.0
  %2823 = vmatprep.subr.mxu0 0.0
  %2824 = vmatpush1.msra.mxu0 0.0
  %2825 = vmatprep.mubr.f32.mxu0 0.0
  %2826 = vmatmul.mubr.f32.gmra.mrb[0].mxu0 %v2756
  %v2827 = vpop.f32.mrb[0].mxu0
  %v2828 = vadd.f32 0.0, %v2827
  %v2829 = vpop.f32.mrb[0].mxu0
  %2830 = vmatprep.mubr.f32.mxu0 0.0
  %2831 = vmatmul.mubr.f32.gmra.mrb[0].mxu0 %v2759
  %v2832 = vpop.f32.mrb[0].mxu0
  %v2833 = vadd.f32 0.0, %v2832
  %v2834 = vpop.f32.mrb[0].mxu0
  %2835 = vdwg.mxu0
  %v2836 = vadd.f32 %v2726, %v2828
  %v2837 = vadd.f32 %v2727, %v2833
  %s2838 = scalar_lea.vmem %s3, 64
  %v2839 = vld [vmem:[%s2838] sm:$0xff]
  %v2840 = vld [vmem:[%s2838 + $0x8] sm:$0xff]
  %2841 = vrot.lane.b32.xlu0 %v2411, 120
  %v2842 = vpop.permute.xlu0 %2841
  %2843 = vrot.lane.b32.xlu0 %v2412, 120
  %v2844 = vpop.permute.xlu0 %2843
  %2845 = vrot.lane.b32.xlu0 %v2413, 120
  %v2846 = vpop.permute.xlu0 %2845
  %2847 = vrot.lane.b32.xlu0 %v2414, 120
  %v2848 = vpop.permute.xlu0 %2847
  %2849 = vrot.lane.b32.xlu0 %v2415, 120
  %v2850 = vpop.permute.xlu0 %2849
  %2851 = vrot.lane.b32.xlu0 %v2416, 120
  %v2852 = vpop.permute.xlu0 %2851
  %2853 = vrot.lane.b32.xlu0 %v2417, 120
  %v2854 = vpop.permute.xlu0 %2853
  %2855 = vrot.lane.b32.xlu0 %v2418, 120
  %v2856 = vpop.permute.xlu0 %2855
  %v2866 = vsel %vm463, %v2839, 0
  %v2869 = vsel %vm463, %v2840, 0
  %2871 = vmatprep.subr.mxu0 0.0
  %2872 = vmatpush1.msra.mxu0 %v2842
  %2873 = vmatprep.subr.mxu0 0.0
  %2874 = vmatpush1.msra.mxu0 %v2844
  %2875 = vmatprep.subr.mxu0 0.0
  %2876 = vmatpush1.msra.mxu0 %v2846
  %2877 = vmatprep.subr.mxu0 0.0
  %2878 = vmatpush1.msra.mxu0 %v2848
  %2879 = vmatprep.subr.mxu0 0.0
  %2880 = vmatpush1.msra.mxu0 %v2850
  %2881 = vmatprep.subr.mxu0 0.0
  %2882 = vmatpush1.msra.mxu0 %v2852
  %2883 = vmatprep.subr.mxu0 0.0
  %2884 = vmatpush1.msra.mxu0 %v2854
  %2885 = vmatprep.subr.mxu0 0.0
  %2886 = vmatpush1.msra.mxu0 %v2856
  %2887 = vmatprep.subr.mxu0 0.0
  %2888 = vmatpush1.msra.mxu0 0.0
  %2889 = vmatprep.subr.mxu0 0.0
  %2890 = vmatpush1.msra.mxu0 0.0
  %2891 = vmatprep.subr.mxu0 0.0
  %2892 = vmatpush1.msra.mxu0 0.0
  %2893 = vmatprep.subr.mxu0 0.0
  %2894 = vmatpush1.msra.mxu0 0.0
  %2895 = vmatprep.subr.mxu0 0.0
  %2896 = vmatpush1.msra.mxu0 0.0
  %2897 = vmatprep.subr.mxu0 0.0
  %2898 = vmatpush1.msra.mxu0 0.0
  %2899 = vmatprep.subr.mxu0 0.0
  %2900 = vmatpush1.msra.mxu0 0.0
  %2901 = vmatprep.subr.mxu0 0.0
  %2902 = vmatpush1.msra.mxu0 0.0
  %2903 = vmatprep.subr.mxu0 0.0
  %2904 = vmatpush1.msra.mxu0 0.0
  %2905 = vmatprep.subr.mxu0 0.0
  %2906 = vmatpush1.msra.mxu0 0.0
  %2907 = vmatprep.subr.mxu0 0.0
  %2908 = vmatpush1.msra.mxu0 0.0
  %2909 = vmatprep.subr.mxu0 0.0
  %2910 = vmatpush1.msra.mxu0 0.0
  %2911 = vmatprep.subr.mxu0 0.0
  %2912 = vmatpush1.msra.mxu0 0.0
  %2913 = vmatprep.subr.mxu0 0.0
  %2914 = vmatpush1.msra.mxu0 0.0
  %2915 = vmatprep.subr.mxu0 0.0
  %2916 = vmatpush1.msra.mxu0 0.0
  %2917 = vmatprep.subr.mxu0 0.0
  %2918 = vmatpush1.msra.mxu0 0.0
  %2919 = vmatprep.subr.mxu0 0.0
  %2920 = vmatpush1.msra.mxu0 0.0
  %2921 = vmatprep.subr.mxu0 0.0
  %2922 = vmatpush1.msra.mxu0 0.0
  %2923 = vmatprep.subr.mxu0 0.0
  %2924 = vmatpush1.msra.mxu0 0.0
  %2925 = vmatprep.subr.mxu0 0.0
  %2926 = vmatpush1.msra.mxu0 0.0
  %2927 = vmatprep.subr.mxu0 0.0
  %2928 = vmatpush1.msra.mxu0 0.0
  %2929 = vmatprep.subr.mxu0 0.0
  %2930 = vmatpush1.msra.mxu0 0.0
  %2931 = vmatprep.subr.mxu0 0.0
  %2932 = vmatpush1.msra.mxu0 0.0
  %2933 = vmatprep.subr.mxu0 0.0
  %2934 = vmatpush1.msra.mxu0 0.0
  %2935 = vmatprep.mubr.f32.mxu0 0.0
  %2936 = vmatmul.mubr.f32.gmra.mrb[0].mxu0 %v2866
  %v2937 = vpop.f32.mrb[0].mxu0
  %v2938 = vadd.f32 0.0, %v2937
  %v2939 = vpop.f32.mrb[0].mxu0
  %2940 = vmatprep.mubr.f32.mxu0 0.0
  %2941 = vmatmul.mubr.f32.gmra.mrb[0].mxu0 %v2869
  %v2942 = vpop.f32.mrb[0].mxu0
  %v2943 = vadd.f32 0.0, %v2942
  %v2944 = vpop.f32.mrb[0].mxu0
  %2945 = vdwg.mxu0
  %v2946 = vadd.f32 %v2836, %v2938
  %v2947 = vadd.f32 %v2837, %v2943
  %s2948 = scalar_lea.vmem %s3, 80
  %v2949 = vld [vmem:[%s2948] sm:$0xff]
  %v2950 = vld [vmem:[%s2948 + $0x8] sm:$0xff]
  %2951 = vrot.lane.b32.xlu0 %v2411, 118
  %v2952 = vpop.permute.xlu0 %2951
  %2953 = vrot.lane.b32.xlu0 %v2412, 118
  %v2954 = vpop.permute.xlu0 %2953
  %2955 = vrot.lane.b32.xlu0 %v2413, 118
  %v2956 = vpop.permute.xlu0 %2955
  %2957 = vrot.lane.b32.xlu0 %v2414, 118
  %v2958 = vpop.permute.xlu0 %2957
  %2959 = vrot.lane.b32.xlu0 %v2415, 118
  %v2960 = vpop.permute.xlu0 %2959
  %2961 = vrot.lane.b32.xlu0 %v2416, 118
  %v2962 = vpop.permute.xlu0 %2961
  %2963 = vrot.lane.b32.xlu0 %v2417, 118
  %v2964 = vpop.permute.xlu0 %2963
  %2965 = vrot.lane.b32.xlu0 %v2418, 118
  %v2966 = vpop.permute.xlu0 %2965
  %v2976 = vsel %vm463, %v2949, 0
  %v2979 = vsel %vm463, %v2950, 0
  %2981 = vmatprep.subr.mxu0 0.0
  %2982 = vmatpush1.msra.mxu0 %v2952
  %2983 = vmatprep.subr.mxu0 0.0
  %2984 = vmatpush1.msra.mxu0 %v2954
  %2985 = vmatprep.subr.mxu0 0.0
  %2986 = vmatpush1.msra.mxu0 %v2956
  %2987 = vmatprep.subr.mxu0 0.0
  %2988 = vmatpush1.msra.mxu0 %v2958
  %2989 = vmatprep.subr.mxu0 0.0
  %2990 = vmatpush1.msra.mxu0 %v2960
  %2991 = vmatprep.subr.mxu0 0.0
  %2992 = vmatpush1.msra.mxu0 %v2962
  %2993 = vmatprep.subr.mxu0 0.0
  %2994 = vmatpush1.msra.mxu0 %v2964
  %2995 = vmatprep.subr.mxu0 0.0
  %2996 = vmatpush1.msra.mxu0 %v2966
  %2997 = vmatprep.subr.mxu0 0.0
  %2998 = vmatpush1.msra.mxu0 0.0
  %2999 = vmatprep.subr.mxu0 0.0
  %3000 = vmatpush1.msra.mxu0 0.0
  %3001 = vmatprep.subr.mxu0 0.0
  %3002 = vmatpush1.msra.mxu0 0.0
  %3003 = vmatprep.subr.mxu0 0.0
  %3004 = vmatpush1.msra.mxu0 0.0
  %3005 = vmatprep.subr.mxu0 0.0
  %3006 = vmatpush1.msra.mxu0 0.0
  %3007 = vmatprep.subr.mxu0 0.0
  %3008 = vmatpush1.msra.mxu0 0.0
  %3009 = vmatprep.subr.mxu0 0.0
  %3010 = vmatpush1.msra.mxu0 0.0
  %3011 = vmatprep.subr.mxu0 0.0
  %3012 = vmatpush1.msra.mxu0 0.0
  %3013 = vmatprep.subr.mxu0 0.0
  %3014 = vmatpush1.msra.mxu0 0.0
  %3015 = vmatprep.subr.mxu0 0.0
  %3016 = vmatpush1.msra.mxu0 0.0
  %3017 = vmatprep.subr.mxu0 0.0
  %3018 = vmatpush1.msra.mxu0 0.0
  %3019 = vmatprep.subr.mxu0 0.0
  %3020 = vmatpush1.msra.mxu0 0.0
  %3021 = vmatprep.subr.mxu0 0.0
  %3022 = vmatpush1.msra.mxu0 0.0
  %3023 = vmatprep.subr.mxu0 0.0
  %3024 = vmatpush1.msra.mxu0 0.0
  %3025 = vmatprep.subr.mxu0 0.0
  %3026 = vmatpush1.msra.mxu0 0.0
  %3027 = vmatprep.subr.mxu0 0.0
  %3028 = vmatpush1.msra.mxu0 0.0
  %3029 = vmatprep.subr.mxu0 0.0
  %3030 = vmatpush1.msra.mxu0 0.0
  %3031 = vmatprep.subr.mxu0 0.0
  %3032 = vmatpush1.msra.mxu0 0.0
  %3033 = vmatprep.subr.mxu0 0.0
  %3034 = vmatpush1.msra.mxu0 0.0
  %3035 = vmatprep.subr.mxu0 0.0
  %3036 = vmatpush1.msra.mxu0 0.0
  %3037 = vmatprep.subr.mxu0 0.0
  %3038 = vmatpush1.msra.mxu0 0.0
  %3039 = vmatprep.subr.mxu0 0.0
  %3040 = vmatpush1.msra.mxu0 0.0
  %3041 = vmatprep.subr.mxu0 0.0
  %3042 = vmatpush1.msra.mxu0 0.0
  %3043 = vmatprep.subr.mxu0 0.0
  %3044 = vmatpush1.msra.mxu0 0.0
  %3045 = vmatprep.mubr.f32.mxu0 0.0
  %3046 = vmatmul.mubr.f32.gmra.mrb[0].mxu0 %v2976
  %v3047 = vpop.f32.mrb[0].mxu0
  %v3048 = vadd.f32 0.0, %v3047
  %v3049 = vpop.f32.mrb[0].mxu0
  %3050 = vmatprep.mubr.f32.mxu0 0.0
  %3051 = vmatmul.mubr.f32.gmra.mrb[0].mxu0 %v2979
  %v3052 = vpop.f32.mrb[0].mxu0
  %v3053 = vadd.f32 0.0, %v3052
  %v3054 = vpop.f32.mrb[0].mxu0
  %3055 = vdwg.mxu0
  %v3056 = vadd.f32 %v2946, %v3048
  %v3057 = vadd.f32 %v2947, %v3053
  %v3058 = vld [vmem:[%s4] sm:$0xff]
  %v3059 = vld [vmem:[%s4 + $0x8] sm:$0xff]
  %3061 = vset.pattern.permute.xlu0 0
  %3062 = vperm.xlu0 %3061, %v3058
  %v3063 = vpop.permute.xlu0 %3062
  %3066 = vset.pattern.permute.xlu0 0
  %3067 = vperm.xlu0 %3066, %v3059
  %v3068 = vpop.permute.xlu0 %3067
  %v3070 = vadd.f32 %v3056, %v3063
  %v3071 = vadd.f32 %v3057, %v3068
  %v3072 = vmul.f32 %v3070, 0.5
  %v3073 = vmul.f32 %v3071, 0.5
  %v3074 = vmul.f32 %v3070, 0.70710677
  %v3075 = vmul.f32 %v3071, 0.70710677
  %v3076 = vand.u32 2147483647, %v3074
  %v3077 = vand.u32 2147483647, %v3075
  %v3078 = vmul.f32 %v3076, 0.3275911
  %v3079 = vmul.f32 %v3077, 0.3275911
  %v3080 = vadd.f32 %v3078, 1.0
  %v3081 = vadd.f32 %v3079, 1.0
  %v3082 = vrcp.pop %v3080
  %v3083 = vmul.f32 1.0, %v3082
  %v3084 = vrcp.pop %v3081
  %v3085 = vmul.f32 1.0, %v3084
  %v3086 = vmul.f32 %v3083, 1.0614054
  %v3087 = vmul.f32 %v3085, 1.0614054
  %v3088 = vadd.f32 %v3086, -1.4531521
  %v3089 = vadd.f32 %v3087, -1.4531521
  %v3090 = vmul.f32 %v3088, %v3083
  %v3091 = vmul.f32 %v3089, %v3085
  %v3092 = vadd.f32 %v3090, 1.4214138
  %v3093 = vadd.f32 %v3091, 1.4214138
  %v3094 = vmul.f32 %v3092, %v3083
  %v3095 = vmul.f32 %v3093, %v3085
  %v3096 = vadd.f32 %v3094, -0.28449672
  %v3097 = vadd.f32 %v3095, -0.28449672
  %v3098 = vmul.f32 %v3096, %v3083
  %v3099 = vmul.f32 %v3097, %v3085
  %v3100 = vadd.f32 %v3098, 0.2548296
  %v3101 = vadd.f32 %v3099, 0.2548296
  %v3102 = vmul.f32 %v3100, %v3083
  %v3103 = vmul.f32 %v3101, %v3085
  %v3104 = vsub.f32 0.0, %v3076
  %v3105 = vsub.f32 0.0, %v3077
  %v3106 = vmul.f32 %v3104, %v3076
  %v3107 = vmul.f32 %v3105, %v3077
  %v3108 = vmul.f32 %v3106, 1.442695
  %v3109 = vpow.pop %v3108
  %v3110 = vmul.f32 %v3107, 1.442695
  %v3111 = vpow.pop %v3110
  %v3112 = vmul.f32 %v3102, %v3109
  %v3113 = vmul.f32 %v3103, %v3111
  %v3114 = vsub.f32 1.0, %v3112
  %v3115 = vsub.f32 1.0, %v3113
  %vm3116 = vcmp.ge.f32.partialorder %v3074, 0.0
  %vm3117 = vcmp.ge.f32.partialorder %v3075, 0.0
  %v3118 = vsub.f32 0.0, %v3114
  %v3119 = vsub.f32 0.0, %v3115
  %v3120 = vsel %vm3116, %v3114, %v3118
  %v3121 = vsel %vm3117, %v3115, %v3119
  %v3122 = vadd.f32 %v3120, 1.0
  %v3123 = vadd.f32 %v3121, 1.0
  %v3124 = vmul.f32 %v3072, %v3122
  %v3125 = vmul.f32 %v3073, %v3123
  %v3126 = vld [vmem:[%s6] sm:$0xff]
  %v3127 = vld [vmem:[%s6 + $0x8] sm:$0xff]
  %v3128 = vld [vmem:[%s6 + $0x10] sm:$0xff]
  %v3129 = vld [vmem:[%s6 + $0x18] sm:$0xff]
  %v3130 = vld [vmem:[%s6 + $0x20] sm:$0xff]
  %v3131 = vld [vmem:[%s6 + $0x28] sm:$0xff]
  %v3132 = vld [vmem:[%s6 + $0x30] sm:$0xff]
  %v3133 = vld [vmem:[%s6 + $0x38] sm:$0xff]
  %v3134 = vld [vmem:[%s5] sm:$0xff]
  %v3135 = vld [vmem:[%s7] sm:$0xff]
  %v3136 = vld [vmem:[%s7 + $0x8] sm:$0xff]
  %v3137 = vld [vmem:[%s7 + $0x10] sm:$0xff]
  %v3138 = vld [vmem:[%s7 + $0x18] sm:$0xff]
  %v3139 = vld [vmem:[%s7 + $0x20] sm:$0xff]
  %v3140 = vld [vmem:[%s7 + $0x28] sm:$0xff]
  %v3141 = vld [vmem:[%s7 + $0x30] sm:$0xff]
  %v3142 = vld [vmem:[%s7 + $0x38] sm:$0xff]
  %3144 = vset.pattern.permute.xlu0 0
  %3145 = vperm.xlu0 %3144, %v3135
  %v3146 = vpop.permute.xlu0 %3145
  %3149 = vset.pattern.permute.xlu0 0
  %3150 = vperm.xlu0 %3149, %v3136
  %v3151 = vpop.permute.xlu0 %3150
  %3154 = vset.pattern.permute.xlu0 0
  %3155 = vperm.xlu0 %3154, %v3137
  %v3156 = vpop.permute.xlu0 %3155
  %3159 = vset.pattern.permute.xlu0 0
  %3160 = vperm.xlu0 %3159, %v3138
  %v3161 = vpop.permute.xlu0 %3160
  %3164 = vset.pattern.permute.xlu0 0
  %3165 = vperm.xlu0 %3164, %v3139
  %v3166 = vpop.permute.xlu0 %3165
  %3169 = vset.pattern.permute.xlu0 0
  %3170 = vperm.xlu0 %3169, %v3140
  %v3171 = vpop.permute.xlu0 %3170
  %3174 = vset.pattern.permute.xlu0 0
  %3175 = vperm.xlu0 %3174, %v3141
  %v3176 = vpop.permute.xlu0 %3175
  %3179 = vset.pattern.permute.xlu0 0
  %3180 = vperm.xlu0 %3179, %v3142
  %v3181 = vpop.permute.xlu0 %3180
  %vm3183 = vcmask 64512
  %v3185 = vsel %vm3183, %v3126, 0
  %v3188 = vsel %vm3183, %v3127, 0
  %v3191 = vsel %vm3183, %v3128, 0
  %v3194 = vsel %vm3183, %v3129, 0
  %v3197 = vsel %vm3183, %v3130, 0
  %v3200 = vsel %vm3183, %v3131, 0
  %v3203 = vsel %vm3183, %v3132, 0
  %v3206 = vsel %vm3183, %v3133, 0
  %3208 = vmatprep.subr.mxu0 0.0
  %3209 = vmatpush1.msra.mxu0 %v3134
  %3210 = vmatprep.subr.mxu0 0.0
  %3211 = vmatpush1.msra.mxu0 0.0
  %3212 = vmatprep.subr.mxu0 0.0
  %3213 = vmatpush1.msra.mxu0 0.0
  %3214 = vmatprep.subr.mxu0 0.0
  %3215 = vmatpush1.msra.mxu0 0.0
  %3216 = vmatprep.subr.mxu0 0.0
  %3217 = vmatpush1.msra.mxu0 0.0
  %3218 = vmatprep.subr.mxu0 0.0
  %3219 = vmatpush1.msra.mxu0 0.0
  %3220 = vmatprep.subr.mxu0 0.0
  %3221 = vmatpush1.msra.mxu0 0.0
  %3222 = vmatprep.subr.mxu0 0.0
  %3223 = vmatpush1.msra.mxu0 0.0
  %3224 = vmatprep.subr.mxu0 0.0
  %3225 = vmatpush1.msra.mxu0 0.0
  %3226 = vmatprep.subr.mxu0 0.0
  %3227 = vmatpush1.msra.mxu0 0.0
  %3228 = vmatprep.subr.mxu0 0.0
  %3229 = vmatpush1.msra.mxu0 0.0
  %3230 = vmatprep.subr.mxu0 0.0
  %3231 = vmatpush1.msra.mxu0 0.0
  %3232 = vmatprep.subr.mxu0 0.0
  %3233 = vmatpush1.msra.mxu0 0.0
  %3234 = vmatprep.subr.mxu0 0.0
  %3235 = vmatpush1.msra.mxu0 0.0
  %3236 = vmatprep.subr.mxu0 0.0
  %3237 = vmatpush1.msra.mxu0 0.0
  %3238 = vmatprep.subr.mxu0 0.0
  %3239 = vmatpush1.msra.mxu0 0.0
  %3240 = vmatprep.subr.mxu0 0.0
  %3241 = vmatpush1.msra.mxu0 0.0
  %3242 = vmatprep.subr.mxu0 0.0
  %3243 = vmatpush1.msra.mxu0 0.0
  %3244 = vmatprep.subr.mxu0 0.0
  %3245 = vmatpush1.msra.mxu0 0.0
  %3246 = vmatprep.subr.mxu0 0.0
  %3247 = vmatpush1.msra.mxu0 0.0
  %3248 = vmatprep.subr.mxu0 0.0
  %3249 = vmatpush1.msra.mxu0 0.0
  %3250 = vmatprep.subr.mxu0 0.0
  %3251 = vmatpush1.msra.mxu0 0.0
  %3252 = vmatprep.subr.mxu0 0.0
  %3253 = vmatpush1.msra.mxu0 0.0
  %3254 = vmatprep.subr.mxu0 0.0
  %3255 = vmatpush1.msra.mxu0 0.0
  %3256 = vmatprep.subr.mxu0 0.0
  %3257 = vmatpush1.msra.mxu0 0.0
  %3258 = vmatprep.subr.mxu0 0.0
  %3259 = vmatpush1.msra.mxu0 0.0
  %3260 = vmatprep.subr.mxu0 0.0
  %3261 = vmatpush1.msra.mxu0 0.0
  %3262 = vmatprep.subr.mxu0 0.0
  %3263 = vmatpush1.msra.mxu0 0.0
  %3264 = vmatprep.subr.mxu0 0.0
  %3265 = vmatpush1.msra.mxu0 0.0
  %3266 = vmatprep.subr.mxu0 0.0
  %3267 = vmatpush1.msra.mxu0 0.0
  %3268 = vmatprep.subr.mxu0 0.0
  %3269 = vmatpush1.msra.mxu0 0.0
  %3270 = vmatprep.subr.mxu0 0.0
  %3271 = vmatpush1.msra.mxu0 0.0
  %3272 = vmatprep.mubr.f32.mxu0 0.0
  %3273 = vmatmul.mubr.f32.gmra.mrb[0].mxu0 %v3185
  %v3274 = vpop.f32.mrb[0].mxu0
  %v3275 = vadd.f32 %v3146, %v3274
  %v3276 = vpop.f32.mrb[0].mxu0
  %3277 = vmatprep.mubr.f32.mxu0 0.0
  %3278 = vmatmul.mubr.f32.gmra.mrb[0].mxu0 %v3188
  %v3279 = vpop.f32.mrb[0].mxu0
  %v3280 = vadd.f32 %v3151, %v3279
  %v3281 = vpop.f32.mrb[0].mxu0
  %3282 = vmatprep.mubr.f32.mxu0 0.0
  %3283 = vmatmul.mubr.f32.gmra.mrb[0].mxu0 %v3191
  %v3284 = vpop.f32.mrb[0].mxu0
  %v3285 = vadd.f32 %v3156, %v3284
  %v3286 = vpop.f32.mrb[0].mxu0
  %3287 = vmatprep.mubr.f32.mxu0 0.0
  %3288 = vmatmul.mubr.f32.gmra.mrb[0].mxu0 %v3194
  %v3289 = vpop.f32.mrb[0].mxu0
  %v3290 = vadd.f32 %v3161, %v3289
  %v3291 = vpop.f32.mrb[0].mxu0
  %3292 = vmatprep.mubr.f32.mxu0 0.0
  %3293 = vmatmul.mubr.f32.gmra.mrb[0].mxu0 %v3197
  %v3294 = vpop.f32.mrb[0].mxu0
  %v3295 = vadd.f32 %v3166, %v3294
  %v3296 = vpop.f32.mrb[0].mxu0
  %3297 = vmatprep.mubr.f32.mxu0 0.0
  %3298 = vmatmul.mubr.f32.gmra.mrb[0].mxu0 %v3200
  %v3299 = vpop.f32.mrb[0].mxu0
  %v3300 = vadd.f32 %v3171, %v3299
  %v3301 = vpop.f32.mrb[0].mxu0
  %3302 = vmatprep.mubr.f32.mxu0 0.0
  %3303 = vmatmul.mubr.f32.gmra.mrb[0].mxu0 %v3203
  %v3304 = vpop.f32.mrb[0].mxu0
  %v3305 = vadd.f32 %v3176, %v3304
  %v3306 = vpop.f32.mrb[0].mxu0
  %3307 = vmatprep.mubr.f32.mxu0 0.0
  %3308 = vmatmul.mubr.f32.gmra.mrb[0].mxu0 %v3206
  %v3309 = vpop.f32.mrb[0].mxu0
  %v3310 = vadd.f32 %v3181, %v3309
  %v3311 = vpop.f32.mrb[0].mxu0
  %3312 = vdwg.mxu0
  %v3313 = vmax.f32 %v3275, 0.0
  %v3314 = vmax.f32 %v3280, 0.0
  %v3315 = vmax.f32 %v3285, 0.0
  %v3316 = vmax.f32 %v3290, 0.0
  %v3317 = vmax.f32 %v3295, 0.0
  %v3318 = vmax.f32 %v3300, 0.0
  %v3319 = vmax.f32 %v3305, 0.0
  %v3320 = vmax.f32 %v3310, 0.0
  %v3321 = vld [vmem:[%s8] sm:$0xff]
  %v3322 = vld [vmem:[%s8 + $0x8] sm:$0xff]
  %v3323 = vld [vmem:[%s9] sm:$0xff]
  %v3324 = vld [vmem:[%s9 + $0x8] sm:$0xff]
  %3326 = vset.pattern.permute.xlu0 0
  %3327 = vperm.xlu0 %3326, %v3323
  %v3328 = vpop.permute.xlu0 %3327
  %3331 = vset.pattern.permute.xlu0 0
  %3332 = vperm.xlu0 %3331, %v3324
  %v3333 = vpop.permute.xlu0 %3332
  %v3336 = vsel %vm463, %v3321, 0
  %v3339 = vsel %vm463, %v3322, 0
  %3341 = vmatprep.subr.mxu0 0.0
  %3342 = vmatpush1.msra.mxu0 %v3313
  %3343 = vmatprep.subr.mxu0 0.0
  %3344 = vmatpush1.msra.mxu0 %v3314
  %3345 = vmatprep.subr.mxu0 0.0
  %3346 = vmatpush1.msra.mxu0 %v3315
  %3347 = vmatprep.subr.mxu0 0.0
  %3348 = vmatpush1.msra.mxu0 %v3316
  %3349 = vmatprep.subr.mxu0 0.0
  %3350 = vmatpush1.msra.mxu0 %v3317
  %3351 = vmatprep.subr.mxu0 0.0
  %3352 = vmatpush1.msra.mxu0 %v3318
  %3353 = vmatprep.subr.mxu0 0.0
  %3354 = vmatpush1.msra.mxu0 %v3319
  %3355 = vmatprep.subr.mxu0 0.0
  %3356 = vmatpush1.msra.mxu0 %v3320
  %3357 = vmatprep.subr.mxu0 0.0
  %3358 = vmatpush1.msra.mxu0 0.0
  %3359 = vmatprep.subr.mxu0 0.0
  %3360 = vmatpush1.msra.mxu0 0.0
  %3361 = vmatprep.subr.mxu0 0.0
  %3362 = vmatpush1.msra.mxu0 0.0
  %3363 = vmatprep.subr.mxu0 0.0
  %3364 = vmatpush1.msra.mxu0 0.0
  %3365 = vmatprep.subr.mxu0 0.0
  %3366 = vmatpush1.msra.mxu0 0.0
  %3367 = vmatprep.subr.mxu0 0.0
  %3368 = vmatpush1.msra.mxu0 0.0
  %3369 = vmatprep.subr.mxu0 0.0
  %3370 = vmatpush1.msra.mxu0 0.0
  %3371 = vmatprep.subr.mxu0 0.0
  %3372 = vmatpush1.msra.mxu0 0.0
  %3373 = vmatprep.subr.mxu0 0.0
  %3374 = vmatpush1.msra.mxu0 0.0
  %3375 = vmatprep.subr.mxu0 0.0
  %3376 = vmatpush1.msra.mxu0 0.0
  %3377 = vmatprep.subr.mxu0 0.0
  %3378 = vmatpush1.msra.mxu0 0.0
  %3379 = vmatprep.subr.mxu0 0.0
  %3380 = vmatpush1.msra.mxu0 0.0
  %3381 = vmatprep.subr.mxu0 0.0
  %3382 = vmatpush1.msra.mxu0 0.0
  %3383 = vmatprep.subr.mxu0 0.0
  %3384 = vmatpush1.msra.mxu0 0.0
  %3385 = vmatprep.subr.mxu0 0.0
  %3386 = vmatpush1.msra.mxu0 0.0
  %3387 = vmatprep.subr.mxu0 0.0
  %3388 = vmatpush1.msra.mxu0 0.0
  %3389 = vmatprep.subr.mxu0 0.0
  %3390 = vmatpush1.msra.mxu0 0.0
  %3391 = vmatprep.subr.mxu0 0.0
  %3392 = vmatpush1.msra.mxu0 0.0
  %3393 = vmatprep.subr.mxu0 0.0
  %3394 = vmatpush1.msra.mxu0 0.0
  %3395 = vmatprep.subr.mxu0 0.0
  %3396 = vmatpush1.msra.mxu0 0.0
  %3397 = vmatprep.subr.mxu0 0.0
  %3398 = vmatpush1.msra.mxu0 0.0
  %3399 = vmatprep.subr.mxu0 0.0
  %3400 = vmatpush1.msra.mxu0 0.0
  %3401 = vmatprep.subr.mxu0 0.0
  %3402 = vmatpush1.msra.mxu0 0.0
  %3403 = vmatprep.subr.mxu0 0.0
  %3404 = vmatpush1.msra.mxu0 0.0
  %3405 = vmatprep.mubr.f32.mxu0 0.0
  %3406 = vmatmul.mubr.f32.gmra.mrb[0].mxu0 %v3336
  %v3407 = vpop.f32.mrb[0].mxu0
  %v3408 = vadd.f32 %v3328, %v3407
  %v3409 = vpop.f32.mrb[0].mxu0
  %3410 = vmatprep.mubr.f32.mxu0 0.0
  %3411 = vmatmul.mubr.f32.gmra.mrb[0].mxu0 %v3339
  %v3412 = vpop.f32.mrb[0].mxu0
  %v3413 = vadd.f32 %v3333, %v3412
  %v3414 = vpop.f32.mrb[0].mxu0
  %3415 = vdwg.mxu0
  %v3416 = vmax.f32 %v3408, 0.0
  %v3417 = vmax.f32 %v3413, 0.0
  %v3418 = vld [vmem:[%s10] sm:$0xff]
  %v3419 = vld [vmem:[%s10 + $0x8] sm:$0xff]
  %v3420 = vld [vmem:[%s11] sm:$0xff]
  %v3421 = vld [vmem:[%s11 + $0x8] sm:$0xff]
  %vm3422 = vcmask 130048
  %v3424 = vsel %vm3422, %v3420, 0
  %v3427 = vsel %vm3422, %v3421, 0
  %3429 = vmatprep.subr.mxu0 0.0
  %3430 = vmatpush1.msra.mxu0 %v3416
  %3431 = vmatprep.subr.mxu0 0.0
  %3432 = vmatpush1.msra.mxu0 %v3417
  %3433 = vmatprep.subr.mxu0 0.0
  %3434 = vmatpush1.msra.mxu0 0.0
  %3435 = vmatprep.subr.mxu0 0.0
  %3436 = vmatpush1.msra.mxu0 0.0
  %3437 = vmatprep.subr.mxu0 0.0
  %3438 = vmatpush1.msra.mxu0 0.0
  %3439 = vmatprep.subr.mxu0 0.0
  %3440 = vmatpush1.msra.mxu0 0.0
  %3441 = vmatprep.subr.mxu0 0.0
  %3442 = vmatpush1.msra.mxu0 0.0
  %3443 = vmatprep.subr.mxu0 0.0
  %3444 = vmatpush1.msra.mxu0 0.0
  %3445 = vmatprep.subr.mxu0 0.0
  %3446 = vmatpush1.msra.mxu0 0.0
  %3447 = vmatprep.subr.mxu0 0.0
  %3448 = vmatpush1.msra.mxu0 0.0
  %3449 = vmatprep.subr.mxu0 0.0
  %3450 = vmatpush1.msra.mxu0 0.0
  %3451 = vmatprep.subr.mxu0 0.0
  %3452 = vmatpush1.msra.mxu0 0.0
  %3453 = vmatprep.subr.mxu0 0.0
  %3454 = vmatpush1.msra.mxu0 0.0
  %3455 = vmatprep.subr.mxu0 0.0
  %3456 = vmatpush1.msra.mxu0 0.0
  %3457 = vmatprep.subr.mxu0 0.0
  %3458 = vmatpush1.msra.mxu0 0.0
  %3459 = vmatprep.subr.mxu0 0.0
  %3460 = vmatpush1.msra.mxu0 0.0
  %3461 = vmatprep.subr.mxu0 0.0
  %3462 = vmatpush1.msra.mxu0 0.0
  %3463 = vmatprep.subr.mxu0 0.0
  %3464 = vmatpush1.msra.mxu0 0.0
  %3465 = vmatprep.subr.mxu0 0.0
  %3466 = vmatpush1.msra.mxu0 0.0
  %3467 = vmatprep.subr.mxu0 0.0
  %3468 = vmatpush1.msra.mxu0 0.0
  %3469 = vmatprep.subr.mxu0 0.0
  %3470 = vmatpush1.msra.mxu0 0.0
  %3471 = vmatprep.subr.mxu0 0.0
  %3472 = vmatpush1.msra.mxu0 0.0
  %3473 = vmatprep.subr.mxu0 0.0
  %3474 = vmatpush1.msra.mxu0 0.0
  %3475 = vmatprep.subr.mxu0 0.0
  %3476 = vmatpush1.msra.mxu0 0.0
  %3477 = vmatprep.subr.mxu0 0.0
  %3478 = vmatpush1.msra.mxu0 0.0
  %3479 = vmatprep.subr.mxu0 0.0
  %3480 = vmatpush1.msra.mxu0 0.0
  %3481 = vmatprep.subr.mxu0 0.0
  %3482 = vmatpush1.msra.mxu0 0.0
  %3483 = vmatprep.subr.mxu0 0.0
  %3484 = vmatpush1.msra.mxu0 0.0
  %3485 = vmatprep.subr.mxu0 0.0
  %3486 = vmatpush1.msra.mxu0 0.0
  %3487 = vmatprep.subr.mxu0 0.0
  %3488 = vmatpush1.msra.mxu0 0.0
  %3489 = vmatprep.subr.mxu0 0.0
  %3490 = vmatpush1.msra.mxu0 0.0
  %3491 = vmatprep.subr.mxu0 0.0
  %3492 = vmatpush1.msra.mxu0 0.0
  %3493 = vmatprep.mubr.f32.mxu0 0.0
  %3494 = vmatmul.mubr.f32.gmra.mrb[0].mxu0 %v3424
  %v3495 = vpop.f32.mrb[0].mxu0
  %v3496 = vadd.f32 0.0, %v3495
  %v3497 = vpop.f32.mrb[0].mxu0
  %3498 = vmatprep.mubr.f32.mxu0 0.0
  %3499 = vmatmul.mubr.f32.gmra.mrb[0].mxu0 %v3427
  %v3500 = vpop.f32.mrb[0].mxu0
  %v3501 = vadd.f32 0.0, %v3500
  %v3502 = vpop.f32.mrb[0].mxu0
  %3503 = vdwg.mxu0
  %v3505 = vsel %vm3422, %v3418, 0
  %v3508 = vsel %vm3422, %v3419, 0
  %3510 = vmatprep.subr.mxu0 0.0
  %3511 = vmatpush1.msra.mxu0 %v3124
  %3512 = vmatprep.subr.mxu0 0.0
  %3513 = vmatpush1.msra.mxu0 %v3125
  %3514 = vmatprep.subr.mxu0 0.0
  %3515 = vmatpush1.msra.mxu0 0.0
  %3516 = vmatprep.subr.mxu0 0.0
  %3517 = vmatpush1.msra.mxu0 0.0
  %3518 = vmatprep.subr.mxu0 0.0
  %3519 = vmatpush1.msra.mxu0 0.0
  %3520 = vmatprep.subr.mxu0 0.0
  %3521 = vmatpush1.msra.mxu0 0.0
  %3522 = vmatprep.subr.mxu0 0.0
  %3523 = vmatpush1.msra.mxu0 0.0
  %3524 = vmatprep.subr.mxu0 0.0
  %3525 = vmatpush1.msra.mxu0 0.0
  %3526 = vmatprep.subr.mxu0 0.0
  %3527 = vmatpush1.msra.mxu0 0.0
  %3528 = vmatprep.subr.mxu0 0.0
  %3529 = vmatpush1.msra.mxu0 0.0
  %3530 = vmatprep.subr.mxu0 0.0
  %3531 = vmatpush1.msra.mxu0 0.0
  %3532 = vmatprep.subr.mxu0 0.0
  %3533 = vmatpush1.msra.mxu0 0.0
  %3534 = vmatprep.subr.mxu0 0.0
  %3535 = vmatpush1.msra.mxu0 0.0
  %3536 = vmatprep.subr.mxu0 0.0
  %3537 = vmatpush1.msra.mxu0 0.0
  %3538 = vmatprep.subr.mxu0 0.0
  %3539 = vmatpush1.msra.mxu0 0.0
  %3540 = vmatprep.subr.mxu0 0.0
  %3541 = vmatpush1.msra.mxu0 0.0
  %3542 = vmatprep.subr.mxu0 0.0
  %3543 = vmatpush1.msra.mxu0 0.0
  %3544 = vmatprep.subr.mxu0 0.0
  %3545 = vmatpush1.msra.mxu0 0.0
  %3546 = vmatprep.subr.mxu0 0.0
  %3547 = vmatpush1.msra.mxu0 0.0
  %3548 = vmatprep.subr.mxu0 0.0
  %3549 = vmatpush1.msra.mxu0 0.0
  %3550 = vmatprep.subr.mxu0 0.0
  %3551 = vmatpush1.msra.mxu0 0.0
  %3552 = vmatprep.subr.mxu0 0.0
  %3553 = vmatpush1.msra.mxu0 0.0
  %3554 = vmatprep.subr.mxu0 0.0
  %3555 = vmatpush1.msra.mxu0 0.0
  %3556 = vmatprep.subr.mxu0 0.0
  %3557 = vmatpush1.msra.mxu0 0.0
  %3558 = vmatprep.subr.mxu0 0.0
  %3559 = vmatpush1.msra.mxu0 0.0
  %3560 = vmatprep.subr.mxu0 0.0
  %3561 = vmatpush1.msra.mxu0 0.0
  %3562 = vmatprep.subr.mxu0 0.0
  %3563 = vmatpush1.msra.mxu0 0.0
  %3564 = vmatprep.subr.mxu0 0.0
  %3565 = vmatpush1.msra.mxu0 0.0
  %3566 = vmatprep.subr.mxu0 0.0
  %3567 = vmatpush1.msra.mxu0 0.0
  %3568 = vmatprep.subr.mxu0 0.0
  %3569 = vmatpush1.msra.mxu0 0.0
  %3570 = vmatprep.subr.mxu0 0.0
  %3571 = vmatpush1.msra.mxu0 0.0
  %3572 = vmatprep.subr.mxu0 0.0
  %3573 = vmatpush1.msra.mxu0 0.0
  %3574 = vmatprep.mubr.f32.mxu0 0.0
  %3575 = vmatmul.mubr.f32.gmra.mrb[0].mxu0 %v3505
  %v3576 = vpop.f32.mrb[0].mxu0
  %v3577 = vadd.f32 %v3496, %v3576
  %v3578 = vpop.f32.mrb[0].mxu0
  %3579 = vmatprep.mubr.f32.mxu0 0.0
  %3580 = vmatmul.mubr.f32.gmra.mrb[0].mxu0 %v3508
  %v3581 = vpop.f32.mrb[0].mxu0
  %v3582 = vadd.f32 %v3501, %v3581
  %v3583 = vpop.f32.mrb[0].mxu0
  %3584 = vdwg.mxu0
  %v3585 = vld [vmem:[%s12] sm:$0xff]
  %v3586 = vld [vmem:[%s12 + $0x8] sm:$0xff]
  %3588 = vset.pattern.permute.xlu0 0
  %3589 = vperm.xlu0 %3588, %v3585
  %v3590 = vpop.permute.xlu0 %3589
  %3593 = vset.pattern.permute.xlu0 0
  %3594 = vperm.xlu0 %3593, %v3586
  %v3595 = vpop.permute.xlu0 %3594
  %v3597 = vadd.f32 %v3577, %v3590
  %v3598 = vadd.f32 %v3582, %v3595
  %v3599 = vmax.f32 %v3597, 0.0
  %v3600 = vmax.f32 %v3598, 0.0
  %v3601 = vld [vmem:[%s13] sm:$0xf]
  %v3602 = vld [vmem:[%s14] sm:$0xf]
  %3604 = vset.pattern.permute.xlu0 0
  %3605 = vperm.xlu0 %3604, %v3602
  %v3606 = vpop.permute.xlu0 %3605
  %v3609 = vsel %vm3422, %v3601, 0
  %3611 = vmatprep.subr.mxu0 0.0
  %3612 = vmatpush1.msra.mxu0 %v3599
  %3613 = vmatprep.subr.mxu0 0.0
  %3614 = vmatpush1.msra.mxu0 %v3600
  %3615 = vmatprep.subr.mxu0 0.0
  %3616 = vmatpush1.msra.mxu0 0.0
  %3617 = vmatprep.subr.mxu0 0.0
  %3618 = vmatpush1.msra.mxu0 0.0
  %3619 = vmatprep.subr.mxu0 0.0
  %3620 = vmatpush1.msra.mxu0 0.0
  %3621 = vmatprep.subr.mxu0 0.0
  %3622 = vmatpush1.msra.mxu0 0.0
  %3623 = vmatprep.subr.mxu0 0.0
  %3624 = vmatpush1.msra.mxu0 0.0
  %3625 = vmatprep.subr.mxu0 0.0
  %3626 = vmatpush1.msra.mxu0 0.0
  %3627 = vmatprep.subr.mxu0 0.0
  %3628 = vmatpush1.msra.mxu0 0.0
  %3629 = vmatprep.subr.mxu0 0.0
  %3630 = vmatpush1.msra.mxu0 0.0
  %3631 = vmatprep.subr.mxu0 0.0
  %3632 = vmatpush1.msra.mxu0 0.0
  %3633 = vmatprep.subr.mxu0 0.0
  %3634 = vmatpush1.msra.mxu0 0.0
  %3635 = vmatprep.subr.mxu0 0.0
  %3636 = vmatpush1.msra.mxu0 0.0
  %3637 = vmatprep.subr.mxu0 0.0
  %3638 = vmatpush1.msra.mxu0 0.0
  %3639 = vmatprep.subr.mxu0 0.0
  %3640 = vmatpush1.msra.mxu0 0.0
  %3641 = vmatprep.subr.mxu0 0.0
  %3642 = vmatpush1.msra.mxu0 0.0
  %3643 = vmatprep.subr.mxu0 0.0
  %3644 = vmatpush1.msra.mxu0 0.0
  %3645 = vmatprep.subr.mxu0 0.0
  %3646 = vmatpush1.msra.mxu0 0.0
  %3647 = vmatprep.subr.mxu0 0.0
  %3648 = vmatpush1.msra.mxu0 0.0
  %3649 = vmatprep.subr.mxu0 0.0
  %3650 = vmatpush1.msra.mxu0 0.0
  %3651 = vmatprep.subr.mxu0 0.0
  %3652 = vmatpush1.msra.mxu0 0.0
  %3653 = vmatprep.subr.mxu0 0.0
  %3654 = vmatpush1.msra.mxu0 0.0
  %3655 = vmatprep.subr.mxu0 0.0
  %3656 = vmatpush1.msra.mxu0 0.0
  %3657 = vmatprep.subr.mxu0 0.0
  %3658 = vmatpush1.msra.mxu0 0.0
  %3659 = vmatprep.subr.mxu0 0.0
  %3660 = vmatpush1.msra.mxu0 0.0
  %3661 = vmatprep.subr.mxu0 0.0
  %3662 = vmatpush1.msra.mxu0 0.0
  %3663 = vmatprep.subr.mxu0 0.0
  %3664 = vmatpush1.msra.mxu0 0.0
  %3665 = vmatprep.subr.mxu0 0.0
  %3666 = vmatpush1.msra.mxu0 0.0
  %3667 = vmatprep.subr.mxu0 0.0
  %3668 = vmatpush1.msra.mxu0 0.0
  %3669 = vmatprep.subr.mxu0 0.0
  %3670 = vmatpush1.msra.mxu0 0.0
  %3671 = vmatprep.subr.mxu0 0.0
  %3672 = vmatpush1.msra.mxu0 0.0
  %3673 = vmatprep.subr.mxu0 0.0
  %3674 = vmatpush1.msra.mxu0 0.0
  %3675 = vmatprep.mubr.f32.mxu0 0.0
  %3676 = vmatmul.mubr.f32.gmra.mrb[0].mxu0 %v3609
  %v3677 = vpop.f32.mrb[0].mxu0
  %v3678 = vadd.f32 %v3606, %v3677
  %v3679 = vpop.f32.mrb[0].mxu0
  %3680 = vdwg.mxu0
  %vm3681 = vcmask 11264
  %3682 = vst.msk [vmem:[%s15] sm:$0xf] %vm3681, %v3678
  // Predicated region
  $region62: #{dqn_forward.5} parent=0 // pred_check
    _
  $region63: #{dqn_forward.5} parent=0 // pred_check_branch
    %3684 = sbr.rel (0) target = $region65
  $region64: #{dqn_forward.5} parent=0 // pred_region
    _
  $region65: #{dqn_forward.5} parent=0 // pred_fallthru
    _
  // Predicated region
  $region66: #{dqn_forward.5} parent=0 // pred_check
    _
  $region67: #{dqn_forward.5} parent=0 // pred_check_branch
    %3686 = sbr.rel (0) target = $region69
  $region68: #{dqn_forward.5} parent=0 // pred_region
    _
  $region69: #{dqn_forward.5} parent=0 // pred_fallthru
    _

</llo_original>
